<compile_context>
chip_gen: v5e
topology: v5e:2x2
jax: 0.10.0
libtpu: 0.0.40
codegen_flags: <defaults>
</compile_context>

<pallas_src>
import functools

import numpy as np
import jax
import jax.numpy as jnp
from jax.experimental import pallas as pl
from jax.experimental.pallas import tpu as pltpu


# ----------------------------------------------------------------------------
# In-kernel fused WN stack (shared by both kernels)
# ----------------------------------------------------------------------------

def _wn_stack(x, in_w_ref, in_b_ref, rs_w_ref, rs_b_ref, xpad_ref, *,
              n_layers, kernel_size, dilation_rate, hidden, pad_max):
    """Full WaveNet stack on an (H, T) f32 value; returns the skip sum (H, T).

    `xpad_ref` is a zeroed VMEM scratch at least (H, T + 2*pad_max) wide; only
    its centre [pad_max, pad_max + T) is ever written, so the zero pad columns
    provide the dilated-conv padding for free.
    """
    T = x.shape[1]
    skip = jnp.zeros((hidden, T), jnp.float32)
    for i in range(n_layers):                        # static unroll (n_layers small)
        d = dilation_rate ** i
        pad = d * (kernel_size - 1) // 2
        # Write current activation into the centre of the zero-padded scratch.
        xpad_ref[:, pad_max:pad_max + T] = x
        # Stack the k dilated taps along sublanes -> single (k*H, T) operand,
        # so the dilated conv is ONE MXU matmul instead of k small ones.
        taps = [xpad_ref[:, pad_max - pad + j * d: pad_max - pad + j * d + T]
                for j in range(kernel_size)]
        taps = taps[0] if kernel_size == 1 else jnp.concatenate(taps, axis=0)
        pre_act = jnp.dot(in_w_ref[i], taps,
                          preferred_element_type=jnp.float32) + in_b_ref[i]
        # fused_add_tanh_sigmoid_multiply with g = 0
        gated = jnp.tanh(pre_act[:hidden]) * jax.nn.sigmoid(pre_act[hidden:])
        rs = jnp.dot(rs_w_ref[i], gated,
                     preferred_element_type=jnp.float32) + rs_b_ref[i]
        x = x + rs[:hidden]         # residual (zero rows on the last layer -> no-op)
        skip = skip + rs[hidden:]   # skip accumulation stays in vregs
    return skip


# ----------------------------------------------------------------------------
# Kernel A: full ResidualUpsampleCouplingLayer forward (one batch element)
#   out = [ repeat(x0, sf) + post1(WN1(pre1(x1u))) ; x1u ]
#   with x1u = repeat(x1 + post(WN(pre(x0))), sf)
# Half-channel routing is pre-folded into zero-padded weights so every op
# below is a full (C, T)-tile op.
# ----------------------------------------------------------------------------

def _upsample_kernel(x_ref, rep_ref,
                     pre_w, pre_b, a_in_w, a_in_b, a_rs_w, a_rs_b, post_w, post_b,
                     pre1_w, pre1_b, b_in_w, b_in_b, b_rs_w, b_rs_b,
                     post1_w, post1_b,
                     o_ref, xpad_ref, *,
                     n_layers, kernel_size, dilation_rate, hidden, pad_max):
    xpad_ref[...] = jnp.zeros(xpad_ref.shape, xpad_ref.dtype)   # zero pads once
    wn = functools.partial(_wn_stack, xpad_ref=xpad_ref, n_layers=n_layers,
                           kernel_size=kernel_size, dilation_rate=dilation_rate,
                           hidden=hidden, pad_max=pad_max)
    xb = x_ref[0]                                   # (C, T) = [x0 ; x1]
    # s1 = post(WN(pre(x0))) — pre_w only reads the top half (zero-padded cols),
    # post_w only writes the bottom half (zero-padded rows): s1_full = [0 ; s1].
    s = jnp.dot(pre_w[...], xb, preferred_element_type=jnp.float32) + pre_b[...]
    s1 = jnp.dot(post_w[...], wn(s, a_in_w, a_in_b, a_rs_w, a_rs_b),
                 preferred_element_type=jnp.float32) + post_b[...]
    # repeat_interleave(., sf) == matmul with a constant 0/1 matrix (one MXU op):
    #   base = [repeat(x0) ; repeat(x1 + s1)] = [repeat(x0) ; upsampled_x1]
    base = jnp.dot(xb + s1, rep_ref[...], preferred_element_type=jnp.float32)
    # s2 = post1(WN1(pre1(upsampled_x1))) — pre1_w reads only the bottom half,
    # post1_w writes only the top half: s2_full = [s2 ; 0].
    s = jnp.dot(pre1_w[...], base, preferred_element_type=jnp.float32) + pre1_b[...]
    s2 = jnp.dot(post1_w[...], wn(s, b_in_w, b_in_b, b_rs_w, b_rs_b),
                 preferred_element_type=jnp.float32) + post1_b[...]
    o_ref[0] = (base + s2).astype(o_ref.dtype)      # [upsampled_x0 ; upsampled_x1]


# ----------------------------------------------------------------------------
# Kernel B: Flip -> Reverse_Hierarchy_flow -> Flip, fully fused.
#   out = [ up_x0 + rev(pyramid(proj(WN(pre(rev(up_x1)))),
#                              proj2(WN2(pre(rev(up_x1)))))) ; up_x1 ]
# The channel reversals and half-channel routing are folded into the
# pre/proj/proj2 weights at init, so the kernel only does full-tile ops.
# ----------------------------------------------------------------------------

def _hierarchy_kernel(x_ref, pre_w, pre_b,
                      a_in_w, a_in_b, a_rs_w, a_rs_b,
                      b_in_w, b_in_b, b_rs_w, b_rs_b,
                      proj_w, proj_b, proj2_w, proj2_b, m1_ref, m2_ref,
                      o_ref, xpad_ref, *,
                      n_layers, kernel_size, dilation_rate, hidden, pad_max):
    xpad_ref[...] = jnp.zeros(xpad_ref.shape, xpad_ref.dtype)
    wn = functools.partial(_wn_stack, xpad_ref=xpad_ref, n_layers=n_layers,
                           kernel_size=kernel_size, dilation_rate=dilation_rate,
                           hidden=hidden, pad_max=pad_max)
    xb = x_ref[0]                                   # (C, T) = [up_x0 ; up_x1]
    s = jnp.dot(pre_w[...], xb, preferred_element_type=jnp.float32) + pre_b[...]
    s1 = jnp.dot(proj_w[...], wn(s, a_in_w, a_in_b, a_rs_w, a_rs_b),
                 preferred_element_type=jnp.float32) + proj_b[...]
    s2 = jnp.dot(proj2_w[...], wn(s, b_in_w, b_in_b, b_rs_w, b_rs_b),
                 preferred_element_type=jnp.float32) + proj2_b[...]
    # Bit-pyramid repeat_interleave-and-add == two matmuls with constant 0/1
    # matrices (s1/s2 have zero rows in the passthrough half, so "add" does too).
    add = (jnp.dot(s1, m1_ref[...], preferred_element_type=jnp.float32)
           + jnp.dot(s2, m2_ref[...], preferred_element_type=jnp.float32))
    o_ref[0] = (xb + add).astype(o_ref.dtype)


# ----------------------------------------------------------------------------
# Constant 0/1 matrices (compile-time constants, cached)
# ----------------------------------------------------------------------------

@functools.lru_cache(maxsize=None)
def _repeat_matrix(t, sf):
    """R (t, t*sf) s.t.  x @ R == repeat_interleave(x, sf, axis=-1)."""
    r = np.zeros((t, t * sf), np.float32)
    for i in range(t):
        r[i, i * sf:(i + 1) * sf] = 1.0
    return jnp.asarray(r)


@functools.lru_cache(maxsize=None)
def _pyramid_matrices(l):
    """0/1 matrices s.t. s1 @ M1 + s2 @ M2 == the PyTorch bit-pyramid add."""
    bit_l = l.bit_length()
    m = np.zeros((2 * l, l), np.float32)
    now = 0
    for i in range(bit_l):
        w = 1 << i
        r = l // w
        for q in range(w):
            m[now + q, q * r:(q + 1) * r] = 1.0
        now += w
    return jnp.asarray(m[:l]), jnp.asarray(m[l:])


def _const_spec(w):
    """BlockSpec for a weight: whole array, constant block index across the grid."""
    if w.ndim == 3:
        return pl.BlockSpec(w.shape, lambda *_: (0, 0, 0))
    return pl.BlockSpec(w.shape, lambda *_: (0, 0))


# ----------------------------------------------------------------------------
# pallas_call wrappers
# ----------------------------------------------------------------------------

def upsample_layer(x, p, *, scale_factor, dilation_rate, n_layers, kernel_size):
    B, C, T = x.shape
    H = p["pre_w"].shape[0]
    Tu = T * scale_factor
    pad_max = dilation_rate ** (n_layers - 1) * (kernel_size - 1) // 2
    rep = _repeat_matrix(T, scale_factor)

    kern = functools.partial(_upsample_kernel, n_layers=n_layers,
                             kernel_size=kernel_size, dilation_rate=dilation_rate,
                             hidden=H, pad_max=pad_max)
    batch_in = lambda bb: (bb, 0, 0)
    batch_out = lambda bb: (bb, 0, 0)

    a, b = p["enc"], p["enc1"]
    args = (x, rep, p["pre_w"], p["pre_b"],
            a["in_w"], a["in_b"], a["rs_w"], a["rs_b"], p["post_w"], p["post_b"],
            p["pre1_w"], p["pre1_b"],
            b["in_w"], b["in_b"], b["rs_w"], b["rs_b"], p["post1_w"], p["post1_b"])
    in_specs = [pl.BlockSpec((1, C, T), batch_in)] + [_const_spec(w) for w in args[1:]]

    per_layer = lambda t: 2 * (2 * H) * (kernel_size * H) * t + 2 * (2 * H) * H * t
    flops = B * (2 * H * C * T + n_layers * per_layer(T) + 2 * C * H * T
                 + 2 * C * T * Tu
                 + 2 * H * C * Tu + n_layers * per_layer(Tu) + 2 * C * H * Tu)
    trans = B * n_layers * 2 * H * (T + Tu)
    bytes_accessed = 4 * (sum(int(np.prod(v.shape)) for v in args) + B * C * Tu)
    ce = pl.CostEstimate(flops=int(flops), transcendentals=int(trans),
                         bytes_accessed=int(bytes_accessed))

    return pl.pallas_call(
        kern,
        out_shape=jax.ShapeDtypeStruct((B, C, Tu), x.dtype),
        grid=(B,),
        in_specs=in_specs,
        out_specs=pl.BlockSpec((1, C, Tu), batch_out),
        scratch_shapes=[pltpu.VMEM((H, Tu + 2 * pad_max), jnp.float32)],
        compiler_params=pltpu.CompilerParams(dimension_semantics=("parallel",)),
        cost_estimate=ce,
    )(*args)


def hierarchy_flow(x, p, *, dilation_rate, n_layers, kernel_size):
    """Fused Flip -> Reverse_Hierarchy_flow -> Flip (flips folded into weights)."""
    B, C, T = x.shape
    H = p["pre_w"].shape[0]
    assert T & (T - 1) == 0, "bit-pyramid requires a power-of-two length"
    pad_max = dilation_rate ** (n_layers - 1) * (kernel_size - 1) // 2
    m1, m2 = _pyramid_matrices(T)

    kern = functools.partial(_hierarchy_kernel, n_layers=n_layers,
                             kernel_size=kernel_size, dilation_rate=dilation_rate,
                             hidden=H, pad_max=pad_max)
    batch = lambda bb: (bb, 0, 0)

    wn_a, wn_b = p["enc"], p["enc2"]
    args = (x, p["pre_w"], p["pre_b"],
            wn_a["in_w"], wn_a["in_b"], wn_a["rs_w"], wn_a["rs_b"],
            wn_b["in_w"], wn_b["in_b"], wn_b["rs_w"], wn_b["rs_b"],
            p["proj_w"], p["proj_b"], p["proj2_w"], p["proj2_b"], m1, m2)
    in_specs = [pl.BlockSpec((1, C, T), batch)] + [_const_spec(w) for w in args[1:]]

    per_layer = 2 * (2 * H) * (kernel_size * H) * T + 2 * (2 * H) * H * T
    flops = B * (2 * H * C * T + 2 * n_layers * per_layer
                 + 2 * (2 * C * H * T) + 2 * (2 * C * T * T))
    trans = B * 2 * n_layers * 2 * H * T
    bytes_accessed = 4 * (sum(int(np.prod(v.shape)) for v in args) + B * C * T)
    ce = pl.CostEstimate(flops=int(flops), transcendentals=int(trans),
                         bytes_accessed=int(bytes_accessed))

    return pl.pallas_call(
        kern,
        out_shape=jax.ShapeDtypeStruct((B, C, T), x.dtype),
        grid=(B,),
        in_specs=in_specs,
        out_specs=pl.BlockSpec((1, C, T), batch),
        scratch_shapes=[pltpu.VMEM((H, T + 2 * pad_max), jnp.float32)],
        compiler_params=pltpu.CompilerParams(dimension_semantics=("parallel",)),
        cost_estimate=ce,
    )(*args)


# ----------------------------------------------------------------------------
# Encoder forward (thin Python loop; no glue XLA ops between kernels)
# ----------------------------------------------------------------------------

def encoder_forward(x, params, *, scale_factor, dilation_rate, n_layers,
                    n_uplayers, kernel_size):
    # Encoder.forward -> ResidualUpsampleCouplingBlock.forward (reverse=False).
    # Each iteration of the PyTorch flow list is
    #   [ResidualUpsampleCouplingLayer, Flip, Reverse_Hierarchy_flow, Flip];
    # both Flips are folded into the hierarchy kernel's weights at init.
    flow_pyramid = []
    for i in range(n_uplayers):
        flow_pyramid.append(x)                              # flow 3*i
        x = upsample_layer(x, params["up"][i], scale_factor=scale_factor,
                           dilation_rate=dilation_rate, n_layers=n_layers,
                           kernel_size=kernel_size)
        x = hierarchy_flow(x, params["hier"][i],            # flows 3*i+1, 3*i+2
                           dilation_rate=dilation_rate, n_layers=n_layers,
                           kernel_size=kernel_size)
    flow_pyramid.append(x)
    return x, flow_pyramid


# ----------------------------------------------------------------------------
# Deterministic parameter initialization (shapes from the PyTorch __init__),
# with all layout folding (taps reshape, half-channel routing, channel Flips)
# done here at zero runtime cost.
# ----------------------------------------------------------------------------

def _init_conv1d(key, cout, cin, k, scale=0.1):
    kw, kb = jax.random.split(key)
    w = jax.random.normal(kw, (cout, cin, k), jnp.float32) * scale
    b = jax.random.normal(kb, (cout,), jnp.float32) * scale
    return w, b


def init_wn(key, hidden, kernel_size, n_layers):
    in_w, in_b, rs_w, rs_b = [], [], [], []
    for i in range(n_layers):
        key, k1, k2 = jax.random.split(key, 3)
        w, b = _init_conv1d(k1, 2 * hidden, hidden, kernel_size)
        # (2H, H, k) -> (2H, k*H): column block j holds tap j's weights.
        in_w.append(jnp.transpose(w, (0, 2, 1)).reshape(2 * hidden,
                                                        kernel_size * hidden))
        in_b.append(b.reshape(2 * hidden, 1))
        co = 2 * hidden if i < n_layers - 1 else hidden
        rw, rb = _init_conv1d(k2, co, hidden, 1)
        rw = rw[:, :, 0]
        if co == hidden:
            # Last layer: zero residual rows so the in-kernel layer loop is uniform.
            rw = jnp.concatenate([jnp.zeros((hidden, hidden), jnp.float32), rw], axis=0)
            rb = jnp.concatenate([jnp.zeros((hidden,), jnp.float32), rb], axis=0)
        rs_w.append(rw)
        rs_b.append(rb.reshape(2 * hidden, 1))
    return {"in_w": jnp.stack(in_w), "in_b": jnp.stack(in_b),
            "rs_w": jnp.stack(rs_w), "rs_b": jnp.stack(rs_b)}


def init_encoder_params(key, in_channels, hidden, kernel_size, n_layers, n_uplayers):
    C = in_channels
    half = C // 2
    zc_h = jnp.zeros((hidden, half), jnp.float32)   # zero pad for (H, C) pre convs
    zh_c = jnp.zeros((half, hidden), jnp.float32)   # zero pad for (C, H) post convs
    zb = jnp.zeros((half, 1), jnp.float32)

    up_layers, hier_layers = [], []
    for _ in range(n_uplayers):
        key, *ks = jax.random.split(key, 12)
        pre_w, pre_b = _init_conv1d(ks[0], hidden, half, 1)
        post_w, post_b = _init_conv1d(ks[1], half, hidden, 1)
        pre1_w, pre1_b = _init_conv1d(ks[2], hidden, half, 1)
        post1_w, post1_b = _init_conv1d(ks[3], half, hidden, 1)
        up_layers.append({
            # pre reads x0 (top half channels) -> pad input columns on the right.
            "pre_w": jnp.concatenate([pre_w[:, :, 0], zc_h], axis=1),
            "pre_b": pre_b.reshape(hidden, 1),
            # post writes s1 into the x1 rows (bottom half) -> pad rows on top.
            "post_w": jnp.concatenate([zh_c, post_w[:, :, 0]], axis=0),
            "post_b": jnp.concatenate([zb, post_b.reshape(half, 1)], axis=0),
            # pre1 reads upsampled x1 (bottom half) -> pad input columns on the left.
            "pre1_w": jnp.concatenate([zc_h, pre1_w[:, :, 0]], axis=1),
            "pre1_b": pre1_b.reshape(hidden, 1),
            # post1 writes s2 into the x0 rows (top half) -> pad rows at the bottom.
            "post1_w": jnp.concatenate([post1_w[:, :, 0], zh_c], axis=0),
            "post1_b": jnp.concatenate([post1_b.reshape(half, 1), zb], axis=0),
            "enc": init_wn(ks[4], hidden, kernel_size, n_layers),
            "enc1": init_wn(ks[5], hidden, kernel_size, n_layers),
        })

        hpre_w, hpre_b = _init_conv1d(ks[6], hidden, half, 1)
        proj_w, proj_b = _init_conv1d(ks[7], half, hidden, 1)
        proj2_w, proj2_b = _init_conv1d(ks[8], half, hidden, 1)
        # Fold the surrounding Flip()s:  the hierarchy's x0 is rev(up_x1) ->
        # pre reads the bottom half with reversed columns; after the second
        # Flip the pyramid add lands (channel-reversed) on up_x0 -> proj/proj2
        # write reversed rows into the top half.
        hier_layers.append({
            "pre_w": jnp.concatenate([zc_h, hpre_w[:, ::-1, 0]], axis=1),
            "pre_b": hpre_b.reshape(hidden, 1),
            "proj_w": jnp.concatenate([proj_w[::-1, :, 0], zh_c], axis=0),
            "proj_b": jnp.concatenate([proj_b[::-1].reshape(half, 1), zb], axis=0),
            "proj2_w": jnp.concatenate([proj2_w[::-1, :, 0], zh_c], axis=0),
            "proj2_b": jnp.concatenate([proj2_b[::-1].reshape(half, 1), zb], axis=0),
            "enc": init_wn(ks[9], hidden, kernel_size, n_layers),
            "enc2": init_wn(ks[10], hidden, kernel_size, n_layers),
        })
    return {"up": up_layers, "hier": hier_layers}


# ----------------------------------------------------------------------------
# Demo
# ----------------------------------------------------------------------------

if __name__ == "__main__":
    # Encoder(in_channels=4, hidden_channels=32, kernel_size=3, scale_factor=2,
    #         dilation_rate=2, n_layers=2, n_uplayers=2, input_length=8)
    B, C, HID = 2, 4, 32
    KSZ, SF, DRATE, NL, NU, L = 3, 2, 2, 2, 2, 8

    key = jax.random.PRNGKey(0)
    pkey, xkey = jax.random.split(key)
    params = init_encoder_params(pkey, C, HID, KSZ, NL, NU)
    x = jax.random.normal(xkey, (B, C, L), jnp.float32)

    run = jax.jit(functools.partial(encoder_forward, scale_factor=SF,
                                    dilation_rate=DRATE, n_layers=NL,
                                    n_uplayers=NU, kernel_size=KSZ))
    y, pyramid = run(x, params)
    y = jax.block_until_ready(y)
    for p in pyramid:
        jax.block_until_ready(p)

    assert y.shape == (B, C, L * SF ** NU), y.shape
    assert len(pyramid) == NU + 1
    assert bool(jnp.all(jnp.isfinite(y)))
    # TODO(synk): activations stay f32 at these toy sizes; bf16 MXU operands
    # would be the next step for realistic hidden/T.
    print("KERNEL_OK")
</pallas_src>

<mosaic_0001>
module attributes {stable_mosaic.version = 11 : i64} {
  func.func @_hierarchy_kernel(%arg0: i32, %arg1: memref<1x4x16xf32, #tpu.memory_space<vmem>>, %arg2: memref<32x4xf32, #tpu.memory_space<vmem>>, %arg3: memref<32x1xf32, #tpu.memory_space<vmem>>, %arg4: memref<2x64x96xf32, #tpu.memory_space<vmem>>, %arg5: memref<2x64x1xf32, #tpu.memory_space<vmem>>, %arg6: memref<2x64x32xf32, #tpu.memory_space<vmem>>, %arg7: memref<2x64x1xf32, #tpu.memory_space<vmem>>, %arg8: memref<2x64x96xf32, #tpu.memory_space<vmem>>, %arg9: memref<2x64x1xf32, #tpu.memory_space<vmem>>, %arg10: memref<2x64x32xf32, #tpu.memory_space<vmem>>, %arg11: memref<2x64x1xf32, #tpu.memory_space<vmem>>, %arg12: memref<4x32xf32, #tpu.memory_space<vmem>>, %arg13: memref<4x1xf32, #tpu.memory_space<vmem>>, %arg14: memref<4x32xf32, #tpu.memory_space<vmem>>, %arg15: memref<4x1xf32, #tpu.memory_space<vmem>>, %arg16: memref<16x16xf32, #tpu.memory_space<vmem>>, %arg17: memref<16x16xf32, #tpu.memory_space<vmem>>, %arg18: memref<1x4x16xf32, #tpu.memory_space<vmem>>, %arg19: memref<32x20xf32, #tpu.memory_space<vmem>>) attributes {dimension_semantics = [#tpu.dimension_semantics<parallel>], iteration_bounds = array<i64: 2>, scalar_prefetch = 0 : i64, scratch_operands = 1 : i64, tpu.core_type = #tpu.core_type<tc>, window_params = [{transform_indices = @transform_0, window_bounds = array<i64: 1, 4, 16>}, {pipeline_mode = #tpu.pipeline_mode<synchronous>, transform_indices = @transform_1, window_bounds = array<i64: 32, 4>}, {pipeline_mode = #tpu.pipeline_mode<synchronous>, transform_indices = @transform_2, window_bounds = array<i64: 32, 1>}, {pipeline_mode = #tpu.pipeline_mode<synchronous>, transform_indices = @transform_3, window_bounds = array<i64: 2, 64, 96>}, {pipeline_mode = #tpu.pipeline_mode<synchronous>, transform_indices = @transform_4, window_bounds = array<i64: 2, 64, 1>}, {pipeline_mode = #tpu.pipeline_mode<synchronous>, transform_indices = @transform_5, window_bounds = array<i64: 2, 64, 32>}, {pipeline_mode = #tpu.pipeline_mode<synchronous>, transform_indices = @transform_6, window_bounds = array<i64: 2, 64, 1>}, {pipeline_mode = #tpu.pipeline_mode<synchronous>, transform_indices = @transform_7, window_bounds = array<i64: 2, 64, 96>}, {pipeline_mode = #tpu.pipeline_mode<synchronous>, transform_indices = @transform_8, window_bounds = array<i64: 2, 64, 1>}, {pipeline_mode = #tpu.pipeline_mode<synchronous>, transform_indices = @transform_9, window_bounds = array<i64: 2, 64, 32>}, {pipeline_mode = #tpu.pipeline_mode<synchronous>, transform_indices = @transform_10, window_bounds = array<i64: 2, 64, 1>}, {pipeline_mode = #tpu.pipeline_mode<synchronous>, transform_indices = @transform_11, window_bounds = array<i64: 4, 32>}, {pipeline_mode = #tpu.pipeline_mode<synchronous>, transform_indices = @transform_12, window_bounds = array<i64: 4, 1>}, {pipeline_mode = #tpu.pipeline_mode<synchronous>, transform_indices = @transform_13, window_bounds = array<i64: 4, 32>}, {pipeline_mode = #tpu.pipeline_mode<synchronous>, transform_indices = @transform_14, window_bounds = array<i64: 4, 1>}, {pipeline_mode = #tpu.pipeline_mode<synchronous>, transform_indices = @transform_15, window_bounds = array<i64: 16, 16>}, {pipeline_mode = #tpu.pipeline_mode<synchronous>, transform_indices = @transform_16, window_bounds = array<i64: 16, 16>}, {transform_indices = @transform_17, window_bounds = array<i64: 1, 4, 16>}]} {
    %cst = arith.constant 0.000000e+00 : f32
    %0 = vector.broadcast %cst : f32 to vector<32x20xf32>
    %c0 = arith.constant 0 : index
    %c0_0 = arith.constant 0 : index
    %1 = vector.load %arg19[%c0, %c0_0] : memref<32x20xf32, #tpu.memory_space<vmem>>, vector<32x20xf32>
    tpu.vector_store %arg19[%c0, %c0_0], %0 {strides = array<i32>} : memref<32x20xf32, #tpu.memory_space<vmem>>, vector<32x20xf32>,
    %c0_1 = arith.constant 0 : index
    %c0_2 = arith.constant 0 : index
    %c0_3 = arith.constant 0 : index
    %2 = vector.load %arg1[%c0_1, %c0_2, %c0_3] : memref<1x4x16xf32, #tpu.memory_space<vmem>>, vector<1x4x16xf32>
    %3 = vector.shape_cast %2 : vector<1x4x16xf32> to vector<4x16xf32>
    %c0_4 = arith.constant 0 : index
    %c0_5 = arith.constant 0 : index
    %4 = vector.load %arg2[%c0_4, %c0_5] : memref<32x4xf32, #tpu.memory_space<vmem>>, vector<32x4xf32>
    %cst_6 = arith.constant dense<0.000000e+00> : vector<32x16xf32>
    %5 = tpu.matmul %4, %3, %cst_6 {dimension_numbers = #tpu.dot_dimension_numbers<[1], [0], [0], [1], [0, 0, 1, 1], [], []>} : vector<32x4xf32>, vector<4x16xf32>, vector<32x16xf32> -> vector<32x16xf32>
    %c0_7 = arith.constant 0 : index
    %c0_8 = arith.constant 0 : index
    %6 = vector.load %arg3[%c0_7, %c0_8] : memref<32x1xf32, #tpu.memory_space<vmem>>, vector<32x1xf32>
    %7 = vector.broadcast %6 : vector<32x1xf32> to vector<32x16xf32>
    %8 = arith.addf %5, %7 : vector<32x16xf32>
    %c0_9 = arith.constant 0 : index
    %c0_10 = arith.constant 0 : index
    %9 = vector.load %arg12[%c0_9, %c0_10] : memref<4x32xf32, #tpu.memory_space<vmem>>, vector<4x32xf32>
    %cst_11 = arith.constant 0.000000e+00 : f32
    %10 = vector.broadcast %cst_11 : f32 to vector<32x16xf32>
    %c0_12 = arith.constant 0 : index
    %c2 = arith.constant 2 : index
    %11 = vector.load %arg19[%c0_12, %c2] : memref<32x20xf32, #tpu.memory_space<vmem>>, vector<32x16xf32>
    tpu.vector_store %arg19[%c0_12, %c2], %8 {strides = array<i32>} : memref<32x20xf32, #tpu.memory_space<vmem>>, vector<32x16xf32>,
    %c0_13 = arith.constant 0 : index
    %c1 = arith.constant 1 : index
    %12 = vector.load %arg19[%c0_13, %c1] : memref<32x20xf32, #tpu.memory_space<vmem>>, vector<32x16xf32>
    %c0_14 = arith.constant 0 : index
    %c2_15 = arith.constant 2 : index
    %13 = vector.load %arg19[%c0_14, %c2_15] : memref<32x20xf32, #tpu.memory_space<vmem>>, vector<32x16xf32>
    %c0_16 = arith.constant 0 : index
    %c3 = arith.constant 3 : index
    %14 = vector.load %arg19[%c0_16, %c3] : memref<32x20xf32, #tpu.memory_space<vmem>>, vector<32x16xf32>
    %15 = tpu.concatenate %12, %13, %14 in 0 : vector<32x16xf32>, vector<32x16xf32>, vector<32x16xf32> -> vector<96x16xf32>
    %c0_17 = arith.constant 0 : index
    %c0_18 = arith.constant 0 : index
    %c0_19 = arith.constant 0 : index
    %16 = vector.load %arg4[%c0_17, %c0_18, %c0_19] : memref<2x64x96xf32, #tpu.memory_space<vmem>>, vector<1x64x96xf32>
    %17 = vector.shape_cast %16 : vector<1x64x96xf32> to vector<64x96xf32>
    %cst_20 = arith.constant dense<0.000000e+00> : vector<64x16xf32>
    %18 = tpu.matmul %17, %15, %cst_20 {dimension_numbers = #tpu.dot_dimension_numbers<[1], [0], [0], [1], [0, 0, 1, 1], [], []>} : vector<64x96xf32>, vector<96x16xf32>, vector<64x16xf32> -> vector<64x16xf32>
    %c0_21 = arith.constant 0 : index
    %c0_22 = arith.constant 0 : index
    %c0_23 = arith.constant 0 : index
    %19 = vector.load %arg5[%c0_21, %c0_22, %c0_23] : memref<2x64x1xf32, #tpu.memory_space<vmem>>, vector<1x64x1xf32>
    %20 = vector.shape_cast %19 : vector<1x64x1xf32> to vector<64x1xf32>
    %21 = vector.broadcast %20 : vector<64x1xf32> to vector<64x16xf32>
    %22 = arith.addf %18, %21 : vector<64x16xf32>
    %23 = vector.extract_strided_slice %22 {offsets = [0, 0], sizes = [32, 16], strides = [1, 1]} : vector<64x16xf32> to vector<32x16xf32>
    %24 = math.tanh %23 : vector<32x16xf32>
    %25 = vector.extract_strided_slice %22 {offsets = [32, 0], sizes = [32, 16], strides = [1, 1]} : vector<64x16xf32> to vector<32x16xf32>
    %26 = arith.negf %25 : vector<32x16xf32>
    %27 = math.exp %26 : vector<32x16xf32>
    %cst_24 = arith.constant 1.000000e+00 : f32
    %28 = vector.broadcast %cst_24 : f32 to vector<32x16xf32>
    %29 = arith.addf %28, %27 : vector<32x16xf32>
    %30 = arith.divf %28, %29 : vector<32x16xf32>
    %31 = arith.mulf %24, %30 : vector<32x16xf32>
    %c0_25 = arith.constant 0 : index
    %c0_26 = arith.constant 0 : index
    %c0_27 = arith.constant 0 : index
    %32 = vector.load %arg6[%c0_25, %c0_26, %c0_27] : memref<2x64x32xf32, #tpu.memory_space<vmem>>, vector<1x64x32xf32>
    %33 = vector.shape_cast %32 : vector<1x64x32xf32> to vector<64x32xf32>
    %cst_28 = arith.constant dense<0.000000e+00> : vector<64x16xf32>
    %34 = tpu.matmul %33, %31, %cst_28 {dimension_numbers = #tpu.dot_dimension_numbers<[1], [0], [0], [1], [0, 0, 1, 1], [], []>} : vector<64x32xf32>, vector<32x16xf32>, vector<64x16xf32> -> vector<64x16xf32>
    %c0_29 = arith.constant 0 : index
    %c0_30 = arith.constant 0 : index
    %c0_31 = arith.constant 0 : index
    %35 = vector.load %arg7[%c0_29, %c0_30, %c0_31] : memref<2x64x1xf32, #tpu.memory_space<vmem>>, vector<1x64x1xf32>
    %36 = vector.shape_cast %35 : vector<1x64x1xf32> to vector<64x1xf32>
    %37 = vector.broadcast %36 : vector<64x1xf32> to vector<64x16xf32>
    %38 = arith.addf %34, %37 : vector<64x16xf32>
    %39 = vector.extract_strided_slice %38 {offsets = [0, 0], sizes = [32, 16], strides = [1, 1]} : vector<64x16xf32> to vector<32x16xf32>
    %40 = arith.addf %8, %39 : vector<32x16xf32>
    %41 = vector.extract_strided_slice %38 {offsets = [32, 0], sizes = [32, 16], strides = [1, 1]} : vector<64x16xf32> to vector<32x16xf32>
    %42 = arith.addf %10, %41 : vector<32x16xf32>
    %c0_32 = arith.constant 0 : index
    %c2_33 = arith.constant 2 : index
    %43 = vector.load %arg19[%c0_32, %c2_33] : memref<32x20xf32, #tpu.memory_space<vmem>>, vector<32x16xf32>
    tpu.vector_store %arg19[%c0_32, %c2_33], %40 {strides = array<i32>} : memref<32x20xf32, #tpu.memory_space<vmem>>, vector<32x16xf32>,
    %c0_34 = arith.constant 0 : index
    %c0_35 = arith.constant 0 : index
    %44 = vector.load %arg19[%c0_34, %c0_35] : memref<32x20xf32, #tpu.memory_space<vmem>>, vector<32x16xf32>
    %c0_36 = arith.constant 0 : index
    %c2_37 = arith.constant 2 : index
    %45 = vector.load %arg19[%c0_36, %c2_37] : memref<32x20xf32, #tpu.memory_space<vmem>>, vector<32x16xf32>
    %c0_38 = arith.constant 0 : index
    %c4 = arith.constant 4 : index
    %46 = vector.load %arg19[%c0_38, %c4] : memref<32x20xf32, #tpu.memory_space<vmem>>, vector<32x16xf32>
    %47 = tpu.concatenate %44, %45, %46 in 0 : vector<32x16xf32>, vector<32x16xf32>, vector<32x16xf32> -> vector<96x16xf32>
    %c1_39 = arith.constant 1 : index
    %c0_40 = arith.constant 0 : index
    %c0_41 = arith.constant 0 : index
    %48 = vector.load %arg4[%c1_39, %c0_40, %c0_41] : memref<2x64x96xf32, #tpu.memory_space<vmem>>, vector<1x64x96xf32>
    %49 = vector.shape_cast %48 : vector<1x64x96xf32> to vector<64x96xf32>
    %cst_42 = arith.constant dense<0.000000e+00> : vector<64x16xf32>
    %50 = tpu.matmul %49, %47, %cst_42 {dimension_numbers = #tpu.dot_dimension_numbers<[1], [0], [0], [1], [0, 0, 1, 1], [], []>} : vector<64x96xf32>, vector<96x16xf32>, vector<64x16xf32> -> vector<64x16xf32>
    %c1_43 = arith.constant 1 : index
    %c0_44 = arith.constant 0 : index
    %c0_45 = arith.constant 0 : index
    %51 = vector.load %arg5[%c1_43, %c0_44, %c0_45] : memref<2x64x1xf32, #tpu.memory_space<vmem>>, vector<1x64x1xf32>
    %52 = vector.shape_cast %51 : vector<1x64x1xf32> to vector<64x1xf32>
    %53 = vector.broadcast %52 : vector<64x1xf32> to vector<64x16xf32>
    %54 = arith.addf %50, %53 : vector<64x16xf32>
    %55 = vector.extract_strided_slice %54 {offsets = [0, 0], sizes = [32, 16], strides = [1, 1]} : vector<64x16xf32> to vector<32x16xf32>
    %56 = math.tanh %55 : vector<32x16xf32>
    %57 = vector.extract_strided_slice %54 {offsets = [32, 0], sizes = [32, 16], strides = [1, 1]} : vector<64x16xf32> to vector<32x16xf32>
    %58 = arith.negf %57 : vector<32x16xf32>
    %59 = math.exp %58 : vector<32x16xf32>
    %cst_46 = arith.constant 1.000000e+00 : f32
    %60 = vector.broadcast %cst_46 : f32 to vector<32x16xf32>
    %61 = arith.addf %60, %59 : vector<32x16xf32>
    %62 = arith.divf %60, %61 : vector<32x16xf32>
    %63 = arith.mulf %56, %62 : vector<32x16xf32>
    %c1_47 = arith.constant 1 : index
    %c0_48 = arith.constant 0 : index
    %c0_49 = arith.constant 0 : index
    %64 = vector.load %arg6[%c1_47, %c0_48, %c0_49] : memref<2x64x32xf32, #tpu.memory_space<vmem>>, vector<1x64x32xf32>
    %65 = vector.shape_cast %64 : vector<1x64x32xf32> to vector<64x32xf32>
    %cst_50 = arith.constant dense<0.000000e+00> : vector<64x16xf32>
    %66 = tpu.matmul %65, %63, %cst_50 {dimension_numbers = #tpu.dot_dimension_numbers<[1], [0], [0], [1], [0, 0, 1, 1], [], []>} : vector<64x32xf32>, vector<32x16xf32>, vector<64x16xf32> -> vector<64x16xf32>
    %c1_51 = arith.constant 1 : index
    %c0_52 = arith.constant 0 : index
    %c0_53 = arith.constant 0 : index
    %67 = vector.load %arg7[%c1_51, %c0_52, %c0_53] : memref<2x64x1xf32, #tpu.memory_space<vmem>>, vector<1x64x1xf32>
    %68 = vector.shape_cast %67 : vector<1x64x1xf32> to vector<64x1xf32>
    %69 = vector.broadcast %68 : vector<64x1xf32> to vector<64x16xf32>
    %70 = arith.addf %66, %69 : vector<64x16xf32>
    %71 = vector.extract_strided_slice %70 {offsets = [32, 0], sizes = [32, 16], strides = [1, 1]} : vector<64x16xf32> to vector<32x16xf32>
    %72 = arith.addf %42, %71 : vector<32x16xf32>
    %cst_54 = arith.constant dense<0.000000e+00> : vector<4x16xf32>
    %73 = tpu.matmul %9, %72, %cst_54 {dimension_numbers = #tpu.dot_dimension_numbers<[1], [0], [0], [1], [0, 0, 1, 1], [], []>} : vector<4x32xf32>, vector<32x16xf32>, vector<4x16xf32> -> vector<4x16xf32>
    %c0_55 = arith.constant 0 : index
    %c0_56 = arith.constant 0 : index
    %74 = vector.load %arg13[%c0_55, %c0_56] : memref<4x1xf32, #tpu.memory_space<vmem>>, vector<4x1xf32>
    %75 = vector.broadcast %74 : vector<4x1xf32> to vector<4x16xf32>
    %76 = arith.addf %73, %75 : vector<4x16xf32>
    %c0_57 = arith.constant 0 : index
    %c0_58 = arith.constant 0 : index
    %77 = vector.load %arg14[%c0_57, %c0_58] : memref<4x32xf32, #tpu.memory_space<vmem>>, vector<4x32xf32>
    %cst_59 = arith.constant 0.000000e+00 : f32
    %78 = vector.broadcast %cst_59 : f32 to vector<32x16xf32>
    %c0_60 = arith.constant 0 : index
    %c2_61 = arith.constant 2 : index
    %79 = vector.load %arg19[%c0_60, %c2_61] : memref<32x20xf32, #tpu.memory_space<vmem>>, vector<32x16xf32>
    tpu.vector_store %arg19[%c0_60, %c2_61], %8 {strides = array<i32>} : memref<32x20xf32, #tpu.memory_space<vmem>>, vector<32x16xf32>,
    %c0_62 = arith.constant 0 : index
    %c1_63 = arith.constant 1 : index
    %80 = vector.load %arg19[%c0_62, %c1_63] : memref<32x20xf32, #tpu.memory_space<vmem>>, vector<32x16xf32>
    %c0_64 = arith.constant 0 : index
    %c2_65 = arith.constant 2 : index
    %81 = vector.load %arg19[%c0_64, %c2_65] : memref<32x20xf32, #tpu.memory_space<vmem>>, vector<32x16xf32>
    %c0_66 = arith.constant 0 : index
    %c3_67 = arith.constant 3 : index
    %82 = vector.load %arg19[%c0_66, %c3_67] : memref<32x20xf32, #tpu.memory_space<vmem>>, vector<32x16xf32>
    %83 = tpu.concatenate %80, %81, %82 in 0 : vector<32x16xf32>, vector<32x16xf32>, vector<32x16xf32> -> vector<96x16xf32>
    %c0_68 = arith.constant 0 : index
    %c0_69 = arith.constant 0 : index
    %c0_70 = arith.constant 0 : index
    %84 = vector.load %arg8[%c0_68, %c0_69, %c0_70] : memref<2x64x96xf32, #tpu.memory_space<vmem>>, vector<1x64x96xf32>
    %85 = vector.shape_cast %84 : vector<1x64x96xf32> to vector<64x96xf32>
    %cst_71 = arith.constant dense<0.000000e+00> : vector<64x16xf32>
    %86 = tpu.matmul %85, %83, %cst_71 {dimension_numbers = #tpu.dot_dimension_numbers<[1], [0], [0], [1], [0, 0, 1, 1], [], []>} : vector<64x96xf32>, vector<96x16xf32>, vector<64x16xf32> -> vector<64x16xf32>
    %c0_72 = arith.constant 0 : index
    %c0_73 = arith.constant 0 : index
    %c0_74 = arith.constant 0 : index
    %87 = vector.load %arg9[%c0_72, %c0_73, %c0_74] : memref<2x64x1xf32, #tpu.memory_space<vmem>>, vector<1x64x1xf32>
    %88 = vector.shape_cast %87 : vector<1x64x1xf32> to vector<64x1xf32>
    %89 = vector.broadcast %88 : vector<64x1xf32> to vector<64x16xf32>
    %90 = arith.addf %86, %89 : vector<64x16xf32>
    %91 = vector.extract_strided_slice %90 {offsets = [0, 0], sizes = [32, 16], strides = [1, 1]} : vector<64x16xf32> to vector<32x16xf32>
    %92 = math.tanh %91 : vector<32x16xf32>
    %93 = vector.extract_strided_slice %90 {offsets = [32, 0], sizes = [32, 16], strides = [1, 1]} : vector<64x16xf32> to vector<32x16xf32>
    %94 = arith.negf %93 : vector<32x16xf32>
    %95 = math.exp %94 : vector<32x16xf32>
    %cst_75 = arith.constant 1.000000e+00 : f32
    %96 = vector.broadcast %cst_75 : f32 to vector<32x16xf32>
    %97 = arith.addf %96, %95 : vector<32x16xf32>
    %98 = arith.divf %96, %97 : vector<32x16xf32>
    %99 = arith.mulf %92, %98 : vector<32x16xf32>
    %c0_76 = arith.constant 0 : index
    %c0_77 = arith.constant 0 : index
    %c0_78 = arith.constant 0 : index
    %100 = vector.load %arg10[%c0_76, %c0_77, %c0_78] : memref<2x64x32xf32, #tpu.memory_space<vmem>>, vector<1x64x32xf32>
    %101 = vector.shape_cast %100 : vector<1x64x32xf32> to vector<64x32xf32>
    %cst_79 = arith.constant dense<0.000000e+00> : vector<64x16xf32>
    %102 = tpu.matmul %101, %99, %cst_79 {dimension_numbers = #tpu.dot_dimension_numbers<[1], [0], [0], [1], [0, 0, 1, 1], [], []>} : vector<64x32xf32>, vector<32x16xf32>, vector<64x16xf32> -> vector<64x16xf32>
    %c0_80 = arith.constant 0 : index
    %c0_81 = arith.constant 0 : index
    %c0_82 = arith.constant 0 : index
    %103 = vector.load %arg11[%c0_80, %c0_81, %c0_82] : memref<2x64x1xf32, #tpu.memory_space<vmem>>, vector<1x64x1xf32>
    %104 = vector.shape_cast %103 : vector<1x64x1xf32> to vector<64x1xf32>
    %105 = vector.broadcast %104 : vector<64x1xf32> to vector<64x16xf32>
    %106 = arith.addf %102, %105 : vector<64x16xf32>
    %107 = vector.extract_strided_slice %106 {offsets = [0, 0], sizes = [32, 16], strides = [1, 1]} : vector<64x16xf32> to vector<32x16xf32>
    %108 = arith.addf %8, %107 : vector<32x16xf32>
    %109 = vector.extract_strided_slice %106 {offsets = [32, 0], sizes = [32, 16], strides = [1, 1]} : vector<64x16xf32> to vector<32x16xf32>
    %110 = arith.addf %78, %109 : vector<32x16xf32>
    %c0_83 = arith.constant 0 : index
    %c2_84 = arith.constant 2 : index
    %111 = vector.load %arg19[%c0_83, %c2_84] : memref<32x20xf32, #tpu.memory_space<vmem>>, vector<32x16xf32>
    tpu.vector_store %arg19[%c0_83, %c2_84], %108 {strides = array<i32>} : memref<32x20xf32, #tpu.memory_space<vmem>>, vector<32x16xf32>,
    %c0_85 = arith.constant 0 : index
    %c0_86 = arith.constant 0 : index
    %112 = vector.load %arg19[%c0_85, %c0_86] : memref<32x20xf32, #tpu.memory_space<vmem>>, vector<32x16xf32>
    %c0_87 = arith.constant 0 : index
    %c2_88 = arith.constant 2 : index
    %113 = vector.load %arg19[%c0_87, %c2_88] : memref<32x20xf32, #tpu.memory_space<vmem>>, vector<32x16xf32>
    %c0_89 = arith.constant 0 : index
    %c4_90 = arith.constant 4 : index
    %114 = vector.load %arg19[%c0_89, %c4_90] : memref<32x20xf32, #tpu.memory_space<vmem>>, vector<32x16xf32>
    %115 = tpu.concatenate %112, %113, %114 in 0 : vector<32x16xf32>, vector<32x16xf32>, vector<32x16xf32> -> vector<96x16xf32>
    %c1_91 = arith.constant 1 : index
    %c0_92 = arith.constant 0 : index
    %c0_93 = arith.constant 0 : index
    %116 = vector.load %arg8[%c1_91, %c0_92, %c0_93] : memref<2x64x96xf32, #tpu.memory_space<vmem>>, vector<1x64x96xf32>
    %117 = vector.shape_cast %116 : vector<1x64x96xf32> to vector<64x96xf32>
    %cst_94 = arith.constant dense<0.000000e+00> : vector<64x16xf32>
    %118 = tpu.matmul %117, %115, %cst_94 {dimension_numbers = #tpu.dot_dimension_numbers<[1], [0], [0], [1], [0, 0, 1, 1], [], []>} : vector<64x96xf32>, vector<96x16xf32>, vector<64x16xf32> -> vector<64x16xf32>
    %c1_95 = arith.constant 1 : index
    %c0_96 = arith.constant 0 : index
    %c0_97 = arith.constant 0 : index
    %119 = vector.load %arg9[%c1_95, %c0_96, %c0_97] : memref<2x64x1xf32, #tpu.memory_space<vmem>>, vector<1x64x1xf32>
    %120 = vector.shape_cast %119 : vector<1x64x1xf32> to vector<64x1xf32>
    %121 = vector.broadcast %120 : vector<64x1xf32> to vector<64x16xf32>
    %122 = arith.addf %118, %121 : vector<64x16xf32>
    %123 = vector.extract_strided_slice %122 {offsets = [0, 0], sizes = [32, 16], strides = [1, 1]} : vector<64x16xf32> to vector<32x16xf32>
    %124 = math.tanh %123 : vector<32x16xf32>
    %125 = vector.extract_strided_slice %122 {offsets = [32, 0], sizes = [32, 16], strides = [1, 1]} : vector<64x16xf32> to vector<32x16xf32>
    %126 = arith.negf %125 : vector<32x16xf32>
    %127 = math.exp %126 : vector<32x16xf32>
    %cst_98 = arith.constant 1.000000e+00 : f32
    %128 = vector.broadcast %cst_98 : f32 to vector<32x16xf32>
    %129 = arith.addf %128, %127 : vector<32x16xf32>
    %130 = arith.divf %128, %129 : vector<32x16xf32>
    %131 = arith.mulf %124, %130 : vector<32x16xf32>
    %c1_99 = arith.constant 1 : index
    %c0_100 = arith.constant 0 : index
    %c0_101 = arith.constant 0 : index
    %132 = vector.load %arg10[%c1_99, %c0_100, %c0_101] : memref<2x64x32xf32, #tpu.memory_space<vmem>>, vector<1x64x32xf32>
    %133 = vector.shape_cast %132 : vector<1x64x32xf32> to vector<64x32xf32>
    %cst_102 = arith.constant dense<0.000000e+00> : vector<64x16xf32>
    %134 = tpu.matmul %133, %131, %cst_102 {dimension_numbers = #tpu.dot_dimension_numbers<[1], [0], [0], [1], [0, 0, 1, 1], [], []>} : vector<64x32xf32>, vector<32x16xf32>, vector<64x16xf32> -> vector<64x16xf32>
    %c1_103 = arith.constant 1 : index
    %c0_104 = arith.constant 0 : index
    %c0_105 = arith.constant 0 : index
    %135 = vector.load %arg11[%c1_103, %c0_104, %c0_105] : memref<2x64x1xf32, #tpu.memory_space<vmem>>, vector<1x64x1xf32>
    %136 = vector.shape_cast %135 : vector<1x64x1xf32> to vector<64x1xf32>
    %137 = vector.broadcast %136 : vector<64x1xf32> to vector<64x16xf32>
    %138 = arith.addf %134, %137 : vector<64x16xf32>
    %139 = vector.extract_strided_slice %138 {offsets = [32, 0], sizes = [32, 16], strides = [1, 1]} : vector<64x16xf32> to vector<32x16xf32>
    %140 = arith.addf %110, %139 : vector<32x16xf32>
    %cst_106 = arith.constant dense<0.000000e+00> : vector<4x16xf32>
    %141 = tpu.matmul %77, %140, %cst_106 {dimension_numbers = #tpu.dot_dimension_numbers<[1], [0], [0], [1], [0, 0, 1, 1], [], []>} : vector<4x32xf32>, vector<32x16xf32>, vector<4x16xf32> -> vector<4x16xf32>
    %c0_107 = arith.constant 0 : index
    %c0_108 = arith.constant 0 : index
    %142 = vector.load %arg15[%c0_107, %c0_108] : memref<4x1xf32, #tpu.memory_space<vmem>>, vector<4x1xf32>
    %143 = vector.broadcast %142 : vector<4x1xf32> to vector<4x16xf32>
    %144 = arith.addf %141, %143 : vector<4x16xf32>
    %c0_109 = arith.constant 0 : index
    %c0_110 = arith.constant 0 : index
    %145 = vector.load %arg16[%c0_109, %c0_110] : memref<16x16xf32, #tpu.memory_space<vmem>>, vector<16x16xf32>
    %cst_111 = arith.constant dense<0.000000e+00> : vector<4x16xf32>
    %146 = tpu.matmul %76, %145, %cst_111 {dimension_numbers = #tpu.dot_dimension_numbers<[1], [0], [0], [1], [0, 0, 1, 1], [], []>} : vector<4x16xf32>, vector<16x16xf32>, vector<4x16xf32> -> vector<4x16xf32>
    %c0_112 = arith.constant 0 : index
    %c0_113 = arith.constant 0 : index
    %147 = vector.load %arg17[%c0_112, %c0_113] : memref<16x16xf32, #tpu.memory_space<vmem>>, vector<16x16xf32>
    %cst_114 = arith.constant dense<0.000000e+00> : vector<4x16xf32>
    %148 = tpu.matmul %144, %147, %cst_114 {dimension_numbers = #tpu.dot_dimension_numbers<[1], [0], [0], [1], [0, 0, 1, 1], [], []>} : vector<4x16xf32>, vector<16x16xf32>, vector<4x16xf32> -> vector<4x16xf32>
    %149 = arith.addf %146, %148 : vector<4x16xf32>
    %150 = arith.addf %3, %149 : vector<4x16xf32>
    %c0_115 = arith.constant 0 : index
    %c0_116 = arith.constant 0 : index
    %c0_117 = arith.constant 0 : index
    %151 = vector.load %arg18[%c0_115, %c0_116, %c0_117] : memref<1x4x16xf32, #tpu.memory_space<vmem>>, vector<1x4x16xf32>
    %152 = vector.shape_cast %151 : vector<1x4x16xf32> to vector<4x16xf32>
    %153 = vector.shape_cast %150 : vector<4x16xf32> to vector<1x4x16xf32>
    tpu.vector_store %arg18[%c0_115, %c0_116, %c0_117], %153 {strides = array<i32>} : memref<1x4x16xf32, #tpu.memory_space<vmem>>, vector<1x4x16xf32>,
    return
  }
  func.func @transform_0(%arg0: i32) -> (i32, i32, i32) {
    %c0_i32 = arith.constant 0 : i32
    %c0_i32_0 = arith.constant 0 : i32
    %c0_i32_1 = arith.constant 0 : i32
    return %arg0, %c0_i32, %c0_i32_0 : i32, i32, i32
  }
  func.func @transform_1(%arg0: i32) -> (i32, i32) {
    %c0_i32 = arith.constant 0 : i32
    %c0_i32_0 = arith.constant 0 : i32
    %c0_i32_1 = arith.constant 0 : i32
    return %c0_i32, %c0_i32_0 : i32, i32
  }
  func.func @transform_2(%arg0: i32) -> (i32, i32) {
    %c0_i32 = arith.constant 0 : i32
    %c0_i32_0 = arith.constant 0 : i32
    %c0_i32_1 = arith.constant 0 : i32
    return %c0_i32, %c0_i32_0 : i32, i32
  }
  func.func @transform_3(%arg0: i32) -> (i32, i32, i32) {
    %c0_i32 = arith.constant 0 : i32
    %c0_i32_0 = arith.constant 0 : i32
    %c0_i32_1 = arith.constant 0 : i32
    %c0_i32_2 = arith.constant 0 : i32
    return %c0_i32, %c0_i32_0, %c0_i32_1 : i32, i32, i32
  }
  func.func @transform_4(%arg0: i32) -> (i32, i32, i32) {
    %c0_i32 = arith.constant 0 : i32
    %c0_i32_0 = arith.constant 0 : i32
    %c0_i32_1 = arith.constant 0 : i32
    %c0_i32_2 = arith.constant 0 : i32
    return %c0_i32, %c0_i32_0, %c0_i32_1 : i32, i32, i32
  }
  func.func @transform_5(%arg0: i32) -> (i32, i32, i32) {
    %c0_i32 = arith.constant 0 : i32
    %c0_i32_0 = arith.constant 0 : i32
    %c0_i32_1 = arith.constant 0 : i32
    %c0_i32_2 = arith.constant 0 : i32
    return %c0_i32, %c0_i32_0, %c0_i32_1 : i32, i32, i32
  }
  func.func @transform_6(%arg0: i32) -> (i32, i32, i32) {
    %c0_i32 = arith.constant 0 : i32
    %c0_i32_0 = arith.constant 0 : i32
    %c0_i32_1 = arith.constant 0 : i32
    %c0_i32_2 = arith.constant 0 : i32
    return %c0_i32, %c0_i32_0, %c0_i32_1 : i32, i32, i32
  }
  func.func @transform_7(%arg0: i32) -> (i32, i32, i32) {
    %c0_i32 = arith.constant 0 : i32
    %c0_i32_0 = arith.constant 0 : i32
    %c0_i32_1 = arith.constant 0 : i32
    %c0_i32_2 = arith.constant 0 : i32
    return %c0_i32, %c0_i32_0, %c0_i32_1 : i32, i32, i32
  }
  func.func @transform_8(%arg0: i32) -> (i32, i32, i32) {
    %c0_i32 = arith.constant 0 : i32
    %c0_i32_0 = arith.constant 0 : i32
    %c0_i32_1 = arith.constant 0 : i32
    %c0_i32_2 = arith.constant 0 : i32
    return %c0_i32, %c0_i32_0, %c0_i32_1 : i32, i32, i32
  }
  func.func @transform_9(%arg0: i32) -> (i32, i32, i32) {
    %c0_i32 = arith.constant 0 : i32
    %c0_i32_0 = arith.constant 0 : i32
    %c0_i32_1 = arith.constant 0 : i32
    %c0_i32_2 = arith.constant 0 : i32
    return %c0_i32, %c0_i32_0, %c0_i32_1 : i32, i32, i32
  }
  func.func @transform_10(%arg0: i32) -> (i32, i32, i32) {
    %c0_i32 = arith.constant 0 : i32
    %c0_i32_0 = arith.constant 0 : i32
    %c0_i32_1 = arith.constant 0 : i32
    %c0_i32_2 = arith.constant 0 : i32
    return %c0_i32, %c0_i32_0, %c0_i32_1 : i32, i32, i32
  }
  func.func @transform_11(%arg0: i32) -> (i32, i32) {
    %c0_i32 = arith.constant 0 : i32
    %c0_i32_0 = arith.constant 0 : i32
    %c0_i32_1 = arith.constant 0 : i32
    return %c0_i32, %c0_i32_0 : i32, i32
  }
  func.func @transform_12(%arg0: i32) -> (i32, i32) {
    %c0_i32 = arith.constant 0 : i32
    %c0_i32_0 = arith.constant 0 : i32
    %c0_i32_1 = arith.constant 0 : i32
    return %c0_i32, %c0_i32_0 : i32, i32
  }
  func.func @transform_13(%arg0: i32) -> (i32, i32) {
    %c0_i32 = arith.constant 0 : i32
    %c0_i32_0 = arith.constant 0 : i32
    %c0_i32_1 = arith.constant 0 : i32
    return %c0_i32, %c0_i32_0 : i32, i32
  }
  func.func @transform_14(%arg0: i32) -> (i32, i32) {
    %c0_i32 = arith.constant 0 : i32
    %c0_i32_0 = arith.constant 0 : i32
    %c0_i32_1 = arith.constant 0 : i32
    return %c0_i32, %c0_i32_0 : i32, i32
  }
  func.func @transform_15(%arg0: i32) -> (i32, i32) {
    %c0_i32 = arith.constant 0 : i32
    %c0_i32_0 = arith.constant 0 : i32
    %c0_i32_1 = arith.constant 0 : i32
    return %c0_i32, %c0_i32_0 : i32, i32
  }
  func.func @transform_16(%arg0: i32) -> (i32, i32) {
    %c0_i32 = arith.constant 0 : i32
    %c0_i32_0 = arith.constant 0 : i32
    %c0_i32_1 = arith.constant 0 : i32
    return %c0_i32, %c0_i32_0 : i32, i32
  }
  func.func @transform_17(%arg0: i32) -> (i32, i32, i32) {
    %c0_i32 = arith.constant 0 : i32
    %c0_i32_0 = arith.constant 0 : i32
    %c0_i32_1 = arith.constant 0 : i32
    return %arg0, %c0_i32, %c0_i32_0 : i32, i32, i32
  }
}

module attributes {stable_mosaic.version = 11 : i64} {
  func.func @_upsample_kernel(%arg0: i32, %arg1: memref<1x4x8xf32, #tpu.memory_space<vmem>>, %arg2: memref<8x16xf32, #tpu.memory_space<vmem>>, %arg3: memref<32x4xf32, #tpu.memory_space<vmem>>, %arg4: memref<32x1xf32, #tpu.memory_space<vmem>>, %arg5: memref<2x64x96xf32, #tpu.memory_space<vmem>>, %arg6: memref<2x64x1xf32, #tpu.memory_space<vmem>>, %arg7: memref<2x64x32xf32, #tpu.memory_space<vmem>>, %arg8: memref<2x64x1xf32, #tpu.memory_space<vmem>>, %arg9: memref<4x32xf32, #tpu.memory_space<vmem>>, %arg10: memref<4x1xf32, #tpu.memory_space<vmem>>, %arg11: memref<32x4xf32, #tpu.memory_space<vmem>>, %arg12: memref<32x1xf32, #tpu.memory_space<vmem>>, %arg13: memref<2x64x96xf32, #tpu.memory_space<vmem>>, %arg14: memref<2x64x1xf32, #tpu.memory_space<vmem>>, %arg15: memref<2x64x32xf32, #tpu.memory_space<vmem>>, %arg16: memref<2x64x1xf32, #tpu.memory_space<vmem>>, %arg17: memref<4x32xf32, #tpu.memory_space<vmem>>, %arg18: memref<4x1xf32, #tpu.memory_space<vmem>>, %arg19: memref<1x4x16xf32, #tpu.memory_space<vmem>>, %arg20: memref<32x20xf32, #tpu.memory_space<vmem>>) attributes {dimension_semantics = [#tpu.dimension_semantics<parallel>], iteration_bounds = array<i64: 2>, scalar_prefetch = 0 : i64, scratch_operands = 1 : i64, tpu.core_type = #tpu.core_type<tc>, window_params = [{transform_indices = @transform_0, window_bounds = array<i64: 1, 4, 8>}, {pipeline_mode = #tpu.pipeline_mode<synchronous>, transform_indices = @transform_1, window_bounds = array<i64: 8, 16>}, {pipeline_mode = #tpu.pipeline_mode<synchronous>, transform_indices = @transform_2, window_bounds = array<i64: 32, 4>}, {pipeline_mode = #tpu.pipeline_mode<synchronous>, transform_indices = @transform_3, window_bounds = array<i64: 32, 1>}, {pipeline_mode = #tpu.pipeline_mode<synchronous>, transform_indices = @transform_4, window_bounds = array<i64: 2, 64, 96>}, {pipeline_mode = #tpu.pipeline_mode<synchronous>, transform_indices = @transform_5, window_bounds = array<i64: 2, 64, 1>}, {pipeline_mode = #tpu.pipeline_mode<synchronous>, transform_indices = @transform_6, window_bounds = array<i64: 2, 64, 32>}, {pipeline_mode = #tpu.pipeline_mode<synchronous>, transform_indices = @transform_7, window_bounds = array<i64: 2, 64, 1>}, {pipeline_mode = #tpu.pipeline_mode<synchronous>, transform_indices = @transform_8, window_bounds = array<i64: 4, 32>}, {pipeline_mode = #tpu.pipeline_mode<synchronous>, transform_indices = @transform_9, window_bounds = array<i64: 4, 1>}, {pipeline_mode = #tpu.pipeline_mode<synchronous>, transform_indices = @transform_10, window_bounds = array<i64: 32, 4>}, {pipeline_mode = #tpu.pipeline_mode<synchronous>, transform_indices = @transform_11, window_bounds = array<i64: 32, 1>}, {pipeline_mode = #tpu.pipeline_mode<synchronous>, transform_indices = @transform_12, window_bounds = array<i64: 2, 64, 96>}, {pipeline_mode = #tpu.pipeline_mode<synchronous>, transform_indices = @transform_13, window_bounds = array<i64: 2, 64, 1>}, {pipeline_mode = #tpu.pipeline_mode<synchronous>, transform_indices = @transform_14, window_bounds = array<i64: 2, 64, 32>}, {pipeline_mode = #tpu.pipeline_mode<synchronous>, transform_indices = @transform_15, window_bounds = array<i64: 2, 64, 1>}, {pipeline_mode = #tpu.pipeline_mode<synchronous>, transform_indices = @transform_16, window_bounds = array<i64: 4, 32>}, {pipeline_mode = #tpu.pipeline_mode<synchronous>, transform_indices = @transform_17, window_bounds = array<i64: 4, 1>}, {transform_indices = @transform_18, window_bounds = array<i64: 1, 4, 16>}]} {
    %cst = arith.constant 0.000000e+00 : f32
    %0 = vector.broadcast %cst : f32 to vector<32x20xf32>
    %c0 = arith.constant 0 : index
    %c0_0 = arith.constant 0 : index
    %1 = vector.load %arg20[%c0, %c0_0] : memref<32x20xf32, #tpu.memory_space<vmem>>, vector<32x20xf32>
    tpu.vector_store %arg20[%c0, %c0_0], %0 {strides = array<i32>} : memref<32x20xf32, #tpu.memory_space<vmem>>, vector<32x20xf32>,
    %c0_1 = arith.constant 0 : index
    %c0_2 = arith.constant 0 : index
    %c0_3 = arith.constant 0 : index
    %2 = vector.load %arg1[%c0_1, %c0_2, %c0_3] : memref<1x4x8xf32, #tpu.memory_space<vmem>>, vector<1x4x8xf32>
    %3 = vector.shape_cast %2 : vector<1x4x8xf32> to vector<4x8xf32>
    %c0_4 = arith.constant 0 : index
    %c0_5 = arith.constant 0 : index
    %4 = vector.load %arg3[%c0_4, %c0_5] : memref<32x4xf32, #tpu.memory_space<vmem>>, vector<32x4xf32>
    %cst_6 = arith.constant dense<0.000000e+00> : vector<32x8xf32>
    %5 = tpu.matmul %4, %3, %cst_6 {dimension_numbers = #tpu.dot_dimension_numbers<[1], [0], [0], [1], [0, 0, 1, 1], [], []>} : vector<32x4xf32>, vector<4x8xf32>, vector<32x8xf32> -> vector<32x8xf32>
    %c0_7 = arith.constant 0 : index
    %c0_8 = arith.constant 0 : index
    %6 = vector.load %arg4[%c0_7, %c0_8] : memref<32x1xf32, #tpu.memory_space<vmem>>, vector<32x1xf32>
    %7 = vector.broadcast %6 : vector<32x1xf32> to vector<32x8xf32>
    %8 = arith.addf %5, %7 : vector<32x8xf32>
    %c0_9 = arith.constant 0 : index
    %c0_10 = arith.constant 0 : index
    %9 = vector.load %arg9[%c0_9, %c0_10] : memref<4x32xf32, #tpu.memory_space<vmem>>, vector<4x32xf32>
    %cst_11 = arith.constant 0.000000e+00 : f32
    %10 = vector.broadcast %cst_11 : f32 to vector<32x8xf32>
    %c0_12 = arith.constant 0 : index
    %c2 = arith.constant 2 : index
    %11 = vector.load %arg20[%c0_12, %c2] : memref<32x20xf32, #tpu.memory_space<vmem>>, vector<32x8xf32>
    tpu.vector_store %arg20[%c0_12, %c2], %8 {strides = array<i32>} : memref<32x20xf32, #tpu.memory_space<vmem>>, vector<32x8xf32>,
    %c0_13 = arith.constant 0 : index
    %c1 = arith.constant 1 : index
    %12 = vector.load %arg20[%c0_13, %c1] : memref<32x20xf32, #tpu.memory_space<vmem>>, vector<32x8xf32>
    %c0_14 = arith.constant 0 : index
    %c2_15 = arith.constant 2 : index
    %13 = vector.load %arg20[%c0_14, %c2_15] : memref<32x20xf32, #tpu.memory_space<vmem>>, vector<32x8xf32>
    %c0_16 = arith.constant 0 : index
    %c3 = arith.constant 3 : index
    %14 = vector.load %arg20[%c0_16, %c3] : memref<32x20xf32, #tpu.memory_space<vmem>>, vector<32x8xf32>
    %15 = tpu.concatenate %12, %13, %14 in 0 : vector<32x8xf32>, vector<32x8xf32>, vector<32x8xf32> -> vector<96x8xf32>
    %c0_17 = arith.constant 0 : index
    %c0_18 = arith.constant 0 : index
    %c0_19 = arith.constant 0 : index
    %16 = vector.load %arg5[%c0_17, %c0_18, %c0_19] : memref<2x64x96xf32, #tpu.memory_space<vmem>>, vector<1x64x96xf32>
    %17 = vector.shape_cast %16 : vector<1x64x96xf32> to vector<64x96xf32>
    %cst_20 = arith.constant dense<0.000000e+00> : vector<64x8xf32>
    %18 = tpu.matmul %17, %15, %cst_20 {dimension_numbers = #tpu.dot_dimension_numbers<[1], [0], [0], [1], [0, 0, 1, 1], [], []>} : vector<64x96xf32>, vector<96x8xf32>, vector<64x8xf32> -> vector<64x8xf32>
    %c0_21 = arith.constant 0 : index
    %c0_22 = arith.constant 0 : index
    %c0_23 = arith.constant 0 : index
    %19 = vector.load %arg6[%c0_21, %c0_22, %c0_23] : memref<2x64x1xf32, #tpu.memory_space<vmem>>, vector<1x64x1xf32>
    %20 = vector.shape_cast %19 : vector<1x64x1xf32> to vector<64x1xf32>
    %21 = vector.broadcast %20 : vector<64x1xf32> to vector<64x8xf32>
    %22 = arith.addf %18, %21 : vector<64x8xf32>
    %23 = vector.extract_strided_slice %22 {offsets = [0, 0], sizes = [32, 8], strides = [1, 1]} : vector<64x8xf32> to vector<32x8xf32>
    %24 = math.tanh %23 : vector<32x8xf32>
    %25 = vector.extract_strided_slice %22 {offsets = [32, 0], sizes = [32, 8], strides = [1, 1]} : vector<64x8xf32> to vector<32x8xf32>
    %26 = arith.negf %25 : vector<32x8xf32>
    %27 = math.exp %26 : vector<32x8xf32>
    %cst_24 = arith.constant 1.000000e+00 : f32
    %28 = vector.broadcast %cst_24 : f32 to vector<32x8xf32>
    %29 = arith.addf %28, %27 : vector<32x8xf32>
    %30 = arith.divf %28, %29 : vector<32x8xf32>
    %31 = arith.mulf %24, %30 : vector<32x8xf32>
    %c0_25 = arith.constant 0 : index
    %c0_26 = arith.constant 0 : index
    %c0_27 = arith.constant 0 : index
    %32 = vector.load %arg7[%c0_25, %c0_26, %c0_27] : memref<2x64x32xf32, #tpu.memory_space<vmem>>, vector<1x64x32xf32>
    %33 = vector.shape_cast %32 : vector<1x64x32xf32> to vector<64x32xf32>
    %cst_28 = arith.constant dense<0.000000e+00> : vector<64x8xf32>
    %34 = tpu.matmul %33, %31, %cst_28 {dimension_numbers = #tpu.dot_dimension_numbers<[1], [0], [0], [1], [0, 0, 1, 1], [], []>} : vector<64x32xf32>, vector<32x8xf32>, vector<64x8xf32> -> vector<64x8xf32>
    %c0_29 = arith.constant 0 : index
    %c0_30 = arith.constant 0 : index
    %c0_31 = arith.constant 0 : index
    %35 = vector.load %arg8[%c0_29, %c0_30, %c0_31] : memref<2x64x1xf32, #tpu.memory_space<vmem>>, vector<1x64x1xf32>
    %36 = vector.shape_cast %35 : vector<1x64x1xf32> to vector<64x1xf32>
    %37 = vector.broadcast %36 : vector<64x1xf32> to vector<64x8xf32>
    %38 = arith.addf %34, %37 : vector<64x8xf32>
    %39 = vector.extract_strided_slice %38 {offsets = [0, 0], sizes = [32, 8], strides = [1, 1]} : vector<64x8xf32> to vector<32x8xf32>
    %40 = arith.addf %8, %39 : vector<32x8xf32>
    %41 = vector.extract_strided_slice %38 {offsets = [32, 0], sizes = [32, 8], strides = [1, 1]} : vector<64x8xf32> to vector<32x8xf32>
    %42 = arith.addf %10, %41 : vector<32x8xf32>
    %c0_32 = arith.constant 0 : index
    %c2_33 = arith.constant 2 : index
    %43 = vector.load %arg20[%c0_32, %c2_33] : memref<32x20xf32, #tpu.memory_space<vmem>>, vector<32x8xf32>
    tpu.vector_store %arg20[%c0_32, %c2_33], %40 {strides = array<i32>} : memref<32x20xf32, #tpu.memory_space<vmem>>, vector<32x8xf32>,
    %c0_34 = arith.constant 0 : index
    %c0_35 = arith.constant 0 : index
    %44 = vector.load %arg20[%c0_34, %c0_35] : memref<32x20xf32, #tpu.memory_space<vmem>>, vector<32x8xf32>
    %c0_36 = arith.constant 0 : index
    %c2_37 = arith.constant 2 : index
    %45 = vector.load %arg20[%c0_36, %c2_37] : memref<32x20xf32, #tpu.memory_space<vmem>>, vector<32x8xf32>
    %c0_38 = arith.constant 0 : index
    %c4 = arith.constant 4 : index
    %46 = vector.load %arg20[%c0_38, %c4] : memref<32x20xf32, #tpu.memory_space<vmem>>, vector<32x8xf32>
    %47 = tpu.concatenate %44, %45, %46 in 0 : vector<32x8xf32>, vector<32x8xf32>, vector<32x8xf32> -> vector<96x8xf32>
    %c1_39 = arith.constant 1 : index
    %c0_40 = arith.constant 0 : index
    %c0_41 = arith.constant 0 : index
    %48 = vector.load %arg5[%c1_39, %c0_40, %c0_41] : memref<2x64x96xf32, #tpu.memory_space<vmem>>, vector<1x64x96xf32>
    %49 = vector.shape_cast %48 : vector<1x64x96xf32> to vector<64x96xf32>
    %cst_42 = arith.constant dense<0.000000e+00> : vector<64x8xf32>
    %50 = tpu.matmul %49, %47, %cst_42 {dimension_numbers = #tpu.dot_dimension_numbers<[1], [0], [0], [1], [0, 0, 1, 1], [], []>} : vector<64x96xf32>, vector<96x8xf32>, vector<64x8xf32> -> vector<64x8xf32>
    %c1_43 = arith.constant 1 : index
    %c0_44 = arith.constant 0 : index
    %c0_45 = arith.constant 0 : index
    %51 = vector.load %arg6[%c1_43, %c0_44, %c0_45] : memref<2x64x1xf32, #tpu.memory_space<vmem>>, vector<1x64x1xf32>
    %52 = vector.shape_cast %51 : vector<1x64x1xf32> to vector<64x1xf32>
    %53 = vector.broadcast %52 : vector<64x1xf32> to vector<64x8xf32>
    %54 = arith.addf %50, %53 : vector<64x8xf32>
    %55 = vector.extract_strided_slice %54 {offsets = [0, 0], sizes = [32, 8], strides = [1, 1]} : vector<64x8xf32> to vector<32x8xf32>
    %56 = math.tanh %55 : vector<32x8xf32>
    %57 = vector.extract_strided_slice %54 {offsets = [32, 0], sizes = [32, 8], strides = [1, 1]} : vector<64x8xf32> to vector<32x8xf32>
    %58 = arith.negf %57 : vector<32x8xf32>
    %59 = math.exp %58 : vector<32x8xf32>
    %cst_46 = arith.constant 1.000000e+00 : f32
    %60 = vector.broadcast %cst_46 : f32 to vector<32x8xf32>
    %61 = arith.addf %60, %59 : vector<32x8xf32>
    %62 = arith.divf %60, %61 : vector<32x8xf32>
    %63 = arith.mulf %56, %62 : vector<32x8xf32>
    %c1_47 = arith.constant 1 : index
    %c0_48 = arith.constant 0 : index
    %c0_49 = arith.constant 0 : index
    %64 = vector.load %arg7[%c1_47, %c0_48, %c0_49] : memref<2x64x32xf32, #tpu.memory_space<vmem>>, vector<1x64x32xf32>
    %65 = vector.shape_cast %64 : vector<1x64x32xf32> to vector<64x32xf32>
    %cst_50 = arith.constant dense<0.000000e+00> : vector<64x8xf32>
    %66 = tpu.matmul %65, %63, %cst_50 {dimension_numbers = #tpu.dot_dimension_numbers<[1], [0], [0], [1], [0, 0, 1, 1], [], []>} : vector<64x32xf32>, vector<32x8xf32>, vector<64x8xf32> -> vector<64x8xf32>
    %c1_51 = arith.constant 1 : index
    %c0_52 = arith.constant 0 : index
    %c0_53 = arith.constant 0 : index
    %67 = vector.load %arg8[%c1_51, %c0_52, %c0_53] : memref<2x64x1xf32, #tpu.memory_space<vmem>>, vector<1x64x1xf32>
    %68 = vector.shape_cast %67 : vector<1x64x1xf32> to vector<64x1xf32>
    %69 = vector.broadcast %68 : vector<64x1xf32> to vector<64x8xf32>
    %70 = arith.addf %66, %69 : vector<64x8xf32>
    %71 = vector.extract_strided_slice %70 {offsets = [32, 0], sizes = [32, 8], strides = [1, 1]} : vector<64x8xf32> to vector<32x8xf32>
    %72 = arith.addf %42, %71 : vector<32x8xf32>
    %cst_54 = arith.constant dense<0.000000e+00> : vector<4x8xf32>
    %73 = tpu.matmul %9, %72, %cst_54 {dimension_numbers = #tpu.dot_dimension_numbers<[1], [0], [0], [1], [0, 0, 1, 1], [], []>} : vector<4x32xf32>, vector<32x8xf32>, vector<4x8xf32> -> vector<4x8xf32>
    %c0_55 = arith.constant 0 : index
    %c0_56 = arith.constant 0 : index
    %74 = vector.load %arg10[%c0_55, %c0_56] : memref<4x1xf32, #tpu.memory_space<vmem>>, vector<4x1xf32>
    %75 = vector.broadcast %74 : vector<4x1xf32> to vector<4x8xf32>
    %76 = arith.addf %73, %75 : vector<4x8xf32>
    %77 = arith.addf %3, %76 : vector<4x8xf32>
    %c0_57 = arith.constant 0 : index
    %c0_58 = arith.constant 0 : index
    %78 = vector.load %arg2[%c0_57, %c0_58] : memref<8x16xf32, #tpu.memory_space<vmem>>, vector<8x16xf32>
    %cst_59 = arith.constant dense<0.000000e+00> : vector<4x16xf32>
    %79 = tpu.matmul %77, %78, %cst_59 {dimension_numbers = #tpu.dot_dimension_numbers<[1], [0], [0], [1], [0, 0, 1, 1], [], []>} : vector<4x8xf32>, vector<8x16xf32>, vector<4x16xf32> -> vector<4x16xf32>
    %c0_60 = arith.constant 0 : index
    %c0_61 = arith.constant 0 : index
    %80 = vector.load %arg11[%c0_60, %c0_61] : memref<32x4xf32, #tpu.memory_space<vmem>>, vector<32x4xf32>
    %cst_62 = arith.constant dense<0.000000e+00> : vector<32x16xf32>
    %81 = tpu.matmul %80, %79, %cst_62 {dimension_numbers = #tpu.dot_dimension_numbers<[1], [0], [0], [1], [0, 0, 1, 1], [], []>} : vector<32x4xf32>, vector<4x16xf32>, vector<32x16xf32> -> vector<32x16xf32>
    %c0_63 = arith.constant 0 : index
    %c0_64 = arith.constant 0 : index
    %82 = vector.load %arg12[%c0_63, %c0_64] : memref<32x1xf32, #tpu.memory_space<vmem>>, vector<32x1xf32>
    %83 = vector.broadcast %82 : vector<32x1xf32> to vector<32x16xf32>
    %84 = arith.addf %81, %83 : vector<32x16xf32>
    %c0_65 = arith.constant 0 : index
    %c0_66 = arith.constant 0 : index
    %85 = vector.load %arg17[%c0_65, %c0_66] : memref<4x32xf32, #tpu.memory_space<vmem>>, vector<4x32xf32>
    %cst_67 = arith.constant 0.000000e+00 : f32
    %86 = vector.broadcast %cst_67 : f32 to vector<32x16xf32>
    %c0_68 = arith.constant 0 : index
    %c2_69 = arith.constant 2 : index
    %87 = vector.load %arg20[%c0_68, %c2_69] : memref<32x20xf32, #tpu.memory_space<vmem>>, vector<32x16xf32>
    tpu.vector_store %arg20[%c0_68, %c2_69], %84 {strides = array<i32>} : memref<32x20xf32, #tpu.memory_space<vmem>>, vector<32x16xf32>,
    %c0_70 = arith.constant 0 : index
    %c1_71 = arith.constant 1 : index
    %88 = vector.load %arg20[%c0_70, %c1_71] : memref<32x20xf32, #tpu.memory_space<vmem>>, vector<32x16xf32>
    %c0_72 = arith.constant 0 : index
    %c2_73 = arith.constant 2 : index
    %89 = vector.load %arg20[%c0_72, %c2_73] : memref<32x20xf32, #tpu.memory_space<vmem>>, vector<32x16xf32>
    %c0_74 = arith.constant 0 : index
    %c3_75 = arith.constant 3 : index
    %90 = vector.load %arg20[%c0_74, %c3_75] : memref<32x20xf32, #tpu.memory_space<vmem>>, vector<32x16xf32>
    %91 = tpu.concatenate %88, %89, %90 in 0 : vector<32x16xf32>, vector<32x16xf32>, vector<32x16xf32> -> vector<96x16xf32>
    %c0_76 = arith.constant 0 : index
    %c0_77 = arith.constant 0 : index
    %c0_78 = arith.constant 0 : index
    %92 = vector.load %arg13[%c0_76, %c0_77, %c0_78] : memref<2x64x96xf32, #tpu.memory_space<vmem>>, vector<1x64x96xf32>
    %93 = vector.shape_cast %92 : vector<1x64x96xf32> to vector<64x96xf32>
    %cst_79 = arith.constant dense<0.000000e+00> : vector<64x16xf32>
    %94 = tpu.matmul %93, %91, %cst_79 {dimension_numbers = #tpu.dot_dimension_numbers<[1], [0], [0], [1], [0, 0, 1, 1], [], []>} : vector<64x96xf32>, vector<96x16xf32>, vector<64x16xf32> -> vector<64x16xf32>
    %c0_80 = arith.constant 0 : index
    %c0_81 = arith.constant 0 : index
    %c0_82 = arith.constant 0 : index
    %95 = vector.load %arg14[%c0_80, %c0_81, %c0_82] : memref<2x64x1xf32, #tpu.memory_space<vmem>>, vector<1x64x1xf32>
    %96 = vector.shape_cast %95 : vector<1x64x1xf32> to vector<64x1xf32>
    %97 = vector.broadcast %96 : vector<64x1xf32> to vector<64x16xf32>
    %98 = arith.addf %94, %97 : vector<64x16xf32>
    %99 = vector.extract_strided_slice %98 {offsets = [0, 0], sizes = [32, 16], strides = [1, 1]} : vector<64x16xf32> to vector<32x16xf32>
    %100 = math.tanh %99 : vector<32x16xf32>
    %101 = vector.extract_strided_slice %98 {offsets = [32, 0], sizes = [32, 16], strides = [1, 1]} : vector<64x16xf32> to vector<32x16xf32>
    %102 = arith.negf %101 : vector<32x16xf32>
    %103 = math.exp %102 : vector<32x16xf32>
    %cst_83 = arith.constant 1.000000e+00 : f32
    %104 = vector.broadcast %cst_83 : f32 to vector<32x16xf32>
    %105 = arith.addf %104, %103 : vector<32x16xf32>
    %106 = arith.divf %104, %105 : vector<32x16xf32>
    %107 = arith.mulf %100, %106 : vector<32x16xf32>
    %c0_84 = arith.constant 0 : index
    %c0_85 = arith.constant 0 : index
    %c0_86 = arith.constant 0 : index
    %108 = vector.load %arg15[%c0_84, %c0_85, %c0_86] : memref<2x64x32xf32, #tpu.memory_space<vmem>>, vector<1x64x32xf32>
    %109 = vector.shape_cast %108 : vector<1x64x32xf32> to vector<64x32xf32>
    %cst_87 = arith.constant dense<0.000000e+00> : vector<64x16xf32>
    %110 = tpu.matmul %109, %107, %cst_87 {dimension_numbers = #tpu.dot_dimension_numbers<[1], [0], [0], [1], [0, 0, 1, 1], [], []>} : vector<64x32xf32>, vector<32x16xf32>, vector<64x16xf32> -> vector<64x16xf32>
    %c0_88 = arith.constant 0 : index
    %c0_89 = arith.constant 0 : index
    %c0_90 = arith.constant 0 : index
    %111 = vector.load %arg16[%c0_88, %c0_89, %c0_90] : memref<2x64x1xf32, #tpu.memory_space<vmem>>, vector<1x64x1xf32>
    %112 = vector.shape_cast %111 : vector<1x64x1xf32> to vector<64x1xf32>
    %113 = vector.broadcast %112 : vector<64x1xf32> to vector<64x16xf32>
    %114 = arith.addf %110, %113 : vector<64x16xf32>
    %115 = vector.extract_strided_slice %114 {offsets = [0, 0], sizes = [32, 16], strides = [1, 1]} : vector<64x16xf32> to vector<32x16xf32>
    %116 = arith.addf %84, %115 : vector<32x16xf32>
    %117 = vector.extract_strided_slice %114 {offsets = [32, 0], sizes = [32, 16], strides = [1, 1]} : vector<64x16xf32> to vector<32x16xf32>
    %118 = arith.addf %86, %117 : vector<32x16xf32>
    %c0_91 = arith.constant 0 : index
    %c2_92 = arith.constant 2 : index
    %119 = vector.load %arg20[%c0_91, %c2_92] : memref<32x20xf32, #tpu.memory_space<vmem>>, vector<32x16xf32>
    tpu.vector_store %arg20[%c0_91, %c2_92], %116 {strides = array<i32>} : memref<32x20xf32, #tpu.memory_space<vmem>>, vector<32x16xf32>,
    %c0_93 = arith.constant 0 : index
    %c0_94 = arith.constant 0 : index
    %120 = vector.load %arg20[%c0_93, %c0_94] : memref<32x20xf32, #tpu.memory_space<vmem>>, vector<32x16xf32>
    %c0_95 = arith.constant 0 : index
    %c2_96 = arith.constant 2 : index
    %121 = vector.load %arg20[%c0_95, %c2_96] : memref<32x20xf32, #tpu.memory_space<vmem>>, vector<32x16xf32>
    %c0_97 = arith.constant 0 : index
    %c4_98 = arith.constant 4 : index
    %122 = vector.load %arg20[%c0_97, %c4_98] : memref<32x20xf32, #tpu.memory_space<vmem>>, vector<32x16xf32>
    %123 = tpu.concatenate %120, %121, %122 in 0 : vector<32x16xf32>, vector<32x16xf32>, vector<32x16xf32> -> vector<96x16xf32>
    %c1_99 = arith.constant 1 : index
    %c0_100 = arith.constant 0 : index
    %c0_101 = arith.constant 0 : index
    %124 = vector.load %arg13[%c1_99, %c0_100, %c0_101] : memref<2x64x96xf32, #tpu.memory_space<vmem>>, vector<1x64x96xf32>
    %125 = vector.shape_cast %124 : vector<1x64x96xf32> to vector<64x96xf32>
    %cst_102 = arith.constant dense<0.000000e+00> : vector<64x16xf32>
    %126 = tpu.matmul %125, %123, %cst_102 {dimension_numbers = #tpu.dot_dimension_numbers<[1], [0], [0], [1], [0, 0, 1, 1], [], []>} : vector<64x96xf32>, vector<96x16xf32>, vector<64x16xf32> -> vector<64x16xf32>
    %c1_103 = arith.constant 1 : index
    %c0_104 = arith.constant 0 : index
    %c0_105 = arith.constant 0 : index
    %127 = vector.load %arg14[%c1_103, %c0_104, %c0_105] : memref<2x64x1xf32, #tpu.memory_space<vmem>>, vector<1x64x1xf32>
    %128 = vector.shape_cast %127 : vector<1x64x1xf32> to vector<64x1xf32>
    %129 = vector.broadcast %128 : vector<64x1xf32> to vector<64x16xf32>
    %130 = arith.addf %126, %129 : vector<64x16xf32>
    %131 = vector.extract_strided_slice %130 {offsets = [0, 0], sizes = [32, 16], strides = [1, 1]} : vector<64x16xf32> to vector<32x16xf32>
    %132 = math.tanh %131 : vector<32x16xf32>
    %133 = vector.extract_strided_slice %130 {offsets = [32, 0], sizes = [32, 16], strides = [1, 1]} : vector<64x16xf32> to vector<32x16xf32>
    %134 = arith.negf %133 : vector<32x16xf32>
    %135 = math.exp %134 : vector<32x16xf32>
    %cst_106 = arith.constant 1.000000e+00 : f32
    %136 = vector.broadcast %cst_106 : f32 to vector<32x16xf32>
    %137 = arith.addf %136, %135 : vector<32x16xf32>
    %138 = arith.divf %136, %137 : vector<32x16xf32>
    %139 = arith.mulf %132, %138 : vector<32x16xf32>
    %c1_107 = arith.constant 1 : index
    %c0_108 = arith.constant 0 : index
    %c0_109 = arith.constant 0 : index
    %140 = vector.load %arg15[%c1_107, %c0_108, %c0_109] : memref<2x64x32xf32, #tpu.memory_space<vmem>>, vector<1x64x32xf32>
    %141 = vector.shape_cast %140 : vector<1x64x32xf32> to vector<64x32xf32>
    %cst_110 = arith.constant dense<0.000000e+00> : vector<64x16xf32>
    %142 = tpu.matmul %141, %139, %cst_110 {dimension_numbers = #tpu.dot_dimension_numbers<[1], [0], [0], [1], [0, 0, 1, 1], [], []>} : vector<64x32xf32>, vector<32x16xf32>, vector<64x16xf32> -> vector<64x16xf32>
    %c1_111 = arith.constant 1 : index
    %c0_112 = arith.constant 0 : index
    %c0_113 = arith.constant 0 : index
    %143 = vector.load %arg16[%c1_111, %c0_112, %c0_113] : memref<2x64x1xf32, #tpu.memory_space<vmem>>, vector<1x64x1xf32>
    %144 = vector.shape_cast %143 : vector<1x64x1xf32> to vector<64x1xf32>
    %145 = vector.broadcast %144 : vector<64x1xf32> to vector<64x16xf32>
    %146 = arith.addf %142, %145 : vector<64x16xf32>
    %147 = vector.extract_strided_slice %146 {offsets = [32, 0], sizes = [32, 16], strides = [1, 1]} : vector<64x16xf32> to vector<32x16xf32>
    %148 = arith.addf %118, %147 : vector<32x16xf32>
    %cst_114 = arith.constant dense<0.000000e+00> : vector<4x16xf32>
    %149 = tpu.matmul %85, %148, %cst_114 {dimension_numbers = #tpu.dot_dimension_numbers<[1], [0], [0], [1], [0, 0, 1, 1], [], []>} : vector<4x32xf32>, vector<32x16xf32>, vector<4x16xf32> -> vector<4x16xf32>
    %c0_115 = arith.constant 0 : index
    %c0_116 = arith.constant 0 : index
    %150 = vector.load %arg18[%c0_115, %c0_116] : memref<4x1xf32, #tpu.memory_space<vmem>>, vector<4x1xf32>
    %151 = vector.broadcast %150 : vector<4x1xf32> to vector<4x16xf32>
    %152 = arith.addf %149, %151 : vector<4x16xf32>
    %153 = arith.addf %79, %152 : vector<4x16xf32>
    %c0_117 = arith.constant 0 : index
    %c0_118 = arith.constant 0 : index
    %c0_119 = arith.constant 0 : index
    %154 = vector.load %arg19[%c0_117, %c0_118, %c0_119] : memref<1x4x16xf32, #tpu.memory_space<vmem>>, vector<1x4x16xf32>
    %155 = vector.shape_cast %154 : vector<1x4x16xf32> to vector<4x16xf32>
    %156 = vector.shape_cast %153 : vector<4x16xf32> to vector<1x4x16xf32>
    tpu.vector_store %arg19[%c0_117, %c0_118, %c0_119], %156 {strides = array<i32>} : memref<1x4x16xf32, #tpu.memory_space<vmem>>, vector<1x4x16xf32>,
    return
  }
  func.func @transform_0(%arg0: i32) -> (i32, i32, i32) {
    %c0_i32 = arith.constant 0 : i32
    %c0_i32_0 = arith.constant 0 : i32
    %c0_i32_1 = arith.constant 0 : i32
    return %arg0, %c0_i32, %c0_i32_0 : i32, i32, i32
  }
  func.func @transform_1(%arg0: i32) -> (i32, i32) {
    %c0_i32 = arith.constant 0 : i32
    %c0_i32_0 = arith.constant 0 : i32
    %c0_i32_1 = arith.constant 0 : i32
    return %c0_i32, %c0_i32_0 : i32, i32
  }
  func.func @transform_2(%arg0: i32) -> (i32, i32) {
    %c0_i32 = arith.constant 0 : i32
    %c0_i32_0 = arith.constant 0 : i32
    %c0_i32_1 = arith.constant 0 : i32
    return %c0_i32, %c0_i32_0 : i32, i32
  }
  func.func @transform_3(%arg0: i32) -> (i32, i32) {
    %c0_i32 = arith.constant 0 : i32
    %c0_i32_0 = arith.constant 0 : i32
    %c0_i32_1 = arith.constant 0 : i32
    return %c0_i32, %c0_i32_0 : i32, i32
  }
  func.func @transform_4(%arg0: i32) -> (i32, i32, i32) {
    %c0_i32 = arith.constant 0 : i32
    %c0_i32_0 = arith.constant 0 : i32
    %c0_i32_1 = arith.constant 0 : i32
    %c0_i32_2 = arith.constant 0 : i32
    return %c0_i32, %c0_i32_0, %c0_i32_1 : i32, i32, i32
  }
  func.func @transform_5(%arg0: i32) -> (i32, i32, i32) {
    %c0_i32 = arith.constant 0 : i32
    %c0_i32_0 = arith.constant 0 : i32
    %c0_i32_1 = arith.constant 0 : i32
    %c0_i32_2 = arith.constant 0 : i32
    return %c0_i32, %c0_i32_0, %c0_i32_1 : i32, i32, i32
  }
  func.func @transform_6(%arg0: i32) -> (i32, i32, i32) {
    %c0_i32 = arith.constant 0 : i32
    %c0_i32_0 = arith.constant 0 : i32
    %c0_i32_1 = arith.constant 0 : i32
    %c0_i32_2 = arith.constant 0 : i32
    return %c0_i32, %c0_i32_0, %c0_i32_1 : i32, i32, i32
  }
  func.func @transform_7(%arg0: i32) -> (i32, i32, i32) {
    %c0_i32 = arith.constant 0 : i32
    %c0_i32_0 = arith.constant 0 : i32
    %c0_i32_1 = arith.constant 0 : i32
    %c0_i32_2 = arith.constant 0 : i32
    return %c0_i32, %c0_i32_0, %c0_i32_1 : i32, i32, i32
  }
  func.func @transform_8(%arg0: i32) -> (i32, i32) {
    %c0_i32 = arith.constant 0 : i32
    %c0_i32_0 = arith.constant 0 : i32
    %c0_i32_1 = arith.constant 0 : i32
    return %c0_i32, %c0_i32_0 : i32, i32
  }
  func.func @transform_9(%arg0: i32) -> (i32, i32) {
    %c0_i32 = arith.constant 0 : i32
    %c0_i32_0 = arith.constant 0 : i32
    %c0_i32_1 = arith.constant 0 : i32
    return %c0_i32, %c0_i32_0 : i32, i32
  }
  func.func @transform_10(%arg0: i32) -> (i32, i32) {
    %c0_i32 = arith.constant 0 : i32
    %c0_i32_0 = arith.constant 0 : i32
    %c0_i32_1 = arith.constant 0 : i32
    return %c0_i32, %c0_i32_0 : i32, i32
  }
  func.func @transform_11(%arg0: i32) -> (i32, i32) {
    %c0_i32 = arith.constant 0 : i32
    %c0_i32_0 = arith.constant 0 : i32
    %c0_i32_1 = arith.constant 0 : i32
    return %c0_i32, %c0_i32_0 : i32, i32
  }
  func.func @transform_12(%arg0: i32) -> (i32, i32, i32) {
    %c0_i32 = arith.constant 0 : i32
    %c0_i32_0 = arith.constant 0 : i32
    %c0_i32_1 = arith.constant 0 : i32
    %c0_i32_2 = arith.constant 0 : i32
    return %c0_i32, %c0_i32_0, %c0_i32_1 : i32, i32, i32
  }
  func.func @transform_13(%arg0: i32) -> (i32, i32, i32) {
    %c0_i32 = arith.constant 0 : i32
    %c0_i32_0 = arith.constant 0 : i32
    %c0_i32_1 = arith.constant 0 : i32
    %c0_i32_2 = arith.constant 0 : i32
    return %c0_i32, %c0_i32_0, %c0_i32_1 : i32, i32, i32
  }
  func.func @transform_14(%arg0: i32) -> (i32, i32, i32) {
    %c0_i32 = arith.constant 0 : i32
    %c0_i32_0 = arith.constant 0 : i32
    %c0_i32_1 = arith.constant 0 : i32
    %c0_i32_2 = arith.constant 0 : i32
    return %c0_i32, %c0_i32_0, %c0_i32_1 : i32, i32, i32
  }
  func.func @transform_15(%arg0: i32) -> (i32, i32, i32) {
    %c0_i32 = arith.constant 0 : i32
    %c0_i32_0 = arith.constant 0 : i32
    %c0_i32_1 = arith.constant 0 : i32
    %c0_i32_2 = arith.constant 0 : i32
    return %c0_i32, %c0_i32_0, %c0_i32_1 : i32, i32, i32
  }
  func.func @transform_16(%arg0: i32) -> (i32, i32) {
    %c0_i32 = arith.constant 0 : i32
    %c0_i32_0 = arith.constant 0 : i32
    %c0_i32_1 = arith.constant 0 : i32
    return %c0_i32, %c0_i32_0 : i32, i32
  }
  func.func @transform_17(%arg0: i32) -> (i32, i32) {
    %c0_i32 = arith.constant 0 : i32
    %c0_i32_0 = arith.constant 0 : i32
    %c0_i32_1 = arith.constant 0 : i32
    return %c0_i32, %c0_i32_0 : i32, i32
  }
  func.func @transform_18(%arg0: i32) -> (i32, i32, i32) {
    %c0_i32 = arith.constant 0 : i32
    %c0_i32_0 = arith.constant 0 : i32
    %c0_i32_1 = arith.constant 0 : i32
    return %arg0, %c0_i32, %c0_i32_0 : i32, i32, i32
  }
}

module attributes {stable_mosaic.version = 11 : i64} {
  func.func @_upsample_kernel(%arg0: i32, %arg1: memref<1x4x16xf32, #tpu.memory_space<vmem>>, %arg2: memref<16x32xf32, #tpu.memory_space<vmem>>, %arg3: memref<32x4xf32, #tpu.memory_space<vmem>>, %arg4: memref<32x1xf32, #tpu.memory_space<vmem>>, %arg5: memref<2x64x96xf32, #tpu.memory_space<vmem>>, %arg6: memref<2x64x1xf32, #tpu.memory_space<vmem>>, %arg7: memref<2x64x32xf32, #tpu.memory_space<vmem>>, %arg8: memref<2x64x1xf32, #tpu.memory_space<vmem>>, %arg9: memref<4x32xf32, #tpu.memory_space<vmem>>, %arg10: memref<4x1xf32, #tpu.memory_space<vmem>>, %arg11: memref<32x4xf32, #tpu.memory_space<vmem>>, %arg12: memref<32x1xf32, #tpu.memory_space<vmem>>, %arg13: memref<2x64x96xf32, #tpu.memory_space<vmem>>, %arg14: memref<2x64x1xf32, #tpu.memory_space<vmem>>, %arg15: memref<2x64x32xf32, #tpu.memory_space<vmem>>, %arg16: memref<2x64x1xf32, #tpu.memory_space<vmem>>, %arg17: memref<4x32xf32, #tpu.memory_space<vmem>>, %arg18: memref<4x1xf32, #tpu.memory_space<vmem>>, %arg19: memref<1x4x32xf32, #tpu.memory_space<vmem>>, %arg20: memref<32x36xf32, #tpu.memory_space<vmem>>) attributes {dimension_semantics = [#tpu.dimension_semantics<parallel>], iteration_bounds = array<i64: 2>, scalar_prefetch = 0 : i64, scratch_operands = 1 : i64, tpu.core_type = #tpu.core_type<tc>, window_params = [{transform_indices = @transform_0, window_bounds = array<i64: 1, 4, 16>}, {pipeline_mode = #tpu.pipeline_mode<synchronous>, transform_indices = @transform_1, window_bounds = array<i64: 16, 32>}, {pipeline_mode = #tpu.pipeline_mode<synchronous>, transform_indices = @transform_2, window_bounds = array<i64: 32, 4>}, {pipeline_mode = #tpu.pipeline_mode<synchronous>, transform_indices = @transform_3, window_bounds = array<i64: 32, 1>}, {pipeline_mode = #tpu.pipeline_mode<synchronous>, transform_indices = @transform_4, window_bounds = array<i64: 2, 64, 96>}, {pipeline_mode = #tpu.pipeline_mode<synchronous>, transform_indices = @transform_5, window_bounds = array<i64: 2, 64, 1>}, {pipeline_mode = #tpu.pipeline_mode<synchronous>, transform_indices = @transform_6, window_bounds = array<i64: 2, 64, 32>}, {pipeline_mode = #tpu.pipeline_mode<synchronous>, transform_indices = @transform_7, window_bounds = array<i64: 2, 64, 1>}, {pipeline_mode = #tpu.pipeline_mode<synchronous>, transform_indices = @transform_8, window_bounds = array<i64: 4, 32>}, {pipeline_mode = #tpu.pipeline_mode<synchronous>, transform_indices = @transform_9, window_bounds = array<i64: 4, 1>}, {pipeline_mode = #tpu.pipeline_mode<synchronous>, transform_indices = @transform_10, window_bounds = array<i64: 32, 4>}, {pipeline_mode = #tpu.pipeline_mode<synchronous>, transform_indices = @transform_11, window_bounds = array<i64: 32, 1>}, {pipeline_mode = #tpu.pipeline_mode<synchronous>, transform_indices = @transform_12, window_bounds = array<i64: 2, 64, 96>}, {pipeline_mode = #tpu.pipeline_mode<synchronous>, transform_indices = @transform_13, window_bounds = array<i64: 2, 64, 1>}, {pipeline_mode = #tpu.pipeline_mode<synchronous>, transform_indices = @transform_14, window_bounds = array<i64: 2, 64, 32>}, {pipeline_mode = #tpu.pipeline_mode<synchronous>, transform_indices = @transform_15, window_bounds = array<i64: 2, 64, 1>}, {pipeline_mode = #tpu.pipeline_mode<synchronous>, transform_indices = @transform_16, window_bounds = array<i64: 4, 32>}, {pipeline_mode = #tpu.pipeline_mode<synchronous>, transform_indices = @transform_17, window_bounds = array<i64: 4, 1>}, {transform_indices = @transform_18, window_bounds = array<i64: 1, 4, 32>}]} {
    %cst = arith.constant 0.000000e+00 : f32
    %0 = vector.broadcast %cst : f32 to vector<32x36xf32>
    %c0 = arith.constant 0 : index
    %c0_0 = arith.constant 0 : index
    %1 = vector.load %arg20[%c0, %c0_0] : memref<32x36xf32, #tpu.memory_space<vmem>>, vector<32x36xf32>
    tpu.vector_store %arg20[%c0, %c0_0], %0 {strides = array<i32>} : memref<32x36xf32, #tpu.memory_space<vmem>>, vector<32x36xf32>,
    %c0_1 = arith.constant 0 : index
    %c0_2 = arith.constant 0 : index
    %c0_3 = arith.constant 0 : index
    %2 = vector.load %arg1[%c0_1, %c0_2, %c0_3] : memref<1x4x16xf32, #tpu.memory_space<vmem>>, vector<1x4x16xf32>
    %3 = vector.shape_cast %2 : vector<1x4x16xf32> to vector<4x16xf32>
    %c0_4 = arith.constant 0 : index
    %c0_5 = arith.constant 0 : index
    %4 = vector.load %arg3[%c0_4, %c0_5] : memref<32x4xf32, #tpu.memory_space<vmem>>, vector<32x4xf32>
    %cst_6 = arith.constant dense<0.000000e+00> : vector<32x16xf32>
    %5 = tpu.matmul %4, %3, %cst_6 {dimension_numbers = #tpu.dot_dimension_numbers<[1], [0], [0], [1], [0, 0, 1, 1], [], []>} : vector<32x4xf32>, vector<4x16xf32>, vector<32x16xf32> -> vector<32x16xf32>
    %c0_7 = arith.constant 0 : index
    %c0_8 = arith.constant 0 : index
    %6 = vector.load %arg4[%c0_7, %c0_8] : memref<32x1xf32, #tpu.memory_space<vmem>>, vector<32x1xf32>
    %7 = vector.broadcast %6 : vector<32x1xf32> to vector<32x16xf32>
    %8 = arith.addf %5, %7 : vector<32x16xf32>
    %c0_9 = arith.constant 0 : index
    %c0_10 = arith.constant 0 : index
    %9 = vector.load %arg9[%c0_9, %c0_10] : memref<4x32xf32, #tpu.memory_space<vmem>>, vector<4x32xf32>
    %cst_11 = arith.constant 0.000000e+00 : f32
    %10 = vector.broadcast %cst_11 : f32 to vector<32x16xf32>
    %c0_12 = arith.constant 0 : index
    %c2 = arith.constant 2 : index
    %11 = vector.load %arg20[%c0_12, %c2] : memref<32x36xf32, #tpu.memory_space<vmem>>, vector<32x16xf32>
    tpu.vector_store %arg20[%c0_12, %c2], %8 {strides = array<i32>} : memref<32x36xf32, #tpu.memory_space<vmem>>, vector<32x16xf32>,
    %c0_13 = arith.constant 0 : index
    %c1 = arith.constant 1 : index
    %12 = vector.load %arg20[%c0_13, %c1] : memref<32x36xf32, #tpu.memory_space<vmem>>, vector<32x16xf32>
    %c0_14 = arith.constant 0 : index
    %c2_15 = arith.constant 2 : index
    %13 = vector.load %arg20[%c0_14, %c2_15] : memref<32x36xf32, #tpu.memory_space<vmem>>, vector<32x16xf32>
    %c0_16 = arith.constant 0 : index
    %c3 = arith.constant 3 : index
    %14 = vector.load %arg20[%c0_16, %c3] : memref<32x36xf32, #tpu.memory_space<vmem>>, vector<32x16xf32>
    %15 = tpu.concatenate %12, %13, %14 in 0 : vector<32x16xf32>, vector<32x16xf32>, vector<32x16xf32> -> vector<96x16xf32>
    %c0_17 = arith.constant 0 : index
    %c0_18 = arith.constant 0 : index
    %c0_19 = arith.constant 0 : index
    %16 = vector.load %arg5[%c0_17, %c0_18, %c0_19] : memref<2x64x96xf32, #tpu.memory_space<vmem>>, vector<1x64x96xf32>
    %17 = vector.shape_cast %16 : vector<1x64x96xf32> to vector<64x96xf32>
    %cst_20 = arith.constant dense<0.000000e+00> : vector<64x16xf32>
    %18 = tpu.matmul %17, %15, %cst_20 {dimension_numbers = #tpu.dot_dimension_numbers<[1], [0], [0], [1], [0, 0, 1, 1], [], []>} : vector<64x96xf32>, vector<96x16xf32>, vector<64x16xf32> -> vector<64x16xf32>
    %c0_21 = arith.constant 0 : index
    %c0_22 = arith.constant 0 : index
    %c0_23 = arith.constant 0 : index
    %19 = vector.load %arg6[%c0_21, %c0_22, %c0_23] : memref<2x64x1xf32, #tpu.memory_space<vmem>>, vector<1x64x1xf32>
    %20 = vector.shape_cast %19 : vector<1x64x1xf32> to vector<64x1xf32>
    %21 = vector.broadcast %20 : vector<64x1xf32> to vector<64x16xf32>
    %22 = arith.addf %18, %21 : vector<64x16xf32>
    %23 = vector.extract_strided_slice %22 {offsets = [0, 0], sizes = [32, 16], strides = [1, 1]} : vector<64x16xf32> to vector<32x16xf32>
    %24 = math.tanh %23 : vector<32x16xf32>
    %25 = vector.extract_strided_slice %22 {offsets = [32, 0], sizes = [32, 16], strides = [1, 1]} : vector<64x16xf32> to vector<32x16xf32>
    %26 = arith.negf %25 : vector<32x16xf32>
    %27 = math.exp %26 : vector<32x16xf32>
    %cst_24 = arith.constant 1.000000e+00 : f32
    %28 = vector.broadcast %cst_24 : f32 to vector<32x16xf32>
    %29 = arith.addf %28, %27 : vector<32x16xf32>
    %30 = arith.divf %28, %29 : vector<32x16xf32>
    %31 = arith.mulf %24, %30 : vector<32x16xf32>
    %c0_25 = arith.constant 0 : index
    %c0_26 = arith.constant 0 : index
    %c0_27 = arith.constant 0 : index
    %32 = vector.load %arg7[%c0_25, %c0_26, %c0_27] : memref<2x64x32xf32, #tpu.memory_space<vmem>>, vector<1x64x32xf32>
    %33 = vector.shape_cast %32 : vector<1x64x32xf32> to vector<64x32xf32>
    %cst_28 = arith.constant dense<0.000000e+00> : vector<64x16xf32>
    %34 = tpu.matmul %33, %31, %cst_28 {dimension_numbers = #tpu.dot_dimension_numbers<[1], [0], [0], [1], [0, 0, 1, 1], [], []>} : vector<64x32xf32>, vector<32x16xf32>, vector<64x16xf32> -> vector<64x16xf32>
    %c0_29 = arith.constant 0 : index
    %c0_30 = arith.constant 0 : index
    %c0_31 = arith.constant 0 : index
    %35 = vector.load %arg8[%c0_29, %c0_30, %c0_31] : memref<2x64x1xf32, #tpu.memory_space<vmem>>, vector<1x64x1xf32>
    %36 = vector.shape_cast %35 : vector<1x64x1xf32> to vector<64x1xf32>
    %37 = vector.broadcast %36 : vector<64x1xf32> to vector<64x16xf32>
    %38 = arith.addf %34, %37 : vector<64x16xf32>
    %39 = vector.extract_strided_slice %38 {offsets = [0, 0], sizes = [32, 16], strides = [1, 1]} : vector<64x16xf32> to vector<32x16xf32>
    %40 = arith.addf %8, %39 : vector<32x16xf32>
    %41 = vector.extract_strided_slice %38 {offsets = [32, 0], sizes = [32, 16], strides = [1, 1]} : vector<64x16xf32> to vector<32x16xf32>
    %42 = arith.addf %10, %41 : vector<32x16xf32>
    %c0_32 = arith.constant 0 : index
    %c2_33 = arith.constant 2 : index
    %43 = vector.load %arg20[%c0_32, %c2_33] : memref<32x36xf32, #tpu.memory_space<vmem>>, vector<32x16xf32>
    tpu.vector_store %arg20[%c0_32, %c2_33], %40 {strides = array<i32>} : memref<32x36xf32, #tpu.memory_space<vmem>>, vector<32x16xf32>,
    %c0_34 = arith.constant 0 : index
    %c0_35 = arith.constant 0 : index
    %44 = vector.load %arg20[%c0_34, %c0_35] : memref<32x36xf32, #tpu.memory_space<vmem>>, vector<32x16xf32>
    %c0_36 = arith.constant 0 : index
    %c2_37 = arith.constant 2 : index
    %45 = vector.load %arg20[%c0_36, %c2_37] : memref<32x36xf32, #tpu.memory_space<vmem>>, vector<32x16xf32>
    %c0_38 = arith.constant 0 : index
    %c4 = arith.constant 4 : index
    %46 = vector.load %arg20[%c0_38, %c4] : memref<32x36xf32, #tpu.memory_space<vmem>>, vector<32x16xf32>
    %47 = tpu.concatenate %44, %45, %46 in 0 : vector<32x16xf32>, vector<32x16xf32>, vector<32x16xf32> -> vector<96x16xf32>
    %c1_39 = arith.constant 1 : index
    %c0_40 = arith.constant 0 : index
    %c0_41 = arith.constant 0 : index
    %48 = vector.load %arg5[%c1_39, %c0_40, %c0_41] : memref<2x64x96xf32, #tpu.memory_space<vmem>>, vector<1x64x96xf32>
    %49 = vector.shape_cast %48 : vector<1x64x96xf32> to vector<64x96xf32>
    %cst_42 = arith.constant dense<0.000000e+00> : vector<64x16xf32>
    %50 = tpu.matmul %49, %47, %cst_42 {dimension_numbers = #tpu.dot_dimension_numbers<[1], [0], [0], [1], [0, 0, 1, 1], [], []>} : vector<64x96xf32>, vector<96x16xf32>, vector<64x16xf32> -> vector<64x16xf32>
    %c1_43 = arith.constant 1 : index
    %c0_44 = arith.constant 0 : index
    %c0_45 = arith.constant 0 : index
    %51 = vector.load %arg6[%c1_43, %c0_44, %c0_45] : memref<2x64x1xf32, #tpu.memory_space<vmem>>, vector<1x64x1xf32>
    %52 = vector.shape_cast %51 : vector<1x64x1xf32> to vector<64x1xf32>
    %53 = vector.broadcast %52 : vector<64x1xf32> to vector<64x16xf32>
    %54 = arith.addf %50, %53 : vector<64x16xf32>
    %55 = vector.extract_strided_slice %54 {offsets = [0, 0], sizes = [32, 16], strides = [1, 1]} : vector<64x16xf32> to vector<32x16xf32>
    %56 = math.tanh %55 : vector<32x16xf32>
    %57 = vector.extract_strided_slice %54 {offsets = [32, 0], sizes = [32, 16], strides = [1, 1]} : vector<64x16xf32> to vector<32x16xf32>
    %58 = arith.negf %57 : vector<32x16xf32>
    %59 = math.exp %58 : vector<32x16xf32>
    %cst_46 = arith.constant 1.000000e+00 : f32
    %60 = vector.broadcast %cst_46 : f32 to vector<32x16xf32>
    %61 = arith.addf %60, %59 : vector<32x16xf32>
    %62 = arith.divf %60, %61 : vector<32x16xf32>
    %63 = arith.mulf %56, %62 : vector<32x16xf32>
    %c1_47 = arith.constant 1 : index
    %c0_48 = arith.constant 0 : index
    %c0_49 = arith.constant 0 : index
    %64 = vector.load %arg7[%c1_47, %c0_48, %c0_49] : memref<2x64x32xf32, #tpu.memory_space<vmem>>, vector<1x64x32xf32>
    %65 = vector.shape_cast %64 : vector<1x64x32xf32> to vector<64x32xf32>
    %cst_50 = arith.constant dense<0.000000e+00> : vector<64x16xf32>
    %66 = tpu.matmul %65, %63, %cst_50 {dimension_numbers = #tpu.dot_dimension_numbers<[1], [0], [0], [1], [0, 0, 1, 1], [], []>} : vector<64x32xf32>, vector<32x16xf32>, vector<64x16xf32> -> vector<64x16xf32>
    %c1_51 = arith.constant 1 : index
    %c0_52 = arith.constant 0 : index
    %c0_53 = arith.constant 0 : index
    %67 = vector.load %arg8[%c1_51, %c0_52, %c0_53] : memref<2x64x1xf32, #tpu.memory_space<vmem>>, vector<1x64x1xf32>
    %68 = vector.shape_cast %67 : vector<1x64x1xf32> to vector<64x1xf32>
    %69 = vector.broadcast %68 : vector<64x1xf32> to vector<64x16xf32>
    %70 = arith.addf %66, %69 : vector<64x16xf32>
    %71 = vector.extract_strided_slice %70 {offsets = [32, 0], sizes = [32, 16], strides = [1, 1]} : vector<64x16xf32> to vector<32x16xf32>
    %72 = arith.addf %42, %71 : vector<32x16xf32>
    %cst_54 = arith.constant dense<0.000000e+00> : vector<4x16xf32>
    %73 = tpu.matmul %9, %72, %cst_54 {dimension_numbers = #tpu.dot_dimension_numbers<[1], [0], [0], [1], [0, 0, 1, 1], [], []>} : vector<4x32xf32>, vector<32x16xf32>, vector<4x16xf32> -> vector<4x16xf32>
    %c0_55 = arith.constant 0 : index
    %c0_56 = arith.constant 0 : index
    %74 = vector.load %arg10[%c0_55, %c0_56] : memref<4x1xf32, #tpu.memory_space<vmem>>, vector<4x1xf32>
    %75 = vector.broadcast %74 : vector<4x1xf32> to vector<4x16xf32>
    %76 = arith.addf %73, %75 : vector<4x16xf32>
    %77 = arith.addf %3, %76 : vector<4x16xf32>
    %c0_57 = arith.constant 0 : index
    %c0_58 = arith.constant 0 : index
    %78 = vector.load %arg2[%c0_57, %c0_58] : memref<16x32xf32, #tpu.memory_space<vmem>>, vector<16x32xf32>
    %cst_59 = arith.constant dense<0.000000e+00> : vector<4x32xf32>
    %79 = tpu.matmul %77, %78, %cst_59 {dimension_numbers = #tpu.dot_dimension_numbers<[1], [0], [0], [1], [0, 0, 1, 1], [], []>} : vector<4x16xf32>, vector<16x32xf32>, vector<4x32xf32> -> vector<4x32xf32>
    %c0_60 = arith.constant 0 : index
    %c0_61 = arith.constant 0 : index
    %80 = vector.load %arg11[%c0_60, %c0_61] : memref<32x4xf32, #tpu.memory_space<vmem>>, vector<32x4xf32>
    %cst_62 = arith.constant dense<0.000000e+00> : vector<32x32xf32>
    %81 = tpu.matmul %80, %79, %cst_62 {dimension_numbers = #tpu.dot_dimension_numbers<[1], [0], [0], [1], [0, 0, 1, 1], [], []>} : vector<32x4xf32>, vector<4x32xf32>, vector<32x32xf32> -> vector<32x32xf32>
    %c0_63 = arith.constant 0 : index
    %c0_64 = arith.constant 0 : index
    %82 = vector.load %arg12[%c0_63, %c0_64] : memref<32x1xf32, #tpu.memory_space<vmem>>, vector<32x1xf32>
    %83 = vector.broadcast %82 : vector<32x1xf32> to vector<32x32xf32>
    %84 = arith.addf %81, %83 : vector<32x32xf32>
    %c0_65 = arith.constant 0 : index
    %c0_66 = arith.constant 0 : index
    %85 = vector.load %arg17[%c0_65, %c0_66] : memref<4x32xf32, #tpu.memory_space<vmem>>, vector<4x32xf32>
    %cst_67 = arith.constant 0.000000e+00 : f32
    %86 = vector.broadcast %cst_67 : f32 to vector<32x32xf32>
    %c0_68 = arith.constant 0 : index
    %c2_69 = arith.constant 2 : index
    %87 = vector.load %arg20[%c0_68, %c2_69] : memref<32x36xf32, #tpu.memory_space<vmem>>, vector<32x32xf32>
    tpu.vector_store %arg20[%c0_68, %c2_69], %84 {strides = array<i32>} : memref<32x36xf32, #tpu.memory_space<vmem>>, vector<32x32xf32>,
    %c0_70 = arith.constant 0 : index
    %c1_71 = arith.constant 1 : index
    %88 = vector.load %arg20[%c0_70, %c1_71] : memref<32x36xf32, #tpu.memory_space<vmem>>, vector<32x32xf32>
    %c0_72 = arith.constant 0 : index
    %c2_73 = arith.constant 2 : index
    %89 = vector.load %arg20[%c0_72, %c2_73] : memref<32x36xf32, #tpu.memory_space<vmem>>, vector<32x32xf32>
    %c0_74 = arith.constant 0 : index
    %c3_75 = arith.constant 3 : index
    %90 = vector.load %arg20[%c0_74, %c3_75] : memref<32x36xf32, #tpu.memory_space<vmem>>, vector<32x32xf32>
    %91 = tpu.concatenate %88, %89, %90 in 0 : vector<32x32xf32>, vector<32x32xf32>, vector<32x32xf32> -> vector<96x32xf32>
    %c0_76 = arith.constant 0 : index
    %c0_77 = arith.constant 0 : index
    %c0_78 = arith.constant 0 : index
    %92 = vector.load %arg13[%c0_76, %c0_77, %c0_78] : memref<2x64x96xf32, #tpu.memory_space<vmem>>, vector<1x64x96xf32>
    %93 = vector.shape_cast %92 : vector<1x64x96xf32> to vector<64x96xf32>
    %cst_79 = arith.constant dense<0.000000e+00> : vector<64x32xf32>
    %94 = tpu.matmul %93, %91, %cst_79 {dimension_numbers = #tpu.dot_dimension_numbers<[1], [0], [0], [1], [0, 0, 1, 1], [], []>} : vector<64x96xf32>, vector<96x32xf32>, vector<64x32xf32> -> vector<64x32xf32>
    %c0_80 = arith.constant 0 : index
    %c0_81 = arith.constant 0 : index
    %c0_82 = arith.constant 0 : index
    %95 = vector.load %arg14[%c0_80, %c0_81, %c0_82] : memref<2x64x1xf32, #tpu.memory_space<vmem>>, vector<1x64x1xf32>
    %96 = vector.shape_cast %95 : vector<1x64x1xf32> to vector<64x1xf32>
    %97 = vector.broadcast %96 : vector<64x1xf32> to vector<64x32xf32>
    %98 = arith.addf %94, %97 : vector<64x32xf32>
    %99 = vector.extract_strided_slice %98 {offsets = [0, 0], sizes = [32, 32], strides = [1, 1]} : vector<64x32xf32> to vector<32x32xf32>
    %100 = math.tanh %99 : vector<32x32xf32>
    %101 = vector.extract_strided_slice %98 {offsets = [32, 0], sizes = [32, 32], strides = [1, 1]} : vector<64x32xf32> to vector<32x32xf32>
    %102 = arith.negf %101 : vector<32x32xf32>
    %103 = math.exp %102 : vector<32x32xf32>
    %cst_83 = arith.constant 1.000000e+00 : f32
    %104 = vector.broadcast %cst_83 : f32 to vector<32x32xf32>
    %105 = arith.addf %104, %103 : vector<32x32xf32>
    %106 = arith.divf %104, %105 : vector<32x32xf32>
    %107 = arith.mulf %100, %106 : vector<32x32xf32>
    %c0_84 = arith.constant 0 : index
    %c0_85 = arith.constant 0 : index
    %c0_86 = arith.constant 0 : index
    %108 = vector.load %arg15[%c0_84, %c0_85, %c0_86] : memref<2x64x32xf32, #tpu.memory_space<vmem>>, vector<1x64x32xf32>
    %109 = vector.shape_cast %108 : vector<1x64x32xf32> to vector<64x32xf32>
    %cst_87 = arith.constant dense<0.000000e+00> : vector<64x32xf32>
    %110 = tpu.matmul %109, %107, %cst_87 {dimension_numbers = #tpu.dot_dimension_numbers<[1], [0], [0], [1], [0, 0, 1, 1], [], []>} : vector<64x32xf32>, vector<32x32xf32>, vector<64x32xf32> -> vector<64x32xf32>
    %c0_88 = arith.constant 0 : index
    %c0_89 = arith.constant 0 : index
    %c0_90 = arith.constant 0 : index
    %111 = vector.load %arg16[%c0_88, %c0_89, %c0_90] : memref<2x64x1xf32, #tpu.memory_space<vmem>>, vector<1x64x1xf32>
    %112 = vector.shape_cast %111 : vector<1x64x1xf32> to vector<64x1xf32>
    %113 = vector.broadcast %112 : vector<64x1xf32> to vector<64x32xf32>
    %114 = arith.addf %110, %113 : vector<64x32xf32>
    %115 = vector.extract_strided_slice %114 {offsets = [0, 0], sizes = [32, 32], strides = [1, 1]} : vector<64x32xf32> to vector<32x32xf32>
    %116 = arith.addf %84, %115 : vector<32x32xf32>
    %117 = vector.extract_strided_slice %114 {offsets = [32, 0], sizes = [32, 32], strides = [1, 1]} : vector<64x32xf32> to vector<32x32xf32>
    %118 = arith.addf %86, %117 : vector<32x32xf32>
    %c0_91 = arith.constant 0 : index
    %c2_92 = arith.constant 2 : index
    %119 = vector.load %arg20[%c0_91, %c2_92] : memref<32x36xf32, #tpu.memory_space<vmem>>, vector<32x32xf32>
    tpu.vector_store %arg20[%c0_91, %c2_92], %116 {strides = array<i32>} : memref<32x36xf32, #tpu.memory_space<vmem>>, vector<32x32xf32>,
    %c0_93 = arith.constant 0 : index
    %c0_94 = arith.constant 0 : index
    %120 = vector.load %arg20[%c0_93, %c0_94] : memref<32x36xf32, #tpu.memory_space<vmem>>, vector<32x32xf32>
    %c0_95 = arith.constant 0 : index
    %c2_96 = arith.constant 2 : index
    %121 = vector.load %arg20[%c0_95, %c2_96] : memref<32x36xf32, #tpu.memory_space<vmem>>, vector<32x32xf32>
    %c0_97 = arith.constant 0 : index
    %c4_98 = arith.constant 4 : index
    %122 = vector.load %arg20[%c0_97, %c4_98] : memref<32x36xf32, #tpu.memory_space<vmem>>, vector<32x32xf32>
    %123 = tpu.concatenate %120, %121, %122 in 0 : vector<32x32xf32>, vector<32x32xf32>, vector<32x32xf32> -> vector<96x32xf32>
    %c1_99 = arith.constant 1 : index
    %c0_100 = arith.constant 0 : index
    %c0_101 = arith.constant 0 : index
    %124 = vector.load %arg13[%c1_99, %c0_100, %c0_101] : memref<2x64x96xf32, #tpu.memory_space<vmem>>, vector<1x64x96xf32>
    %125 = vector.shape_cast %124 : vector<1x64x96xf32> to vector<64x96xf32>
    %cst_102 = arith.constant dense<0.000000e+00> : vector<64x32xf32>
    %126 = tpu.matmul %125, %123, %cst_102 {dimension_numbers = #tpu.dot_dimension_numbers<[1], [0], [0], [1], [0, 0, 1, 1], [], []>} : vector<64x96xf32>, vector<96x32xf32>, vector<64x32xf32> -> vector<64x32xf32>
    %c1_103 = arith.constant 1 : index
    %c0_104 = arith.constant 0 : index
    %c0_105 = arith.constant 0 : index
    %127 = vector.load %arg14[%c1_103, %c0_104, %c0_105] : memref<2x64x1xf32, #tpu.memory_space<vmem>>, vector<1x64x1xf32>
    %128 = vector.shape_cast %127 : vector<1x64x1xf32> to vector<64x1xf32>
    %129 = vector.broadcast %128 : vector<64x1xf32> to vector<64x32xf32>
    %130 = arith.addf %126, %129 : vector<64x32xf32>
    %131 = vector.extract_strided_slice %130 {offsets = [0, 0], sizes = [32, 32], strides = [1, 1]} : vector<64x32xf32> to vector<32x32xf32>
    %132 = math.tanh %131 : vector<32x32xf32>
    %133 = vector.extract_strided_slice %130 {offsets = [32, 0], sizes = [32, 32], strides = [1, 1]} : vector<64x32xf32> to vector<32x32xf32>
    %134 = arith.negf %133 : vector<32x32xf32>
    %135 = math.exp %134 : vector<32x32xf32>
    %cst_106 = arith.constant 1.000000e+00 : f32
    %136 = vector.broadcast %cst_106 : f32 to vector<32x32xf32>
    %137 = arith.addf %136, %135 : vector<32x32xf32>
    %138 = arith.divf %136, %137 : vector<32x32xf32>
    %139 = arith.mulf %132, %138 : vector<32x32xf32>
    %c1_107 = arith.constant 1 : index
    %c0_108 = arith.constant 0 : index
    %c0_109 = arith.constant 0 : index
    %140 = vector.load %arg15[%c1_107, %c0_108, %c0_109] : memref<2x64x32xf32, #tpu.memory_space<vmem>>, vector<1x64x32xf32>
    %141 = vector.shape_cast %140 : vector<1x64x32xf32> to vector<64x32xf32>
    %cst_110 = arith.constant dense<0.000000e+00> : vector<64x32xf32>
    %142 = tpu.matmul %141, %139, %cst_110 {dimension_numbers = #tpu.dot_dimension_numbers<[1], [0], [0], [1], [0, 0, 1, 1], [], []>} : vector<64x32xf32>, vector<32x32xf32>, vector<64x32xf32> -> vector<64x32xf32>
    %c1_111 = arith.constant 1 : index
    %c0_112 = arith.constant 0 : index
    %c0_113 = arith.constant 0 : index
    %143 = vector.load %arg16[%c1_111, %c0_112, %c0_113] : memref<2x64x1xf32, #tpu.memory_space<vmem>>, vector<1x64x1xf32>
    %144 = vector.shape_cast %143 : vector<1x64x1xf32> to vector<64x1xf32>
    %145 = vector.broadcast %144 : vector<64x1xf32> to vector<64x32xf32>
    %146 = arith.addf %142, %145 : vector<64x32xf32>
    %147 = vector.extract_strided_slice %146 {offsets = [32, 0], sizes = [32, 32], strides = [1, 1]} : vector<64x32xf32> to vector<32x32xf32>
    %148 = arith.addf %118, %147 : vector<32x32xf32>
    %cst_114 = arith.constant dense<0.000000e+00> : vector<4x32xf32>
    %149 = tpu.matmul %85, %148, %cst_114 {dimension_numbers = #tpu.dot_dimension_numbers<[1], [0], [0], [1], [0, 0, 1, 1], [], []>} : vector<4x32xf32>, vector<32x32xf32>, vector<4x32xf32> -> vector<4x32xf32>
    %c0_115 = arith.constant 0 : index
    %c0_116 = arith.constant 0 : index
    %150 = vector.load %arg18[%c0_115, %c0_116] : memref<4x1xf32, #tpu.memory_space<vmem>>, vector<4x1xf32>
    %151 = vector.broadcast %150 : vector<4x1xf32> to vector<4x32xf32>
    %152 = arith.addf %149, %151 : vector<4x32xf32>
    %153 = arith.addf %79, %152 : vector<4x32xf32>
    %c0_117 = arith.constant 0 : index
    %c0_118 = arith.constant 0 : index
    %c0_119 = arith.constant 0 : index
    %154 = vector.load %arg19[%c0_117, %c0_118, %c0_119] : memref<1x4x32xf32, #tpu.memory_space<vmem>>, vector<1x4x32xf32>
    %155 = vector.shape_cast %154 : vector<1x4x32xf32> to vector<4x32xf32>
    %156 = vector.shape_cast %153 : vector<4x32xf32> to vector<1x4x32xf32>
    tpu.vector_store %arg19[%c0_117, %c0_118, %c0_119], %156 {strides = array<i32>} : memref<1x4x32xf32, #tpu.memory_space<vmem>>, vector<1x4x32xf32>,
    return
  }
  func.func @transform_0(%arg0: i32) -> (i32, i32, i32) {
    %c0_i32 = arith.constant 0 : i32
    %c0_i32_0 = arith.constant 0 : i32
    %c0_i32_1 = arith.constant 0 : i32
    return %arg0, %c0_i32, %c0_i32_0 : i32, i32, i32
  }
  func.func @transform_1(%arg0: i32) -> (i32, i32) {
    %c0_i32 = arith.constant 0 : i32
    %c0_i32_0 = arith.constant 0 : i32
    %c0_i32_1 = arith.constant 0 : i32
    return %c0_i32, %c0_i32_0 : i32, i32
  }
  func.func @transform_2(%arg0: i32) -> (i32, i32) {
    %c0_i32 = arith.constant 0 : i32
    %c0_i32_0 = arith.constant 0 : i32
    %c0_i32_1 = arith.constant 0 : i32
    return %c0_i32, %c0_i32_0 : i32, i32
  }
  func.func @transform_3(%arg0: i32) -> (i32, i32) {
    %c0_i32 = arith.constant 0 : i32
    %c0_i32_0 = arith.constant 0 : i32
    %c0_i32_1 = arith.constant 0 : i32
    return %c0_i32, %c0_i32_0 : i32, i32
  }
  func.func @transform_4(%arg0: i32) -> (i32, i32, i32) {
    %c0_i32 = arith.constant 0 : i32
    %c0_i32_0 = arith.constant 0 : i32
    %c0_i32_1 = arith.constant 0 : i32
    %c0_i32_2 = arith.constant 0 : i32
    return %c0_i32, %c0_i32_0, %c0_i32_1 : i32, i32, i32
  }
  func.func @transform_5(%arg0: i32) -> (i32, i32, i32) {
    %c0_i32 = arith.constant 0 : i32
    %c0_i32_0 = arith.constant 0 : i32
    %c0_i32_1 = arith.constant 0 : i32
    %c0_i32_2 = arith.constant 0 : i32
    return %c0_i32, %c0_i32_0, %c0_i32_1 : i32, i32, i32
  }
  func.func @transform_6(%arg0: i32) -> (i32, i32, i32) {
    %c0_i32 = arith.constant 0 : i32
    %c0_i32_0 = arith.constant 0 : i32
    %c0_i32_1 = arith.constant 0 : i32
    %c0_i32_2 = arith.constant 0 : i32
    return %c0_i32, %c0_i32_0, %c0_i32_1 : i32, i32, i32
  }
  func.func @transform_7(%arg0: i32) -> (i32, i32, i32) {
    %c0_i32 = arith.constant 0 : i32
    %c0_i32_0 = arith.constant 0 : i32
    %c0_i32_1 = arith.constant 0 : i32
    %c0_i32_2 = arith.constant 0 : i32
    return %c0_i32, %c0_i32_0, %c0_i32_1 : i32, i32, i32
  }
  func.func @transform_8(%arg0: i32) -> (i32, i32) {
    %c0_i32 = arith.constant 0 : i32
    %c0_i32_0 = arith.constant 0 : i32
    %c0_i32_1 = arith.constant 0 : i32
    return %c0_i32, %c0_i32_0 : i32, i32
  }
  func.func @transform_9(%arg0: i32) -> (i32, i32) {
    %c0_i32 = arith.constant 0 : i32
    %c0_i32_0 = arith.constant 0 : i32
    %c0_i32_1 = arith.constant 0 : i32
    return %c0_i32, %c0_i32_0 : i32, i32
  }
  func.func @transform_10(%arg0: i32) -> (i32, i32) {
    %c0_i32 = arith.constant 0 : i32
    %c0_i32_0 = arith.constant 0 : i32
    %c0_i32_1 = arith.constant 0 : i32
    return %c0_i32, %c0_i32_0 : i32, i32
  }
  func.func @transform_11(%arg0: i32) -> (i32, i32) {
    %c0_i32 = arith.constant 0 : i32
    %c0_i32_0 = arith.constant 0 : i32
    %c0_i32_1 = arith.constant 0 : i32
    return %c0_i32, %c0_i32_0 : i32, i32
  }
  func.func @transform_12(%arg0: i32) -> (i32, i32, i32) {
    %c0_i32 = arith.constant 0 : i32
    %c0_i32_0 = arith.constant 0 : i32
    %c0_i32_1 = arith.constant 0 : i32
    %c0_i32_2 = arith.constant 0 : i32
    return %c0_i32, %c0_i32_0, %c0_i32_1 : i32, i32, i32
  }
  func.func @transform_13(%arg0: i32) -> (i32, i32, i32) {
    %c0_i32 = arith.constant 0 : i32
    %c0_i32_0 = arith.constant 0 : i32
    %c0_i32_1 = arith.constant 0 : i32
    %c0_i32_2 = arith.constant 0 : i32
    return %c0_i32, %c0_i32_0, %c0_i32_1 : i32, i32, i32
  }
  func.func @transform_14(%arg0: i32) -> (i32, i32, i32) {
    %c0_i32 = arith.constant 0 : i32
    %c0_i32_0 = arith.constant 0 : i32
    %c0_i32_1 = arith.constant 0 : i32
    %c0_i32_2 = arith.constant 0 : i32
    return %c0_i32, %c0_i32_0, %c0_i32_1 : i32, i32, i32
  }
  func.func @transform_15(%arg0: i32) -> (i32, i32, i32) {
    %c0_i32 = arith.constant 0 : i32
    %c0_i32_0 = arith.constant 0 : i32
    %c0_i32_1 = arith.constant 0 : i32
    %c0_i32_2 = arith.constant 0 : i32
    return %c0_i32, %c0_i32_0, %c0_i32_1 : i32, i32, i32
  }
  func.func @transform_16(%arg0: i32) -> (i32, i32) {
    %c0_i32 = arith.constant 0 : i32
    %c0_i32_0 = arith.constant 0 : i32
    %c0_i32_1 = arith.constant 0 : i32
    return %c0_i32, %c0_i32_0 : i32, i32
  }
  func.func @transform_17(%arg0: i32) -> (i32, i32) {
    %c0_i32 = arith.constant 0 : i32
    %c0_i32_0 = arith.constant 0 : i32
    %c0_i32_1 = arith.constant 0 : i32
    return %c0_i32, %c0_i32_0 : i32, i32
  }
  func.func @transform_18(%arg0: i32) -> (i32, i32, i32) {
    %c0_i32 = arith.constant 0 : i32
    %c0_i32_0 = arith.constant 0 : i32
    %c0_i32_1 = arith.constant 0 : i32
    return %arg0, %c0_i32, %c0_i32_0 : i32, i32, i32
  }
}

module attributes {stable_mosaic.version = 11 : i64} {
  func.func @_hierarchy_kernel(%arg0: i32, %arg1: memref<1x4x32xf32, #tpu.memory_space<vmem>>, %arg2: memref<32x4xf32, #tpu.memory_space<vmem>>, %arg3: memref<32x1xf32, #tpu.memory_space<vmem>>, %arg4: memref<2x64x96xf32, #tpu.memory_space<vmem>>, %arg5: memref<2x64x1xf32, #tpu.memory_space<vmem>>, %arg6: memref<2x64x32xf32, #tpu.memory_space<vmem>>, %arg7: memref<2x64x1xf32, #tpu.memory_space<vmem>>, %arg8: memref<2x64x96xf32, #tpu.memory_space<vmem>>, %arg9: memref<2x64x1xf32, #tpu.memory_space<vmem>>, %arg10: memref<2x64x32xf32, #tpu.memory_space<vmem>>, %arg11: memref<2x64x1xf32, #tpu.memory_space<vmem>>, %arg12: memref<4x32xf32, #tpu.memory_space<vmem>>, %arg13: memref<4x1xf32, #tpu.memory_space<vmem>>, %arg14: memref<4x32xf32, #tpu.memory_space<vmem>>, %arg15: memref<4x1xf32, #tpu.memory_space<vmem>>, %arg16: memref<32x32xf32, #tpu.memory_space<vmem>>, %arg17: memref<32x32xf32, #tpu.memory_space<vmem>>, %arg18: memref<1x4x32xf32, #tpu.memory_space<vmem>>, %arg19: memref<32x36xf32, #tpu.memory_space<vmem>>) attributes {dimension_semantics = [#tpu.dimension_semantics<parallel>], iteration_bounds = array<i64: 2>, scalar_prefetch = 0 : i64, scratch_operands = 1 : i64, tpu.core_type = #tpu.core_type<tc>, window_params = [{transform_indices = @transform_0, window_bounds = array<i64: 1, 4, 32>}, {pipeline_mode = #tpu.pipeline_mode<synchronous>, transform_indices = @transform_1, window_bounds = array<i64: 32, 4>}, {pipeline_mode = #tpu.pipeline_mode<synchronous>, transform_indices = @transform_2, window_bounds = array<i64: 32, 1>}, {pipeline_mode = #tpu.pipeline_mode<synchronous>, transform_indices = @transform_3, window_bounds = array<i64: 2, 64, 96>}, {pipeline_mode = #tpu.pipeline_mode<synchronous>, transform_indices = @transform_4, window_bounds = array<i64: 2, 64, 1>}, {pipeline_mode = #tpu.pipeline_mode<synchronous>, transform_indices = @transform_5, window_bounds = array<i64: 2, 64, 32>}, {pipeline_mode = #tpu.pipeline_mode<synchronous>, transform_indices = @transform_6, window_bounds = array<i64: 2, 64, 1>}, {pipeline_mode = #tpu.pipeline_mode<synchronous>, transform_indices = @transform_7, window_bounds = array<i64: 2, 64, 96>}, {pipeline_mode = #tpu.pipeline_mode<synchronous>, transform_indices = @transform_8, window_bounds = array<i64: 2, 64, 1>}, {pipeline_mode = #tpu.pipeline_mode<synchronous>, transform_indices = @transform_9, window_bounds = array<i64: 2, 64, 32>}, {pipeline_mode = #tpu.pipeline_mode<synchronous>, transform_indices = @transform_10, window_bounds = array<i64: 2, 64, 1>}, {pipeline_mode = #tpu.pipeline_mode<synchronous>, transform_indices = @transform_11, window_bounds = array<i64: 4, 32>}, {pipeline_mode = #tpu.pipeline_mode<synchronous>, transform_indices = @transform_12, window_bounds = array<i64: 4, 1>}, {pipeline_mode = #tpu.pipeline_mode<synchronous>, transform_indices = @transform_13, window_bounds = array<i64: 4, 32>}, {pipeline_mode = #tpu.pipeline_mode<synchronous>, transform_indices = @transform_14, window_bounds = array<i64: 4, 1>}, {pipeline_mode = #tpu.pipeline_mode<synchronous>, transform_indices = @transform_15, window_bounds = array<i64: 32, 32>}, {pipeline_mode = #tpu.pipeline_mode<synchronous>, transform_indices = @transform_16, window_bounds = array<i64: 32, 32>}, {transform_indices = @transform_17, window_bounds = array<i64: 1, 4, 32>}]} {
    %cst = arith.constant 0.000000e+00 : f32
    %0 = vector.broadcast %cst : f32 to vector<32x36xf32>
    %c0 = arith.constant 0 : index
    %c0_0 = arith.constant 0 : index
    %1 = vector.load %arg19[%c0, %c0_0] : memref<32x36xf32, #tpu.memory_space<vmem>>, vector<32x36xf32>
    tpu.vector_store %arg19[%c0, %c0_0], %0 {strides = array<i32>} : memref<32x36xf32, #tpu.memory_space<vmem>>, vector<32x36xf32>,
    %c0_1 = arith.constant 0 : index
    %c0_2 = arith.constant 0 : index
    %c0_3 = arith.constant 0 : index
    %2 = vector.load %arg1[%c0_1, %c0_2, %c0_3] : memref<1x4x32xf32, #tpu.memory_space<vmem>>, vector<1x4x32xf32>
    %3 = vector.shape_cast %2 : vector<1x4x32xf32> to vector<4x32xf32>
    %c0_4 = arith.constant 0 : index
    %c0_5 = arith.constant 0 : index
    %4 = vector.load %arg2[%c0_4, %c0_5] : memref<32x4xf32, #tpu.memory_space<vmem>>, vector<32x4xf32>
    %cst_6 = arith.constant dense<0.000000e+00> : vector<32x32xf32>
    %5 = tpu.matmul %4, %3, %cst_6 {dimension_numbers = #tpu.dot_dimension_numbers<[1], [0], [0], [1], [0, 0, 1, 1], [], []>} : vector<32x4xf32>, vector<4x32xf32>, vector<32x32xf32> -> vector<32x32xf32>
    %c0_7 = arith.constant 0 : index
    %c0_8 = arith.constant 0 : index
    %6 = vector.load %arg3[%c0_7, %c0_8] : memref<32x1xf32, #tpu.memory_space<vmem>>, vector<32x1xf32>
    %7 = vector.broadcast %6 : vector<32x1xf32> to vector<32x32xf32>
    %8 = arith.addf %5, %7 : vector<32x32xf32>
    %c0_9 = arith.constant 0 : index
    %c0_10 = arith.constant 0 : index
    %9 = vector.load %arg12[%c0_9, %c0_10] : memref<4x32xf32, #tpu.memory_space<vmem>>, vector<4x32xf32>
    %cst_11 = arith.constant 0.000000e+00 : f32
    %10 = vector.broadcast %cst_11 : f32 to vector<32x32xf32>
    %c0_12 = arith.constant 0 : index
    %c2 = arith.constant 2 : index
    %11 = vector.load %arg19[%c0_12, %c2] : memref<32x36xf32, #tpu.memory_space<vmem>>, vector<32x32xf32>
    tpu.vector_store %arg19[%c0_12, %c2], %8 {strides = array<i32>} : memref<32x36xf32, #tpu.memory_space<vmem>>, vector<32x32xf32>,
    %c0_13 = arith.constant 0 : index
    %c1 = arith.constant 1 : index
    %12 = vector.load %arg19[%c0_13, %c1] : memref<32x36xf32, #tpu.memory_space<vmem>>, vector<32x32xf32>
    %c0_14 = arith.constant 0 : index
    %c2_15 = arith.constant 2 : index
    %13 = vector.load %arg19[%c0_14, %c2_15] : memref<32x36xf32, #tpu.memory_space<vmem>>, vector<32x32xf32>
    %c0_16 = arith.constant 0 : index
    %c3 = arith.constant 3 : index
    %14 = vector.load %arg19[%c0_16, %c3] : memref<32x36xf32, #tpu.memory_space<vmem>>, vector<32x32xf32>
    %15 = tpu.concatenate %12, %13, %14 in 0 : vector<32x32xf32>, vector<32x32xf32>, vector<32x32xf32> -> vector<96x32xf32>
    %c0_17 = arith.constant 0 : index
    %c0_18 = arith.constant 0 : index
    %c0_19 = arith.constant 0 : index
    %16 = vector.load %arg4[%c0_17, %c0_18, %c0_19] : memref<2x64x96xf32, #tpu.memory_space<vmem>>, vector<1x64x96xf32>
    %17 = vector.shape_cast %16 : vector<1x64x96xf32> to vector<64x96xf32>
    %cst_20 = arith.constant dense<0.000000e+00> : vector<64x32xf32>
    %18 = tpu.matmul %17, %15, %cst_20 {dimension_numbers = #tpu.dot_dimension_numbers<[1], [0], [0], [1], [0, 0, 1, 1], [], []>} : vector<64x96xf32>, vector<96x32xf32>, vector<64x32xf32> -> vector<64x32xf32>
    %c0_21 = arith.constant 0 : index
    %c0_22 = arith.constant 0 : index
    %c0_23 = arith.constant 0 : index
    %19 = vector.load %arg5[%c0_21, %c0_22, %c0_23] : memref<2x64x1xf32, #tpu.memory_space<vmem>>, vector<1x64x1xf32>
    %20 = vector.shape_cast %19 : vector<1x64x1xf32> to vector<64x1xf32>
    %21 = vector.broadcast %20 : vector<64x1xf32> to vector<64x32xf32>
    %22 = arith.addf %18, %21 : vector<64x32xf32>
    %23 = vector.extract_strided_slice %22 {offsets = [0, 0], sizes = [32, 32], strides = [1, 1]} : vector<64x32xf32> to vector<32x32xf32>
    %24 = math.tanh %23 : vector<32x32xf32>
    %25 = vector.extract_strided_slice %22 {offsets = [32, 0], sizes = [32, 32], strides = [1, 1]} : vector<64x32xf32> to vector<32x32xf32>
    %26 = arith.negf %25 : vector<32x32xf32>
    %27 = math.exp %26 : vector<32x32xf32>
    %cst_24 = arith.constant 1.000000e+00 : f32
    %28 = vector.broadcast %cst_24 : f32 to vector<32x32xf32>
    %29 = arith.addf %28, %27 : vector<32x32xf32>
    %30 = arith.divf %28, %29 : vector<32x32xf32>
    %31 = arith.mulf %24, %30 : vector<32x32xf32>
    %c0_25 = arith.constant 0 : index
    %c0_26 = arith.constant 0 : index
    %c0_27 = arith.constant 0 : index
    %32 = vector.load %arg6[%c0_25, %c0_26, %c0_27] : memref<2x64x32xf32, #tpu.memory_space<vmem>>, vector<1x64x32xf32>
    %33 = vector.shape_cast %32 : vector<1x64x32xf32> to vector<64x32xf32>
    %cst_28 = arith.constant dense<0.000000e+00> : vector<64x32xf32>
    %34 = tpu.matmul %33, %31, %cst_28 {dimension_numbers = #tpu.dot_dimension_numbers<[1], [0], [0], [1], [0, 0, 1, 1], [], []>} : vector<64x32xf32>, vector<32x32xf32>, vector<64x32xf32> -> vector<64x32xf32>
    %c0_29 = arith.constant 0 : index
    %c0_30 = arith.constant 0 : index
    %c0_31 = arith.constant 0 : index
    %35 = vector.load %arg7[%c0_29, %c0_30, %c0_31] : memref<2x64x1xf32, #tpu.memory_space<vmem>>, vector<1x64x1xf32>
    %36 = vector.shape_cast %35 : vector<1x64x1xf32> to vector<64x1xf32>
    %37 = vector.broadcast %36 : vector<64x1xf32> to vector<64x32xf32>
    %38 = arith.addf %34, %37 : vector<64x32xf32>
    %39 = vector.extract_strided_slice %38 {offsets = [0, 0], sizes = [32, 32], strides = [1, 1]} : vector<64x32xf32> to vector<32x32xf32>
    %40 = arith.addf %8, %39 : vector<32x32xf32>
    %41 = vector.extract_strided_slice %38 {offsets = [32, 0], sizes = [32, 32], strides = [1, 1]} : vector<64x32xf32> to vector<32x32xf32>
    %42 = arith.addf %10, %41 : vector<32x32xf32>
    %c0_32 = arith.constant 0 : index
    %c2_33 = arith.constant 2 : index
    %43 = vector.load %arg19[%c0_32, %c2_33] : memref<32x36xf32, #tpu.memory_space<vmem>>, vector<32x32xf32>
    tpu.vector_store %arg19[%c0_32, %c2_33], %40 {strides = array<i32>} : memref<32x36xf32, #tpu.memory_space<vmem>>, vector<32x32xf32>,
    %c0_34 = arith.constant 0 : index
    %c0_35 = arith.constant 0 : index
    %44 = vector.load %arg19[%c0_34, %c0_35] : memref<32x36xf32, #tpu.memory_space<vmem>>, vector<32x32xf32>
    %c0_36 = arith.constant 0 : index
    %c2_37 = arith.constant 2 : index
    %45 = vector.load %arg19[%c0_36, %c2_37] : memref<32x36xf32, #tpu.memory_space<vmem>>, vector<32x32xf32>
    %c0_38 = arith.constant 0 : index
    %c4 = arith.constant 4 : index
    %46 = vector.load %arg19[%c0_38, %c4] : memref<32x36xf32, #tpu.memory_space<vmem>>, vector<32x32xf32>
    %47 = tpu.concatenate %44, %45, %46 in 0 : vector<32x32xf32>, vector<32x32xf32>, vector<32x32xf32> -> vector<96x32xf32>
    %c1_39 = arith.constant 1 : index
    %c0_40 = arith.constant 0 : index
    %c0_41 = arith.constant 0 : index
    %48 = vector.load %arg4[%c1_39, %c0_40, %c0_41] : memref<2x64x96xf32, #tpu.memory_space<vmem>>, vector<1x64x96xf32>
    %49 = vector.shape_cast %48 : vector<1x64x96xf32> to vector<64x96xf32>
    %cst_42 = arith.constant dense<0.000000e+00> : vector<64x32xf32>
    %50 = tpu.matmul %49, %47, %cst_42 {dimension_numbers = #tpu.dot_dimension_numbers<[1], [0], [0], [1], [0, 0, 1, 1], [], []>} : vector<64x96xf32>, vector<96x32xf32>, vector<64x32xf32> -> vector<64x32xf32>
    %c1_43 = arith.constant 1 : index
    %c0_44 = arith.constant 0 : index
    %c0_45 = arith.constant 0 : index
    %51 = vector.load %arg5[%c1_43, %c0_44, %c0_45] : memref<2x64x1xf32, #tpu.memory_space<vmem>>, vector<1x64x1xf32>
    %52 = vector.shape_cast %51 : vector<1x64x1xf32> to vector<64x1xf32>
    %53 = vector.broadcast %52 : vector<64x1xf32> to vector<64x32xf32>
    %54 = arith.addf %50, %53 : vector<64x32xf32>
    %55 = vector.extract_strided_slice %54 {offsets = [0, 0], sizes = [32, 32], strides = [1, 1]} : vector<64x32xf32> to vector<32x32xf32>
    %56 = math.tanh %55 : vector<32x32xf32>
    %57 = vector.extract_strided_slice %54 {offsets = [32, 0], sizes = [32, 32], strides = [1, 1]} : vector<64x32xf32> to vector<32x32xf32>
    %58 = arith.negf %57 : vector<32x32xf32>
    %59 = math.exp %58 : vector<32x32xf32>
    %cst_46 = arith.constant 1.000000e+00 : f32
    %60 = vector.broadcast %cst_46 : f32 to vector<32x32xf32>
    %61 = arith.addf %60, %59 : vector<32x32xf32>
    %62 = arith.divf %60, %61 : vector<32x32xf32>
    %63 = arith.mulf %56, %62 : vector<32x32xf32>
    %c1_47 = arith.constant 1 : index
    %c0_48 = arith.constant 0 : index
    %c0_49 = arith.constant 0 : index
    %64 = vector.load %arg6[%c1_47, %c0_48, %c0_49] : memref<2x64x32xf32, #tpu.memory_space<vmem>>, vector<1x64x32xf32>
    %65 = vector.shape_cast %64 : vector<1x64x32xf32> to vector<64x32xf32>
    %cst_50 = arith.constant dense<0.000000e+00> : vector<64x32xf32>
    %66 = tpu.matmul %65, %63, %cst_50 {dimension_numbers = #tpu.dot_dimension_numbers<[1], [0], [0], [1], [0, 0, 1, 1], [], []>} : vector<64x32xf32>, vector<32x32xf32>, vector<64x32xf32> -> vector<64x32xf32>
    %c1_51 = arith.constant 1 : index
    %c0_52 = arith.constant 0 : index
    %c0_53 = arith.constant 0 : index
    %67 = vector.load %arg7[%c1_51, %c0_52, %c0_53] : memref<2x64x1xf32, #tpu.memory_space<vmem>>, vector<1x64x1xf32>
    %68 = vector.shape_cast %67 : vector<1x64x1xf32> to vector<64x1xf32>
    %69 = vector.broadcast %68 : vector<64x1xf32> to vector<64x32xf32>
    %70 = arith.addf %66, %69 : vector<64x32xf32>
    %71 = vector.extract_strided_slice %70 {offsets = [32, 0], sizes = [32, 32], strides = [1, 1]} : vector<64x32xf32> to vector<32x32xf32>
    %72 = arith.addf %42, %71 : vector<32x32xf32>
    %cst_54 = arith.constant dense<0.000000e+00> : vector<4x32xf32>
    %73 = tpu.matmul %9, %72, %cst_54 {dimension_numbers = #tpu.dot_dimension_numbers<[1], [0], [0], [1], [0, 0, 1, 1], [], []>} : vector<4x32xf32>, vector<32x32xf32>, vector<4x32xf32> -> vector<4x32xf32>
    %c0_55 = arith.constant 0 : index
    %c0_56 = arith.constant 0 : index
    %74 = vector.load %arg13[%c0_55, %c0_56] : memref<4x1xf32, #tpu.memory_space<vmem>>, vector<4x1xf32>
    %75 = vector.broadcast %74 : vector<4x1xf32> to vector<4x32xf32>
    %76 = arith.addf %73, %75 : vector<4x32xf32>
    %c0_57 = arith.constant 0 : index
    %c0_58 = arith.constant 0 : index
    %77 = vector.load %arg14[%c0_57, %c0_58] : memref<4x32xf32, #tpu.memory_space<vmem>>, vector<4x32xf32>
    %cst_59 = arith.constant 0.000000e+00 : f32
    %78 = vector.broadcast %cst_59 : f32 to vector<32x32xf32>
    %c0_60 = arith.constant 0 : index
    %c2_61 = arith.constant 2 : index
    %79 = vector.load %arg19[%c0_60, %c2_61] : memref<32x36xf32, #tpu.memory_space<vmem>>, vector<32x32xf32>
    tpu.vector_store %arg19[%c0_60, %c2_61], %8 {strides = array<i32>} : memref<32x36xf32, #tpu.memory_space<vmem>>, vector<32x32xf32>,
    %c0_62 = arith.constant 0 : index
    %c1_63 = arith.constant 1 : index
    %80 = vector.load %arg19[%c0_62, %c1_63] : memref<32x36xf32, #tpu.memory_space<vmem>>, vector<32x32xf32>
    %c0_64 = arith.constant 0 : index
    %c2_65 = arith.constant 2 : index
    %81 = vector.load %arg19[%c0_64, %c2_65] : memref<32x36xf32, #tpu.memory_space<vmem>>, vector<32x32xf32>
    %c0_66 = arith.constant 0 : index
    %c3_67 = arith.constant 3 : index
    %82 = vector.load %arg19[%c0_66, %c3_67] : memref<32x36xf32, #tpu.memory_space<vmem>>, vector<32x32xf32>
    %83 = tpu.concatenate %80, %81, %82 in 0 : vector<32x32xf32>, vector<32x32xf32>, vector<32x32xf32> -> vector<96x32xf32>
    %c0_68 = arith.constant 0 : index
    %c0_69 = arith.constant 0 : index
    %c0_70 = arith.constant 0 : index
    %84 = vector.load %arg8[%c0_68, %c0_69, %c0_70] : memref<2x64x96xf32, #tpu.memory_space<vmem>>, vector<1x64x96xf32>
    %85 = vector.shape_cast %84 : vector<1x64x96xf32> to vector<64x96xf32>
    %cst_71 = arith.constant dense<0.000000e+00> : vector<64x32xf32>
    %86 = tpu.matmul %85, %83, %cst_71 {dimension_numbers = #tpu.dot_dimension_numbers<[1], [0], [0], [1], [0, 0, 1, 1], [], []>} : vector<64x96xf32>, vector<96x32xf32>, vector<64x32xf32> -> vector<64x32xf32>
    %c0_72 = arith.constant 0 : index
    %c0_73 = arith.constant 0 : index
    %c0_74 = arith.constant 0 : index
    %87 = vector.load %arg9[%c0_72, %c0_73, %c0_74] : memref<2x64x1xf32, #tpu.memory_space<vmem>>, vector<1x64x1xf32>
    %88 = vector.shape_cast %87 : vector<1x64x1xf32> to vector<64x1xf32>
    %89 = vector.broadcast %88 : vector<64x1xf32> to vector<64x32xf32>
    %90 = arith.addf %86, %89 : vector<64x32xf32>
    %91 = vector.extract_strided_slice %90 {offsets = [0, 0], sizes = [32, 32], strides = [1, 1]} : vector<64x32xf32> to vector<32x32xf32>
    %92 = math.tanh %91 : vector<32x32xf32>
    %93 = vector.extract_strided_slice %90 {offsets = [32, 0], sizes = [32, 32], strides = [1, 1]} : vector<64x32xf32> to vector<32x32xf32>
    %94 = arith.negf %93 : vector<32x32xf32>
    %95 = math.exp %94 : vector<32x32xf32>
    %cst_75 = arith.constant 1.000000e+00 : f32
    %96 = vector.broadcast %cst_75 : f32 to vector<32x32xf32>
    %97 = arith.addf %96, %95 : vector<32x32xf32>
    %98 = arith.divf %96, %97 : vector<32x32xf32>
    %99 = arith.mulf %92, %98 : vector<32x32xf32>
    %c0_76 = arith.constant 0 : index
    %c0_77 = arith.constant 0 : index
    %c0_78 = arith.constant 0 : index
    %100 = vector.load %arg10[%c0_76, %c0_77, %c0_78] : memref<2x64x32xf32, #tpu.memory_space<vmem>>, vector<1x64x32xf32>
    %101 = vector.shape_cast %100 : vector<1x64x32xf32> to vector<64x32xf32>
    %cst_79 = arith.constant dense<0.000000e+00> : vector<64x32xf32>
    %102 = tpu.matmul %101, %99, %cst_79 {dimension_numbers = #tpu.dot_dimension_numbers<[1], [0], [0], [1], [0, 0, 1, 1], [], []>} : vector<64x32xf32>, vector<32x32xf32>, vector<64x32xf32> -> vector<64x32xf32>
    %c0_80 = arith.constant 0 : index
    %c0_81 = arith.constant 0 : index
    %c0_82 = arith.constant 0 : index
    %103 = vector.load %arg11[%c0_80, %c0_81, %c0_82] : memref<2x64x1xf32, #tpu.memory_space<vmem>>, vector<1x64x1xf32>
    %104 = vector.shape_cast %103 : vector<1x64x1xf32> to vector<64x1xf32>
    %105 = vector.broadcast %104 : vector<64x1xf32> to vector<64x32xf32>
    %106 = arith.addf %102, %105 : vector<64x32xf32>
    %107 = vector.extract_strided_slice %106 {offsets = [0, 0], sizes = [32, 32], strides = [1, 1]} : vector<64x32xf32> to vector<32x32xf32>
    %108 = arith.addf %8, %107 : vector<32x32xf32>
    %109 = vector.extract_strided_slice %106 {offsets = [32, 0], sizes = [32, 32], strides = [1, 1]} : vector<64x32xf32> to vector<32x32xf32>
    %110 = arith.addf %78, %109 : vector<32x32xf32>
    %c0_83 = arith.constant 0 : index
    %c2_84 = arith.constant 2 : index
    %111 = vector.load %arg19[%c0_83, %c2_84] : memref<32x36xf32, #tpu.memory_space<vmem>>, vector<32x32xf32>
    tpu.vector_store %arg19[%c0_83, %c2_84], %108 {strides = array<i32>} : memref<32x36xf32, #tpu.memory_space<vmem>>, vector<32x32xf32>,
    %c0_85 = arith.constant 0 : index
    %c0_86 = arith.constant 0 : index
    %112 = vector.load %arg19[%c0_85, %c0_86] : memref<32x36xf32, #tpu.memory_space<vmem>>, vector<32x32xf32>
    %c0_87 = arith.constant 0 : index
    %c2_88 = arith.constant 2 : index
    %113 = vector.load %arg19[%c0_87, %c2_88] : memref<32x36xf32, #tpu.memory_space<vmem>>, vector<32x32xf32>
    %c0_89 = arith.constant 0 : index
    %c4_90 = arith.constant 4 : index
    %114 = vector.load %arg19[%c0_89, %c4_90] : memref<32x36xf32, #tpu.memory_space<vmem>>, vector<32x32xf32>
    %115 = tpu.concatenate %112, %113, %114 in 0 : vector<32x32xf32>, vector<32x32xf32>, vector<32x32xf32> -> vector<96x32xf32>
    %c1_91 = arith.constant 1 : index
    %c0_92 = arith.constant 0 : index
    %c0_93 = arith.constant 0 : index
    %116 = vector.load %arg8[%c1_91, %c0_92, %c0_93] : memref<2x64x96xf32, #tpu.memory_space<vmem>>, vector<1x64x96xf32>
    %117 = vector.shape_cast %116 : vector<1x64x96xf32> to vector<64x96xf32>
    %cst_94 = arith.constant dense<0.000000e+00> : vector<64x32xf32>
    %118 = tpu.matmul %117, %115, %cst_94 {dimension_numbers = #tpu.dot_dimension_numbers<[1], [0], [0], [1], [0, 0, 1, 1], [], []>} : vector<64x96xf32>, vector<96x32xf32>, vector<64x32xf32> -> vector<64x32xf32>
    %c1_95 = arith.constant 1 : index
    %c0_96 = arith.constant 0 : index
    %c0_97 = arith.constant 0 : index
    %119 = vector.load %arg9[%c1_95, %c0_96, %c0_97] : memref<2x64x1xf32, #tpu.memory_space<vmem>>, vector<1x64x1xf32>
    %120 = vector.shape_cast %119 : vector<1x64x1xf32> to vector<64x1xf32>
    %121 = vector.broadcast %120 : vector<64x1xf32> to vector<64x32xf32>
    %122 = arith.addf %118, %121 : vector<64x32xf32>
    %123 = vector.extract_strided_slice %122 {offsets = [0, 0], sizes = [32, 32], strides = [1, 1]} : vector<64x32xf32> to vector<32x32xf32>
    %124 = math.tanh %123 : vector<32x32xf32>
    %125 = vector.extract_strided_slice %122 {offsets = [32, 0], sizes = [32, 32], strides = [1, 1]} : vector<64x32xf32> to vector<32x32xf32>
    %126 = arith.negf %125 : vector<32x32xf32>
    %127 = math.exp %126 : vector<32x32xf32>
    %cst_98 = arith.constant 1.000000e+00 : f32
    %128 = vector.broadcast %cst_98 : f32 to vector<32x32xf32>
    %129 = arith.addf %128, %127 : vector<32x32xf32>
    %130 = arith.divf %128, %129 : vector<32x32xf32>
    %131 = arith.mulf %124, %130 : vector<32x32xf32>
    %c1_99 = arith.constant 1 : index
    %c0_100 = arith.constant 0 : index
    %c0_101 = arith.constant 0 : index
    %132 = vector.load %arg10[%c1_99, %c0_100, %c0_101] : memref<2x64x32xf32, #tpu.memory_space<vmem>>, vector<1x64x32xf32>
    %133 = vector.shape_cast %132 : vector<1x64x32xf32> to vector<64x32xf32>
    %cst_102 = arith.constant dense<0.000000e+00> : vector<64x32xf32>
    %134 = tpu.matmul %133, %131, %cst_102 {dimension_numbers = #tpu.dot_dimension_numbers<[1], [0], [0], [1], [0, 0, 1, 1], [], []>} : vector<64x32xf32>, vector<32x32xf32>, vector<64x32xf32> -> vector<64x32xf32>
    %c1_103 = arith.constant 1 : index
    %c0_104 = arith.constant 0 : index
    %c0_105 = arith.constant 0 : index
    %135 = vector.load %arg11[%c1_103, %c0_104, %c0_105] : memref<2x64x1xf32, #tpu.memory_space<vmem>>, vector<1x64x1xf32>
    %136 = vector.shape_cast %135 : vector<1x64x1xf32> to vector<64x1xf32>
    %137 = vector.broadcast %136 : vector<64x1xf32> to vector<64x32xf32>
    %138 = arith.addf %134, %137 : vector<64x32xf32>
    %139 = vector.extract_strided_slice %138 {offsets = [32, 0], sizes = [32, 32], strides = [1, 1]} : vector<64x32xf32> to vector<32x32xf32>
    %140 = arith.addf %110, %139 : vector<32x32xf32>
    %cst_106 = arith.constant dense<0.000000e+00> : vector<4x32xf32>
    %141 = tpu.matmul %77, %140, %cst_106 {dimension_numbers = #tpu.dot_dimension_numbers<[1], [0], [0], [1], [0, 0, 1, 1], [], []>} : vector<4x32xf32>, vector<32x32xf32>, vector<4x32xf32> -> vector<4x32xf32>
    %c0_107 = arith.constant 0 : index
    %c0_108 = arith.constant 0 : index
    %142 = vector.load %arg15[%c0_107, %c0_108] : memref<4x1xf32, #tpu.memory_space<vmem>>, vector<4x1xf32>
    %143 = vector.broadcast %142 : vector<4x1xf32> to vector<4x32xf32>
    %144 = arith.addf %141, %143 : vector<4x32xf32>
    %c0_109 = arith.constant 0 : index
    %c0_110 = arith.constant 0 : index
    %145 = vector.load %arg16[%c0_109, %c0_110] : memref<32x32xf32, #tpu.memory_space<vmem>>, vector<32x32xf32>
    %cst_111 = arith.constant dense<0.000000e+00> : vector<4x32xf32>
    %146 = tpu.matmul %76, %145, %cst_111 {dimension_numbers = #tpu.dot_dimension_numbers<[1], [0], [0], [1], [0, 0, 1, 1], [], []>} : vector<4x32xf32>, vector<32x32xf32>, vector<4x32xf32> -> vector<4x32xf32>
    %c0_112 = arith.constant 0 : index
    %c0_113 = arith.constant 0 : index
    %147 = vector.load %arg17[%c0_112, %c0_113] : memref<32x32xf32, #tpu.memory_space<vmem>>, vector<32x32xf32>
    %cst_114 = arith.constant dense<0.000000e+00> : vector<4x32xf32>
    %148 = tpu.matmul %144, %147, %cst_114 {dimension_numbers = #tpu.dot_dimension_numbers<[1], [0], [0], [1], [0, 0, 1, 1], [], []>} : vector<4x32xf32>, vector<32x32xf32>, vector<4x32xf32> -> vector<4x32xf32>
    %149 = arith.addf %146, %148 : vector<4x32xf32>
    %150 = arith.addf %3, %149 : vector<4x32xf32>
    %c0_115 = arith.constant 0 : index
    %c0_116 = arith.constant 0 : index
    %c0_117 = arith.constant 0 : index
    %151 = vector.load %arg18[%c0_115, %c0_116, %c0_117] : memref<1x4x32xf32, #tpu.memory_space<vmem>>, vector<1x4x32xf32>
    %152 = vector.shape_cast %151 : vector<1x4x32xf32> to vector<4x32xf32>
    %153 = vector.shape_cast %150 : vector<4x32xf32> to vector<1x4x32xf32>
    tpu.vector_store %arg18[%c0_115, %c0_116, %c0_117], %153 {strides = array<i32>} : memref<1x4x32xf32, #tpu.memory_space<vmem>>, vector<1x4x32xf32>,
    return
  }
  func.func @transform_0(%arg0: i32) -> (i32, i32, i32) {
    %c0_i32 = arith.constant 0 : i32
    %c0_i32_0 = arith.constant 0 : i32
    %c0_i32_1 = arith.constant 0 : i32
    return %arg0, %c0_i32, %c0_i32_0 : i32, i32, i32
  }
  func.func @transform_1(%arg0: i32) -> (i32, i32) {
    %c0_i32 = arith.constant 0 : i32
    %c0_i32_0 = arith.constant 0 : i32
    %c0_i32_1 = arith.constant 0 : i32
    return %c0_i32, %c0_i32_0 : i32, i32
  }
  func.func @transform_2(%arg0: i32) -> (i32, i32) {
    %c0_i32 = arith.constant 0 : i32
    %c0_i32_0 = arith.constant 0 : i32
    %c0_i32_1 = arith.constant 0 : i32
    return %c0_i32, %c0_i32_0 : i32, i32
  }
  func.func @transform_3(%arg0: i32) -> (i32, i32, i32) {
    %c0_i32 = arith.constant 0 : i32
    %c0_i32_0 = arith.constant 0 : i32
    %c0_i32_1 = arith.constant 0 : i32
    %c0_i32_2 = arith.constant 0 : i32
    return %c0_i32, %c0_i32_0, %c0_i32_1 : i32, i32, i32
  }
  func.func @transform_4(%arg0: i32) -> (i32, i32, i32) {
    %c0_i32 = arith.constant 0 : i32
    %c0_i32_0 = arith.constant 0 : i32
    %c0_i32_1 = arith.constant 0 : i32
    %c0_i32_2 = arith.constant 0 : i32
    return %c0_i32, %c0_i32_0, %c0_i32_1 : i32, i32, i32
  }
  func.func @transform_5(%arg0: i32) -> (i32, i32, i32) {
    %c0_i32 = arith.constant 0 : i32
    %c0_i32_0 = arith.constant 0 : i32
    %c0_i32_1 = arith.constant 0 : i32
    %c0_i32_2 = arith.constant 0 : i32
    return %c0_i32, %c0_i32_0, %c0_i32_1 : i32, i32, i32
  }
  func.func @transform_6(%arg0: i32) -> (i32, i32, i32) {
    %c0_i32 = arith.constant 0 : i32
    %c0_i32_0 = arith.constant 0 : i32
    %c0_i32_1 = arith.constant 0 : i32
    %c0_i32_2 = arith.constant 0 : i32
    return %c0_i32, %c0_i32_0, %c0_i32_1 : i32, i32, i32
  }
  func.func @transform_7(%arg0: i32) -> (i32, i32, i32) {
    %c0_i32 = arith.constant 0 : i32
    %c0_i32_0 = arith.constant 0 : i32
    %c0_i32_1 = arith.constant 0 : i32
    %c0_i32_2 = arith.constant 0 : i32
    return %c0_i32, %c0_i32_0, %c0_i32_1 : i32, i32, i32
  }
  func.func @transform_8(%arg0: i32) -> (i32, i32, i32) {
    %c0_i32 = arith.constant 0 : i32
    %c0_i32_0 = arith.constant 0 : i32
    %c0_i32_1 = arith.constant 0 : i32
    %c0_i32_2 = arith.constant 0 : i32
    return %c0_i32, %c0_i32_0, %c0_i32_1 : i32, i32, i32
  }
  func.func @transform_9(%arg0: i32) -> (i32, i32, i32) {
    %c0_i32 = arith.constant 0 : i32
    %c0_i32_0 = arith.constant 0 : i32
    %c0_i32_1 = arith.constant 0 : i32
    %c0_i32_2 = arith.constant 0 : i32
    return %c0_i32, %c0_i32_0, %c0_i32_1 : i32, i32, i32
  }
  func.func @transform_10(%arg0: i32) -> (i32, i32, i32) {
    %c0_i32 = arith.constant 0 : i32
    %c0_i32_0 = arith.constant 0 : i32
    %c0_i32_1 = arith.constant 0 : i32
    %c0_i32_2 = arith.constant 0 : i32
    return %c0_i32, %c0_i32_0, %c0_i32_1 : i32, i32, i32
  }
  func.func @transform_11(%arg0: i32) -> (i32, i32) {
    %c0_i32 = arith.constant 0 : i32
    %c0_i32_0 = arith.constant 0 : i32
    %c0_i32_1 = arith.constant 0 : i32
    return %c0_i32, %c0_i32_0 : i32, i32
  }
  func.func @transform_12(%arg0: i32) -> (i32, i32) {
    %c0_i32 = arith.constant 0 : i32
    %c0_i32_0 = arith.constant 0 : i32
    %c0_i32_1 = arith.constant 0 : i32
    return %c0_i32, %c0_i32_0 : i32, i32
  }
  func.func @transform_13(%arg0: i32) -> (i32, i32) {
    %c0_i32 = arith.constant 0 : i32
    %c0_i32_0 = arith.constant 0 : i32
    %c0_i32_1 = arith.constant 0 : i32
    return %c0_i32, %c0_i32_0 : i32, i32
  }
  func.func @transform_14(%arg0: i32) -> (i32, i32) {
    %c0_i32 = arith.constant 0 : i32
    %c0_i32_0 = arith.constant 0 : i32
    %c0_i32_1 = arith.constant 0 : i32
    return %c0_i32, %c0_i32_0 : i32, i32
  }
  func.func @transform_15(%arg0: i32) -> (i32, i32) {
    %c0_i32 = arith.constant 0 : i32
    %c0_i32_0 = arith.constant 0 : i32
    %c0_i32_1 = arith.constant 0 : i32
    return %c0_i32, %c0_i32_0 : i32, i32
  }
  func.func @transform_16(%arg0: i32) -> (i32, i32) {
    %c0_i32 = arith.constant 0 : i32
    %c0_i32_0 = arith.constant 0 : i32
    %c0_i32_1 = arith.constant 0 : i32
    return %c0_i32, %c0_i32_0 : i32, i32
  }
  func.func @transform_17(%arg0: i32) -> (i32, i32, i32) {
    %c0_i32 = arith.constant 0 : i32
    %c0_i32_0 = arith.constant 0 : i32
    %c0_i32_1 = arith.constant 0 : i32
    return %arg0, %c0_i32, %c0_i32_0 : i32, i32, i32
  }
}

</mosaic_0001>

<llo_original>
// kernel: encoder_forward.7
$region0: #{encoder_forward.7}
  #allocation0 [shape = 'u32[]', space=smem, size = 0x4, offset = 0x4, fixed_abs, tag = 'smem constant byte address 0x4 - core index']
  #allocation1 [shape = 'u32[72,128]{1,0:T(1,128)}', space=vmem, size = 0x9000, scoped, tag = 'internal scratch']
  #allocation2 [shape = 'f32[32,36]{1,0:T(8,128)}', space=vmem, size = 0x4000, scoped, tag = 'scratch operand']
  %s0 = inlined_call_operand.vmem [shape: f32[2,4,32], index: 0, kind: input, shape index: {}]
  %s1 = inlined_call_operand.vmem [shape: f32[32,4], index: 1, kind: input, shape index: {}]
  %s2 = inlined_call_operand.vmem [shape: f32[32,1], index: 2, kind: input, shape index: {}]
  %s3 = inlined_call_operand.vmem [shape: f32[2,64,96], index: 3, kind: input, shape index: {}]
  %s4 = inlined_call_operand.vmem [shape: f32[2,64,1], index: 4, kind: input, shape index: {}]
  %s5 = inlined_call_operand.vmem [shape: f32[2,64,32], index: 5, kind: input, shape index: {}]
  %s6 = inlined_call_operand.vmem [shape: f32[2,64,1], index: 6, kind: input, shape index: {}]
  %s7 = inlined_call_operand.vmem [shape: f32[2,64,96], index: 7, kind: input, shape index: {}]
  %s8 = inlined_call_operand.vmem [shape: f32[2,64,1], index: 8, kind: input, shape index: {}]
  %s9 = inlined_call_operand.vmem [shape: f32[2,64,32], index: 9, kind: input, shape index: {}]
  %s10 = inlined_call_operand.vmem [shape: f32[2,64,1], index: 10, kind: input, shape index: {}]
  %s11 = inlined_call_operand.vmem [shape: f32[4,32], index: 11, kind: input, shape index: {}]
  %s12 = inlined_call_operand.vmem [shape: f32[4,1], index: 12, kind: input, shape index: {}]
  %s13 = inlined_call_operand.vmem [shape: f32[4,32], index: 13, kind: input, shape index: {}]
  %s14 = inlined_call_operand.vmem [shape: f32[4,1], index: 14, kind: input, shape index: {}]
  %s15 = inlined_call_operand.vmem [shape: f32[32,32], index: 15, kind: input, shape index: {}]
  %s16 = inlined_call_operand.vmem [shape: f32[32,32], index: 16, kind: input, shape index: {}]
  %s17 = inlined_call_operand.vmem [shape: f32[2,4,32], index: 17, kind: output, shape index: {}]
  %s18 = sld [smem:[#allocation0]]
  $region101: #{encoder_forward.7} parent=0
    _
  %s20 = ssub.s32 1, %s18
  %s21 = scalar_select 0, %s20, %s18
  loop: start=0, step=1, limit=4
  $region2: #{encoder_forward.7} parent=0 // loop_pre_header
    _
  $region3: #{encoder_forward.7} parent=0 // loop_header
    %s23 = sphi 0, %s27
    %p24 = scmp.ge.s32.totalorder %s23, 4
    %s33 = sphi 0, %s35
    %s36 = sphi 0, %s33
    %s37 = sphi 0, %s36
    %s53 = sphi 0, %s37
    %s57 = sphi 0, %s57
    %s59 = sphi 0, %s57
    %s60 = sphi 0, %s59
    %s74 = sphi 0, %s60
    %s78 = sphi 0, %s78
    %s80 = sphi 0, %s78
    %s81 = sphi 0, %s80
    %s95 = sphi 0, %s81
    %s99 = sphi 0, %s99
    %s101 = sphi 0, %s99
    %s102 = sphi 0, %s101
    %s116 = sphi 0, %s102
    %s120 = sphi 0, %s120
    %s122 = sphi 0, %s120
    %s123 = sphi 0, %s122
    %s137 = sphi 0, %s123
    %s141 = sphi 0, %s141
    %s143 = sphi 0, %s141
    %s144 = sphi 0, %s143
    %s158 = sphi 0, %s144
    %s162 = sphi 0, %s162
    %s164 = sphi 0, %s162
    %s165 = sphi 0, %s164
    %s179 = sphi 0, %s165
    %s183 = sphi 0, %s183
    %s185 = sphi 0, %s183
    %s186 = sphi 0, %s185
    %s200 = sphi 0, %s186
    %s204 = sphi 0, %s204
    %s206 = sphi 0, %s204
    %s207 = sphi 0, %s206
    %s221 = sphi 0, %s207
    %s225 = sphi 0, %s225
    %s227 = sphi 0, %s225
    %s228 = sphi 0, %s227
    %s242 = sphi 0, %s228
    %s246 = sphi 0, %s246
    %s248 = sphi 0, %s246
    %s249 = sphi 0, %s248
    %s263 = sphi 0, %s249
    %s267 = sphi 0, %s267
    %s269 = sphi 0, %s267
    %s270 = sphi 0, %s269
    %s284 = sphi 0, %s270
    %s288 = sphi 0, %s288
    %s290 = sphi 0, %s288
    %s291 = sphi 0, %s290
    %s305 = sphi 0, %s291
    %s309 = sphi 0, %s309
    %s311 = sphi 0, %s309
    %s312 = sphi 0, %s311
    %s326 = sphi 0, %s312
    %s330 = sphi 0, %s330
    %s332 = sphi 0, %s330
    %s333 = sphi 0, %s332
    %s347 = sphi 0, %s333
    %s351 = sphi 0, %s351
    %s353 = sphi 0, %s351
    %s354 = sphi 0, %s353
    %s368 = sphi 0, %s354
    %s372 = sphi 0, %s372
    %s374 = sphi 0, %s372
    %s375 = sphi 0, %s374
    %s389 = sphi 0, %s375
    %s395 = sphi 0, %s397
    %s398 = sphi 0, %s395
    %s399 = sphi 0, %s398
    %s415 = sphi 0, %s399
  $region4: #{encoder_forward.7} parent=0 // loop_header_branch
    %26 = sbr.rel (%p24) target = $region8
  $region5: #{encoder_forward.7} parent=0 // loop_body
    %s28 = ssub.s32 %s23, 1
    %s29 = ssub.s32 %s23, 2
    %s30 = sadd.s32 %s23, 1
    %s31 = ssub.s32 %s23, %s30
    %p32 = scmp.eq.s32.totalorder %s31, 0
    %s34 = sadd.s32 %s33, 1
    %s35 = scalar_select %p32, %s33, %s34
    %p38 = pneg %p32
    %p39 = scmp.eq.s32.totalorder %s23, 1
    %p40 = por %p38, %p39
    %p41 = scmp.ne.s32.totalorder %s33, %s36
    %p42 = scmp.eq.s32.totalorder %s23, 0
    %p43 = por %p41, %p42
    %p44 = scmp.ne.s32.totalorder %s33, %s36
    %p45 = scmp.eq.s32.totalorder %s28, 1
    %p46 = por %p44, %p45
    %p47 = scmp.ne.s32.totalorder %s36, %s37
    %p48 = scmp.eq.s32.totalorder %s28, 0
    %p49 = por %p47, %p48
    %p50 = scmp.ne.s32.totalorder %s36, %s37
    %p51 = scmp.eq.s32.totalorder %s29, 1
    %p52 = por %p50, %p51
    %p54 = scmp.ne.s32.totalorder %s37, %s53
    %p55 = scmp.eq.s32.totalorder %s29, 0
    %p56 = por %p54, %p55
    %s58 = sadd.s32 %s57, 1
    %p61 = scmp.eq.s32.totalorder %s23, 1
    %p62 = scmp.ne.s32.totalorder %s57, %s59
    %p63 = scmp.eq.s32.totalorder %s23, 0
    %p64 = por %p62, %p63
    %p65 = scmp.ne.s32.totalorder %s57, %s59
    %p66 = scmp.eq.s32.totalorder %s28, 1
    %p67 = por %p65, %p66
    %p68 = scmp.ne.s32.totalorder %s59, %s60
    %p69 = scmp.eq.s32.totalorder %s28, 0
    %p70 = por %p68, %p69
    %p71 = scmp.ne.s32.totalorder %s59, %s60
    %p72 = scmp.eq.s32.totalorder %s29, 1
    %p73 = por %p71, %p72
    %p75 = scmp.ne.s32.totalorder %s60, %s74
    %p76 = scmp.eq.s32.totalorder %s29, 0
    %p77 = por %p75, %p76
    %s79 = sadd.s32 %s78, 1
    %p82 = scmp.eq.s32.totalorder %s23, 1
    %p83 = scmp.ne.s32.totalorder %s78, %s80
    %p84 = scmp.eq.s32.totalorder %s23, 0
    %p85 = por %p83, %p84
    %p86 = scmp.ne.s32.totalorder %s78, %s80
    %p87 = scmp.eq.s32.totalorder %s28, 1
    %p88 = por %p86, %p87
    %p89 = scmp.ne.s32.totalorder %s80, %s81
    %p90 = scmp.eq.s32.totalorder %s28, 0
    %p91 = por %p89, %p90
    %p92 = scmp.ne.s32.totalorder %s80, %s81
    %p93 = scmp.eq.s32.totalorder %s29, 1
    %p94 = por %p92, %p93
    %p96 = scmp.ne.s32.totalorder %s81, %s95
    %p97 = scmp.eq.s32.totalorder %s29, 0
    %p98 = por %p96, %p97
    %s100 = sadd.s32 %s99, 1
    %p103 = scmp.eq.s32.totalorder %s23, 1
    %p104 = scmp.ne.s32.totalorder %s99, %s101
    %p105 = scmp.eq.s32.totalorder %s23, 0
    %p106 = por %p104, %p105
    %p107 = scmp.ne.s32.totalorder %s99, %s101
    %p108 = scmp.eq.s32.totalorder %s28, 1
    %p109 = por %p107, %p108
    %p110 = scmp.ne.s32.totalorder %s101, %s102
    %p111 = scmp.eq.s32.totalorder %s28, 0
    %p112 = por %p110, %p111
    %p113 = scmp.ne.s32.totalorder %s101, %s102
    %p114 = scmp.eq.s32.totalorder %s29, 1
    %p115 = por %p113, %p114
    %p117 = scmp.ne.s32.totalorder %s102, %s116
    %p118 = scmp.eq.s32.totalorder %s29, 0
    %p119 = por %p117, %p118
    %s121 = sadd.s32 %s120, 1
    %p124 = scmp.eq.s32.totalorder %s23, 1
    %p125 = scmp.ne.s32.totalorder %s120, %s122
    %p126 = scmp.eq.s32.totalorder %s23, 0
    %p127 = por %p125, %p126
    %p128 = scmp.ne.s32.totalorder %s120, %s122
    %p129 = scmp.eq.s32.totalorder %s28, 1
    %p130 = por %p128, %p129
    %p131 = scmp.ne.s32.totalorder %s122, %s123
    %p132 = scmp.eq.s32.totalorder %s28, 0
    %p133 = por %p131, %p132
    %p134 = scmp.ne.s32.totalorder %s122, %s123
    %p135 = scmp.eq.s32.totalorder %s29, 1
    %p136 = por %p134, %p135
    %p138 = scmp.ne.s32.totalorder %s123, %s137
    %p139 = scmp.eq.s32.totalorder %s29, 0
    %p140 = por %p138, %p139
    %s142 = sadd.s32 %s141, 1
    %p145 = scmp.eq.s32.totalorder %s23, 1
    %p146 = scmp.ne.s32.totalorder %s141, %s143
    %p147 = scmp.eq.s32.totalorder %s23, 0
    %p148 = por %p146, %p147
    %p149 = scmp.ne.s32.totalorder %s141, %s143
    %p150 = scmp.eq.s32.totalorder %s28, 1
    %p151 = por %p149, %p150
    %p152 = scmp.ne.s32.totalorder %s143, %s144
    %p153 = scmp.eq.s32.totalorder %s28, 0
    %p154 = por %p152, %p153
    %p155 = scmp.ne.s32.totalorder %s143, %s144
    %p156 = scmp.eq.s32.totalorder %s29, 1
    %p157 = por %p155, %p156
    %p159 = scmp.ne.s32.totalorder %s144, %s158
    %p160 = scmp.eq.s32.totalorder %s29, 0
    %p161 = por %p159, %p160
    %s163 = sadd.s32 %s162, 1
    %p166 = scmp.eq.s32.totalorder %s23, 1
    %p167 = scmp.ne.s32.totalorder %s162, %s164
    %p168 = scmp.eq.s32.totalorder %s23, 0
    %p169 = por %p167, %p168
    %p170 = scmp.ne.s32.totalorder %s162, %s164
    %p171 = scmp.eq.s32.totalorder %s28, 1
    %p172 = por %p170, %p171
    %p173 = scmp.ne.s32.totalorder %s164, %s165
    %p174 = scmp.eq.s32.totalorder %s28, 0
    %p175 = por %p173, %p174
    %p176 = scmp.ne.s32.totalorder %s164, %s165
    %p177 = scmp.eq.s32.totalorder %s29, 1
    %p178 = por %p176, %p177
    %p180 = scmp.ne.s32.totalorder %s165, %s179
    %p181 = scmp.eq.s32.totalorder %s29, 0
    %p182 = por %p180, %p181
    %s184 = sadd.s32 %s183, 1
    %p187 = scmp.eq.s32.totalorder %s23, 1
    %p188 = scmp.ne.s32.totalorder %s183, %s185
    %p189 = scmp.eq.s32.totalorder %s23, 0
    %p190 = por %p188, %p189
    %p191 = scmp.ne.s32.totalorder %s183, %s185
    %p192 = scmp.eq.s32.totalorder %s28, 1
    %p193 = por %p191, %p192
    %p194 = scmp.ne.s32.totalorder %s185, %s186
    %p195 = scmp.eq.s32.totalorder %s28, 0
    %p196 = por %p194, %p195
    %p197 = scmp.ne.s32.totalorder %s185, %s186
    %p198 = scmp.eq.s32.totalorder %s29, 1
    %p199 = por %p197, %p198
    %p201 = scmp.ne.s32.totalorder %s186, %s200
    %p202 = scmp.eq.s32.totalorder %s29, 0
    %p203 = por %p201, %p202
    %s205 = sadd.s32 %s204, 1
    %p208 = scmp.eq.s32.totalorder %s23, 1
    %p209 = scmp.ne.s32.totalorder %s204, %s206
    %p210 = scmp.eq.s32.totalorder %s23, 0
    %p211 = por %p209, %p210
    %p212 = scmp.ne.s32.totalorder %s204, %s206
    %p213 = scmp.eq.s32.totalorder %s28, 1
    %p214 = por %p212, %p213
    %p215 = scmp.ne.s32.totalorder %s206, %s207
    %p216 = scmp.eq.s32.totalorder %s28, 0
    %p217 = por %p215, %p216
    %p218 = scmp.ne.s32.totalorder %s206, %s207
    %p219 = scmp.eq.s32.totalorder %s29, 1
    %p220 = por %p218, %p219
    %p222 = scmp.ne.s32.totalorder %s207, %s221
    %p223 = scmp.eq.s32.totalorder %s29, 0
    %p224 = por %p222, %p223
    %s226 = sadd.s32 %s225, 1
    %p229 = scmp.eq.s32.totalorder %s23, 1
    %p230 = scmp.ne.s32.totalorder %s225, %s227
    %p231 = scmp.eq.s32.totalorder %s23, 0
    %p232 = por %p230, %p231
    %p233 = scmp.ne.s32.totalorder %s225, %s227
    %p234 = scmp.eq.s32.totalorder %s28, 1
    %p235 = por %p233, %p234
    %p236 = scmp.ne.s32.totalorder %s227, %s228
    %p237 = scmp.eq.s32.totalorder %s28, 0
    %p238 = por %p236, %p237
    %p239 = scmp.ne.s32.totalorder %s227, %s228
    %p240 = scmp.eq.s32.totalorder %s29, 1
    %p241 = por %p239, %p240
    %p243 = scmp.ne.s32.totalorder %s228, %s242
    %p244 = scmp.eq.s32.totalorder %s29, 0
    %p245 = por %p243, %p244
    %s247 = sadd.s32 %s246, 1
    %p250 = scmp.eq.s32.totalorder %s23, 1
    %p251 = scmp.ne.s32.totalorder %s246, %s248
    %p252 = scmp.eq.s32.totalorder %s23, 0
    %p253 = por %p251, %p252
    %p254 = scmp.ne.s32.totalorder %s246, %s248
    %p255 = scmp.eq.s32.totalorder %s28, 1
    %p256 = por %p254, %p255
    %p257 = scmp.ne.s32.totalorder %s248, %s249
    %p258 = scmp.eq.s32.totalorder %s28, 0
    %p259 = por %p257, %p258
    %p260 = scmp.ne.s32.totalorder %s248, %s249
    %p261 = scmp.eq.s32.totalorder %s29, 1
    %p262 = por %p260, %p261
    %p264 = scmp.ne.s32.totalorder %s249, %s263
    %p265 = scmp.eq.s32.totalorder %s29, 0
    %p266 = por %p264, %p265
    %s268 = sadd.s32 %s267, 1
    %p271 = scmp.eq.s32.totalorder %s23, 1
    %p272 = scmp.ne.s32.totalorder %s267, %s269
    %p273 = scmp.eq.s32.totalorder %s23, 0
    %p274 = por %p272, %p273
    %p275 = scmp.ne.s32.totalorder %s267, %s269
    %p276 = scmp.eq.s32.totalorder %s28, 1
    %p277 = por %p275, %p276
    %p278 = scmp.ne.s32.totalorder %s269, %s270
    %p279 = scmp.eq.s32.totalorder %s28, 0
    %p280 = por %p278, %p279
    %p281 = scmp.ne.s32.totalorder %s269, %s270
    %p282 = scmp.eq.s32.totalorder %s29, 1
    %p283 = por %p281, %p282
    %p285 = scmp.ne.s32.totalorder %s270, %s284
    %p286 = scmp.eq.s32.totalorder %s29, 0
    %p287 = por %p285, %p286
    %s289 = sadd.s32 %s288, 1
    %p292 = scmp.eq.s32.totalorder %s23, 1
    %p293 = scmp.ne.s32.totalorder %s288, %s290
    %p294 = scmp.eq.s32.totalorder %s23, 0
    %p295 = por %p293, %p294
    %p296 = scmp.ne.s32.totalorder %s288, %s290
    %p297 = scmp.eq.s32.totalorder %s28, 1
    %p298 = por %p296, %p297
    %p299 = scmp.ne.s32.totalorder %s290, %s291
    %p300 = scmp.eq.s32.totalorder %s28, 0
    %p301 = por %p299, %p300
    %p302 = scmp.ne.s32.totalorder %s290, %s291
    %p303 = scmp.eq.s32.totalorder %s29, 1
    %p304 = por %p302, %p303
    %p306 = scmp.ne.s32.totalorder %s291, %s305
    %p307 = scmp.eq.s32.totalorder %s29, 0
    %p308 = por %p306, %p307
    %s310 = sadd.s32 %s309, 1
    %p313 = scmp.eq.s32.totalorder %s23, 1
    %p314 = scmp.ne.s32.totalorder %s309, %s311
    %p315 = scmp.eq.s32.totalorder %s23, 0
    %p316 = por %p314, %p315
    %p317 = scmp.ne.s32.totalorder %s309, %s311
    %p318 = scmp.eq.s32.totalorder %s28, 1
    %p319 = por %p317, %p318
    %p320 = scmp.ne.s32.totalorder %s311, %s312
    %p321 = scmp.eq.s32.totalorder %s28, 0
    %p322 = por %p320, %p321
    %p323 = scmp.ne.s32.totalorder %s311, %s312
    %p324 = scmp.eq.s32.totalorder %s29, 1
    %p325 = por %p323, %p324
    %p327 = scmp.ne.s32.totalorder %s312, %s326
    %p328 = scmp.eq.s32.totalorder %s29, 0
    %p329 = por %p327, %p328
    %s331 = sadd.s32 %s330, 1
    %p334 = scmp.eq.s32.totalorder %s23, 1
    %p335 = scmp.ne.s32.totalorder %s330, %s332
    %p336 = scmp.eq.s32.totalorder %s23, 0
    %p337 = por %p335, %p336
    %p338 = scmp.ne.s32.totalorder %s330, %s332
    %p339 = scmp.eq.s32.totalorder %s28, 1
    %p340 = por %p338, %p339
    %p341 = scmp.ne.s32.totalorder %s332, %s333
    %p342 = scmp.eq.s32.totalorder %s28, 0
    %p343 = por %p341, %p342
    %p344 = scmp.ne.s32.totalorder %s332, %s333
    %p345 = scmp.eq.s32.totalorder %s29, 1
    %p346 = por %p344, %p345
    %p348 = scmp.ne.s32.totalorder %s333, %s347
    %p349 = scmp.eq.s32.totalorder %s29, 0
    %p350 = por %p348, %p349
    %s352 = sadd.s32 %s351, 1
    %p355 = scmp.eq.s32.totalorder %s23, 1
    %p356 = scmp.ne.s32.totalorder %s351, %s353
    %p357 = scmp.eq.s32.totalorder %s23, 0
    %p358 = por %p356, %p357
    %p359 = scmp.ne.s32.totalorder %s351, %s353
    %p360 = scmp.eq.s32.totalorder %s28, 1
    %p361 = por %p359, %p360
    %p362 = scmp.ne.s32.totalorder %s353, %s354
    %p363 = scmp.eq.s32.totalorder %s28, 0
    %p364 = por %p362, %p363
    %p365 = scmp.ne.s32.totalorder %s353, %s354
    %p366 = scmp.eq.s32.totalorder %s29, 1
    %p367 = por %p365, %p366
    %p369 = scmp.ne.s32.totalorder %s354, %s368
    %p370 = scmp.eq.s32.totalorder %s29, 0
    %p371 = por %p369, %p370
    %s373 = sadd.s32 %s372, 1
    %p376 = scmp.eq.s32.totalorder %s23, 1
    %p377 = scmp.ne.s32.totalorder %s372, %s374
    %p378 = scmp.eq.s32.totalorder %s23, 0
    %p379 = por %p377, %p378
    %p380 = scmp.ne.s32.totalorder %s372, %s374
    %p381 = scmp.eq.s32.totalorder %s28, 1
    %p382 = por %p380, %p381
    %p383 = scmp.ne.s32.totalorder %s374, %s375
    %p384 = scmp.eq.s32.totalorder %s28, 0
    %p385 = por %p383, %p384
    %p386 = scmp.ne.s32.totalorder %s374, %s375
    %p387 = scmp.eq.s32.totalorder %s29, 1
    %p388 = por %p386, %p387
    %p390 = scmp.ne.s32.totalorder %s375, %s389
    %p391 = scmp.eq.s32.totalorder %s29, 0
    %p392 = por %p390, %p391
    %s393 = ssub.s32 %s23, %s30
    %p394 = scmp.eq.s32.totalorder %s393, 0
    %s396 = sadd.s32 %s395, 1
    %s397 = scalar_select %p394, %s395, %s396
    %p400 = pneg %p394
    %p401 = scmp.eq.s32.totalorder %s23, 1
    %p402 = por %p400, %p401
    %p403 = scmp.ne.s32.totalorder %s395, %s398
    %p404 = scmp.eq.s32.totalorder %s23, 0
    %p405 = por %p403, %p404
    %p406 = scmp.ne.s32.totalorder %s395, %s398
    %p407 = scmp.eq.s32.totalorder %s28, 1
    %p408 = por %p406, %p407
    %p409 = scmp.ne.s32.totalorder %s398, %s399
    %p410 = scmp.eq.s32.totalorder %s28, 0
    %p411 = por %p409, %p410
    %p412 = scmp.ne.s32.totalorder %s398, %s399
    %p413 = scmp.eq.s32.totalorder %s29, 1
    %p414 = por %p412, %p413
    %p416 = scmp.ne.s32.totalorder %s399, %s415
    %p417 = scmp.eq.s32.totalorder %s29, 0
    %p418 = por %p416, %p417
    %p419 = scmp.le.s32.totalorder 1, %s23
    %p420 = scmp.lt.s32.totalorder %s23, 3
    %p421 = pnand %p419, %p420
    %p422 = pneg %p421
    // Predicated region
    $region9: #{encoder_forward.7} parent=5 // pred_check
      _
    $region10: #{encoder_forward.7} parent=5 // pred_check_branch
      %424 = sbr.rel (%p421) target = $region12
    $region11: #{encoder_forward.7} parent=5 // pred_region
      %s425 = ssub.s32 %s23, 1
      // Predicated region
      $region13: #{encoder_forward.7} parent=11 // pred_check
        %p426 = pneg %p70
      $region14: #{encoder_forward.7} parent=11 // pred_check_branch
        %428 = sbr.rel (%p426) target = $region16
      $region15: #{encoder_forward.7} parent=11 // pred_region
        _
      $region16: #{encoder_forward.7} parent=11 // pred_fallthru
        _
      // Predicated region
      $region17: #{encoder_forward.7} parent=11 // pred_check
        %p429 = pneg %p91
      $region18: #{encoder_forward.7} parent=11 // pred_check_branch
        %431 = sbr.rel (%p429) target = $region20
      $region19: #{encoder_forward.7} parent=11 // pred_region
        _
      $region20: #{encoder_forward.7} parent=11 // pred_fallthru
        _
      // Predicated region
      $region21: #{encoder_forward.7} parent=11 // pred_check
        %p432 = pneg %p112
      $region22: #{encoder_forward.7} parent=11 // pred_check_branch
        %434 = sbr.rel (%p432) target = $region24
      $region23: #{encoder_forward.7} parent=11 // pred_region
        _
      $region24: #{encoder_forward.7} parent=11 // pred_fallthru
        _
      // Predicated region
      $region25: #{encoder_forward.7} parent=11 // pred_check
        %p435 = pneg %p133
      $region26: #{encoder_forward.7} parent=11 // pred_check_branch
        %437 = sbr.rel (%p435) target = $region28
      $region27: #{encoder_forward.7} parent=11 // pred_region
        _
      $region28: #{encoder_forward.7} parent=11 // pred_fallthru
        _
      // Predicated region
      $region29: #{encoder_forward.7} parent=11 // pred_check
        %p438 = pneg %p154
      $region30: #{encoder_forward.7} parent=11 // pred_check_branch
        %440 = sbr.rel (%p438) target = $region32
      $region31: #{encoder_forward.7} parent=11 // pred_region
        _
      $region32: #{encoder_forward.7} parent=11 // pred_fallthru
        _
      // Predicated region
      $region33: #{encoder_forward.7} parent=11 // pred_check
        %p441 = pneg %p175
      $region34: #{encoder_forward.7} parent=11 // pred_check_branch
        %443 = sbr.rel (%p441) target = $region36
      $region35: #{encoder_forward.7} parent=11 // pred_region
        _
      $region36: #{encoder_forward.7} parent=11 // pred_fallthru
        _
      // Predicated region
      $region37: #{encoder_forward.7} parent=11 // pred_check
        %p444 = pneg %p196
      $region38: #{encoder_forward.7} parent=11 // pred_check_branch
        %446 = sbr.rel (%p444) target = $region40
      $region39: #{encoder_forward.7} parent=11 // pred_region
        _
      $region40: #{encoder_forward.7} parent=11 // pred_fallthru
        _
      // Predicated region
      $region41: #{encoder_forward.7} parent=11 // pred_check
        %p447 = pneg %p217
      $region42: #{encoder_forward.7} parent=11 // pred_check_branch
        %449 = sbr.rel (%p447) target = $region44
      $region43: #{encoder_forward.7} parent=11 // pred_region
        _
      $region44: #{encoder_forward.7} parent=11 // pred_fallthru
        _
      // Predicated region
      $region45: #{encoder_forward.7} parent=11 // pred_check
        %p450 = pneg %p238
      $region46: #{encoder_forward.7} parent=11 // pred_check_branch
        %452 = sbr.rel (%p450) target = $region48
      $region47: #{encoder_forward.7} parent=11 // pred_region
        _
      $region48: #{encoder_forward.7} parent=11 // pred_fallthru
        _
      // Predicated region
      $region49: #{encoder_forward.7} parent=11 // pred_check
        %p453 = pneg %p259
      $region50: #{encoder_forward.7} parent=11 // pred_check_branch
        %455 = sbr.rel (%p453) target = $region52
      $region51: #{encoder_forward.7} parent=11 // pred_region
        _
      $region52: #{encoder_forward.7} parent=11 // pred_fallthru
        _
      // Predicated region
      $region53: #{encoder_forward.7} parent=11 // pred_check
        %p456 = pneg %p280
      $region54: #{encoder_forward.7} parent=11 // pred_check_branch
        %458 = sbr.rel (%p456) target = $region56
      $region55: #{encoder_forward.7} parent=11 // pred_region
        _
      $region56: #{encoder_forward.7} parent=11 // pred_fallthru
        _
      // Predicated region
      $region57: #{encoder_forward.7} parent=11 // pred_check
        %p459 = pneg %p301
      $region58: #{encoder_forward.7} parent=11 // pred_check_branch
        %461 = sbr.rel (%p459) target = $region60
      $region59: #{encoder_forward.7} parent=11 // pred_region
        _
      $region60: #{encoder_forward.7} parent=11 // pred_fallthru
        _
      // Predicated region
      $region61: #{encoder_forward.7} parent=11 // pred_check
        %p462 = pneg %p322
      $region62: #{encoder_forward.7} parent=11 // pred_check_branch
        %464 = sbr.rel (%p462) target = $region64
      $region63: #{encoder_forward.7} parent=11 // pred_region
        _
      $region64: #{encoder_forward.7} parent=11 // pred_fallthru
        _
      // Predicated region
      $region65: #{encoder_forward.7} parent=11 // pred_check
        %p465 = pneg %p343
      $region66: #{encoder_forward.7} parent=11 // pred_check_branch
        %467 = sbr.rel (%p465) target = $region68
      $region67: #{encoder_forward.7} parent=11 // pred_region
        _
      $region68: #{encoder_forward.7} parent=11 // pred_fallthru
        _
      // Predicated region
      $region69: #{encoder_forward.7} parent=11 // pred_check
        %p468 = pneg %p364
      $region70: #{encoder_forward.7} parent=11 // pred_check_branch
        %470 = sbr.rel (%p468) target = $region72
      $region71: #{encoder_forward.7} parent=11 // pred_region
        _
      $region72: #{encoder_forward.7} parent=11 // pred_fallthru
        _
      // Predicated region
      $region73: #{encoder_forward.7} parent=11 // pred_check
        %p471 = pneg %p385
      $region74: #{encoder_forward.7} parent=11 // pred_check_branch
        %473 = sbr.rel (%p471) target = $region76
      $region75: #{encoder_forward.7} parent=11 // pred_region
        _
      $region76: #{encoder_forward.7} parent=11 // pred_fallthru
        _
    $region12: #{encoder_forward.7} parent=5 // pred_fallthru
      _
    %p474 = scmp.lt.s32.totalorder %s23, 2
    // Predicated region
    $region77: #{encoder_forward.7} parent=5 // pred_check
      %p475 = pneg %p474
    $region78: #{encoder_forward.7} parent=5 // pred_check_branch
      %477 = sbr.rel (%p475) target = $region80
    $region79: #{encoder_forward.7} parent=5 // pred_region
      // Predicated region
      $region81: #{encoder_forward.7} parent=79 // pred_check
        %p478 = pneg %p43
      $region82: #{encoder_forward.7} parent=79 // pred_check_branch
        %480 = sbr.rel (%p478) target = $region84
      $region83: #{encoder_forward.7} parent=79 // pred_region
        %p481 = scmp.lt.s32.totalorder %s23, 1
        %s482 = scalar_select %p481, %s23, 1
        %s483 = smul.addr %s482, 4
        %s484 = scalar_lea.vmem %s0, %s483
      $region84: #{encoder_forward.7} parent=79 // pred_fallthru
        _
    $region80: #{encoder_forward.7} parent=5 // pred_fallthru
      _
    %p485 = scmp.le.s32.totalorder 1, %s23
    %p486 = scmp.lt.s32.totalorder %s23, 3
    %p487 = pnand %p485, %p486
    %p488 = pneg %p487
    // Predicated region
    $region85: #{encoder_forward.7} parent=5 // pred_check
      _
    $region86: #{encoder_forward.7} parent=5 // pred_check_branch
      %490 = sbr.rel (%p487) target = $region88
    $region87: #{encoder_forward.7} parent=5 // pred_region
      %s491 = ssub.s32 %s23, 1
      %p492 = scmp.lt.s32.totalorder %s28, 1
      %s493 = scalar_select %p492, %s28, 1
      %s494 = smul.addr %s493, 4
      %s495 = scalar_lea.vmem %s0, %s494
      %p496 = pneg %p49
      %p497 = pneg %p46
      %p498 = pneg %p70
      %p499 = pneg %p67
      %p500 = pneg %p91
      %p501 = pneg %p88
      %p502 = pneg %p112
      %p503 = pneg %p109
      %p504 = pneg %p133
      %p505 = pneg %p130
      %p506 = pneg %p154
      %p507 = pneg %p151
      %p508 = pneg %p175
      %p509 = pneg %p172
      %p510 = pneg %p196
      %p511 = pneg %p193
      %p512 = pneg %p217
      %p513 = pneg %p214
      %p514 = pneg %p238
      %p515 = pneg %p235
      %p516 = pneg %p259
      %p517 = pneg %p256
      %p518 = pneg %p280
      %p519 = pneg %p277
      %p520 = pneg %p301
      %p521 = pneg %p298
      %p522 = pneg %p322
      %p523 = pneg %p319
      %p524 = pneg %p343
      %p525 = pneg %p340
      %p526 = pneg %p364
      %p527 = pneg %p361
      %p528 = pneg %p385
      %p529 = pneg %p382
      %p530 = pneg %p411
      %p531 = pneg %p408
      %p532 = scmp.lt.s32.totalorder %s28, 1
      %s533 = scalar_select %p532, %s28, 1
      %s534 = smul.addr %s533, 4
      %s535 = scalar_lea.vmem %s17, %s534
      %p536 = scmp.lt.s32.totalorder %s28, 1
      %s537 = scalar_select %p536, %s28, 1
      %s538 = smul.addr %s537, 4
      %s539 = scalar_lea.vmem %s0, %s538
      %p540 = scmp.lt.s32.totalorder %s28, 1
      %s541 = scalar_select %p540, %s28, 1
      %s542 = smul.addr %s541, 4
      %s543 = scalar_lea.vmem %s17, %s542
      %vm544 = vcmask 293888
      %545 = vst.msk [vmem:[#allocation2] sm:$0xff] %vm544, 0.0
      %546 = vst.msk [vmem:[#allocation2 + $0x8] sm:$0xff] %vm544, 0.0
      %547 = vst.msk [vmem:[#allocation2 + $0x10] sm:$0xff] %vm544, 0.0
      %548 = vst.msk [vmem:[#allocation2 + $0x18] sm:$0xff] %vm544, 0.0
      %v549 = vld [vmem:[%s539] sm:$0xf]
      %v550 = vld [vmem:[%s1] sm:$0xff]
      %v551 = vld [vmem:[%s1 + $0x8] sm:$0xff]
      %v552 = vld [vmem:[%s1 + $0x10] sm:$0xff]
      %v553 = vld [vmem:[%s1 + $0x18] sm:$0xff]
      %v554 = vld [vmem:[%s2] sm:$0xff]
      %v555 = vld [vmem:[%s2 + $0x8] sm:$0xff]
      %v556 = vld [vmem:[%s2 + $0x10] sm:$0xff]
      %v557 = vld [vmem:[%s2 + $0x18] sm:$0xff]
      %559 = vset.pattern.permute.xlu0 0
      %560 = vperm.xlu0 %559, %v554
      %v561 = vpop.permute.xlu0 %560
      %564 = vset.pattern.permute.xlu0 0
      %565 = vperm.xlu0 %564, %v555
      %v566 = vpop.permute.xlu0 %565
      %569 = vset.pattern.permute.xlu0 0
      %570 = vperm.xlu0 %569, %v556
      %v571 = vpop.permute.xlu0 %570
      %574 = vset.pattern.permute.xlu0 0
      %575 = vperm.xlu0 %574, %v557
      %v576 = vpop.permute.xlu0 %575
      %vm578 = vcmask 31744
      %v580 = vsel %vm578, %v550, 0
      %v583 = vsel %vm578, %v551, 0
      %v586 = vsel %vm578, %v552, 0
      %v589 = vsel %vm578, %v553, 0
      %vm591 = vcmask 1043456
      %v593 = vsel %vm591, %v549, 0
      %595 = vmatpush.msra.mxu0 0.0
      %596 = vmatpush.msra.mxu0 0.0
      %597 = vmatpush.msra.mxu0 0.0
      %598 = vmatpush.msra.mxu0 0.0
      %599 = vmatpush.msra.mxu0 0.0
      %600 = vmatpush.msra.mxu0 0.0
      %601 = vmatpush.msra.mxu0 0.0
      %602 = vmatpush.msra.mxu0 0.0
      %603 = vmatpush.msra.mxu0 0.0
      %604 = vmatpush.msra.mxu0 0.0
      %605 = vmatpush.msra.mxu0 0.0
      %606 = vmatpush.msra.mxu0 0.0
      %607 = vmatpush.msra.mxu0 0.0
      %608 = vmatpush.msra.mxu0 0.0
      %609 = vmatpush.msra.mxu0 0.0
      %610 = vmatpush.msra.mxu0 %v593
      %611 = vmatmul.f32.gmra.mxu0 %v580
      %v612 = vpop.f32.mrf.mxu0
      %v613 = vadd.f32 %v561, %v612
      %614 = vmatmul.f32.gmra.mxu0 %v583
      %v615 = vpop.f32.mrf.mxu0
      %v616 = vadd.f32 %v566, %v615
      %617 = vmatmul.f32.gmra.mxu0 %v586
      %v618 = vpop.f32.mrf.mxu0
      %v619 = vadd.f32 %v571, %v618
      %620 = vmatmul.f32.gmra.mxu0 %v589
      %v621 = vpop.f32.mrf.mxu0
      %v622 = vadd.f32 %v576, %v621
      %623 = vdwg.mxu0
      %v624 = vld [vmem:[%s11] sm:$0xf]
      %629 = vrot.lane.b32.xlu0 %v613, 2
      %v630 = vpop.permute.xlu0 %629
      %631 = vrot.lane.b32.xlu0 %v616, 2
      %v632 = vpop.permute.xlu0 %631
      %633 = vrot.lane.b32.xlu0 %v619, 2
      %v634 = vpop.permute.xlu0 %633
      %635 = vrot.lane.b32.xlu0 %v622, 2
      %v636 = vpop.permute.xlu0 %635
      %vm641 = vcmask 277520
      %642 = vst.msk [vmem:[#allocation2] sm:$0xff] %vm641, %v630
      %643 = vst.msk [vmem:[#allocation2 + $0x8] sm:$0xff] %vm641, %v632
      %644 = vst.msk [vmem:[#allocation2 + $0x10] sm:$0xff] %vm641, %v634
      %645 = vst.msk [vmem:[#allocation2 + $0x18] sm:$0xff] %vm641, %v636
      %v646 = vld [vmem:[#allocation2] sm:$0xff]
      %v647 = vld [vmem:[#allocation2 + $0x8] sm:$0xff]
      %v648 = vld [vmem:[#allocation2 + $0x10] sm:$0xff]
      %v649 = vld [vmem:[#allocation2 + $0x18] sm:$0xff]
      %654 = vrot.lane.b32.xlu0 %v646, 127
      %v655 = vpop.permute.xlu0 %654
      %656 = vrot.lane.b32.xlu0 %v647, 127
      %v657 = vpop.permute.xlu0 %656
      %658 = vrot.lane.b32.xlu0 %v648, 127
      %v659 = vpop.permute.xlu0 %658
      %660 = vrot.lane.b32.xlu0 %v649, 127
      %v661 = vpop.permute.xlu0 %660
      %662 = vrot.lane.b32.xlu0 %v646, 126
      %v663 = vpop.permute.xlu0 %662
      %664 = vrot.lane.b32.xlu0 %v647, 126
      %v665 = vpop.permute.xlu0 %664
      %666 = vrot.lane.b32.xlu0 %v648, 126
      %v667 = vpop.permute.xlu0 %666
      %668 = vrot.lane.b32.xlu0 %v649, 126
      %v669 = vpop.permute.xlu0 %668
      %v670 = vld [vmem:[%s3] sm:$0xff]
      %v671 = vld [vmem:[%s3 + $0x8] sm:$0xff]
      %v672 = vld [vmem:[%s3 + $0x10] sm:$0xff]
      %v673 = vld [vmem:[%s3 + $0x18] sm:$0xff]
      %v674 = vld [vmem:[%s3 + $0x20] sm:$0xff]
      %v675 = vld [vmem:[%s3 + $0x28] sm:$0xff]
      %v676 = vld [vmem:[%s3 + $0x30] sm:$0xff]
      %v677 = vld [vmem:[%s3 + $0x38] sm:$0xff]
      %v678 = vld [vmem:[%s4] sm:$0xff]
      %v679 = vld [vmem:[%s4 + $0x8] sm:$0xff]
      %v680 = vld [vmem:[%s4 + $0x10] sm:$0xff]
      %v681 = vld [vmem:[%s4 + $0x18] sm:$0xff]
      %v682 = vld [vmem:[%s4 + $0x20] sm:$0xff]
      %v683 = vld [vmem:[%s4 + $0x28] sm:$0xff]
      %v684 = vld [vmem:[%s4 + $0x30] sm:$0xff]
      %v685 = vld [vmem:[%s4 + $0x38] sm:$0xff]
      %687 = vset.pattern.permute.xlu0 0
      %688 = vperm.xlu0 %687, %v678
      %v689 = vpop.permute.xlu0 %688
      %692 = vset.pattern.permute.xlu0 0
      %693 = vperm.xlu0 %692, %v679
      %v694 = vpop.permute.xlu0 %693
      %697 = vset.pattern.permute.xlu0 0
      %698 = vperm.xlu0 %697, %v680
      %v699 = vpop.permute.xlu0 %698
      %702 = vset.pattern.permute.xlu0 0
      %703 = vperm.xlu0 %702, %v681
      %v704 = vpop.permute.xlu0 %703
      %707 = vset.pattern.permute.xlu0 0
      %708 = vperm.xlu0 %707, %v682
      %v709 = vpop.permute.xlu0 %708
      %712 = vset.pattern.permute.xlu0 0
      %713 = vperm.xlu0 %712, %v683
      %v714 = vpop.permute.xlu0 %713
      %717 = vset.pattern.permute.xlu0 0
      %718 = vperm.xlu0 %717, %v684
      %v719 = vpop.permute.xlu0 %718
      %722 = vset.pattern.permute.xlu0 0
      %723 = vperm.xlu0 %722, %v685
      %v724 = vpop.permute.xlu0 %723
      %726 = vrot.lane.b32.xlu0 %v655, 127
      %v727 = vpop.permute.xlu0 %726
      %728 = vrot.lane.b32.xlu0 %v657, 127
      %v729 = vpop.permute.xlu0 %728
      %730 = vrot.lane.b32.xlu0 %v659, 127
      %v731 = vpop.permute.xlu0 %730
      %732 = vrot.lane.b32.xlu0 %v661, 127
      %v733 = vpop.permute.xlu0 %732
      %734 = vrot.lane.b32.xlu0 %v663, 127
      %v735 = vpop.permute.xlu0 %734
      %736 = vrot.lane.b32.xlu0 %v665, 127
      %v737 = vpop.permute.xlu0 %736
      %738 = vrot.lane.b32.xlu0 %v667, 127
      %v739 = vpop.permute.xlu0 %738
      %740 = vrot.lane.b32.xlu0 %v669, 127
      %v741 = vpop.permute.xlu0 %740
      %vm754 = vcmask 785408
      %v756 = vsel %vm754, %v670, 0
      %v759 = vsel %vm754, %v671, 0
      %v762 = vsel %vm754, %v672, 0
      %v765 = vsel %vm754, %v673, 0
      %v768 = vsel %vm754, %v674, 0
      %v771 = vsel %vm754, %v675, 0
      %v774 = vsel %vm754, %v676, 0
      %v777 = vsel %vm754, %v677, 0
      %779 = vmatpush.msra.mxu0 0.0
      %780 = vmatpush.msra.mxu0 0.0
      %781 = vmatpush.msra.mxu0 0.0
      %782 = vmatpush.msra.mxu0 0.0
      %783 = vmatpush.msra.mxu0 %v741
      %784 = vmatpush.msra.mxu0 %v739
      %785 = vmatpush.msra.mxu0 %v737
      %786 = vmatpush.msra.mxu0 %v735
      %787 = vmatpush.msra.mxu0 %v733
      %788 = vmatpush.msra.mxu0 %v731
      %789 = vmatpush.msra.mxu0 %v729
      %790 = vmatpush.msra.mxu0 %v727
      %791 = vmatpush.msra.mxu0 %v661
      %792 = vmatpush.msra.mxu0 %v659
      %793 = vmatpush.msra.mxu0 %v657
      %794 = vmatpush.msra.mxu0 %v655
      %795 = vmatmul.f32.gmra.mxu0 %v756
      %v796 = vpop.f32.mrf.mxu0
      %v797 = vadd.f32 %v689, %v796
      %798 = vmatmul.f32.gmra.mxu0 %v759
      %v799 = vpop.f32.mrf.mxu0
      %v800 = vadd.f32 %v694, %v799
      %801 = vmatmul.f32.gmra.mxu0 %v762
      %v802 = vpop.f32.mrf.mxu0
      %v803 = vadd.f32 %v699, %v802
      %804 = vmatmul.f32.gmra.mxu0 %v765
      %v805 = vpop.f32.mrf.mxu0
      %v806 = vadd.f32 %v704, %v805
      %807 = vmatmul.f32.gmra.mxu0 %v768
      %v808 = vpop.f32.mrf.mxu0
      %v809 = vadd.f32 %v709, %v808
      %810 = vmatmul.f32.gmra.mxu0 %v771
      %v811 = vpop.f32.mrf.mxu0
      %v812 = vadd.f32 %v714, %v811
      %813 = vmatmul.f32.gmra.mxu0 %v774
      %v814 = vpop.f32.mrf.mxu0
      %v815 = vadd.f32 %v719, %v814
      %816 = vmatmul.f32.gmra.mxu0 %v777
      %v817 = vpop.f32.mrf.mxu0
      %v818 = vadd.f32 %v724, %v817
      %819 = vdwg.mxu0
      %v820 = vtanh.pop %v797
      %v821 = vtanh.pop %v800
      %v822 = vtanh.pop %v803
      %v823 = vtanh.pop %v806
      %v824 = vxor.u32 %v809, 2147483648
      %v825 = vxor.u32 %v812, 2147483648
      %v826 = vxor.u32 %v815, 2147483648
      %v827 = vxor.u32 %v818, 2147483648
      %v828 = vmul.f32 %v824, 1.442695
      %v829 = vpow.pop %v828
      %v830 = vmul.f32 %v825, 1.442695
      %v831 = vpow.pop %v830
      %v832 = vmul.f32 %v826, 1.442695
      %v833 = vpow.pop %v832
      %v834 = vmul.f32 %v827, 1.442695
      %v835 = vpow.pop %v834
      %v836 = vadd.f32 %v829, 1.0
      %v837 = vadd.f32 %v831, 1.0
      %v838 = vadd.f32 %v833, 1.0
      %v839 = vadd.f32 %v835, 1.0
      %v840 = vrcp.pop %v836
      %v841 = vmul.f32 %v836, %v840
      %v842 = vsub.f32 1.0, %v841
      %v843 = vmul.f32 %v840, %v842
      %v844 = vadd.f32 %v840, %v843
      %vm845 = vweird.f32 %v836
      %vm846 = vweird.f32 %v840
      %vm847 = vmor %vm845, %vm846
      %v848 = vsel %vm847, %v840, %v844
      %v849 = vand.u32 2147483647, %v836
      %vm850 = vcmp.eq.f32.partialorder %v849, 8.507059e+37
      %v851 = vand.u32 %v836, 2147483648
      %v852 = vor.u32 1.1754944e-38, %v851
      %v853 = vsel %vm850, %v852, %v848
      %v854 = vmul.f32 1.0, %v853
      %v855 = vrcp.pop %v837
      %v856 = vmul.f32 %v837, %v855
      %v857 = vsub.f32 1.0, %v856
      %v858 = vmul.f32 %v855, %v857
      %v859 = vadd.f32 %v855, %v858
      %vm860 = vweird.f32 %v837
      %vm861 = vweird.f32 %v855
      %vm862 = vmor %vm860, %vm861
      %v863 = vsel %vm862, %v855, %v859
      %v864 = vand.u32 2147483647, %v837
      %vm865 = vcmp.eq.f32.partialorder %v864, 8.507059e+37
      %v866 = vand.u32 %v837, 2147483648
      %v867 = vor.u32 1.1754944e-38, %v866
      %v868 = vsel %vm865, %v867, %v863
      %v869 = vmul.f32 1.0, %v868
      %v870 = vrcp.pop %v838
      %v871 = vmul.f32 %v838, %v870
      %v872 = vsub.f32 1.0, %v871
      %v873 = vmul.f32 %v870, %v872
      %v874 = vadd.f32 %v870, %v873
      %vm875 = vweird.f32 %v838
      %vm876 = vweird.f32 %v870
      %vm877 = vmor %vm875, %vm876
      %v878 = vsel %vm877, %v870, %v874
      %v879 = vand.u32 2147483647, %v838
      %vm880 = vcmp.eq.f32.partialorder %v879, 8.507059e+37
      %v881 = vand.u32 %v838, 2147483648
      %v882 = vor.u32 1.1754944e-38, %v881
      %v883 = vsel %vm880, %v882, %v878
      %v884 = vmul.f32 1.0, %v883
      %v885 = vrcp.pop %v839
      %v886 = vmul.f32 %v839, %v885
      %v887 = vsub.f32 1.0, %v886
      %v888 = vmul.f32 %v885, %v887
      %v889 = vadd.f32 %v885, %v888
      %vm890 = vweird.f32 %v839
      %vm891 = vweird.f32 %v885
      %vm892 = vmor %vm890, %vm891
      %v893 = vsel %vm892, %v885, %v889
      %v894 = vand.u32 2147483647, %v839
      %vm895 = vcmp.eq.f32.partialorder %v894, 8.507059e+37
      %v896 = vand.u32 %v839, 2147483648
      %v897 = vor.u32 1.1754944e-38, %v896
      %v898 = vsel %vm895, %v897, %v893
      %v899 = vmul.f32 1.0, %v898
      %v900 = vmul.f32 %v820, %v854
      %v901 = vmul.f32 %v821, %v869
      %v902 = vmul.f32 %v822, %v884
      %v903 = vmul.f32 %v823, %v899
      %v904 = vld [vmem:[%s5] sm:$0xff]
      %v905 = vld [vmem:[%s5 + $0x8] sm:$0xff]
      %v906 = vld [vmem:[%s5 + $0x10] sm:$0xff]
      %v907 = vld [vmem:[%s5 + $0x18] sm:$0xff]
      %v908 = vld [vmem:[%s5 + $0x20] sm:$0xff]
      %v909 = vld [vmem:[%s5 + $0x28] sm:$0xff]
      %v910 = vld [vmem:[%s5 + $0x30] sm:$0xff]
      %v911 = vld [vmem:[%s5 + $0x38] sm:$0xff]
      %v912 = vld [vmem:[%s6] sm:$0xff]
      %v913 = vld [vmem:[%s6 + $0x8] sm:$0xff]
      %v914 = vld [vmem:[%s6 + $0x10] sm:$0xff]
      %v915 = vld [vmem:[%s6 + $0x18] sm:$0xff]
      %v916 = vld [vmem:[%s6 + $0x20] sm:$0xff]
      %v917 = vld [vmem:[%s6 + $0x28] sm:$0xff]
      %v918 = vld [vmem:[%s6 + $0x30] sm:$0xff]
      %v919 = vld [vmem:[%s6 + $0x38] sm:$0xff]
      %921 = vset.pattern.permute.xlu0 0
      %922 = vperm.xlu0 %921, %v912
      %v923 = vpop.permute.xlu0 %922
      %926 = vset.pattern.permute.xlu0 0
      %927 = vperm.xlu0 %926, %v913
      %v928 = vpop.permute.xlu0 %927
      %931 = vset.pattern.permute.xlu0 0
      %932 = vperm.xlu0 %931, %v914
      %v933 = vpop.permute.xlu0 %932
      %936 = vset.pattern.permute.xlu0 0
      %937 = vperm.xlu0 %936, %v915
      %v938 = vpop.permute.xlu0 %937
      %941 = vset.pattern.permute.xlu0 0
      %942 = vperm.xlu0 %941, %v916
      %v943 = vpop.permute.xlu0 %942
      %946 = vset.pattern.permute.xlu0 0
      %947 = vperm.xlu0 %946, %v917
      %v948 = vpop.permute.xlu0 %947
      %951 = vset.pattern.permute.xlu0 0
      %952 = vperm.xlu0 %951, %v918
      %v953 = vpop.permute.xlu0 %952
      %956 = vset.pattern.permute.xlu0 0
      %957 = vperm.xlu0 %956, %v919
      %v958 = vpop.permute.xlu0 %957
      %vm960 = vcmask 261120
      %v962 = vsel %vm960, %v904, 0
      %v965 = vsel %vm960, %v905, 0
      %v968 = vsel %vm960, %v906, 0
      %v971 = vsel %vm960, %v907, 0
      %v974 = vsel %vm960, %v908, 0
      %v977 = vsel %vm960, %v909, 0
      %v980 = vsel %vm960, %v910, 0
      %v983 = vsel %vm960, %v911, 0
      %985 = vmatpush.msra.mxu0 0.0
      %986 = vmatpush.msra.mxu0 0.0
      %987 = vmatpush.msra.mxu0 0.0
      %988 = vmatpush.msra.mxu0 0.0
      %989 = vmatpush.msra.mxu0 0.0
      %990 = vmatpush.msra.mxu0 0.0
      %991 = vmatpush.msra.mxu0 0.0
      %992 = vmatpush.msra.mxu0 0.0
      %993 = vmatpush.msra.mxu0 0.0
      %994 = vmatpush.msra.mxu0 0.0
      %995 = vmatpush.msra.mxu0 0.0
      %996 = vmatpush.msra.mxu0 0.0
      %997 = vmatpush.msra.mxu0 %v903
      %998 = vmatpush.msra.mxu0 %v902
      %999 = vmatpush.msra.mxu0 %v901
      %1000 = vmatpush.msra.mxu0 %v900
      %1001 = vmatmul.f32.gmra.mxu0 %v962
      %v1002 = vpop.f32.mrf.mxu0
      %v1003 = vadd.f32 %v923, %v1002
      %1004 = vmatmul.f32.gmra.mxu0 %v965
      %v1005 = vpop.f32.mrf.mxu0
      %v1006 = vadd.f32 %v928, %v1005
      %1007 = vmatmul.f32.gmra.mxu0 %v968
      %v1008 = vpop.f32.mrf.mxu0
      %v1009 = vadd.f32 %v933, %v1008
      %1010 = vmatmul.f32.gmra.mxu0 %v971
      %v1011 = vpop.f32.mrf.mxu0
      %v1012 = vadd.f32 %v938, %v1011
      %1013 = vmatmul.f32.gmra.mxu0 %v974
      %v1014 = vpop.f32.mrf.mxu0
      %v1015 = vadd.f32 %v943, %v1014
      %1016 = vmatmul.f32.gmra.mxu0 %v977
      %v1017 = vpop.f32.mrf.mxu0
      %v1018 = vadd.f32 %v948, %v1017
      %1019 = vmatmul.f32.gmra.mxu0 %v980
      %v1020 = vpop.f32.mrf.mxu0
      %v1021 = vadd.f32 %v953, %v1020
      %1022 = vmatmul.f32.gmra.mxu0 %v983
      %v1023 = vpop.f32.mrf.mxu0
      %v1024 = vadd.f32 %v958, %v1023
      %1025 = vdwg.mxu0
      %v1026 = vadd.f32 %v613, %v1003
      %v1027 = vadd.f32 %v616, %v1006
      %v1028 = vadd.f32 %v619, %v1009
      %v1029 = vadd.f32 %v622, %v1012
      %v1030 = vadd.f32 %v1015, 0.0
      %v1031 = vadd.f32 %v1018, 0.0
      %v1032 = vadd.f32 %v1021, 0.0
      %v1033 = vadd.f32 %v1024, 0.0
      %1038 = vrot.lane.b32.xlu0 %v1026, 2
      %v1039 = vpop.permute.xlu0 %1038
      %1040 = vrot.lane.b32.xlu0 %v1027, 2
      %v1041 = vpop.permute.xlu0 %1040
      %1042 = vrot.lane.b32.xlu0 %v1028, 2
      %v1043 = vpop.permute.xlu0 %1042
      %1044 = vrot.lane.b32.xlu0 %v1029, 2
      %v1045 = vpop.permute.xlu0 %1044
      %1050 = vst.msk [vmem:[#allocation2] sm:$0xff] %vm641, %v1039
      %1051 = vst.msk [vmem:[#allocation2 + $0x8] sm:$0xff] %vm641, %v1041
      %1052 = vst.msk [vmem:[#allocation2 + $0x10] sm:$0xff] %vm641, %v1043
      %1053 = vst.msk [vmem:[#allocation2 + $0x18] sm:$0xff] %vm641, %v1045
      %v1054 = vld [vmem:[#allocation2] sm:$0xff]
      %v1055 = vld [vmem:[#allocation2 + $0x8] sm:$0xff]
      %v1056 = vld [vmem:[#allocation2 + $0x10] sm:$0xff]
      %v1057 = vld [vmem:[#allocation2 + $0x18] sm:$0xff]
      %1062 = vrot.lane.b32.xlu0 %v1054, 126
      %v1063 = vpop.permute.xlu0 %1062
      %1064 = vrot.lane.b32.xlu0 %v1055, 126
      %v1065 = vpop.permute.xlu0 %1064
      %1066 = vrot.lane.b32.xlu0 %v1056, 126
      %v1067 = vpop.permute.xlu0 %1066
      %1068 = vrot.lane.b32.xlu0 %v1057, 126
      %v1069 = vpop.permute.xlu0 %1068
      %1074 = vrot.lane.b32.xlu0 %v1054, 124
      %v1075 = vpop.permute.xlu0 %1074
      %1076 = vrot.lane.b32.xlu0 %v1055, 124
      %v1077 = vpop.permute.xlu0 %1076
      %1078 = vrot.lane.b32.xlu0 %v1056, 124
      %v1079 = vpop.permute.xlu0 %1078
      %1080 = vrot.lane.b32.xlu0 %v1057, 124
      %v1081 = vpop.permute.xlu0 %1080
      %s1086 = scalar_lea.vmem %s3, 64
      %v1087 = vld [vmem:[%s1086] sm:$0xff]
      %v1088 = vld [vmem:[%s1086 + $0x8] sm:$0xff]
      %v1089 = vld [vmem:[%s1086 + $0x10] sm:$0xff]
      %v1090 = vld [vmem:[%s1086 + $0x18] sm:$0xff]
      %v1091 = vld [vmem:[%s1086 + $0x20] sm:$0xff]
      %v1092 = vld [vmem:[%s1086 + $0x28] sm:$0xff]
      %v1093 = vld [vmem:[%s1086 + $0x30] sm:$0xff]
      %v1094 = vld [vmem:[%s1086 + $0x38] sm:$0xff]
      %s1095 = scalar_lea.vmem %s4, 64
      %v1096 = vld [vmem:[%s1095] sm:$0xff]
      %v1097 = vld [vmem:[%s1095 + $0x8] sm:$0xff]
      %v1098 = vld [vmem:[%s1095 + $0x10] sm:$0xff]
      %v1099 = vld [vmem:[%s1095 + $0x18] sm:$0xff]
      %v1100 = vld [vmem:[%s1095 + $0x20] sm:$0xff]
      %v1101 = vld [vmem:[%s1095 + $0x28] sm:$0xff]
      %v1102 = vld [vmem:[%s1095 + $0x30] sm:$0xff]
      %v1103 = vld [vmem:[%s1095 + $0x38] sm:$0xff]
      %1105 = vset.pattern.permute.xlu0 0
      %1106 = vperm.xlu0 %1105, %v1096
      %v1107 = vpop.permute.xlu0 %1106
      %1110 = vset.pattern.permute.xlu0 0
      %1111 = vperm.xlu0 %1110, %v1097
      %v1112 = vpop.permute.xlu0 %1111
      %1115 = vset.pattern.permute.xlu0 0
      %1116 = vperm.xlu0 %1115, %v1098
      %v1117 = vpop.permute.xlu0 %1116
      %1120 = vset.pattern.permute.xlu0 0
      %1121 = vperm.xlu0 %1120, %v1099
      %v1122 = vpop.permute.xlu0 %1121
      %1125 = vset.pattern.permute.xlu0 0
      %1126 = vperm.xlu0 %1125, %v1100
      %v1127 = vpop.permute.xlu0 %1126
      %1130 = vset.pattern.permute.xlu0 0
      %1131 = vperm.xlu0 %1130, %v1101
      %v1132 = vpop.permute.xlu0 %1131
      %1135 = vset.pattern.permute.xlu0 0
      %1136 = vperm.xlu0 %1135, %v1102
      %v1137 = vpop.permute.xlu0 %1136
      %1140 = vset.pattern.permute.xlu0 0
      %1141 = vperm.xlu0 %1140, %v1103
      %v1142 = vpop.permute.xlu0 %1141
      %v1145 = vsel %vm754, %v1087, 0
      %v1148 = vsel %vm754, %v1088, 0
      %v1151 = vsel %vm754, %v1089, 0
      %v1154 = vsel %vm754, %v1090, 0
      %v1157 = vsel %vm754, %v1091, 0
      %v1160 = vsel %vm754, %v1092, 0
      %v1163 = vsel %vm754, %v1093, 0
      %v1166 = vsel %vm754, %v1094, 0
      %1168 = vmatpush.msra.mxu0 0.0
      %1169 = vmatpush.msra.mxu0 0.0
      %1170 = vmatpush.msra.mxu0 0.0
      %1171 = vmatpush.msra.mxu0 0.0
      %1172 = vmatpush.msra.mxu0 %v1081
      %1173 = vmatpush.msra.mxu0 %v1079
      %1174 = vmatpush.msra.mxu0 %v1077
      %1175 = vmatpush.msra.mxu0 %v1075
      %1176 = vmatpush.msra.mxu0 %v1069
      %1177 = vmatpush.msra.mxu0 %v1067
      %1178 = vmatpush.msra.mxu0 %v1065
      %1179 = vmatpush.msra.mxu0 %v1063
      %1180 = vmatpush.msra.mxu0 %v1057
      %1181 = vmatpush.msra.mxu0 %v1056
      %1182 = vmatpush.msra.mxu0 %v1055
      %1183 = vmatpush.msra.mxu0 %v1054
      %1184 = vmatmul.f32.gmra.mxu0 %v1145
      %v1185 = vpop.f32.mrf.mxu0
      %v1186 = vadd.f32 %v1107, %v1185
      %1187 = vmatmul.f32.gmra.mxu0 %v1148
      %v1188 = vpop.f32.mrf.mxu0
      %v1189 = vadd.f32 %v1112, %v1188
      %1190 = vmatmul.f32.gmra.mxu0 %v1151
      %v1191 = vpop.f32.mrf.mxu0
      %v1192 = vadd.f32 %v1117, %v1191
      %1193 = vmatmul.f32.gmra.mxu0 %v1154
      %v1194 = vpop.f32.mrf.mxu0
      %v1195 = vadd.f32 %v1122, %v1194
      %1196 = vmatmul.f32.gmra.mxu0 %v1157
      %v1197 = vpop.f32.mrf.mxu0
      %v1198 = vadd.f32 %v1127, %v1197
      %1199 = vmatmul.f32.gmra.mxu0 %v1160
      %v1200 = vpop.f32.mrf.mxu0
      %v1201 = vadd.f32 %v1132, %v1200
      %1202 = vmatmul.f32.gmra.mxu0 %v1163
      %v1203 = vpop.f32.mrf.mxu0
      %v1204 = vadd.f32 %v1137, %v1203
      %1205 = vmatmul.f32.gmra.mxu0 %v1166
      %v1206 = vpop.f32.mrf.mxu0
      %v1207 = vadd.f32 %v1142, %v1206
      %1208 = vdwg.mxu0
      %v1209 = vtanh.pop %v1186
      %v1210 = vtanh.pop %v1189
      %v1211 = vtanh.pop %v1192
      %v1212 = vtanh.pop %v1195
      %v1213 = vxor.u32 %v1198, 2147483648
      %v1214 = vxor.u32 %v1201, 2147483648
      %v1215 = vxor.u32 %v1204, 2147483648
      %v1216 = vxor.u32 %v1207, 2147483648
      %v1217 = vmul.f32 %v1213, 1.442695
      %v1218 = vpow.pop %v1217
      %v1219 = vmul.f32 %v1214, 1.442695
      %v1220 = vpow.pop %v1219
      %v1221 = vmul.f32 %v1215, 1.442695
      %v1222 = vpow.pop %v1221
      %v1223 = vmul.f32 %v1216, 1.442695
      %v1224 = vpow.pop %v1223
      %v1225 = vadd.f32 %v1218, 1.0
      %v1226 = vadd.f32 %v1220, 1.0
      %v1227 = vadd.f32 %v1222, 1.0
      %v1228 = vadd.f32 %v1224, 1.0
      %v1229 = vrcp.pop %v1225
      %v1230 = vmul.f32 %v1225, %v1229
      %v1231 = vsub.f32 1.0, %v1230
      %v1232 = vmul.f32 %v1229, %v1231
      %v1233 = vadd.f32 %v1229, %v1232
      %vm1234 = vweird.f32 %v1225
      %vm1235 = vweird.f32 %v1229
      %vm1236 = vmor %vm1234, %vm1235
      %v1237 = vsel %vm1236, %v1229, %v1233
      %v1238 = vand.u32 2147483647, %v1225
      %vm1239 = vcmp.eq.f32.partialorder %v1238, 8.507059e+37
      %v1240 = vand.u32 %v1225, 2147483648
      %v1241 = vor.u32 1.1754944e-38, %v1240
      %v1242 = vsel %vm1239, %v1241, %v1237
      %v1243 = vmul.f32 1.0, %v1242
      %v1244 = vrcp.pop %v1226
      %v1245 = vmul.f32 %v1226, %v1244
      %v1246 = vsub.f32 1.0, %v1245
      %v1247 = vmul.f32 %v1244, %v1246
      %v1248 = vadd.f32 %v1244, %v1247
      %vm1249 = vweird.f32 %v1226
      %vm1250 = vweird.f32 %v1244
      %vm1251 = vmor %vm1249, %vm1250
      %v1252 = vsel %vm1251, %v1244, %v1248
      %v1253 = vand.u32 2147483647, %v1226
      %vm1254 = vcmp.eq.f32.partialorder %v1253, 8.507059e+37
      %v1255 = vand.u32 %v1226, 2147483648
      %v1256 = vor.u32 1.1754944e-38, %v1255
      %v1257 = vsel %vm1254, %v1256, %v1252
      %v1258 = vmul.f32 1.0, %v1257
      %v1259 = vrcp.pop %v1227
      %v1260 = vmul.f32 %v1227, %v1259
      %v1261 = vsub.f32 1.0, %v1260
      %v1262 = vmul.f32 %v1259, %v1261
      %v1263 = vadd.f32 %v1259, %v1262
      %vm1264 = vweird.f32 %v1227
      %vm1265 = vweird.f32 %v1259
      %vm1266 = vmor %vm1264, %vm1265
      %v1267 = vsel %vm1266, %v1259, %v1263
      %v1268 = vand.u32 2147483647, %v1227
      %vm1269 = vcmp.eq.f32.partialorder %v1268, 8.507059e+37
      %v1270 = vand.u32 %v1227, 2147483648
      %v1271 = vor.u32 1.1754944e-38, %v1270
      %v1272 = vsel %vm1269, %v1271, %v1267
      %v1273 = vmul.f32 1.0, %v1272
      %v1274 = vrcp.pop %v1228
      %v1275 = vmul.f32 %v1228, %v1274
      %v1276 = vsub.f32 1.0, %v1275
      %v1277 = vmul.f32 %v1274, %v1276
      %v1278 = vadd.f32 %v1274, %v1277
      %vm1279 = vweird.f32 %v1228
      %vm1280 = vweird.f32 %v1274
      %vm1281 = vmor %vm1279, %vm1280
      %v1282 = vsel %vm1281, %v1274, %v1278
      %v1283 = vand.u32 2147483647, %v1228
      %vm1284 = vcmp.eq.f32.partialorder %v1283, 8.507059e+37
      %v1285 = vand.u32 %v1228, 2147483648
      %v1286 = vor.u32 1.1754944e-38, %v1285
      %v1287 = vsel %vm1284, %v1286, %v1282
      %v1288 = vmul.f32 1.0, %v1287
      %v1289 = vmul.f32 %v1209, %v1243
      %v1290 = vmul.f32 %v1210, %v1258
      %v1291 = vmul.f32 %v1211, %v1273
      %v1292 = vmul.f32 %v1212, %v1288
      %s1293 = scalar_lea.vmem %s5, 64
      %v1294 = vld [vmem:[%s1293] sm:$0xff]
      %v1295 = vld [vmem:[%s1293 + $0x8] sm:$0xff]
      %v1296 = vld [vmem:[%s1293 + $0x10] sm:$0xff]
      %v1297 = vld [vmem:[%s1293 + $0x18] sm:$0xff]
      %v1298 = vld [vmem:[%s1293 + $0x20] sm:$0xff]
      %v1299 = vld [vmem:[%s1293 + $0x28] sm:$0xff]
      %v1300 = vld [vmem:[%s1293 + $0x30] sm:$0xff]
      %v1301 = vld [vmem:[%s1293 + $0x38] sm:$0xff]
      %s1302 = scalar_lea.vmem %s6, 64
      %v1303 = vld [vmem:[%s1302] sm:$0xff]
      %v1304 = vld [vmem:[%s1302 + $0x8] sm:$0xff]
      %v1305 = vld [vmem:[%s1302 + $0x10] sm:$0xff]
      %v1306 = vld [vmem:[%s1302 + $0x18] sm:$0xff]
      %v1307 = vld [vmem:[%s1302 + $0x20] sm:$0xff]
      %v1308 = vld [vmem:[%s1302 + $0x28] sm:$0xff]
      %v1309 = vld [vmem:[%s1302 + $0x30] sm:$0xff]
      %v1310 = vld [vmem:[%s1302 + $0x38] sm:$0xff]
      %1312 = vset.pattern.permute.xlu0 0
      %1313 = vperm.xlu0 %1312, %v1303
      %v1314 = vpop.permute.xlu0 %1313
      %1316 = vset.pattern.permute.xlu0 0
      %1317 = vperm.xlu0 %1316, %v1304
      %v1318 = vpop.permute.xlu0 %1317
      %1320 = vset.pattern.permute.xlu0 0
      %1321 = vperm.xlu0 %1320, %v1305
      %v1322 = vpop.permute.xlu0 %1321
      %1324 = vset.pattern.permute.xlu0 0
      %1325 = vperm.xlu0 %1324, %v1306
      %v1326 = vpop.permute.xlu0 %1325
      %1328 = vset.pattern.permute.xlu0 0
      %1329 = vperm.xlu0 %1328, %v1307
      %v1330 = vpop.permute.xlu0 %1329
      %1333 = vset.pattern.permute.xlu0 0
      %1334 = vperm.xlu0 %1333, %v1308
      %v1335 = vpop.permute.xlu0 %1334
      %1338 = vset.pattern.permute.xlu0 0
      %1339 = vperm.xlu0 %1338, %v1309
      %v1340 = vpop.permute.xlu0 %1339
      %1343 = vset.pattern.permute.xlu0 0
      %1344 = vperm.xlu0 %1343, %v1310
      %v1345 = vpop.permute.xlu0 %1344
      %v1348 = vsel %vm960, %v1294, 0
      %v1351 = vsel %vm960, %v1295, 0
      %v1354 = vsel %vm960, %v1296, 0
      %v1357 = vsel %vm960, %v1297, 0
      %v1360 = vsel %vm960, %v1298, 0
      %v1363 = vsel %vm960, %v1299, 0
      %v1366 = vsel %vm960, %v1300, 0
      %v1369 = vsel %vm960, %v1301, 0
      %1371 = vmatpush.msra.mxu0 0.0
      %1372 = vmatpush.msra.mxu0 0.0
      %1373 = vmatpush.msra.mxu0 0.0
      %1374 = vmatpush.msra.mxu0 0.0
      %1375 = vmatpush.msra.mxu0 0.0
      %1376 = vmatpush.msra.mxu0 0.0
      %1377 = vmatpush.msra.mxu0 0.0
      %1378 = vmatpush.msra.mxu0 0.0
      %1379 = vmatpush.msra.mxu0 0.0
      %1380 = vmatpush.msra.mxu0 0.0
      %1381 = vmatpush.msra.mxu0 0.0
      %1382 = vmatpush.msra.mxu0 0.0
      %1383 = vmatpush.msra.mxu0 %v1292
      %1384 = vmatpush.msra.mxu0 %v1291
      %1385 = vmatpush.msra.mxu0 %v1290
      %1386 = vmatpush.msra.mxu0 %v1289
      %1387 = vmatmul.f32.gmra.mxu0 %v1348
      %v1388 = vpop.f32.mrf.mxu0
      %1389 = vmatmul.f32.gmra.mxu0 %v1351
      %v1390 = vpop.f32.mrf.mxu0
      %1391 = vmatmul.f32.gmra.mxu0 %v1354
      %v1392 = vpop.f32.mrf.mxu0
      %1393 = vmatmul.f32.gmra.mxu0 %v1357
      %v1394 = vpop.f32.mrf.mxu0
      %1395 = vmatmul.f32.gmra.mxu0 %v1360
      %v1396 = vpop.f32.mrf.mxu0
      %v1397 = vadd.f32 %v1330, %v1396
      %1398 = vmatmul.f32.gmra.mxu0 %v1363
      %v1399 = vpop.f32.mrf.mxu0
      %v1400 = vadd.f32 %v1335, %v1399
      %1401 = vmatmul.f32.gmra.mxu0 %v1366
      %v1402 = vpop.f32.mrf.mxu0
      %v1403 = vadd.f32 %v1340, %v1402
      %1404 = vmatmul.f32.gmra.mxu0 %v1369
      %v1405 = vpop.f32.mrf.mxu0
      %v1406 = vadd.f32 %v1345, %v1405
      %1407 = vdwg.mxu0
      %v1408 = vadd.f32 %v1030, %v1397
      %v1409 = vadd.f32 %v1031, %v1400
      %v1410 = vadd.f32 %v1032, %v1403
      %v1411 = vadd.f32 %v1033, %v1406
      %v1412 = vld [vmem:[%s12] sm:$0xf]
      %1414 = vset.pattern.permute.xlu0 0
      %1415 = vperm.xlu0 %1414, %v1412
      %v1416 = vpop.permute.xlu0 %1415
      %v1419 = vsel %vm960, %v624, 0
      %1421 = vmatpush.msra.mxu0 0.0
      %1422 = vmatpush.msra.mxu0 0.0
      %1423 = vmatpush.msra.mxu0 0.0
      %1424 = vmatpush.msra.mxu0 0.0
      %1425 = vmatpush.msra.mxu0 0.0
      %1426 = vmatpush.msra.mxu0 0.0
      %1427 = vmatpush.msra.mxu0 0.0
      %1428 = vmatpush.msra.mxu0 0.0
      %1429 = vmatpush.msra.mxu0 0.0
      %1430 = vmatpush.msra.mxu0 0.0
      %1431 = vmatpush.msra.mxu0 0.0
      %1432 = vmatpush.msra.mxu0 0.0
      %1433 = vmatpush.msra.mxu0 %v1411
      %1434 = vmatpush.msra.mxu0 %v1410
      %1435 = vmatpush.msra.mxu0 %v1409
      %1436 = vmatpush.msra.mxu0 %v1408
      %1437 = vmatmul.f32.gmra.mxu0 %v1419
      %v1438 = vpop.f32.mrf.mxu0
      %v1439 = vadd.f32 %v1416, %v1438
      %1440 = vdwg.mxu0
      %v1441 = vld [vmem:[%s13] sm:$0xf]
      %1442 = vst.msk [vmem:[#allocation2] sm:$0xff] %vm641, %v630
      %1443 = vst.msk [vmem:[#allocation2 + $0x8] sm:$0xff] %vm641, %v632
      %1444 = vst.msk [vmem:[#allocation2 + $0x10] sm:$0xff] %vm641, %v634
      %1445 = vst.msk [vmem:[#allocation2 + $0x18] sm:$0xff] %vm641, %v636
      %v1446 = vld [vmem:[#allocation2] sm:$0xff]
      %v1447 = vld [vmem:[#allocation2 + $0x8] sm:$0xff]
      %v1448 = vld [vmem:[#allocation2 + $0x10] sm:$0xff]
      %v1449 = vld [vmem:[#allocation2 + $0x18] sm:$0xff]
      %1454 = vrot.lane.b32.xlu0 %v1446, 127
      %v1455 = vpop.permute.xlu0 %1454
      %1456 = vrot.lane.b32.xlu0 %v1447, 127
      %v1457 = vpop.permute.xlu0 %1456
      %1458 = vrot.lane.b32.xlu0 %v1448, 127
      %v1459 = vpop.permute.xlu0 %1458
      %1460 = vrot.lane.b32.xlu0 %v1449, 127
      %v1461 = vpop.permute.xlu0 %1460
      %1462 = vrot.lane.b32.xlu0 %v1446, 126
      %v1463 = vpop.permute.xlu0 %1462
      %1464 = vrot.lane.b32.xlu0 %v1447, 126
      %v1465 = vpop.permute.xlu0 %1464
      %1466 = vrot.lane.b32.xlu0 %v1448, 126
      %v1467 = vpop.permute.xlu0 %1466
      %1468 = vrot.lane.b32.xlu0 %v1449, 126
      %v1469 = vpop.permute.xlu0 %1468
      %v1470 = vld [vmem:[%s7] sm:$0xff]
      %v1471 = vld [vmem:[%s7 + $0x8] sm:$0xff]
      %v1472 = vld [vmem:[%s7 + $0x10] sm:$0xff]
      %v1473 = vld [vmem:[%s7 + $0x18] sm:$0xff]
      %v1474 = vld [vmem:[%s7 + $0x20] sm:$0xff]
      %v1475 = vld [vmem:[%s7 + $0x28] sm:$0xff]
      %v1476 = vld [vmem:[%s7 + $0x30] sm:$0xff]
      %v1477 = vld [vmem:[%s7 + $0x38] sm:$0xff]
      %v1478 = vld [vmem:[%s8] sm:$0xff]
      %v1479 = vld [vmem:[%s8 + $0x8] sm:$0xff]
      %v1480 = vld [vmem:[%s8 + $0x10] sm:$0xff]
      %v1481 = vld [vmem:[%s8 + $0x18] sm:$0xff]
      %v1482 = vld [vmem:[%s8 + $0x20] sm:$0xff]
      %v1483 = vld [vmem:[%s8 + $0x28] sm:$0xff]
      %v1484 = vld [vmem:[%s8 + $0x30] sm:$0xff]
      %v1485 = vld [vmem:[%s8 + $0x38] sm:$0xff]
      %1487 = vset.pattern.permute.xlu0 0
      %1488 = vperm.xlu0 %1487, %v1478
      %v1489 = vpop.permute.xlu0 %1488
      %1492 = vset.pattern.permute.xlu0 0
      %1493 = vperm.xlu0 %1492, %v1479
      %v1494 = vpop.permute.xlu0 %1493
      %1497 = vset.pattern.permute.xlu0 0
      %1498 = vperm.xlu0 %1497, %v1480
      %v1499 = vpop.permute.xlu0 %1498
      %1502 = vset.pattern.permute.xlu0 0
      %1503 = vperm.xlu0 %1502, %v1481
      %v1504 = vpop.permute.xlu0 %1503
      %1507 = vset.pattern.permute.xlu0 0
      %1508 = vperm.xlu0 %1507, %v1482
      %v1509 = vpop.permute.xlu0 %1508
      %1512 = vset.pattern.permute.xlu0 0
      %1513 = vperm.xlu0 %1512, %v1483
      %v1514 = vpop.permute.xlu0 %1513
      %1517 = vset.pattern.permute.xlu0 0
      %1518 = vperm.xlu0 %1517, %v1484
      %v1519 = vpop.permute.xlu0 %1518
      %1522 = vset.pattern.permute.xlu0 0
      %1523 = vperm.xlu0 %1522, %v1485
      %v1524 = vpop.permute.xlu0 %1523
      %1526 = vrot.lane.b32.xlu0 %v1455, 127
      %v1527 = vpop.permute.xlu0 %1526
      %1528 = vrot.lane.b32.xlu0 %v1457, 127
      %v1529 = vpop.permute.xlu0 %1528
      %1530 = vrot.lane.b32.xlu0 %v1459, 127
      %v1531 = vpop.permute.xlu0 %1530
      %1532 = vrot.lane.b32.xlu0 %v1461, 127
      %v1533 = vpop.permute.xlu0 %1532
      %1534 = vrot.lane.b32.xlu0 %v1463, 127
      %v1535 = vpop.permute.xlu0 %1534
      %1536 = vrot.lane.b32.xlu0 %v1465, 127
      %v1537 = vpop.permute.xlu0 %1536
      %1538 = vrot.lane.b32.xlu0 %v1467, 127
      %v1539 = vpop.permute.xlu0 %1538
      %1540 = vrot.lane.b32.xlu0 %v1469, 127
      %v1541 = vpop.permute.xlu0 %1540
      %v1555 = vsel %vm754, %v1470, 0
      %v1558 = vsel %vm754, %v1471, 0
      %v1561 = vsel %vm754, %v1472, 0
      %v1564 = vsel %vm754, %v1473, 0
      %v1567 = vsel %vm754, %v1474, 0
      %v1570 = vsel %vm754, %v1475, 0
      %v1573 = vsel %vm754, %v1476, 0
      %v1576 = vsel %vm754, %v1477, 0
      %1578 = vmatpush.msra.mxu0 0.0
      %1579 = vmatpush.msra.mxu0 0.0
      %1580 = vmatpush.msra.mxu0 0.0
      %1581 = vmatpush.msra.mxu0 0.0
      %1582 = vmatpush.msra.mxu0 %v1541
      %1583 = vmatpush.msra.mxu0 %v1539
      %1584 = vmatpush.msra.mxu0 %v1537
      %1585 = vmatpush.msra.mxu0 %v1535
      %1586 = vmatpush.msra.mxu0 %v1533
      %1587 = vmatpush.msra.mxu0 %v1531
      %1588 = vmatpush.msra.mxu0 %v1529
      %1589 = vmatpush.msra.mxu0 %v1527
      %1590 = vmatpush.msra.mxu0 %v1461
      %1591 = vmatpush.msra.mxu0 %v1459
      %1592 = vmatpush.msra.mxu0 %v1457
      %1593 = vmatpush.msra.mxu0 %v1455
      %1594 = vmatmul.f32.gmra.mxu0 %v1555
      %v1595 = vpop.f32.mrf.mxu0
      %v1596 = vadd.f32 %v1489, %v1595
      %1597 = vmatmul.f32.gmra.mxu0 %v1558
      %v1598 = vpop.f32.mrf.mxu0
      %v1599 = vadd.f32 %v1494, %v1598
      %1600 = vmatmul.f32.gmra.mxu0 %v1561
      %v1601 = vpop.f32.mrf.mxu0
      %v1602 = vadd.f32 %v1499, %v1601
      %1603 = vmatmul.f32.gmra.mxu0 %v1564
      %v1604 = vpop.f32.mrf.mxu0
      %v1605 = vadd.f32 %v1504, %v1604
      %1606 = vmatmul.f32.gmra.mxu0 %v1567
      %v1607 = vpop.f32.mrf.mxu0
      %v1608 = vadd.f32 %v1509, %v1607
      %1609 = vmatmul.f32.gmra.mxu0 %v1570
      %v1610 = vpop.f32.mrf.mxu0
      %v1611 = vadd.f32 %v1514, %v1610
      %1612 = vmatmul.f32.gmra.mxu0 %v1573
      %v1613 = vpop.f32.mrf.mxu0
      %v1614 = vadd.f32 %v1519, %v1613
      %1615 = vmatmul.f32.gmra.mxu0 %v1576
      %v1616 = vpop.f32.mrf.mxu0
      %v1617 = vadd.f32 %v1524, %v1616
      %1618 = vdwg.mxu0
      %v1619 = vtanh.pop %v1596
      %v1620 = vtanh.pop %v1599
      %v1621 = vtanh.pop %v1602
      %v1622 = vtanh.pop %v1605
      %v1623 = vxor.u32 %v1608, 2147483648
      %v1624 = vxor.u32 %v1611, 2147483648
      %v1625 = vxor.u32 %v1614, 2147483648
      %v1626 = vxor.u32 %v1617, 2147483648
      %v1627 = vmul.f32 %v1623, 1.442695
      %v1628 = vpow.pop %v1627
      %v1629 = vmul.f32 %v1624, 1.442695
      %v1630 = vpow.pop %v1629
      %v1631 = vmul.f32 %v1625, 1.442695
      %v1632 = vpow.pop %v1631
      %v1633 = vmul.f32 %v1626, 1.442695
      %v1634 = vpow.pop %v1633
      %v1635 = vadd.f32 %v1628, 1.0
      %v1636 = vadd.f32 %v1630, 1.0
      %v1637 = vadd.f32 %v1632, 1.0
      %v1638 = vadd.f32 %v1634, 1.0
      %v1639 = vrcp.pop %v1635
      %v1640 = vmul.f32 %v1635, %v1639
      %v1641 = vsub.f32 1.0, %v1640
      %v1642 = vmul.f32 %v1639, %v1641
      %v1643 = vadd.f32 %v1639, %v1642
      %vm1644 = vweird.f32 %v1635
      %vm1645 = vweird.f32 %v1639
      %vm1646 = vmor %vm1644, %vm1645
      %v1647 = vsel %vm1646, %v1639, %v1643
      %v1648 = vand.u32 2147483647, %v1635
      %vm1649 = vcmp.eq.f32.partialorder %v1648, 8.507059e+37
      %v1650 = vand.u32 %v1635, 2147483648
      %v1651 = vor.u32 1.1754944e-38, %v1650
      %v1652 = vsel %vm1649, %v1651, %v1647
      %v1653 = vmul.f32 1.0, %v1652
      %v1654 = vrcp.pop %v1636
      %v1655 = vmul.f32 %v1636, %v1654
      %v1656 = vsub.f32 1.0, %v1655
      %v1657 = vmul.f32 %v1654, %v1656
      %v1658 = vadd.f32 %v1654, %v1657
      %vm1659 = vweird.f32 %v1636
      %vm1660 = vweird.f32 %v1654
      %vm1661 = vmor %vm1659, %vm1660
      %v1662 = vsel %vm1661, %v1654, %v1658
      %v1663 = vand.u32 2147483647, %v1636
      %vm1664 = vcmp.eq.f32.partialorder %v1663, 8.507059e+37
      %v1665 = vand.u32 %v1636, 2147483648
      %v1666 = vor.u32 1.1754944e-38, %v1665
      %v1667 = vsel %vm1664, %v1666, %v1662
      %v1668 = vmul.f32 1.0, %v1667
      %v1669 = vrcp.pop %v1637
      %v1670 = vmul.f32 %v1637, %v1669
      %v1671 = vsub.f32 1.0, %v1670
      %v1672 = vmul.f32 %v1669, %v1671
      %v1673 = vadd.f32 %v1669, %v1672
      %vm1674 = vweird.f32 %v1637
      %vm1675 = vweird.f32 %v1669
      %vm1676 = vmor %vm1674, %vm1675
      %v1677 = vsel %vm1676, %v1669, %v1673
      %v1678 = vand.u32 2147483647, %v1637
      %vm1679 = vcmp.eq.f32.partialorder %v1678, 8.507059e+37
      %v1680 = vand.u32 %v1637, 2147483648
      %v1681 = vor.u32 1.1754944e-38, %v1680
      %v1682 = vsel %vm1679, %v1681, %v1677
      %v1683 = vmul.f32 1.0, %v1682
      %v1684 = vrcp.pop %v1638
      %v1685 = vmul.f32 %v1638, %v1684
      %v1686 = vsub.f32 1.0, %v1685
      %v1687 = vmul.f32 %v1684, %v1686
      %v1688 = vadd.f32 %v1684, %v1687
      %vm1689 = vweird.f32 %v1638
      %vm1690 = vweird.f32 %v1684
      %vm1691 = vmor %vm1689, %vm1690
      %v1692 = vsel %vm1691, %v1684, %v1688
      %v1693 = vand.u32 2147483647, %v1638
      %vm1694 = vcmp.eq.f32.partialorder %v1693, 8.507059e+37
      %v1695 = vand.u32 %v1638, 2147483648
      %v1696 = vor.u32 1.1754944e-38, %v1695
      %v1697 = vsel %vm1694, %v1696, %v1692
      %v1698 = vmul.f32 1.0, %v1697
      %v1699 = vmul.f32 %v1619, %v1653
      %v1700 = vmul.f32 %v1620, %v1668
      %v1701 = vmul.f32 %v1621, %v1683
      %v1702 = vmul.f32 %v1622, %v1698
      %v1703 = vld [vmem:[%s9] sm:$0xff]
      %v1704 = vld [vmem:[%s9 + $0x8] sm:$0xff]
      %v1705 = vld [vmem:[%s9 + $0x10] sm:$0xff]
      %v1706 = vld [vmem:[%s9 + $0x18] sm:$0xff]
      %v1707 = vld [vmem:[%s9 + $0x20] sm:$0xff]
      %v1708 = vld [vmem:[%s9 + $0x28] sm:$0xff]
      %v1709 = vld [vmem:[%s9 + $0x30] sm:$0xff]
      %v1710 = vld [vmem:[%s9 + $0x38] sm:$0xff]
      %v1711 = vld [vmem:[%s10] sm:$0xff]
      %v1712 = vld [vmem:[%s10 + $0x8] sm:$0xff]
      %v1713 = vld [vmem:[%s10 + $0x10] sm:$0xff]
      %v1714 = vld [vmem:[%s10 + $0x18] sm:$0xff]
      %v1715 = vld [vmem:[%s10 + $0x20] sm:$0xff]
      %v1716 = vld [vmem:[%s10 + $0x28] sm:$0xff]
      %v1717 = vld [vmem:[%s10 + $0x30] sm:$0xff]
      %v1718 = vld [vmem:[%s10 + $0x38] sm:$0xff]
      %1720 = vset.pattern.permute.xlu0 0
      %1721 = vperm.xlu0 %1720, %v1711
      %v1722 = vpop.permute.xlu0 %1721
      %1725 = vset.pattern.permute.xlu0 0
      %1726 = vperm.xlu0 %1725, %v1712
      %v1727 = vpop.permute.xlu0 %1726
      %1730 = vset.pattern.permute.xlu0 0
      %1731 = vperm.xlu0 %1730, %v1713
      %v1732 = vpop.permute.xlu0 %1731
      %1735 = vset.pattern.permute.xlu0 0
      %1736 = vperm.xlu0 %1735, %v1714
      %v1737 = vpop.permute.xlu0 %1736
      %1740 = vset.pattern.permute.xlu0 0
      %1741 = vperm.xlu0 %1740, %v1715
      %v1742 = vpop.permute.xlu0 %1741
      %1745 = vset.pattern.permute.xlu0 0
      %1746 = vperm.xlu0 %1745, %v1716
      %v1747 = vpop.permute.xlu0 %1746
      %1750 = vset.pattern.permute.xlu0 0
      %1751 = vperm.xlu0 %1750, %v1717
      %v1752 = vpop.permute.xlu0 %1751
      %1755 = vset.pattern.permute.xlu0 0
      %1756 = vperm.xlu0 %1755, %v1718
      %v1757 = vpop.permute.xlu0 %1756
      %v1760 = vsel %vm960, %v1703, 0
      %v1763 = vsel %vm960, %v1704, 0
      %v1766 = vsel %vm960, %v1705, 0
      %v1769 = vsel %vm960, %v1706, 0
      %v1772 = vsel %vm960, %v1707, 0
      %v1775 = vsel %vm960, %v1708, 0
      %v1778 = vsel %vm960, %v1709, 0
      %v1781 = vsel %vm960, %v1710, 0
      %1783 = vmatpush.msra.mxu0 0.0
      %1784 = vmatpush.msra.mxu0 0.0
      %1785 = vmatpush.msra.mxu0 0.0
      %1786 = vmatpush.msra.mxu0 0.0
      %1787 = vmatpush.msra.mxu0 0.0
      %1788 = vmatpush.msra.mxu0 0.0
      %1789 = vmatpush.msra.mxu0 0.0
      %1790 = vmatpush.msra.mxu0 0.0
      %1791 = vmatpush.msra.mxu0 0.0
      %1792 = vmatpush.msra.mxu0 0.0
      %1793 = vmatpush.msra.mxu0 0.0
      %1794 = vmatpush.msra.mxu0 0.0
      %1795 = vmatpush.msra.mxu0 %v1702
      %1796 = vmatpush.msra.mxu0 %v1701
      %1797 = vmatpush.msra.mxu0 %v1700
      %1798 = vmatpush.msra.mxu0 %v1699
      %1799 = vmatmul.f32.gmra.mxu0 %v1760
      %v1800 = vpop.f32.mrf.mxu0
      %v1801 = vadd.f32 %v1722, %v1800
      %1802 = vmatmul.f32.gmra.mxu0 %v1763
      %v1803 = vpop.f32.mrf.mxu0
      %v1804 = vadd.f32 %v1727, %v1803
      %1805 = vmatmul.f32.gmra.mxu0 %v1766
      %v1806 = vpop.f32.mrf.mxu0
      %v1807 = vadd.f32 %v1732, %v1806
      %1808 = vmatmul.f32.gmra.mxu0 %v1769
      %v1809 = vpop.f32.mrf.mxu0
      %v1810 = vadd.f32 %v1737, %v1809
      %1811 = vmatmul.f32.gmra.mxu0 %v1772
      %v1812 = vpop.f32.mrf.mxu0
      %v1813 = vadd.f32 %v1742, %v1812
      %1814 = vmatmul.f32.gmra.mxu0 %v1775
      %v1815 = vpop.f32.mrf.mxu0
      %v1816 = vadd.f32 %v1747, %v1815
      %1817 = vmatmul.f32.gmra.mxu0 %v1778
      %v1818 = vpop.f32.mrf.mxu0
      %v1819 = vadd.f32 %v1752, %v1818
      %1820 = vmatmul.f32.gmra.mxu0 %v1781
      %v1821 = vpop.f32.mrf.mxu0
      %v1822 = vadd.f32 %v1757, %v1821
      %1823 = vdwg.mxu0
      %v1824 = vadd.f32 %v613, %v1801
      %v1825 = vadd.f32 %v616, %v1804
      %v1826 = vadd.f32 %v619, %v1807
      %v1827 = vadd.f32 %v622, %v1810
      %v1828 = vadd.f32 %v1813, 0.0
      %v1829 = vadd.f32 %v1816, 0.0
      %v1830 = vadd.f32 %v1819, 0.0
      %v1831 = vadd.f32 %v1822, 0.0
      %1836 = vrot.lane.b32.xlu0 %v1824, 2
      %v1837 = vpop.permute.xlu0 %1836
      %1838 = vrot.lane.b32.xlu0 %v1825, 2
      %v1839 = vpop.permute.xlu0 %1838
      %1840 = vrot.lane.b32.xlu0 %v1826, 2
      %v1841 = vpop.permute.xlu0 %1840
      %1842 = vrot.lane.b32.xlu0 %v1827, 2
      %v1843 = vpop.permute.xlu0 %1842
      %1848 = vst.msk [vmem:[#allocation2] sm:$0xff] %vm641, %v1837
      %1849 = vst.msk [vmem:[#allocation2 + $0x8] sm:$0xff] %vm641, %v1839
      %1850 = vst.msk [vmem:[#allocation2 + $0x10] sm:$0xff] %vm641, %v1841
      %1851 = vst.msk [vmem:[#allocation2 + $0x18] sm:$0xff] %vm641, %v1843
      %v1852 = vld [vmem:[#allocation2] sm:$0xff]
      %v1853 = vld [vmem:[#allocation2 + $0x8] sm:$0xff]
      %v1854 = vld [vmem:[#allocation2 + $0x10] sm:$0xff]
      %v1855 = vld [vmem:[#allocation2 + $0x18] sm:$0xff]
      %1860 = vrot.lane.b32.xlu0 %v1852, 126
      %v1861 = vpop.permute.xlu0 %1860
      %1862 = vrot.lane.b32.xlu0 %v1853, 126
      %v1863 = vpop.permute.xlu0 %1862
      %1864 = vrot.lane.b32.xlu0 %v1854, 126
      %v1865 = vpop.permute.xlu0 %1864
      %1866 = vrot.lane.b32.xlu0 %v1855, 126
      %v1867 = vpop.permute.xlu0 %1866
      %1872 = vrot.lane.b32.xlu0 %v1852, 124
      %v1873 = vpop.permute.xlu0 %1872
      %1874 = vrot.lane.b32.xlu0 %v1853, 124
      %v1875 = vpop.permute.xlu0 %1874
      %1876 = vrot.lane.b32.xlu0 %v1854, 124
      %v1877 = vpop.permute.xlu0 %1876
      %1878 = vrot.lane.b32.xlu0 %v1855, 124
      %v1879 = vpop.permute.xlu0 %1878
      %s1884 = scalar_lea.vmem %s7, 64
      %v1885 = vld [vmem:[%s1884] sm:$0xff]
      %v1886 = vld [vmem:[%s1884 + $0x8] sm:$0xff]
      %v1887 = vld [vmem:[%s1884 + $0x10] sm:$0xff]
      %v1888 = vld [vmem:[%s1884 + $0x18] sm:$0xff]
      %v1889 = vld [vmem:[%s1884 + $0x20] sm:$0xff]
      %v1890 = vld [vmem:[%s1884 + $0x28] sm:$0xff]
      %v1891 = vld [vmem:[%s1884 + $0x30] sm:$0xff]
      %v1892 = vld [vmem:[%s1884 + $0x38] sm:$0xff]
      %s1893 = scalar_lea.vmem %s8, 64
      %v1894 = vld [vmem:[%s1893] sm:$0xff]
      %v1895 = vld [vmem:[%s1893 + $0x8] sm:$0xff]
      %v1896 = vld [vmem:[%s1893 + $0x10] sm:$0xff]
      %v1897 = vld [vmem:[%s1893 + $0x18] sm:$0xff]
      %v1898 = vld [vmem:[%s1893 + $0x20] sm:$0xff]
      %v1899 = vld [vmem:[%s1893 + $0x28] sm:$0xff]
      %v1900 = vld [vmem:[%s1893 + $0x30] sm:$0xff]
      %v1901 = vld [vmem:[%s1893 + $0x38] sm:$0xff]
      %1903 = vset.pattern.permute.xlu0 0
      %1904 = vperm.xlu0 %1903, %v1894
      %v1905 = vpop.permute.xlu0 %1904
      %1908 = vset.pattern.permute.xlu0 0
      %1909 = vperm.xlu0 %1908, %v1895
      %v1910 = vpop.permute.xlu0 %1909
      %1913 = vset.pattern.permute.xlu0 0
      %1914 = vperm.xlu0 %1913, %v1896
      %v1915 = vpop.permute.xlu0 %1914
      %1918 = vset.pattern.permute.xlu0 0
      %1919 = vperm.xlu0 %1918, %v1897
      %v1920 = vpop.permute.xlu0 %1919
      %1923 = vset.pattern.permute.xlu0 0
      %1924 = vperm.xlu0 %1923, %v1898
      %v1925 = vpop.permute.xlu0 %1924
      %1928 = vset.pattern.permute.xlu0 0
      %1929 = vperm.xlu0 %1928, %v1899
      %v1930 = vpop.permute.xlu0 %1929
      %1933 = vset.pattern.permute.xlu0 0
      %1934 = vperm.xlu0 %1933, %v1900
      %v1935 = vpop.permute.xlu0 %1934
      %1938 = vset.pattern.permute.xlu0 0
      %1939 = vperm.xlu0 %1938, %v1901
      %v1940 = vpop.permute.xlu0 %1939
      %v1943 = vsel %vm754, %v1885, 0
      %v1946 = vsel %vm754, %v1886, 0
      %v1949 = vsel %vm754, %v1887, 0
      %v1952 = vsel %vm754, %v1888, 0
      %v1955 = vsel %vm754, %v1889, 0
      %v1958 = vsel %vm754, %v1890, 0
      %v1961 = vsel %vm754, %v1891, 0
      %v1964 = vsel %vm754, %v1892, 0
      %1966 = vmatpush.msra.mxu0 0.0
      %1967 = vmatpush.msra.mxu0 0.0
      %1968 = vmatpush.msra.mxu0 0.0
      %1969 = vmatpush.msra.mxu0 0.0
      %1970 = vmatpush.msra.mxu0 %v1879
      %1971 = vmatpush.msra.mxu0 %v1877
      %1972 = vmatpush.msra.mxu0 %v1875
      %1973 = vmatpush.msra.mxu0 %v1873
      %1974 = vmatpush.msra.mxu0 %v1867
      %1975 = vmatpush.msra.mxu0 %v1865
      %1976 = vmatpush.msra.mxu0 %v1863
      %1977 = vmatpush.msra.mxu0 %v1861
      %1978 = vmatpush.msra.mxu0 %v1855
      %1979 = vmatpush.msra.mxu0 %v1854
      %1980 = vmatpush.msra.mxu0 %v1853
      %1981 = vmatpush.msra.mxu0 %v1852
      %1982 = vmatmul.f32.gmra.mxu0 %v1943
      %v1983 = vpop.f32.mrf.mxu0
      %v1984 = vadd.f32 %v1905, %v1983
      %1985 = vmatmul.f32.gmra.mxu0 %v1946
      %v1986 = vpop.f32.mrf.mxu0
      %v1987 = vadd.f32 %v1910, %v1986
      %1988 = vmatmul.f32.gmra.mxu0 %v1949
      %v1989 = vpop.f32.mrf.mxu0
      %v1990 = vadd.f32 %v1915, %v1989
      %1991 = vmatmul.f32.gmra.mxu0 %v1952
      %v1992 = vpop.f32.mrf.mxu0
      %v1993 = vadd.f32 %v1920, %v1992
      %1994 = vmatmul.f32.gmra.mxu0 %v1955
      %v1995 = vpop.f32.mrf.mxu0
      %v1996 = vadd.f32 %v1925, %v1995
      %1997 = vmatmul.f32.gmra.mxu0 %v1958
      %v1998 = vpop.f32.mrf.mxu0
      %v1999 = vadd.f32 %v1930, %v1998
      %2000 = vmatmul.f32.gmra.mxu0 %v1961
      %v2001 = vpop.f32.mrf.mxu0
      %v2002 = vadd.f32 %v1935, %v2001
      %2003 = vmatmul.f32.gmra.mxu0 %v1964
      %v2004 = vpop.f32.mrf.mxu0
      %v2005 = vadd.f32 %v1940, %v2004
      %2006 = vdwg.mxu0
      %v2007 = vtanh.pop %v1984
      %v2008 = vtanh.pop %v1987
      %v2009 = vtanh.pop %v1990
      %v2010 = vtanh.pop %v1993
      %v2011 = vxor.u32 %v1996, 2147483648
      %v2012 = vxor.u32 %v1999, 2147483648
      %v2013 = vxor.u32 %v2002, 2147483648
      %v2014 = vxor.u32 %v2005, 2147483648
      %v2015 = vmul.f32 %v2011, 1.442695
      %v2016 = vpow.pop %v2015
      %v2017 = vmul.f32 %v2012, 1.442695
      %v2018 = vpow.pop %v2017
      %v2019 = vmul.f32 %v2013, 1.442695
      %v2020 = vpow.pop %v2019
      %v2021 = vmul.f32 %v2014, 1.442695
      %v2022 = vpow.pop %v2021
      %v2023 = vadd.f32 %v2016, 1.0
      %v2024 = vadd.f32 %v2018, 1.0
      %v2025 = vadd.f32 %v2020, 1.0
      %v2026 = vadd.f32 %v2022, 1.0
      %v2027 = vrcp.pop %v2023
      %v2028 = vmul.f32 %v2023, %v2027
      %v2029 = vsub.f32 1.0, %v2028
      %v2030 = vmul.f32 %v2027, %v2029
      %v2031 = vadd.f32 %v2027, %v2030
      %vm2032 = vweird.f32 %v2023
      %vm2033 = vweird.f32 %v2027
      %vm2034 = vmor %vm2032, %vm2033
      %v2035 = vsel %vm2034, %v2027, %v2031
      %v2036 = vand.u32 2147483647, %v2023
      %vm2037 = vcmp.eq.f32.partialorder %v2036, 8.507059e+37
      %v2038 = vand.u32 %v2023, 2147483648
      %v2039 = vor.u32 1.1754944e-38, %v2038
      %v2040 = vsel %vm2037, %v2039, %v2035
      %v2041 = vmul.f32 1.0, %v2040
      %v2042 = vrcp.pop %v2024
      %v2043 = vmul.f32 %v2024, %v2042
      %v2044 = vsub.f32 1.0, %v2043
      %v2045 = vmul.f32 %v2042, %v2044
      %v2046 = vadd.f32 %v2042, %v2045
      %vm2047 = vweird.f32 %v2024
      %vm2048 = vweird.f32 %v2042
      %vm2049 = vmor %vm2047, %vm2048
      %v2050 = vsel %vm2049, %v2042, %v2046
      %v2051 = vand.u32 2147483647, %v2024
      %vm2052 = vcmp.eq.f32.partialorder %v2051, 8.507059e+37
      %v2053 = vand.u32 %v2024, 2147483648
      %v2054 = vor.u32 1.1754944e-38, %v2053
      %v2055 = vsel %vm2052, %v2054, %v2050
      %v2056 = vmul.f32 1.0, %v2055
      %v2057 = vrcp.pop %v2025
      %v2058 = vmul.f32 %v2025, %v2057
      %v2059 = vsub.f32 1.0, %v2058
      %v2060 = vmul.f32 %v2057, %v2059
      %v2061 = vadd.f32 %v2057, %v2060
      %vm2062 = vweird.f32 %v2025
      %vm2063 = vweird.f32 %v2057
      %vm2064 = vmor %vm2062, %vm2063
      %v2065 = vsel %vm2064, %v2057, %v2061
      %v2066 = vand.u32 2147483647, %v2025
      %vm2067 = vcmp.eq.f32.partialorder %v2066, 8.507059e+37
      %v2068 = vand.u32 %v2025, 2147483648
      %v2069 = vor.u32 1.1754944e-38, %v2068
      %v2070 = vsel %vm2067, %v2069, %v2065
      %v2071 = vmul.f32 1.0, %v2070
      %v2072 = vrcp.pop %v2026
      %v2073 = vmul.f32 %v2026, %v2072
      %v2074 = vsub.f32 1.0, %v2073
      %v2075 = vmul.f32 %v2072, %v2074
      %v2076 = vadd.f32 %v2072, %v2075
      %vm2077 = vweird.f32 %v2026
      %vm2078 = vweird.f32 %v2072
      %vm2079 = vmor %vm2077, %vm2078
      %v2080 = vsel %vm2079, %v2072, %v2076
      %v2081 = vand.u32 2147483647, %v2026
      %vm2082 = vcmp.eq.f32.partialorder %v2081, 8.507059e+37
      %v2083 = vand.u32 %v2026, 2147483648
      %v2084 = vor.u32 1.1754944e-38, %v2083
      %v2085 = vsel %vm2082, %v2084, %v2080
      %v2086 = vmul.f32 1.0, %v2085
      %v2087 = vmul.f32 %v2007, %v2041
      %v2088 = vmul.f32 %v2008, %v2056
      %v2089 = vmul.f32 %v2009, %v2071
      %v2090 = vmul.f32 %v2010, %v2086
      %s2091 = scalar_lea.vmem %s9, 64
      %v2092 = vld [vmem:[%s2091] sm:$0xff]
      %v2093 = vld [vmem:[%s2091 + $0x8] sm:$0xff]
      %v2094 = vld [vmem:[%s2091 + $0x10] sm:$0xff]
      %v2095 = vld [vmem:[%s2091 + $0x18] sm:$0xff]
      %v2096 = vld [vmem:[%s2091 + $0x20] sm:$0xff]
      %v2097 = vld [vmem:[%s2091 + $0x28] sm:$0xff]
      %v2098 = vld [vmem:[%s2091 + $0x30] sm:$0xff]
      %v2099 = vld [vmem:[%s2091 + $0x38] sm:$0xff]
      %s2100 = scalar_lea.vmem %s10, 64
      %v2101 = vld [vmem:[%s2100] sm:$0xff]
      %v2102 = vld [vmem:[%s2100 + $0x8] sm:$0xff]
      %v2103 = vld [vmem:[%s2100 + $0x10] sm:$0xff]
      %v2104 = vld [vmem:[%s2100 + $0x18] sm:$0xff]
      %v2105 = vld [vmem:[%s2100 + $0x20] sm:$0xff]
      %v2106 = vld [vmem:[%s2100 + $0x28] sm:$0xff]
      %v2107 = vld [vmem:[%s2100 + $0x30] sm:$0xff]
      %v2108 = vld [vmem:[%s2100 + $0x38] sm:$0xff]
      %2110 = vset.pattern.permute.xlu0 0
      %2111 = vperm.xlu0 %2110, %v2101
      %v2112 = vpop.permute.xlu0 %2111
      %2114 = vset.pattern.permute.xlu0 0
      %2115 = vperm.xlu0 %2114, %v2102
      %v2116 = vpop.permute.xlu0 %2115
      %2118 = vset.pattern.permute.xlu0 0
      %2119 = vperm.xlu0 %2118, %v2103
      %v2120 = vpop.permute.xlu0 %2119
      %2122 = vset.pattern.permute.xlu0 0
      %2123 = vperm.xlu0 %2122, %v2104
      %v2124 = vpop.permute.xlu0 %2123
      %2126 = vset.pattern.permute.xlu0 0
      %2127 = vperm.xlu0 %2126, %v2105
      %v2128 = vpop.permute.xlu0 %2127
      %2131 = vset.pattern.permute.xlu0 0
      %2132 = vperm.xlu0 %2131, %v2106
      %v2133 = vpop.permute.xlu0 %2132
      %2136 = vset.pattern.permute.xlu0 0
      %2137 = vperm.xlu0 %2136, %v2107
      %v2138 = vpop.permute.xlu0 %2137
      %2141 = vset.pattern.permute.xlu0 0
      %2142 = vperm.xlu0 %2141, %v2108
      %v2143 = vpop.permute.xlu0 %2142
      %v2146 = vsel %vm960, %v2092, 0
      %v2149 = vsel %vm960, %v2093, 0
      %v2152 = vsel %vm960, %v2094, 0
      %v2155 = vsel %vm960, %v2095, 0
      %v2158 = vsel %vm960, %v2096, 0
      %v2161 = vsel %vm960, %v2097, 0
      %v2164 = vsel %vm960, %v2098, 0
      %v2167 = vsel %vm960, %v2099, 0
      %2169 = vmatpush.msra.mxu0 0.0
      %2170 = vmatpush.msra.mxu0 0.0
      %2171 = vmatpush.msra.mxu0 0.0
      %2172 = vmatpush.msra.mxu0 0.0
      %2173 = vmatpush.msra.mxu0 0.0
      %2174 = vmatpush.msra.mxu0 0.0
      %2175 = vmatpush.msra.mxu0 0.0
      %2176 = vmatpush.msra.mxu0 0.0
      %2177 = vmatpush.msra.mxu0 0.0
      %2178 = vmatpush.msra.mxu0 0.0
      %2179 = vmatpush.msra.mxu0 0.0
      %2180 = vmatpush.msra.mxu0 0.0
      %2181 = vmatpush.msra.mxu0 %v2090
      %2182 = vmatpush.msra.mxu0 %v2089
      %2183 = vmatpush.msra.mxu0 %v2088
      %2184 = vmatpush.msra.mxu0 %v2087
      %2185 = vmatmul.f32.gmra.mxu0 %v2146
      %v2186 = vpop.f32.mrf.mxu0
      %2187 = vmatmul.f32.gmra.mxu0 %v2149
      %v2188 = vpop.f32.mrf.mxu0
      %2189 = vmatmul.f32.gmra.mxu0 %v2152
      %v2190 = vpop.f32.mrf.mxu0
      %2191 = vmatmul.f32.gmra.mxu0 %v2155
      %v2192 = vpop.f32.mrf.mxu0
      %2193 = vmatmul.f32.gmra.mxu0 %v2158
      %v2194 = vpop.f32.mrf.mxu0
      %v2195 = vadd.f32 %v2128, %v2194
      %2196 = vmatmul.f32.gmra.mxu0 %v2161
      %v2197 = vpop.f32.mrf.mxu0
      %v2198 = vadd.f32 %v2133, %v2197
      %2199 = vmatmul.f32.gmra.mxu0 %v2164
      %v2200 = vpop.f32.mrf.mxu0
      %v2201 = vadd.f32 %v2138, %v2200
      %2202 = vmatmul.f32.gmra.mxu0 %v2167
      %v2203 = vpop.f32.mrf.mxu0
      %v2204 = vadd.f32 %v2143, %v2203
      %2205 = vdwg.mxu0
      %v2206 = vadd.f32 %v1828, %v2195
      %v2207 = vadd.f32 %v1829, %v2198
      %v2208 = vadd.f32 %v1830, %v2201
      %v2209 = vadd.f32 %v1831, %v2204
      %v2210 = vld [vmem:[%s14] sm:$0xf]
      %2212 = vset.pattern.permute.xlu0 0
      %2213 = vperm.xlu0 %2212, %v2210
      %v2214 = vpop.permute.xlu0 %2213
      %v2217 = vsel %vm960, %v1441, 0
      %2219 = vmatpush.msra.mxu0 0.0
      %2220 = vmatpush.msra.mxu0 0.0
      %2221 = vmatpush.msra.mxu0 0.0
      %2222 = vmatpush.msra.mxu0 0.0
      %2223 = vmatpush.msra.mxu0 0.0
      %2224 = vmatpush.msra.mxu0 0.0
      %2225 = vmatpush.msra.mxu0 0.0
      %2226 = vmatpush.msra.mxu0 0.0
      %2227 = vmatpush.msra.mxu0 0.0
      %2228 = vmatpush.msra.mxu0 0.0
      %2229 = vmatpush.msra.mxu0 0.0
      %2230 = vmatpush.msra.mxu0 0.0
      %2231 = vmatpush.msra.mxu0 %v2209
      %2232 = vmatpush.msra.mxu0 %v2208
      %2233 = vmatpush.msra.mxu0 %v2207
      %2234 = vmatpush.msra.mxu0 %v2206
      %2235 = vmatmul.f32.gmra.mxu0 %v2217
      %v2236 = vpop.f32.mrf.mxu0
      %v2237 = vadd.f32 %v2214, %v2236
      %2238 = vdwg.mxu0
      %v2239 = vld [vmem:[%s15] sm:$0xff]
      %v2240 = vld [vmem:[%s15 + $0x8] sm:$0xff]
      %v2241 = vld [vmem:[%s15 + $0x10] sm:$0xff]
      %v2242 = vld [vmem:[%s15 + $0x18] sm:$0xff]
      %v2243 = vld [vmem:[%s16] sm:$0xff]
      %v2244 = vld [vmem:[%s16 + $0x8] sm:$0xff]
      %v2245 = vld [vmem:[%s16 + $0x10] sm:$0xff]
      %v2246 = vld [vmem:[%s16 + $0x18] sm:$0xff]
      %v2248 = vsel %vm960, %v2237, 0
      %2250 = vmatpush.msra.mxu0 0.0
      %2251 = vmatpush.msra.mxu0 0.0
      %2252 = vmatpush.msra.mxu0 0.0
      %2253 = vmatpush.msra.mxu0 0.0
      %2254 = vmatpush.msra.mxu0 0.0
      %2255 = vmatpush.msra.mxu0 0.0
      %2256 = vmatpush.msra.mxu0 0.0
      %2257 = vmatpush.msra.mxu0 0.0
      %2258 = vmatpush.msra.mxu0 0.0
      %2259 = vmatpush.msra.mxu0 0.0
      %2260 = vmatpush.msra.mxu0 0.0
      %2261 = vmatpush.msra.mxu0 0.0
      %2262 = vmatpush.msra.mxu0 %v2246
      %2263 = vmatpush.msra.mxu0 %v2245
      %2264 = vmatpush.msra.mxu0 %v2244
      %2265 = vmatpush.msra.mxu0 %v2243
      %2266 = vmatmul.f32.gmra.mxu0 %v2248
      %v2267 = vpop.f32.mrf.mxu0
      %v2268 = vadd.f32 0.0, %v2267
      %2269 = vdwg.mxu0
      %v2271 = vsel %vm960, %v1439, 0
      %2273 = vmatpush.msra.mxu0 0.0
      %2274 = vmatpush.msra.mxu0 0.0
      %2275 = vmatpush.msra.mxu0 0.0
      %2276 = vmatpush.msra.mxu0 0.0
      %2277 = vmatpush.msra.mxu0 0.0
      %2278 = vmatpush.msra.mxu0 0.0
      %2279 = vmatpush.msra.mxu0 0.0
      %2280 = vmatpush.msra.mxu0 0.0
      %2281 = vmatpush.msra.mxu0 0.0
      %2282 = vmatpush.msra.mxu0 0.0
      %2283 = vmatpush.msra.mxu0 0.0
      %2284 = vmatpush.msra.mxu0 0.0
      %2285 = vmatpush.msra.mxu0 %v2242
      %2286 = vmatpush.msra.mxu0 %v2241
      %2287 = vmatpush.msra.mxu0 %v2240
      %2288 = vmatpush.msra.mxu0 %v2239
      %2289 = vmatmul.f32.gmra.mxu0 %v2271
      %v2290 = vpop.f32.mrf.mxu0
      %v2291 = vadd.f32 %v2268, %v2290
      %2292 = vdwg.mxu0
      %v2293 = vadd.f32 %v549, %v2291
      %vm2294 = vcmask 257024
      %2295 = vst.msk [vmem:[%s543] sm:$0xf] %vm2294, %v2293
      %p2296 = scmp.lt.s32.totalorder %s28, 1
      %s2297 = scalar_select %p2296, %s28, 1
      %s2298 = smul.addr %s2297, 4
      %s2299 = scalar_lea.vmem %s17, %s2298
      // Predicated region
      $region89: #{encoder_forward.7} parent=87 // pred_check
        %p2300 = pneg %p408
      $region90: #{encoder_forward.7} parent=87 // pred_check_branch
        %2302 = sbr.rel (%p2300) target = $region92
      $region91: #{encoder_forward.7} parent=87 // pred_region
        _
      $region92: #{encoder_forward.7} parent=87 // pred_fallthru
        _
    $region88: #{encoder_forward.7} parent=5 // pred_fallthru
      _
    %p2303 = scmp.le.s32.totalorder 2, %s23
    // Predicated region
    $region93: #{encoder_forward.7} parent=5 // pred_check
      %p2304 = pneg %p2303
    $region94: #{encoder_forward.7} parent=5 // pred_check_branch
      %2306 = sbr.rel (%p2304) target = $region96
    $region95: #{encoder_forward.7} parent=5 // pred_region
      %s2307 = ssub.s32 %s23, 2
      // Predicated region
      $region97: #{encoder_forward.7} parent=95 // pred_check
        %p2308 = pneg %p414
      $region98: #{encoder_forward.7} parent=95 // pred_check_branch
        %2310 = sbr.rel (%p2308) target = $region100
      $region99: #{encoder_forward.7} parent=95 // pred_region
        %p2311 = scmp.lt.s32.totalorder %s29, 1
        %s2312 = scalar_select %p2311, %s29, 1
        %s2313 = smul.addr %s2312, 4
        %s2314 = scalar_lea.vmem %s17, %s2313
      $region100: #{encoder_forward.7} parent=95 // pred_fallthru
        _
    $region96: #{encoder_forward.7} parent=5 // pred_fallthru
      _
  $region6: #{encoder_forward.7} parent=0 // loop_footer
    %s27 = sadd.s32 1, %s23
  $region7: #{encoder_forward.7} parent=0 // loop_footer_branch
    %22 = sbr.rel target = $region3
  $region8: #{encoder_forward.7} parent=0 // loop_exit
    _

// kernel: encoder_forward.4
$region0: #{encoder_forward.4}
  #allocation0 [shape = 'u32[]', space=smem, size = 0x4, offset = 0x4, fixed_abs, tag = 'smem constant byte address 0x4 - core index']
  #allocation1 [shape = 'u32[72,128]{1,0:T(1,128)}', space=vmem, size = 0x9000, scoped, tag = 'internal scratch']
  #allocation2 [shape = 'f32[32,20]{1,0:T(8,128)}', space=vmem, size = 0x4000, scoped, tag = 'scratch operand']
  %s0 = inlined_call_operand.vmem [shape: f32[2,4,8], index: 0, kind: input, shape index: {}]
  %s1 = inlined_call_operand.vmem [shape: f32[8,16], index: 1, kind: input, shape index: {}]
  %s2 = inlined_call_operand.vmem [shape: f32[32,4], index: 2, kind: input, shape index: {}]
  %s3 = inlined_call_operand.vmem [shape: f32[32,1], index: 3, kind: input, shape index: {}]
  %s4 = inlined_call_operand.vmem [shape: f32[2,64,96], index: 4, kind: input, shape index: {}]
  %s5 = inlined_call_operand.vmem [shape: f32[2,64,1], index: 5, kind: input, shape index: {}]
  %s6 = inlined_call_operand.vmem [shape: f32[2,64,32], index: 6, kind: input, shape index: {}]
  %s7 = inlined_call_operand.vmem [shape: f32[2,64,1], index: 7, kind: input, shape index: {}]
  %s8 = inlined_call_operand.vmem [shape: f32[4,32], index: 8, kind: input, shape index: {}]
  %s9 = inlined_call_operand.vmem [shape: f32[4,1], index: 9, kind: input, shape index: {}]
  %s10 = inlined_call_operand.vmem [shape: f32[32,4], index: 10, kind: input, shape index: {}]
  %s11 = inlined_call_operand.vmem [shape: f32[32,1], index: 11, kind: input, shape index: {}]
  %s12 = inlined_call_operand.vmem [shape: f32[2,64,96], index: 12, kind: input, shape index: {}]
  %s13 = inlined_call_operand.vmem [shape: f32[2,64,1], index: 13, kind: input, shape index: {}]
  %s14 = inlined_call_operand.vmem [shape: f32[2,64,32], index: 14, kind: input, shape index: {}]
  %s15 = inlined_call_operand.vmem [shape: f32[2,64,1], index: 15, kind: input, shape index: {}]
  %s16 = inlined_call_operand.vmem [shape: f32[4,32], index: 16, kind: input, shape index: {}]
  %s17 = inlined_call_operand.vmem [shape: f32[4,1], index: 17, kind: input, shape index: {}]
  %s18 = inlined_call_operand.vmem [shape: f32[2,4,16], index: 18, kind: output, shape index: {}]
  %s19 = sld [smem:[#allocation0]]
  $region105: #{encoder_forward.4} parent=0
    _
  %s21 = ssub.s32 1, %s19
  %s22 = scalar_select 0, %s21, %s19
  loop: start=0, step=1, limit=4
  $region2: #{encoder_forward.4} parent=0 // loop_pre_header
    _
  $region3: #{encoder_forward.4} parent=0 // loop_header
    %s24 = sphi 0, %s28
    %p25 = scmp.ge.s32.totalorder %s24, 4
    %s34 = sphi 0, %s36
    %s37 = sphi 0, %s34
    %s38 = sphi 0, %s37
    %s54 = sphi 0, %s38
    %s58 = sphi 0, %s58
    %s60 = sphi 0, %s58
    %s61 = sphi 0, %s60
    %s75 = sphi 0, %s61
    %s79 = sphi 0, %s79
    %s81 = sphi 0, %s79
    %s82 = sphi 0, %s81
    %s96 = sphi 0, %s82
    %s100 = sphi 0, %s100
    %s102 = sphi 0, %s100
    %s103 = sphi 0, %s102
    %s117 = sphi 0, %s103
    %s121 = sphi 0, %s121
    %s123 = sphi 0, %s121
    %s124 = sphi 0, %s123
    %s138 = sphi 0, %s124
    %s142 = sphi 0, %s142
    %s144 = sphi 0, %s142
    %s145 = sphi 0, %s144
    %s159 = sphi 0, %s145
    %s163 = sphi 0, %s163
    %s165 = sphi 0, %s163
    %s166 = sphi 0, %s165
    %s180 = sphi 0, %s166
    %s184 = sphi 0, %s184
    %s186 = sphi 0, %s184
    %s187 = sphi 0, %s186
    %s201 = sphi 0, %s187
    %s205 = sphi 0, %s205
    %s207 = sphi 0, %s205
    %s208 = sphi 0, %s207
    %s222 = sphi 0, %s208
    %s226 = sphi 0, %s226
    %s228 = sphi 0, %s226
    %s229 = sphi 0, %s228
    %s243 = sphi 0, %s229
    %s247 = sphi 0, %s247
    %s249 = sphi 0, %s247
    %s250 = sphi 0, %s249
    %s264 = sphi 0, %s250
    %s268 = sphi 0, %s268
    %s270 = sphi 0, %s268
    %s271 = sphi 0, %s270
    %s285 = sphi 0, %s271
    %s289 = sphi 0, %s289
    %s291 = sphi 0, %s289
    %s292 = sphi 0, %s291
    %s306 = sphi 0, %s292
    %s310 = sphi 0, %s310
    %s312 = sphi 0, %s310
    %s313 = sphi 0, %s312
    %s327 = sphi 0, %s313
    %s331 = sphi 0, %s331
    %s333 = sphi 0, %s331
    %s334 = sphi 0, %s333
    %s348 = sphi 0, %s334
    %s352 = sphi 0, %s352
    %s354 = sphi 0, %s352
    %s355 = sphi 0, %s354
    %s369 = sphi 0, %s355
    %s373 = sphi 0, %s373
    %s375 = sphi 0, %s373
    %s376 = sphi 0, %s375
    %s390 = sphi 0, %s376
    %s394 = sphi 0, %s394
    %s396 = sphi 0, %s394
    %s397 = sphi 0, %s396
    %s411 = sphi 0, %s397
    %s417 = sphi 0, %s419
    %s420 = sphi 0, %s417
    %s421 = sphi 0, %s420
    %s437 = sphi 0, %s421
  $region4: #{encoder_forward.4} parent=0 // loop_header_branch
    %27 = sbr.rel (%p25) target = $region8
  $region5: #{encoder_forward.4} parent=0 // loop_body
    %s29 = ssub.s32 %s24, 1
    %s30 = ssub.s32 %s24, 2
    %s31 = sadd.s32 %s24, 1
    %s32 = ssub.s32 %s24, %s31
    %p33 = scmp.eq.s32.totalorder %s32, 0
    %s35 = sadd.s32 %s34, 1
    %s36 = scalar_select %p33, %s34, %s35
    %p39 = pneg %p33
    %p40 = scmp.eq.s32.totalorder %s24, 1
    %p41 = por %p39, %p40
    %p42 = scmp.ne.s32.totalorder %s34, %s37
    %p43 = scmp.eq.s32.totalorder %s24, 0
    %p44 = por %p42, %p43
    %p45 = scmp.ne.s32.totalorder %s34, %s37
    %p46 = scmp.eq.s32.totalorder %s29, 1
    %p47 = por %p45, %p46
    %p48 = scmp.ne.s32.totalorder %s37, %s38
    %p49 = scmp.eq.s32.totalorder %s29, 0
    %p50 = por %p48, %p49
    %p51 = scmp.ne.s32.totalorder %s37, %s38
    %p52 = scmp.eq.s32.totalorder %s30, 1
    %p53 = por %p51, %p52
    %p55 = scmp.ne.s32.totalorder %s38, %s54
    %p56 = scmp.eq.s32.totalorder %s30, 0
    %p57 = por %p55, %p56
    %s59 = sadd.s32 %s58, 1
    %p62 = scmp.eq.s32.totalorder %s24, 1
    %p63 = scmp.ne.s32.totalorder %s58, %s60
    %p64 = scmp.eq.s32.totalorder %s24, 0
    %p65 = por %p63, %p64
    %p66 = scmp.ne.s32.totalorder %s58, %s60
    %p67 = scmp.eq.s32.totalorder %s29, 1
    %p68 = por %p66, %p67
    %p69 = scmp.ne.s32.totalorder %s60, %s61
    %p70 = scmp.eq.s32.totalorder %s29, 0
    %p71 = por %p69, %p70
    %p72 = scmp.ne.s32.totalorder %s60, %s61
    %p73 = scmp.eq.s32.totalorder %s30, 1
    %p74 = por %p72, %p73
    %p76 = scmp.ne.s32.totalorder %s61, %s75
    %p77 = scmp.eq.s32.totalorder %s30, 0
    %p78 = por %p76, %p77
    %s80 = sadd.s32 %s79, 1
    %p83 = scmp.eq.s32.totalorder %s24, 1
    %p84 = scmp.ne.s32.totalorder %s79, %s81
    %p85 = scmp.eq.s32.totalorder %s24, 0
    %p86 = por %p84, %p85
    %p87 = scmp.ne.s32.totalorder %s79, %s81
    %p88 = scmp.eq.s32.totalorder %s29, 1
    %p89 = por %p87, %p88
    %p90 = scmp.ne.s32.totalorder %s81, %s82
    %p91 = scmp.eq.s32.totalorder %s29, 0
    %p92 = por %p90, %p91
    %p93 = scmp.ne.s32.totalorder %s81, %s82
    %p94 = scmp.eq.s32.totalorder %s30, 1
    %p95 = por %p93, %p94
    %p97 = scmp.ne.s32.totalorder %s82, %s96
    %p98 = scmp.eq.s32.totalorder %s30, 0
    %p99 = por %p97, %p98
    %s101 = sadd.s32 %s100, 1
    %p104 = scmp.eq.s32.totalorder %s24, 1
    %p105 = scmp.ne.s32.totalorder %s100, %s102
    %p106 = scmp.eq.s32.totalorder %s24, 0
    %p107 = por %p105, %p106
    %p108 = scmp.ne.s32.totalorder %s100, %s102
    %p109 = scmp.eq.s32.totalorder %s29, 1
    %p110 = por %p108, %p109
    %p111 = scmp.ne.s32.totalorder %s102, %s103
    %p112 = scmp.eq.s32.totalorder %s29, 0
    %p113 = por %p111, %p112
    %p114 = scmp.ne.s32.totalorder %s102, %s103
    %p115 = scmp.eq.s32.totalorder %s30, 1
    %p116 = por %p114, %p115
    %p118 = scmp.ne.s32.totalorder %s103, %s117
    %p119 = scmp.eq.s32.totalorder %s30, 0
    %p120 = por %p118, %p119
    %s122 = sadd.s32 %s121, 1
    %p125 = scmp.eq.s32.totalorder %s24, 1
    %p126 = scmp.ne.s32.totalorder %s121, %s123
    %p127 = scmp.eq.s32.totalorder %s24, 0
    %p128 = por %p126, %p127
    %p129 = scmp.ne.s32.totalorder %s121, %s123
    %p130 = scmp.eq.s32.totalorder %s29, 1
    %p131 = por %p129, %p130
    %p132 = scmp.ne.s32.totalorder %s123, %s124
    %p133 = scmp.eq.s32.totalorder %s29, 0
    %p134 = por %p132, %p133
    %p135 = scmp.ne.s32.totalorder %s123, %s124
    %p136 = scmp.eq.s32.totalorder %s30, 1
    %p137 = por %p135, %p136
    %p139 = scmp.ne.s32.totalorder %s124, %s138
    %p140 = scmp.eq.s32.totalorder %s30, 0
    %p141 = por %p139, %p140
    %s143 = sadd.s32 %s142, 1
    %p146 = scmp.eq.s32.totalorder %s24, 1
    %p147 = scmp.ne.s32.totalorder %s142, %s144
    %p148 = scmp.eq.s32.totalorder %s24, 0
    %p149 = por %p147, %p148
    %p150 = scmp.ne.s32.totalorder %s142, %s144
    %p151 = scmp.eq.s32.totalorder %s29, 1
    %p152 = por %p150, %p151
    %p153 = scmp.ne.s32.totalorder %s144, %s145
    %p154 = scmp.eq.s32.totalorder %s29, 0
    %p155 = por %p153, %p154
    %p156 = scmp.ne.s32.totalorder %s144, %s145
    %p157 = scmp.eq.s32.totalorder %s30, 1
    %p158 = por %p156, %p157
    %p160 = scmp.ne.s32.totalorder %s145, %s159
    %p161 = scmp.eq.s32.totalorder %s30, 0
    %p162 = por %p160, %p161
    %s164 = sadd.s32 %s163, 1
    %p167 = scmp.eq.s32.totalorder %s24, 1
    %p168 = scmp.ne.s32.totalorder %s163, %s165
    %p169 = scmp.eq.s32.totalorder %s24, 0
    %p170 = por %p168, %p169
    %p171 = scmp.ne.s32.totalorder %s163, %s165
    %p172 = scmp.eq.s32.totalorder %s29, 1
    %p173 = por %p171, %p172
    %p174 = scmp.ne.s32.totalorder %s165, %s166
    %p175 = scmp.eq.s32.totalorder %s29, 0
    %p176 = por %p174, %p175
    %p177 = scmp.ne.s32.totalorder %s165, %s166
    %p178 = scmp.eq.s32.totalorder %s30, 1
    %p179 = por %p177, %p178
    %p181 = scmp.ne.s32.totalorder %s166, %s180
    %p182 = scmp.eq.s32.totalorder %s30, 0
    %p183 = por %p181, %p182
    %s185 = sadd.s32 %s184, 1
    %p188 = scmp.eq.s32.totalorder %s24, 1
    %p189 = scmp.ne.s32.totalorder %s184, %s186
    %p190 = scmp.eq.s32.totalorder %s24, 0
    %p191 = por %p189, %p190
    %p192 = scmp.ne.s32.totalorder %s184, %s186
    %p193 = scmp.eq.s32.totalorder %s29, 1
    %p194 = por %p192, %p193
    %p195 = scmp.ne.s32.totalorder %s186, %s187
    %p196 = scmp.eq.s32.totalorder %s29, 0
    %p197 = por %p195, %p196
    %p198 = scmp.ne.s32.totalorder %s186, %s187
    %p199 = scmp.eq.s32.totalorder %s30, 1
    %p200 = por %p198, %p199
    %p202 = scmp.ne.s32.totalorder %s187, %s201
    %p203 = scmp.eq.s32.totalorder %s30, 0
    %p204 = por %p202, %p203
    %s206 = sadd.s32 %s205, 1
    %p209 = scmp.eq.s32.totalorder %s24, 1
    %p210 = scmp.ne.s32.totalorder %s205, %s207
    %p211 = scmp.eq.s32.totalorder %s24, 0
    %p212 = por %p210, %p211
    %p213 = scmp.ne.s32.totalorder %s205, %s207
    %p214 = scmp.eq.s32.totalorder %s29, 1
    %p215 = por %p213, %p214
    %p216 = scmp.ne.s32.totalorder %s207, %s208
    %p217 = scmp.eq.s32.totalorder %s29, 0
    %p218 = por %p216, %p217
    %p219 = scmp.ne.s32.totalorder %s207, %s208
    %p220 = scmp.eq.s32.totalorder %s30, 1
    %p221 = por %p219, %p220
    %p223 = scmp.ne.s32.totalorder %s208, %s222
    %p224 = scmp.eq.s32.totalorder %s30, 0
    %p225 = por %p223, %p224
    %s227 = sadd.s32 %s226, 1
    %p230 = scmp.eq.s32.totalorder %s24, 1
    %p231 = scmp.ne.s32.totalorder %s226, %s228
    %p232 = scmp.eq.s32.totalorder %s24, 0
    %p233 = por %p231, %p232
    %p234 = scmp.ne.s32.totalorder %s226, %s228
    %p235 = scmp.eq.s32.totalorder %s29, 1
    %p236 = por %p234, %p235
    %p237 = scmp.ne.s32.totalorder %s228, %s229
    %p238 = scmp.eq.s32.totalorder %s29, 0
    %p239 = por %p237, %p238
    %p240 = scmp.ne.s32.totalorder %s228, %s229
    %p241 = scmp.eq.s32.totalorder %s30, 1
    %p242 = por %p240, %p241
    %p244 = scmp.ne.s32.totalorder %s229, %s243
    %p245 = scmp.eq.s32.totalorder %s30, 0
    %p246 = por %p244, %p245
    %s248 = sadd.s32 %s247, 1
    %p251 = scmp.eq.s32.totalorder %s24, 1
    %p252 = scmp.ne.s32.totalorder %s247, %s249
    %p253 = scmp.eq.s32.totalorder %s24, 0
    %p254 = por %p252, %p253
    %p255 = scmp.ne.s32.totalorder %s247, %s249
    %p256 = scmp.eq.s32.totalorder %s29, 1
    %p257 = por %p255, %p256
    %p258 = scmp.ne.s32.totalorder %s249, %s250
    %p259 = scmp.eq.s32.totalorder %s29, 0
    %p260 = por %p258, %p259
    %p261 = scmp.ne.s32.totalorder %s249, %s250
    %p262 = scmp.eq.s32.totalorder %s30, 1
    %p263 = por %p261, %p262
    %p265 = scmp.ne.s32.totalorder %s250, %s264
    %p266 = scmp.eq.s32.totalorder %s30, 0
    %p267 = por %p265, %p266
    %s269 = sadd.s32 %s268, 1
    %p272 = scmp.eq.s32.totalorder %s24, 1
    %p273 = scmp.ne.s32.totalorder %s268, %s270
    %p274 = scmp.eq.s32.totalorder %s24, 0
    %p275 = por %p273, %p274
    %p276 = scmp.ne.s32.totalorder %s268, %s270
    %p277 = scmp.eq.s32.totalorder %s29, 1
    %p278 = por %p276, %p277
    %p279 = scmp.ne.s32.totalorder %s270, %s271
    %p280 = scmp.eq.s32.totalorder %s29, 0
    %p281 = por %p279, %p280
    %p282 = scmp.ne.s32.totalorder %s270, %s271
    %p283 = scmp.eq.s32.totalorder %s30, 1
    %p284 = por %p282, %p283
    %p286 = scmp.ne.s32.totalorder %s271, %s285
    %p287 = scmp.eq.s32.totalorder %s30, 0
    %p288 = por %p286, %p287
    %s290 = sadd.s32 %s289, 1
    %p293 = scmp.eq.s32.totalorder %s24, 1
    %p294 = scmp.ne.s32.totalorder %s289, %s291
    %p295 = scmp.eq.s32.totalorder %s24, 0
    %p296 = por %p294, %p295
    %p297 = scmp.ne.s32.totalorder %s289, %s291
    %p298 = scmp.eq.s32.totalorder %s29, 1
    %p299 = por %p297, %p298
    %p300 = scmp.ne.s32.totalorder %s291, %s292
    %p301 = scmp.eq.s32.totalorder %s29, 0
    %p302 = por %p300, %p301
    %p303 = scmp.ne.s32.totalorder %s291, %s292
    %p304 = scmp.eq.s32.totalorder %s30, 1
    %p305 = por %p303, %p304
    %p307 = scmp.ne.s32.totalorder %s292, %s306
    %p308 = scmp.eq.s32.totalorder %s30, 0
    %p309 = por %p307, %p308
    %s311 = sadd.s32 %s310, 1
    %p314 = scmp.eq.s32.totalorder %s24, 1
    %p315 = scmp.ne.s32.totalorder %s310, %s312
    %p316 = scmp.eq.s32.totalorder %s24, 0
    %p317 = por %p315, %p316
    %p318 = scmp.ne.s32.totalorder %s310, %s312
    %p319 = scmp.eq.s32.totalorder %s29, 1
    %p320 = por %p318, %p319
    %p321 = scmp.ne.s32.totalorder %s312, %s313
    %p322 = scmp.eq.s32.totalorder %s29, 0
    %p323 = por %p321, %p322
    %p324 = scmp.ne.s32.totalorder %s312, %s313
    %p325 = scmp.eq.s32.totalorder %s30, 1
    %p326 = por %p324, %p325
    %p328 = scmp.ne.s32.totalorder %s313, %s327
    %p329 = scmp.eq.s32.totalorder %s30, 0
    %p330 = por %p328, %p329
    %s332 = sadd.s32 %s331, 1
    %p335 = scmp.eq.s32.totalorder %s24, 1
    %p336 = scmp.ne.s32.totalorder %s331, %s333
    %p337 = scmp.eq.s32.totalorder %s24, 0
    %p338 = por %p336, %p337
    %p339 = scmp.ne.s32.totalorder %s331, %s333
    %p340 = scmp.eq.s32.totalorder %s29, 1
    %p341 = por %p339, %p340
    %p342 = scmp.ne.s32.totalorder %s333, %s334
    %p343 = scmp.eq.s32.totalorder %s29, 0
    %p344 = por %p342, %p343
    %p345 = scmp.ne.s32.totalorder %s333, %s334
    %p346 = scmp.eq.s32.totalorder %s30, 1
    %p347 = por %p345, %p346
    %p349 = scmp.ne.s32.totalorder %s334, %s348
    %p350 = scmp.eq.s32.totalorder %s30, 0
    %p351 = por %p349, %p350
    %s353 = sadd.s32 %s352, 1
    %p356 = scmp.eq.s32.totalorder %s24, 1
    %p357 = scmp.ne.s32.totalorder %s352, %s354
    %p358 = scmp.eq.s32.totalorder %s24, 0
    %p359 = por %p357, %p358
    %p360 = scmp.ne.s32.totalorder %s352, %s354
    %p361 = scmp.eq.s32.totalorder %s29, 1
    %p362 = por %p360, %p361
    %p363 = scmp.ne.s32.totalorder %s354, %s355
    %p364 = scmp.eq.s32.totalorder %s29, 0
    %p365 = por %p363, %p364
    %p366 = scmp.ne.s32.totalorder %s354, %s355
    %p367 = scmp.eq.s32.totalorder %s30, 1
    %p368 = por %p366, %p367
    %p370 = scmp.ne.s32.totalorder %s355, %s369
    %p371 = scmp.eq.s32.totalorder %s30, 0
    %p372 = por %p370, %p371
    %s374 = sadd.s32 %s373, 1
    %p377 = scmp.eq.s32.totalorder %s24, 1
    %p378 = scmp.ne.s32.totalorder %s373, %s375
    %p379 = scmp.eq.s32.totalorder %s24, 0
    %p380 = por %p378, %p379
    %p381 = scmp.ne.s32.totalorder %s373, %s375
    %p382 = scmp.eq.s32.totalorder %s29, 1
    %p383 = por %p381, %p382
    %p384 = scmp.ne.s32.totalorder %s375, %s376
    %p385 = scmp.eq.s32.totalorder %s29, 0
    %p386 = por %p384, %p385
    %p387 = scmp.ne.s32.totalorder %s375, %s376
    %p388 = scmp.eq.s32.totalorder %s30, 1
    %p389 = por %p387, %p388
    %p391 = scmp.ne.s32.totalorder %s376, %s390
    %p392 = scmp.eq.s32.totalorder %s30, 0
    %p393 = por %p391, %p392
    %s395 = sadd.s32 %s394, 1
    %p398 = scmp.eq.s32.totalorder %s24, 1
    %p399 = scmp.ne.s32.totalorder %s394, %s396
    %p400 = scmp.eq.s32.totalorder %s24, 0
    %p401 = por %p399, %p400
    %p402 = scmp.ne.s32.totalorder %s394, %s396
    %p403 = scmp.eq.s32.totalorder %s29, 1
    %p404 = por %p402, %p403
    %p405 = scmp.ne.s32.totalorder %s396, %s397
    %p406 = scmp.eq.s32.totalorder %s29, 0
    %p407 = por %p405, %p406
    %p408 = scmp.ne.s32.totalorder %s396, %s397
    %p409 = scmp.eq.s32.totalorder %s30, 1
    %p410 = por %p408, %p409
    %p412 = scmp.ne.s32.totalorder %s397, %s411
    %p413 = scmp.eq.s32.totalorder %s30, 0
    %p414 = por %p412, %p413
    %s415 = ssub.s32 %s24, %s31
    %p416 = scmp.eq.s32.totalorder %s415, 0
    %s418 = sadd.s32 %s417, 1
    %s419 = scalar_select %p416, %s417, %s418
    %p422 = pneg %p416
    %p423 = scmp.eq.s32.totalorder %s24, 1
    %p424 = por %p422, %p423
    %p425 = scmp.ne.s32.totalorder %s417, %s420
    %p426 = scmp.eq.s32.totalorder %s24, 0
    %p427 = por %p425, %p426
    %p428 = scmp.ne.s32.totalorder %s417, %s420
    %p429 = scmp.eq.s32.totalorder %s29, 1
    %p430 = por %p428, %p429
    %p431 = scmp.ne.s32.totalorder %s420, %s421
    %p432 = scmp.eq.s32.totalorder %s29, 0
    %p433 = por %p431, %p432
    %p434 = scmp.ne.s32.totalorder %s420, %s421
    %p435 = scmp.eq.s32.totalorder %s30, 1
    %p436 = por %p434, %p435
    %p438 = scmp.ne.s32.totalorder %s421, %s437
    %p439 = scmp.eq.s32.totalorder %s30, 0
    %p440 = por %p438, %p439
    %p441 = scmp.le.s32.totalorder 1, %s24
    %p442 = scmp.lt.s32.totalorder %s24, 3
    %p443 = pnand %p441, %p442
    %p444 = pneg %p443
    // Predicated region
    $region9: #{encoder_forward.4} parent=5 // pred_check
      _
    $region10: #{encoder_forward.4} parent=5 // pred_check_branch
      %446 = sbr.rel (%p443) target = $region12
    $region11: #{encoder_forward.4} parent=5 // pred_region
      %s447 = ssub.s32 %s24, 1
      // Predicated region
      $region13: #{encoder_forward.4} parent=11 // pred_check
        %p448 = pneg %p71
      $region14: #{encoder_forward.4} parent=11 // pred_check_branch
        %450 = sbr.rel (%p448) target = $region16
      $region15: #{encoder_forward.4} parent=11 // pred_region
        _
      $region16: #{encoder_forward.4} parent=11 // pred_fallthru
        _
      // Predicated region
      $region17: #{encoder_forward.4} parent=11 // pred_check
        %p451 = pneg %p92
      $region18: #{encoder_forward.4} parent=11 // pred_check_branch
        %453 = sbr.rel (%p451) target = $region20
      $region19: #{encoder_forward.4} parent=11 // pred_region
        _
      $region20: #{encoder_forward.4} parent=11 // pred_fallthru
        _
      // Predicated region
      $region21: #{encoder_forward.4} parent=11 // pred_check
        %p454 = pneg %p113
      $region22: #{encoder_forward.4} parent=11 // pred_check_branch
        %456 = sbr.rel (%p454) target = $region24
      $region23: #{encoder_forward.4} parent=11 // pred_region
        _
      $region24: #{encoder_forward.4} parent=11 // pred_fallthru
        _
      // Predicated region
      $region25: #{encoder_forward.4} parent=11 // pred_check
        %p457 = pneg %p134
      $region26: #{encoder_forward.4} parent=11 // pred_check_branch
        %459 = sbr.rel (%p457) target = $region28
      $region27: #{encoder_forward.4} parent=11 // pred_region
        _
      $region28: #{encoder_forward.4} parent=11 // pred_fallthru
        _
      // Predicated region
      $region29: #{encoder_forward.4} parent=11 // pred_check
        %p460 = pneg %p155
      $region30: #{encoder_forward.4} parent=11 // pred_check_branch
        %462 = sbr.rel (%p460) target = $region32
      $region31: #{encoder_forward.4} parent=11 // pred_region
        _
      $region32: #{encoder_forward.4} parent=11 // pred_fallthru
        _
      // Predicated region
      $region33: #{encoder_forward.4} parent=11 // pred_check
        %p463 = pneg %p176
      $region34: #{encoder_forward.4} parent=11 // pred_check_branch
        %465 = sbr.rel (%p463) target = $region36
      $region35: #{encoder_forward.4} parent=11 // pred_region
        _
      $region36: #{encoder_forward.4} parent=11 // pred_fallthru
        _
      // Predicated region
      $region37: #{encoder_forward.4} parent=11 // pred_check
        %p466 = pneg %p197
      $region38: #{encoder_forward.4} parent=11 // pred_check_branch
        %468 = sbr.rel (%p466) target = $region40
      $region39: #{encoder_forward.4} parent=11 // pred_region
        _
      $region40: #{encoder_forward.4} parent=11 // pred_fallthru
        _
      // Predicated region
      $region41: #{encoder_forward.4} parent=11 // pred_check
        %p469 = pneg %p218
      $region42: #{encoder_forward.4} parent=11 // pred_check_branch
        %471 = sbr.rel (%p469) target = $region44
      $region43: #{encoder_forward.4} parent=11 // pred_region
        _
      $region44: #{encoder_forward.4} parent=11 // pred_fallthru
        _
      // Predicated region
      $region45: #{encoder_forward.4} parent=11 // pred_check
        %p472 = pneg %p239
      $region46: #{encoder_forward.4} parent=11 // pred_check_branch
        %474 = sbr.rel (%p472) target = $region48
      $region47: #{encoder_forward.4} parent=11 // pred_region
        _
      $region48: #{encoder_forward.4} parent=11 // pred_fallthru
        _
      // Predicated region
      $region49: #{encoder_forward.4} parent=11 // pred_check
        %p475 = pneg %p260
      $region50: #{encoder_forward.4} parent=11 // pred_check_branch
        %477 = sbr.rel (%p475) target = $region52
      $region51: #{encoder_forward.4} parent=11 // pred_region
        _
      $region52: #{encoder_forward.4} parent=11 // pred_fallthru
        _
      // Predicated region
      $region53: #{encoder_forward.4} parent=11 // pred_check
        %p478 = pneg %p281
      $region54: #{encoder_forward.4} parent=11 // pred_check_branch
        %480 = sbr.rel (%p478) target = $region56
      $region55: #{encoder_forward.4} parent=11 // pred_region
        _
      $region56: #{encoder_forward.4} parent=11 // pred_fallthru
        _
      // Predicated region
      $region57: #{encoder_forward.4} parent=11 // pred_check
        %p481 = pneg %p302
      $region58: #{encoder_forward.4} parent=11 // pred_check_branch
        %483 = sbr.rel (%p481) target = $region60
      $region59: #{encoder_forward.4} parent=11 // pred_region
        _
      $region60: #{encoder_forward.4} parent=11 // pred_fallthru
        _
      // Predicated region
      $region61: #{encoder_forward.4} parent=11 // pred_check
        %p484 = pneg %p323
      $region62: #{encoder_forward.4} parent=11 // pred_check_branch
        %486 = sbr.rel (%p484) target = $region64
      $region63: #{encoder_forward.4} parent=11 // pred_region
        _
      $region64: #{encoder_forward.4} parent=11 // pred_fallthru
        _
      // Predicated region
      $region65: #{encoder_forward.4} parent=11 // pred_check
        %p487 = pneg %p344
      $region66: #{encoder_forward.4} parent=11 // pred_check_branch
        %489 = sbr.rel (%p487) target = $region68
      $region67: #{encoder_forward.4} parent=11 // pred_region
        _
      $region68: #{encoder_forward.4} parent=11 // pred_fallthru
        _
      // Predicated region
      $region69: #{encoder_forward.4} parent=11 // pred_check
        %p490 = pneg %p365
      $region70: #{encoder_forward.4} parent=11 // pred_check_branch
        %492 = sbr.rel (%p490) target = $region72
      $region71: #{encoder_forward.4} parent=11 // pred_region
        _
      $region72: #{encoder_forward.4} parent=11 // pred_fallthru
        _
      // Predicated region
      $region73: #{encoder_forward.4} parent=11 // pred_check
        %p493 = pneg %p386
      $region74: #{encoder_forward.4} parent=11 // pred_check_branch
        %495 = sbr.rel (%p493) target = $region76
      $region75: #{encoder_forward.4} parent=11 // pred_region
        _
      $region76: #{encoder_forward.4} parent=11 // pred_fallthru
        _
      // Predicated region
      $region77: #{encoder_forward.4} parent=11 // pred_check
        %p496 = pneg %p407
      $region78: #{encoder_forward.4} parent=11 // pred_check_branch
        %498 = sbr.rel (%p496) target = $region80
      $region79: #{encoder_forward.4} parent=11 // pred_region
        _
      $region80: #{encoder_forward.4} parent=11 // pred_fallthru
        _
    $region12: #{encoder_forward.4} parent=5 // pred_fallthru
      _
    %p499 = scmp.lt.s32.totalorder %s24, 2
    // Predicated region
    $region81: #{encoder_forward.4} parent=5 // pred_check
      %p500 = pneg %p499
    $region82: #{encoder_forward.4} parent=5 // pred_check_branch
      %502 = sbr.rel (%p500) target = $region84
    $region83: #{encoder_forward.4} parent=5 // pred_region
      // Predicated region
      $region85: #{encoder_forward.4} parent=83 // pred_check
        %p503 = pneg %p44
      $region86: #{encoder_forward.4} parent=83 // pred_check_branch
        %505 = sbr.rel (%p503) target = $region88
      $region87: #{encoder_forward.4} parent=83 // pred_region
        %p506 = scmp.lt.s32.totalorder %s24, 1
        %s507 = scalar_select %p506, %s24, 1
        %s508 = smul.addr %s507, 4
        %s509 = scalar_lea.vmem %s0, %s508
      $region88: #{encoder_forward.4} parent=83 // pred_fallthru
        _
    $region84: #{encoder_forward.4} parent=5 // pred_fallthru
      _
    %p510 = scmp.le.s32.totalorder 1, %s24
    %p511 = scmp.lt.s32.totalorder %s24, 3
    %p512 = pnand %p510, %p511
    %p513 = pneg %p512
    // Predicated region
    $region89: #{encoder_forward.4} parent=5 // pred_check
      _
    $region90: #{encoder_forward.4} parent=5 // pred_check_branch
      %515 = sbr.rel (%p512) target = $region92
    $region91: #{encoder_forward.4} parent=5 // pred_region
      %s516 = ssub.s32 %s24, 1
      %p517 = scmp.lt.s32.totalorder %s29, 1
      %s518 = scalar_select %p517, %s29, 1
      %s519 = smul.addr %s518, 4
      %s520 = scalar_lea.vmem %s0, %s519
      %p521 = pneg %p50
      %p522 = pneg %p47
      %p523 = pneg %p71
      %p524 = pneg %p68
      %p525 = pneg %p92
      %p526 = pneg %p89
      %p527 = pneg %p113
      %p528 = pneg %p110
      %p529 = pneg %p134
      %p530 = pneg %p131
      %p531 = pneg %p155
      %p532 = pneg %p152
      %p533 = pneg %p176
      %p534 = pneg %p173
      %p535 = pneg %p197
      %p536 = pneg %p194
      %p537 = pneg %p218
      %p538 = pneg %p215
      %p539 = pneg %p239
      %p540 = pneg %p236
      %p541 = pneg %p260
      %p542 = pneg %p257
      %p543 = pneg %p281
      %p544 = pneg %p278
      %p545 = pneg %p302
      %p546 = pneg %p299
      %p547 = pneg %p323
      %p548 = pneg %p320
      %p549 = pneg %p344
      %p550 = pneg %p341
      %p551 = pneg %p365
      %p552 = pneg %p362
      %p553 = pneg %p386
      %p554 = pneg %p383
      %p555 = pneg %p407
      %p556 = pneg %p404
      %p557 = pneg %p433
      %p558 = pneg %p430
      %p559 = scmp.lt.s32.totalorder %s29, 1
      %s560 = scalar_select %p559, %s29, 1
      %s561 = smul.addr %s560, 4
      %s562 = scalar_lea.vmem %s18, %s561
      %p563 = scmp.lt.s32.totalorder %s29, 1
      %s564 = scalar_select %p563, %s29, 1
      %s565 = smul.addr %s564, 4
      %s566 = scalar_lea.vmem %s0, %s565
      %p567 = scmp.lt.s32.totalorder %s29, 1
      %s568 = scalar_select %p567, %s29, 1
      %s569 = smul.addr %s568, 4
      %s570 = scalar_lea.vmem %s18, %s569
      %vm571 = vcmask 162816
      %572 = vst.msk [vmem:[#allocation2] sm:$0xff] %vm571, 0.0
      %573 = vst.msk [vmem:[#allocation2 + $0x8] sm:$0xff] %vm571, 0.0
      %574 = vst.msk [vmem:[#allocation2 + $0x10] sm:$0xff] %vm571, 0.0
      %575 = vst.msk [vmem:[#allocation2 + $0x18] sm:$0xff] %vm571, 0.0
      %v576 = vld [vmem:[%s566] sm:$0xf]
      %v577 = vld [vmem:[%s2] sm:$0xff]
      %v578 = vld [vmem:[%s2 + $0x8] sm:$0xff]
      %v579 = vld [vmem:[%s2 + $0x10] sm:$0xff]
      %v580 = vld [vmem:[%s2 + $0x18] sm:$0xff]
      %v581 = vld [vmem:[%s3] sm:$0xff]
      %v582 = vld [vmem:[%s3 + $0x8] sm:$0xff]
      %v583 = vld [vmem:[%s3 + $0x10] sm:$0xff]
      %v584 = vld [vmem:[%s3 + $0x18] sm:$0xff]
      %586 = vset.pattern.permute.xlu0 0
      %587 = vperm.xlu0 %586, %v581
      %v588 = vpop.permute.xlu0 %587
      %591 = vset.pattern.permute.xlu0 0
      %592 = vperm.xlu0 %591, %v582
      %v593 = vpop.permute.xlu0 %592
      %596 = vset.pattern.permute.xlu0 0
      %597 = vperm.xlu0 %596, %v583
      %v598 = vpop.permute.xlu0 %597
      %601 = vset.pattern.permute.xlu0 0
      %602 = vperm.xlu0 %601, %v584
      %v603 = vpop.permute.xlu0 %602
      %vm605 = vcmask 31744
      %v607 = vsel %vm605, %v577, 0
      %v610 = vsel %vm605, %v578, 0
      %v613 = vsel %vm605, %v579, 0
      %v616 = vsel %vm605, %v580, 0
      %vm618 = vcmask 1043456
      %v620 = vsel %vm618, %v576, 0
      %622 = vmatpush.msra.mxu0 0.0
      %623 = vmatpush.msra.mxu0 0.0
      %624 = vmatpush.msra.mxu0 0.0
      %625 = vmatpush.msra.mxu0 0.0
      %626 = vmatpush.msra.mxu0 0.0
      %627 = vmatpush.msra.mxu0 0.0
      %628 = vmatpush.msra.mxu0 0.0
      %629 = vmatpush.msra.mxu0 0.0
      %630 = vmatpush.msra.mxu0 0.0
      %631 = vmatpush.msra.mxu0 0.0
      %632 = vmatpush.msra.mxu0 0.0
      %633 = vmatpush.msra.mxu0 0.0
      %634 = vmatpush.msra.mxu0 0.0
      %635 = vmatpush.msra.mxu0 0.0
      %636 = vmatpush.msra.mxu0 0.0
      %637 = vmatpush.msra.mxu0 %v620
      %638 = vmatmul.f32.gmra.mxu0 %v607
      %v639 = vpop.f32.mrf.mxu0
      %v640 = vadd.f32 %v588, %v639
      %641 = vmatmul.f32.gmra.mxu0 %v610
      %v642 = vpop.f32.mrf.mxu0
      %v643 = vadd.f32 %v593, %v642
      %644 = vmatmul.f32.gmra.mxu0 %v613
      %v645 = vpop.f32.mrf.mxu0
      %v646 = vadd.f32 %v598, %v645
      %647 = vmatmul.f32.gmra.mxu0 %v616
      %v648 = vpop.f32.mrf.mxu0
      %v649 = vadd.f32 %v603, %v648
      %650 = vdwg.mxu0
      %v651 = vld [vmem:[%s8] sm:$0xf]
      %656 = vrot.lane.b32.xlu0 %v640, 2
      %v657 = vpop.permute.xlu0 %656
      %658 = vrot.lane.b32.xlu0 %v643, 2
      %v659 = vpop.permute.xlu0 %658
      %660 = vrot.lane.b32.xlu0 %v646, 2
      %v661 = vpop.permute.xlu0 %660
      %662 = vrot.lane.b32.xlu0 %v649, 2
      %v663 = vpop.permute.xlu0 %662
      %vm668 = vcmask 80912
      %669 = vst.msk [vmem:[#allocation2] sm:$0xff] %vm668, %v657
      %670 = vst.msk [vmem:[#allocation2 + $0x8] sm:$0xff] %vm668, %v659
      %671 = vst.msk [vmem:[#allocation2 + $0x10] sm:$0xff] %vm668, %v661
      %672 = vst.msk [vmem:[#allocation2 + $0x18] sm:$0xff] %vm668, %v663
      %v673 = vld [vmem:[#allocation2] sm:$0xff]
      %v674 = vld [vmem:[#allocation2 + $0x8] sm:$0xff]
      %v675 = vld [vmem:[#allocation2 + $0x10] sm:$0xff]
      %v676 = vld [vmem:[#allocation2 + $0x18] sm:$0xff]
      %681 = vrot.lane.b32.xlu0 %v673, 127
      %v682 = vpop.permute.xlu0 %681
      %683 = vrot.lane.b32.xlu0 %v674, 127
      %v684 = vpop.permute.xlu0 %683
      %685 = vrot.lane.b32.xlu0 %v675, 127
      %v686 = vpop.permute.xlu0 %685
      %687 = vrot.lane.b32.xlu0 %v676, 127
      %v688 = vpop.permute.xlu0 %687
      %689 = vrot.lane.b32.xlu0 %v673, 126
      %v690 = vpop.permute.xlu0 %689
      %691 = vrot.lane.b32.xlu0 %v674, 126
      %v692 = vpop.permute.xlu0 %691
      %693 = vrot.lane.b32.xlu0 %v675, 126
      %v694 = vpop.permute.xlu0 %693
      %695 = vrot.lane.b32.xlu0 %v676, 126
      %v696 = vpop.permute.xlu0 %695
      %v697 = vld [vmem:[%s4] sm:$0xff]
      %v698 = vld [vmem:[%s4 + $0x8] sm:$0xff]
      %v699 = vld [vmem:[%s4 + $0x10] sm:$0xff]
      %v700 = vld [vmem:[%s4 + $0x18] sm:$0xff]
      %v701 = vld [vmem:[%s4 + $0x20] sm:$0xff]
      %v702 = vld [vmem:[%s4 + $0x28] sm:$0xff]
      %v703 = vld [vmem:[%s4 + $0x30] sm:$0xff]
      %v704 = vld [vmem:[%s4 + $0x38] sm:$0xff]
      %v705 = vld [vmem:[%s5] sm:$0xff]
      %v706 = vld [vmem:[%s5 + $0x8] sm:$0xff]
      %v707 = vld [vmem:[%s5 + $0x10] sm:$0xff]
      %v708 = vld [vmem:[%s5 + $0x18] sm:$0xff]
      %v709 = vld [vmem:[%s5 + $0x20] sm:$0xff]
      %v710 = vld [vmem:[%s5 + $0x28] sm:$0xff]
      %v711 = vld [vmem:[%s5 + $0x30] sm:$0xff]
      %v712 = vld [vmem:[%s5 + $0x38] sm:$0xff]
      %714 = vset.pattern.permute.xlu0 0
      %715 = vperm.xlu0 %714, %v705
      %v716 = vpop.permute.xlu0 %715
      %719 = vset.pattern.permute.xlu0 0
      %720 = vperm.xlu0 %719, %v706
      %v721 = vpop.permute.xlu0 %720
      %724 = vset.pattern.permute.xlu0 0
      %725 = vperm.xlu0 %724, %v707
      %v726 = vpop.permute.xlu0 %725
      %729 = vset.pattern.permute.xlu0 0
      %730 = vperm.xlu0 %729, %v708
      %v731 = vpop.permute.xlu0 %730
      %734 = vset.pattern.permute.xlu0 0
      %735 = vperm.xlu0 %734, %v709
      %v736 = vpop.permute.xlu0 %735
      %739 = vset.pattern.permute.xlu0 0
      %740 = vperm.xlu0 %739, %v710
      %v741 = vpop.permute.xlu0 %740
      %744 = vset.pattern.permute.xlu0 0
      %745 = vperm.xlu0 %744, %v711
      %v746 = vpop.permute.xlu0 %745
      %749 = vset.pattern.permute.xlu0 0
      %750 = vperm.xlu0 %749, %v712
      %v751 = vpop.permute.xlu0 %750
      %753 = vrot.lane.b32.xlu0 %v682, 127
      %v754 = vpop.permute.xlu0 %753
      %755 = vrot.lane.b32.xlu0 %v684, 127
      %v756 = vpop.permute.xlu0 %755
      %757 = vrot.lane.b32.xlu0 %v686, 127
      %v758 = vpop.permute.xlu0 %757
      %759 = vrot.lane.b32.xlu0 %v688, 127
      %v760 = vpop.permute.xlu0 %759
      %761 = vrot.lane.b32.xlu0 %v690, 127
      %v762 = vpop.permute.xlu0 %761
      %763 = vrot.lane.b32.xlu0 %v692, 127
      %v764 = vpop.permute.xlu0 %763
      %765 = vrot.lane.b32.xlu0 %v694, 127
      %v766 = vpop.permute.xlu0 %765
      %767 = vrot.lane.b32.xlu0 %v696, 127
      %v768 = vpop.permute.xlu0 %767
      %vm781 = vcmask 785408
      %v783 = vsel %vm781, %v697, 0
      %v786 = vsel %vm781, %v698, 0
      %v789 = vsel %vm781, %v699, 0
      %v792 = vsel %vm781, %v700, 0
      %v795 = vsel %vm781, %v701, 0
      %v798 = vsel %vm781, %v702, 0
      %v801 = vsel %vm781, %v703, 0
      %v804 = vsel %vm781, %v704, 0
      %806 = vmatpush.msra.mxu0 0.0
      %807 = vmatpush.msra.mxu0 0.0
      %808 = vmatpush.msra.mxu0 0.0
      %809 = vmatpush.msra.mxu0 0.0
      %810 = vmatpush.msra.mxu0 %v768
      %811 = vmatpush.msra.mxu0 %v766
      %812 = vmatpush.msra.mxu0 %v764
      %813 = vmatpush.msra.mxu0 %v762
      %814 = vmatpush.msra.mxu0 %v760
      %815 = vmatpush.msra.mxu0 %v758
      %816 = vmatpush.msra.mxu0 %v756
      %817 = vmatpush.msra.mxu0 %v754
      %818 = vmatpush.msra.mxu0 %v688
      %819 = vmatpush.msra.mxu0 %v686
      %820 = vmatpush.msra.mxu0 %v684
      %821 = vmatpush.msra.mxu0 %v682
      %822 = vmatmul.f32.gmra.mxu0 %v783
      %v823 = vpop.f32.mrf.mxu0
      %v824 = vadd.f32 %v716, %v823
      %825 = vmatmul.f32.gmra.mxu0 %v786
      %v826 = vpop.f32.mrf.mxu0
      %v827 = vadd.f32 %v721, %v826
      %828 = vmatmul.f32.gmra.mxu0 %v789
      %v829 = vpop.f32.mrf.mxu0
      %v830 = vadd.f32 %v726, %v829
      %831 = vmatmul.f32.gmra.mxu0 %v792
      %v832 = vpop.f32.mrf.mxu0
      %v833 = vadd.f32 %v731, %v832
      %834 = vmatmul.f32.gmra.mxu0 %v795
      %v835 = vpop.f32.mrf.mxu0
      %v836 = vadd.f32 %v736, %v835
      %837 = vmatmul.f32.gmra.mxu0 %v798
      %v838 = vpop.f32.mrf.mxu0
      %v839 = vadd.f32 %v741, %v838
      %840 = vmatmul.f32.gmra.mxu0 %v801
      %v841 = vpop.f32.mrf.mxu0
      %v842 = vadd.f32 %v746, %v841
      %843 = vmatmul.f32.gmra.mxu0 %v804
      %v844 = vpop.f32.mrf.mxu0
      %v845 = vadd.f32 %v751, %v844
      %846 = vdwg.mxu0
      %v847 = vtanh.pop %v824
      %v848 = vtanh.pop %v827
      %v849 = vtanh.pop %v830
      %v850 = vtanh.pop %v833
      %v851 = vxor.u32 %v836, 2147483648
      %v852 = vxor.u32 %v839, 2147483648
      %v853 = vxor.u32 %v842, 2147483648
      %v854 = vxor.u32 %v845, 2147483648
      %v855 = vmul.f32 %v851, 1.442695
      %v856 = vpow.pop %v855
      %v857 = vmul.f32 %v852, 1.442695
      %v858 = vpow.pop %v857
      %v859 = vmul.f32 %v853, 1.442695
      %v860 = vpow.pop %v859
      %v861 = vmul.f32 %v854, 1.442695
      %v862 = vpow.pop %v861
      %v863 = vadd.f32 %v856, 1.0
      %v864 = vadd.f32 %v858, 1.0
      %v865 = vadd.f32 %v860, 1.0
      %v866 = vadd.f32 %v862, 1.0
      %v867 = vrcp.pop %v863
      %v868 = vmul.f32 %v863, %v867
      %v869 = vsub.f32 1.0, %v868
      %v870 = vmul.f32 %v867, %v869
      %v871 = vadd.f32 %v867, %v870
      %vm872 = vweird.f32 %v863
      %vm873 = vweird.f32 %v867
      %vm874 = vmor %vm872, %vm873
      %v875 = vsel %vm874, %v867, %v871
      %v876 = vand.u32 2147483647, %v863
      %vm877 = vcmp.eq.f32.partialorder %v876, 8.507059e+37
      %v878 = vand.u32 %v863, 2147483648
      %v879 = vor.u32 1.1754944e-38, %v878
      %v880 = vsel %vm877, %v879, %v875
      %v881 = vmul.f32 1.0, %v880
      %v882 = vrcp.pop %v864
      %v883 = vmul.f32 %v864, %v882
      %v884 = vsub.f32 1.0, %v883
      %v885 = vmul.f32 %v882, %v884
      %v886 = vadd.f32 %v882, %v885
      %vm887 = vweird.f32 %v864
      %vm888 = vweird.f32 %v882
      %vm889 = vmor %vm887, %vm888
      %v890 = vsel %vm889, %v882, %v886
      %v891 = vand.u32 2147483647, %v864
      %vm892 = vcmp.eq.f32.partialorder %v891, 8.507059e+37
      %v893 = vand.u32 %v864, 2147483648
      %v894 = vor.u32 1.1754944e-38, %v893
      %v895 = vsel %vm892, %v894, %v890
      %v896 = vmul.f32 1.0, %v895
      %v897 = vrcp.pop %v865
      %v898 = vmul.f32 %v865, %v897
      %v899 = vsub.f32 1.0, %v898
      %v900 = vmul.f32 %v897, %v899
      %v901 = vadd.f32 %v897, %v900
      %vm902 = vweird.f32 %v865
      %vm903 = vweird.f32 %v897
      %vm904 = vmor %vm902, %vm903
      %v905 = vsel %vm904, %v897, %v901
      %v906 = vand.u32 2147483647, %v865
      %vm907 = vcmp.eq.f32.partialorder %v906, 8.507059e+37
      %v908 = vand.u32 %v865, 2147483648
      %v909 = vor.u32 1.1754944e-38, %v908
      %v910 = vsel %vm907, %v909, %v905
      %v911 = vmul.f32 1.0, %v910
      %v912 = vrcp.pop %v866
      %v913 = vmul.f32 %v866, %v912
      %v914 = vsub.f32 1.0, %v913
      %v915 = vmul.f32 %v912, %v914
      %v916 = vadd.f32 %v912, %v915
      %vm917 = vweird.f32 %v866
      %vm918 = vweird.f32 %v912
      %vm919 = vmor %vm917, %vm918
      %v920 = vsel %vm919, %v912, %v916
      %v921 = vand.u32 2147483647, %v866
      %vm922 = vcmp.eq.f32.partialorder %v921, 8.507059e+37
      %v923 = vand.u32 %v866, 2147483648
      %v924 = vor.u32 1.1754944e-38, %v923
      %v925 = vsel %vm922, %v924, %v920
      %v926 = vmul.f32 1.0, %v925
      %v927 = vmul.f32 %v847, %v881
      %v928 = vmul.f32 %v848, %v896
      %v929 = vmul.f32 %v849, %v911
      %v930 = vmul.f32 %v850, %v926
      %v931 = vld [vmem:[%s6] sm:$0xff]
      %v932 = vld [vmem:[%s6 + $0x8] sm:$0xff]
      %v933 = vld [vmem:[%s6 + $0x10] sm:$0xff]
      %v934 = vld [vmem:[%s6 + $0x18] sm:$0xff]
      %v935 = vld [vmem:[%s6 + $0x20] sm:$0xff]
      %v936 = vld [vmem:[%s6 + $0x28] sm:$0xff]
      %v937 = vld [vmem:[%s6 + $0x30] sm:$0xff]
      %v938 = vld [vmem:[%s6 + $0x38] sm:$0xff]
      %v939 = vld [vmem:[%s7] sm:$0xff]
      %v940 = vld [vmem:[%s7 + $0x8] sm:$0xff]
      %v941 = vld [vmem:[%s7 + $0x10] sm:$0xff]
      %v942 = vld [vmem:[%s7 + $0x18] sm:$0xff]
      %v943 = vld [vmem:[%s7 + $0x20] sm:$0xff]
      %v944 = vld [vmem:[%s7 + $0x28] sm:$0xff]
      %v945 = vld [vmem:[%s7 + $0x30] sm:$0xff]
      %v946 = vld [vmem:[%s7 + $0x38] sm:$0xff]
      %948 = vset.pattern.permute.xlu0 0
      %949 = vperm.xlu0 %948, %v939
      %v950 = vpop.permute.xlu0 %949
      %953 = vset.pattern.permute.xlu0 0
      %954 = vperm.xlu0 %953, %v940
      %v955 = vpop.permute.xlu0 %954
      %958 = vset.pattern.permute.xlu0 0
      %959 = vperm.xlu0 %958, %v941
      %v960 = vpop.permute.xlu0 %959
      %963 = vset.pattern.permute.xlu0 0
      %964 = vperm.xlu0 %963, %v942
      %v965 = vpop.permute.xlu0 %964
      %968 = vset.pattern.permute.xlu0 0
      %969 = vperm.xlu0 %968, %v943
      %v970 = vpop.permute.xlu0 %969
      %973 = vset.pattern.permute.xlu0 0
      %974 = vperm.xlu0 %973, %v944
      %v975 = vpop.permute.xlu0 %974
      %978 = vset.pattern.permute.xlu0 0
      %979 = vperm.xlu0 %978, %v945
      %v980 = vpop.permute.xlu0 %979
      %983 = vset.pattern.permute.xlu0 0
      %984 = vperm.xlu0 %983, %v946
      %v985 = vpop.permute.xlu0 %984
      %vm987 = vcmask 261120
      %v989 = vsel %vm987, %v931, 0
      %v992 = vsel %vm987, %v932, 0
      %v995 = vsel %vm987, %v933, 0
      %v998 = vsel %vm987, %v934, 0
      %v1001 = vsel %vm987, %v935, 0
      %v1004 = vsel %vm987, %v936, 0
      %v1007 = vsel %vm987, %v937, 0
      %v1010 = vsel %vm987, %v938, 0
      %1012 = vmatpush.msra.mxu0 0.0
      %1013 = vmatpush.msra.mxu0 0.0
      %1014 = vmatpush.msra.mxu0 0.0
      %1015 = vmatpush.msra.mxu0 0.0
      %1016 = vmatpush.msra.mxu0 0.0
      %1017 = vmatpush.msra.mxu0 0.0
      %1018 = vmatpush.msra.mxu0 0.0
      %1019 = vmatpush.msra.mxu0 0.0
      %1020 = vmatpush.msra.mxu0 0.0
      %1021 = vmatpush.msra.mxu0 0.0
      %1022 = vmatpush.msra.mxu0 0.0
      %1023 = vmatpush.msra.mxu0 0.0
      %1024 = vmatpush.msra.mxu0 %v930
      %1025 = vmatpush.msra.mxu0 %v929
      %1026 = vmatpush.msra.mxu0 %v928
      %1027 = vmatpush.msra.mxu0 %v927
      %1028 = vmatmul.f32.gmra.mxu0 %v989
      %v1029 = vpop.f32.mrf.mxu0
      %v1030 = vadd.f32 %v950, %v1029
      %1031 = vmatmul.f32.gmra.mxu0 %v992
      %v1032 = vpop.f32.mrf.mxu0
      %v1033 = vadd.f32 %v955, %v1032
      %1034 = vmatmul.f32.gmra.mxu0 %v995
      %v1035 = vpop.f32.mrf.mxu0
      %v1036 = vadd.f32 %v960, %v1035
      %1037 = vmatmul.f32.gmra.mxu0 %v998
      %v1038 = vpop.f32.mrf.mxu0
      %v1039 = vadd.f32 %v965, %v1038
      %1040 = vmatmul.f32.gmra.mxu0 %v1001
      %v1041 = vpop.f32.mrf.mxu0
      %v1042 = vadd.f32 %v970, %v1041
      %1043 = vmatmul.f32.gmra.mxu0 %v1004
      %v1044 = vpop.f32.mrf.mxu0
      %v1045 = vadd.f32 %v975, %v1044
      %1046 = vmatmul.f32.gmra.mxu0 %v1007
      %v1047 = vpop.f32.mrf.mxu0
      %v1048 = vadd.f32 %v980, %v1047
      %1049 = vmatmul.f32.gmra.mxu0 %v1010
      %v1050 = vpop.f32.mrf.mxu0
      %v1051 = vadd.f32 %v985, %v1050
      %1052 = vdwg.mxu0
      %v1053 = vadd.f32 %v640, %v1030
      %v1054 = vadd.f32 %v643, %v1033
      %v1055 = vadd.f32 %v646, %v1036
      %v1056 = vadd.f32 %v649, %v1039
      %v1057 = vadd.f32 %v1042, 0.0
      %v1058 = vadd.f32 %v1045, 0.0
      %v1059 = vadd.f32 %v1048, 0.0
      %v1060 = vadd.f32 %v1051, 0.0
      %1065 = vrot.lane.b32.xlu0 %v1053, 2
      %v1066 = vpop.permute.xlu0 %1065
      %1067 = vrot.lane.b32.xlu0 %v1054, 2
      %v1068 = vpop.permute.xlu0 %1067
      %1069 = vrot.lane.b32.xlu0 %v1055, 2
      %v1070 = vpop.permute.xlu0 %1069
      %1071 = vrot.lane.b32.xlu0 %v1056, 2
      %v1072 = vpop.permute.xlu0 %1071
      %1077 = vst.msk [vmem:[#allocation2] sm:$0xff] %vm668, %v1066
      %1078 = vst.msk [vmem:[#allocation2 + $0x8] sm:$0xff] %vm668, %v1068
      %1079 = vst.msk [vmem:[#allocation2 + $0x10] sm:$0xff] %vm668, %v1070
      %1080 = vst.msk [vmem:[#allocation2 + $0x18] sm:$0xff] %vm668, %v1072
      %v1081 = vld [vmem:[#allocation2] sm:$0xff]
      %v1082 = vld [vmem:[#allocation2 + $0x8] sm:$0xff]
      %v1083 = vld [vmem:[#allocation2 + $0x10] sm:$0xff]
      %v1084 = vld [vmem:[#allocation2 + $0x18] sm:$0xff]
      %1089 = vrot.lane.b32.xlu0 %v1081, 126
      %v1090 = vpop.permute.xlu0 %1089
      %1091 = vrot.lane.b32.xlu0 %v1082, 126
      %v1092 = vpop.permute.xlu0 %1091
      %1093 = vrot.lane.b32.xlu0 %v1083, 126
      %v1094 = vpop.permute.xlu0 %1093
      %1095 = vrot.lane.b32.xlu0 %v1084, 126
      %v1096 = vpop.permute.xlu0 %1095
      %1101 = vrot.lane.b32.xlu0 %v1081, 124
      %v1102 = vpop.permute.xlu0 %1101
      %1103 = vrot.lane.b32.xlu0 %v1082, 124
      %v1104 = vpop.permute.xlu0 %1103
      %1105 = vrot.lane.b32.xlu0 %v1083, 124
      %v1106 = vpop.permute.xlu0 %1105
      %1107 = vrot.lane.b32.xlu0 %v1084, 124
      %v1108 = vpop.permute.xlu0 %1107
      %s1113 = scalar_lea.vmem %s4, 64
      %v1114 = vld [vmem:[%s1113] sm:$0xff]
      %v1115 = vld [vmem:[%s1113 + $0x8] sm:$0xff]
      %v1116 = vld [vmem:[%s1113 + $0x10] sm:$0xff]
      %v1117 = vld [vmem:[%s1113 + $0x18] sm:$0xff]
      %v1118 = vld [vmem:[%s1113 + $0x20] sm:$0xff]
      %v1119 = vld [vmem:[%s1113 + $0x28] sm:$0xff]
      %v1120 = vld [vmem:[%s1113 + $0x30] sm:$0xff]
      %v1121 = vld [vmem:[%s1113 + $0x38] sm:$0xff]
      %s1122 = scalar_lea.vmem %s5, 64
      %v1123 = vld [vmem:[%s1122] sm:$0xff]
      %v1124 = vld [vmem:[%s1122 + $0x8] sm:$0xff]
      %v1125 = vld [vmem:[%s1122 + $0x10] sm:$0xff]
      %v1126 = vld [vmem:[%s1122 + $0x18] sm:$0xff]
      %v1127 = vld [vmem:[%s1122 + $0x20] sm:$0xff]
      %v1128 = vld [vmem:[%s1122 + $0x28] sm:$0xff]
      %v1129 = vld [vmem:[%s1122 + $0x30] sm:$0xff]
      %v1130 = vld [vmem:[%s1122 + $0x38] sm:$0xff]
      %1132 = vset.pattern.permute.xlu0 0
      %1133 = vperm.xlu0 %1132, %v1123
      %v1134 = vpop.permute.xlu0 %1133
      %1137 = vset.pattern.permute.xlu0 0
      %1138 = vperm.xlu0 %1137, %v1124
      %v1139 = vpop.permute.xlu0 %1138
      %1142 = vset.pattern.permute.xlu0 0
      %1143 = vperm.xlu0 %1142, %v1125
      %v1144 = vpop.permute.xlu0 %1143
      %1147 = vset.pattern.permute.xlu0 0
      %1148 = vperm.xlu0 %1147, %v1126
      %v1149 = vpop.permute.xlu0 %1148
      %1152 = vset.pattern.permute.xlu0 0
      %1153 = vperm.xlu0 %1152, %v1127
      %v1154 = vpop.permute.xlu0 %1153
      %1157 = vset.pattern.permute.xlu0 0
      %1158 = vperm.xlu0 %1157, %v1128
      %v1159 = vpop.permute.xlu0 %1158
      %1162 = vset.pattern.permute.xlu0 0
      %1163 = vperm.xlu0 %1162, %v1129
      %v1164 = vpop.permute.xlu0 %1163
      %1167 = vset.pattern.permute.xlu0 0
      %1168 = vperm.xlu0 %1167, %v1130
      %v1169 = vpop.permute.xlu0 %1168
      %v1172 = vsel %vm781, %v1114, 0
      %v1175 = vsel %vm781, %v1115, 0
      %v1178 = vsel %vm781, %v1116, 0
      %v1181 = vsel %vm781, %v1117, 0
      %v1184 = vsel %vm781, %v1118, 0
      %v1187 = vsel %vm781, %v1119, 0
      %v1190 = vsel %vm781, %v1120, 0
      %v1193 = vsel %vm781, %v1121, 0
      %1195 = vmatpush.msra.mxu0 0.0
      %1196 = vmatpush.msra.mxu0 0.0
      %1197 = vmatpush.msra.mxu0 0.0
      %1198 = vmatpush.msra.mxu0 0.0
      %1199 = vmatpush.msra.mxu0 %v1108
      %1200 = vmatpush.msra.mxu0 %v1106
      %1201 = vmatpush.msra.mxu0 %v1104
      %1202 = vmatpush.msra.mxu0 %v1102
      %1203 = vmatpush.msra.mxu0 %v1096
      %1204 = vmatpush.msra.mxu0 %v1094
      %1205 = vmatpush.msra.mxu0 %v1092
      %1206 = vmatpush.msra.mxu0 %v1090
      %1207 = vmatpush.msra.mxu0 %v1084
      %1208 = vmatpush.msra.mxu0 %v1083
      %1209 = vmatpush.msra.mxu0 %v1082
      %1210 = vmatpush.msra.mxu0 %v1081
      %1211 = vmatmul.f32.gmra.mxu0 %v1172
      %v1212 = vpop.f32.mrf.mxu0
      %v1213 = vadd.f32 %v1134, %v1212
      %1214 = vmatmul.f32.gmra.mxu0 %v1175
      %v1215 = vpop.f32.mrf.mxu0
      %v1216 = vadd.f32 %v1139, %v1215
      %1217 = vmatmul.f32.gmra.mxu0 %v1178
      %v1218 = vpop.f32.mrf.mxu0
      %v1219 = vadd.f32 %v1144, %v1218
      %1220 = vmatmul.f32.gmra.mxu0 %v1181
      %v1221 = vpop.f32.mrf.mxu0
      %v1222 = vadd.f32 %v1149, %v1221
      %1223 = vmatmul.f32.gmra.mxu0 %v1184
      %v1224 = vpop.f32.mrf.mxu0
      %v1225 = vadd.f32 %v1154, %v1224
      %1226 = vmatmul.f32.gmra.mxu0 %v1187
      %v1227 = vpop.f32.mrf.mxu0
      %v1228 = vadd.f32 %v1159, %v1227
      %1229 = vmatmul.f32.gmra.mxu0 %v1190
      %v1230 = vpop.f32.mrf.mxu0
      %v1231 = vadd.f32 %v1164, %v1230
      %1232 = vmatmul.f32.gmra.mxu0 %v1193
      %v1233 = vpop.f32.mrf.mxu0
      %v1234 = vadd.f32 %v1169, %v1233
      %1235 = vdwg.mxu0
      %v1236 = vtanh.pop %v1213
      %v1237 = vtanh.pop %v1216
      %v1238 = vtanh.pop %v1219
      %v1239 = vtanh.pop %v1222
      %v1240 = vxor.u32 %v1225, 2147483648
      %v1241 = vxor.u32 %v1228, 2147483648
      %v1242 = vxor.u32 %v1231, 2147483648
      %v1243 = vxor.u32 %v1234, 2147483648
      %v1244 = vmul.f32 %v1240, 1.442695
      %v1245 = vpow.pop %v1244
      %v1246 = vmul.f32 %v1241, 1.442695
      %v1247 = vpow.pop %v1246
      %v1248 = vmul.f32 %v1242, 1.442695
      %v1249 = vpow.pop %v1248
      %v1250 = vmul.f32 %v1243, 1.442695
      %v1251 = vpow.pop %v1250
      %v1252 = vadd.f32 %v1245, 1.0
      %v1253 = vadd.f32 %v1247, 1.0
      %v1254 = vadd.f32 %v1249, 1.0
      %v1255 = vadd.f32 %v1251, 1.0
      %v1256 = vrcp.pop %v1252
      %v1257 = vmul.f32 %v1252, %v1256
      %v1258 = vsub.f32 1.0, %v1257
      %v1259 = vmul.f32 %v1256, %v1258
      %v1260 = vadd.f32 %v1256, %v1259
      %vm1261 = vweird.f32 %v1252
      %vm1262 = vweird.f32 %v1256
      %vm1263 = vmor %vm1261, %vm1262
      %v1264 = vsel %vm1263, %v1256, %v1260
      %v1265 = vand.u32 2147483647, %v1252
      %vm1266 = vcmp.eq.f32.partialorder %v1265, 8.507059e+37
      %v1267 = vand.u32 %v1252, 2147483648
      %v1268 = vor.u32 1.1754944e-38, %v1267
      %v1269 = vsel %vm1266, %v1268, %v1264
      %v1270 = vmul.f32 1.0, %v1269
      %v1271 = vrcp.pop %v1253
      %v1272 = vmul.f32 %v1253, %v1271
      %v1273 = vsub.f32 1.0, %v1272
      %v1274 = vmul.f32 %v1271, %v1273
      %v1275 = vadd.f32 %v1271, %v1274
      %vm1276 = vweird.f32 %v1253
      %vm1277 = vweird.f32 %v1271
      %vm1278 = vmor %vm1276, %vm1277
      %v1279 = vsel %vm1278, %v1271, %v1275
      %v1280 = vand.u32 2147483647, %v1253
      %vm1281 = vcmp.eq.f32.partialorder %v1280, 8.507059e+37
      %v1282 = vand.u32 %v1253, 2147483648
      %v1283 = vor.u32 1.1754944e-38, %v1282
      %v1284 = vsel %vm1281, %v1283, %v1279
      %v1285 = vmul.f32 1.0, %v1284
      %v1286 = vrcp.pop %v1254
      %v1287 = vmul.f32 %v1254, %v1286
      %v1288 = vsub.f32 1.0, %v1287
      %v1289 = vmul.f32 %v1286, %v1288
      %v1290 = vadd.f32 %v1286, %v1289
      %vm1291 = vweird.f32 %v1254
      %vm1292 = vweird.f32 %v1286
      %vm1293 = vmor %vm1291, %vm1292
      %v1294 = vsel %vm1293, %v1286, %v1290
      %v1295 = vand.u32 2147483647, %v1254
      %vm1296 = vcmp.eq.f32.partialorder %v1295, 8.507059e+37
      %v1297 = vand.u32 %v1254, 2147483648
      %v1298 = vor.u32 1.1754944e-38, %v1297
      %v1299 = vsel %vm1296, %v1298, %v1294
      %v1300 = vmul.f32 1.0, %v1299
      %v1301 = vrcp.pop %v1255
      %v1302 = vmul.f32 %v1255, %v1301
      %v1303 = vsub.f32 1.0, %v1302
      %v1304 = vmul.f32 %v1301, %v1303
      %v1305 = vadd.f32 %v1301, %v1304
      %vm1306 = vweird.f32 %v1255
      %vm1307 = vweird.f32 %v1301
      %vm1308 = vmor %vm1306, %vm1307
      %v1309 = vsel %vm1308, %v1301, %v1305
      %v1310 = vand.u32 2147483647, %v1255
      %vm1311 = vcmp.eq.f32.partialorder %v1310, 8.507059e+37
      %v1312 = vand.u32 %v1255, 2147483648
      %v1313 = vor.u32 1.1754944e-38, %v1312
      %v1314 = vsel %vm1311, %v1313, %v1309
      %v1315 = vmul.f32 1.0, %v1314
      %v1316 = vmul.f32 %v1236, %v1270
      %v1317 = vmul.f32 %v1237, %v1285
      %v1318 = vmul.f32 %v1238, %v1300
      %v1319 = vmul.f32 %v1239, %v1315
      %s1320 = scalar_lea.vmem %s6, 64
      %v1321 = vld [vmem:[%s1320] sm:$0xff]
      %v1322 = vld [vmem:[%s1320 + $0x8] sm:$0xff]
      %v1323 = vld [vmem:[%s1320 + $0x10] sm:$0xff]
      %v1324 = vld [vmem:[%s1320 + $0x18] sm:$0xff]
      %v1325 = vld [vmem:[%s1320 + $0x20] sm:$0xff]
      %v1326 = vld [vmem:[%s1320 + $0x28] sm:$0xff]
      %v1327 = vld [vmem:[%s1320 + $0x30] sm:$0xff]
      %v1328 = vld [vmem:[%s1320 + $0x38] sm:$0xff]
      %s1329 = scalar_lea.vmem %s7, 64
      %v1330 = vld [vmem:[%s1329] sm:$0xff]
      %v1331 = vld [vmem:[%s1329 + $0x8] sm:$0xff]
      %v1332 = vld [vmem:[%s1329 + $0x10] sm:$0xff]
      %v1333 = vld [vmem:[%s1329 + $0x18] sm:$0xff]
      %v1334 = vld [vmem:[%s1329 + $0x20] sm:$0xff]
      %v1335 = vld [vmem:[%s1329 + $0x28] sm:$0xff]
      %v1336 = vld [vmem:[%s1329 + $0x30] sm:$0xff]
      %v1337 = vld [vmem:[%s1329 + $0x38] sm:$0xff]
      %1339 = vset.pattern.permute.xlu0 0
      %1340 = vperm.xlu0 %1339, %v1330
      %v1341 = vpop.permute.xlu0 %1340
      %1343 = vset.pattern.permute.xlu0 0
      %1344 = vperm.xlu0 %1343, %v1331
      %v1345 = vpop.permute.xlu0 %1344
      %1347 = vset.pattern.permute.xlu0 0
      %1348 = vperm.xlu0 %1347, %v1332
      %v1349 = vpop.permute.xlu0 %1348
      %1351 = vset.pattern.permute.xlu0 0
      %1352 = vperm.xlu0 %1351, %v1333
      %v1353 = vpop.permute.xlu0 %1352
      %1355 = vset.pattern.permute.xlu0 0
      %1356 = vperm.xlu0 %1355, %v1334
      %v1357 = vpop.permute.xlu0 %1356
      %1360 = vset.pattern.permute.xlu0 0
      %1361 = vperm.xlu0 %1360, %v1335
      %v1362 = vpop.permute.xlu0 %1361
      %1365 = vset.pattern.permute.xlu0 0
      %1366 = vperm.xlu0 %1365, %v1336
      %v1367 = vpop.permute.xlu0 %1366
      %1370 = vset.pattern.permute.xlu0 0
      %1371 = vperm.xlu0 %1370, %v1337
      %v1372 = vpop.permute.xlu0 %1371
      %v1375 = vsel %vm987, %v1321, 0
      %v1378 = vsel %vm987, %v1322, 0
      %v1381 = vsel %vm987, %v1323, 0
      %v1384 = vsel %vm987, %v1324, 0
      %v1387 = vsel %vm987, %v1325, 0
      %v1390 = vsel %vm987, %v1326, 0
      %v1393 = vsel %vm987, %v1327, 0
      %v1396 = vsel %vm987, %v1328, 0
      %1398 = vmatpush.msra.mxu0 0.0
      %1399 = vmatpush.msra.mxu0 0.0
      %1400 = vmatpush.msra.mxu0 0.0
      %1401 = vmatpush.msra.mxu0 0.0
      %1402 = vmatpush.msra.mxu0 0.0
      %1403 = vmatpush.msra.mxu0 0.0
      %1404 = vmatpush.msra.mxu0 0.0
      %1405 = vmatpush.msra.mxu0 0.0
      %1406 = vmatpush.msra.mxu0 0.0
      %1407 = vmatpush.msra.mxu0 0.0
      %1408 = vmatpush.msra.mxu0 0.0
      %1409 = vmatpush.msra.mxu0 0.0
      %1410 = vmatpush.msra.mxu0 %v1319
      %1411 = vmatpush.msra.mxu0 %v1318
      %1412 = vmatpush.msra.mxu0 %v1317
      %1413 = vmatpush.msra.mxu0 %v1316
      %1414 = vmatmul.f32.gmra.mxu0 %v1375
      %v1415 = vpop.f32.mrf.mxu0
      %1416 = vmatmul.f32.gmra.mxu0 %v1378
      %v1417 = vpop.f32.mrf.mxu0
      %1418 = vmatmul.f32.gmra.mxu0 %v1381
      %v1419 = vpop.f32.mrf.mxu0
      %1420 = vmatmul.f32.gmra.mxu0 %v1384
      %v1421 = vpop.f32.mrf.mxu0
      %1422 = vmatmul.f32.gmra.mxu0 %v1387
      %v1423 = vpop.f32.mrf.mxu0
      %v1424 = vadd.f32 %v1357, %v1423
      %1425 = vmatmul.f32.gmra.mxu0 %v1390
      %v1426 = vpop.f32.mrf.mxu0
      %v1427 = vadd.f32 %v1362, %v1426
      %1428 = vmatmul.f32.gmra.mxu0 %v1393
      %v1429 = vpop.f32.mrf.mxu0
      %v1430 = vadd.f32 %v1367, %v1429
      %1431 = vmatmul.f32.gmra.mxu0 %v1396
      %v1432 = vpop.f32.mrf.mxu0
      %v1433 = vadd.f32 %v1372, %v1432
      %1434 = vdwg.mxu0
      %v1435 = vadd.f32 %v1057, %v1424
      %v1436 = vadd.f32 %v1058, %v1427
      %v1437 = vadd.f32 %v1059, %v1430
      %v1438 = vadd.f32 %v1060, %v1433
      %v1439 = vld [vmem:[%s9] sm:$0xf]
      %1441 = vset.pattern.permute.xlu0 0
      %1442 = vperm.xlu0 %1441, %v1439
      %v1443 = vpop.permute.xlu0 %1442
      %v1446 = vsel %vm987, %v651, 0
      %1448 = vmatpush.msra.mxu0 0.0
      %1449 = vmatpush.msra.mxu0 0.0
      %1450 = vmatpush.msra.mxu0 0.0
      %1451 = vmatpush.msra.mxu0 0.0
      %1452 = vmatpush.msra.mxu0 0.0
      %1453 = vmatpush.msra.mxu0 0.0
      %1454 = vmatpush.msra.mxu0 0.0
      %1455 = vmatpush.msra.mxu0 0.0
      %1456 = vmatpush.msra.mxu0 0.0
      %1457 = vmatpush.msra.mxu0 0.0
      %1458 = vmatpush.msra.mxu0 0.0
      %1459 = vmatpush.msra.mxu0 0.0
      %1460 = vmatpush.msra.mxu0 %v1438
      %1461 = vmatpush.msra.mxu0 %v1437
      %1462 = vmatpush.msra.mxu0 %v1436
      %1463 = vmatpush.msra.mxu0 %v1435
      %1464 = vmatmul.f32.gmra.mxu0 %v1446
      %v1465 = vpop.f32.mrf.mxu0
      %v1466 = vadd.f32 %v1443, %v1465
      %1467 = vdwg.mxu0
      %v1468 = vadd.f32 %v576, %v1466
      %v1469 = vld [vmem:[%s1] sm:$0xff]
      %vm1470 = vcmask 64512
      %v1472 = vsel %vm1470, %v1468, 0
      %1474 = vmatpush.msra.mxu0 0.0
      %1475 = vmatpush.msra.mxu0 0.0
      %1476 = vmatpush.msra.mxu0 0.0
      %1477 = vmatpush.msra.mxu0 0.0
      %1478 = vmatpush.msra.mxu0 0.0
      %1479 = vmatpush.msra.mxu0 0.0
      %1480 = vmatpush.msra.mxu0 0.0
      %1481 = vmatpush.msra.mxu0 0.0
      %1482 = vmatpush.msra.mxu0 0.0
      %1483 = vmatpush.msra.mxu0 0.0
      %1484 = vmatpush.msra.mxu0 0.0
      %1485 = vmatpush.msra.mxu0 0.0
      %1486 = vmatpush.msra.mxu0 0.0
      %1487 = vmatpush.msra.mxu0 0.0
      %1488 = vmatpush.msra.mxu0 0.0
      %1489 = vmatpush.msra.mxu0 %v1469
      %1490 = vmatmul.f32.gmra.mxu0 %v1472
      %v1491 = vpop.f32.mrf.mxu0
      %v1492 = vadd.f32 0.0, %v1491
      %1493 = vdwg.mxu0
      %v1494 = vld [vmem:[%s10] sm:$0xff]
      %v1495 = vld [vmem:[%s10 + $0x8] sm:$0xff]
      %v1496 = vld [vmem:[%s10 + $0x10] sm:$0xff]
      %v1497 = vld [vmem:[%s10 + $0x18] sm:$0xff]
      %v1498 = vld [vmem:[%s11] sm:$0xff]
      %v1499 = vld [vmem:[%s11 + $0x8] sm:$0xff]
      %v1500 = vld [vmem:[%s11 + $0x10] sm:$0xff]
      %v1501 = vld [vmem:[%s11 + $0x18] sm:$0xff]
      %1503 = vset.pattern.permute.xlu0 0
      %1504 = vperm.xlu0 %1503, %v1498
      %v1505 = vpop.permute.xlu0 %1504
      %1508 = vset.pattern.permute.xlu0 0
      %1509 = vperm.xlu0 %1508, %v1499
      %v1510 = vpop.permute.xlu0 %1509
      %1513 = vset.pattern.permute.xlu0 0
      %1514 = vperm.xlu0 %1513, %v1500
      %v1515 = vpop.permute.xlu0 %1514
      %1518 = vset.pattern.permute.xlu0 0
      %1519 = vperm.xlu0 %1518, %v1501
      %v1520 = vpop.permute.xlu0 %1519
      %v1523 = vsel %vm605, %v1494, 0
      %v1526 = vsel %vm605, %v1495, 0
      %v1529 = vsel %vm605, %v1496, 0
      %v1532 = vsel %vm605, %v1497, 0
      %v1535 = vsel %vm618, %v1492, 0
      %1537 = vmatpush.msra.mxu0 0.0
      %1538 = vmatpush.msra.mxu0 0.0
      %1539 = vmatpush.msra.mxu0 0.0
      %1540 = vmatpush.msra.mxu0 0.0
      %1541 = vmatpush.msra.mxu0 0.0
      %1542 = vmatpush.msra.mxu0 0.0
      %1543 = vmatpush.msra.mxu0 0.0
      %1544 = vmatpush.msra.mxu0 0.0
      %1545 = vmatpush.msra.mxu0 0.0
      %1546 = vmatpush.msra.mxu0 0.0
      %1547 = vmatpush.msra.mxu0 0.0
      %1548 = vmatpush.msra.mxu0 0.0
      %1549 = vmatpush.msra.mxu0 0.0
      %1550 = vmatpush.msra.mxu0 0.0
      %1551 = vmatpush.msra.mxu0 0.0
      %1552 = vmatpush.msra.mxu0 %v1535
      %1553 = vmatmul.f32.gmra.mxu0 %v1523
      %v1554 = vpop.f32.mrf.mxu0
      %v1555 = vadd.f32 %v1505, %v1554
      %1556 = vmatmul.f32.gmra.mxu0 %v1526
      %v1557 = vpop.f32.mrf.mxu0
      %v1558 = vadd.f32 %v1510, %v1557
      %1559 = vmatmul.f32.gmra.mxu0 %v1529
      %v1560 = vpop.f32.mrf.mxu0
      %v1561 = vadd.f32 %v1515, %v1560
      %1562 = vmatmul.f32.gmra.mxu0 %v1532
      %v1563 = vpop.f32.mrf.mxu0
      %v1564 = vadd.f32 %v1520, %v1563
      %1565 = vdwg.mxu0
      %v1566 = vld [vmem:[%s16] sm:$0xf]
      %1571 = vrot.lane.b32.xlu0 %v1555, 2
      %v1572 = vpop.permute.xlu0 %1571
      %1573 = vrot.lane.b32.xlu0 %v1558, 2
      %v1574 = vpop.permute.xlu0 %1573
      %1575 = vrot.lane.b32.xlu0 %v1561, 2
      %v1576 = vpop.permute.xlu0 %1575
      %1577 = vrot.lane.b32.xlu0 %v1564, 2
      %v1578 = vpop.permute.xlu0 %1577
      %vm1583 = vcmask 146448
      %1584 = vst.msk [vmem:[#allocation2] sm:$0xff] %vm1583, %v1572
      %1585 = vst.msk [vmem:[#allocation2 + $0x8] sm:$0xff] %vm1583, %v1574
      %1586 = vst.msk [vmem:[#allocation2 + $0x10] sm:$0xff] %vm1583, %v1576
      %1587 = vst.msk [vmem:[#allocation2 + $0x18] sm:$0xff] %vm1583, %v1578
      %v1588 = vld [vmem:[#allocation2] sm:$0xff]
      %v1589 = vld [vmem:[#allocation2 + $0x8] sm:$0xff]
      %v1590 = vld [vmem:[#allocation2 + $0x10] sm:$0xff]
      %v1591 = vld [vmem:[#allocation2 + $0x18] sm:$0xff]
      %1596 = vrot.lane.b32.xlu0 %v1588, 127
      %v1597 = vpop.permute.xlu0 %1596
      %1598 = vrot.lane.b32.xlu0 %v1589, 127
      %v1599 = vpop.permute.xlu0 %1598
      %1600 = vrot.lane.b32.xlu0 %v1590, 127
      %v1601 = vpop.permute.xlu0 %1600
      %1602 = vrot.lane.b32.xlu0 %v1591, 127
      %v1603 = vpop.permute.xlu0 %1602
      %1604 = vrot.lane.b32.xlu0 %v1588, 126
      %v1605 = vpop.permute.xlu0 %1604
      %1606 = vrot.lane.b32.xlu0 %v1589, 126
      %v1607 = vpop.permute.xlu0 %1606
      %1608 = vrot.lane.b32.xlu0 %v1590, 126
      %v1609 = vpop.permute.xlu0 %1608
      %1610 = vrot.lane.b32.xlu0 %v1591, 126
      %v1611 = vpop.permute.xlu0 %1610
      %v1612 = vld [vmem:[%s12] sm:$0xff]
      %v1613 = vld [vmem:[%s12 + $0x8] sm:$0xff]
      %v1614 = vld [vmem:[%s12 + $0x10] sm:$0xff]
      %v1615 = vld [vmem:[%s12 + $0x18] sm:$0xff]
      %v1616 = vld [vmem:[%s12 + $0x20] sm:$0xff]
      %v1617 = vld [vmem:[%s12 + $0x28] sm:$0xff]
      %v1618 = vld [vmem:[%s12 + $0x30] sm:$0xff]
      %v1619 = vld [vmem:[%s12 + $0x38] sm:$0xff]
      %v1620 = vld [vmem:[%s13] sm:$0xff]
      %v1621 = vld [vmem:[%s13 + $0x8] sm:$0xff]
      %v1622 = vld [vmem:[%s13 + $0x10] sm:$0xff]
      %v1623 = vld [vmem:[%s13 + $0x18] sm:$0xff]
      %v1624 = vld [vmem:[%s13 + $0x20] sm:$0xff]
      %v1625 = vld [vmem:[%s13 + $0x28] sm:$0xff]
      %v1626 = vld [vmem:[%s13 + $0x30] sm:$0xff]
      %v1627 = vld [vmem:[%s13 + $0x38] sm:$0xff]
      %1629 = vset.pattern.permute.xlu0 0
      %1630 = vperm.xlu0 %1629, %v1620
      %v1631 = vpop.permute.xlu0 %1630
      %1634 = vset.pattern.permute.xlu0 0
      %1635 = vperm.xlu0 %1634, %v1621
      %v1636 = vpop.permute.xlu0 %1635
      %1639 = vset.pattern.permute.xlu0 0
      %1640 = vperm.xlu0 %1639, %v1622
      %v1641 = vpop.permute.xlu0 %1640
      %1644 = vset.pattern.permute.xlu0 0
      %1645 = vperm.xlu0 %1644, %v1623
      %v1646 = vpop.permute.xlu0 %1645
      %1649 = vset.pattern.permute.xlu0 0
      %1650 = vperm.xlu0 %1649, %v1624
      %v1651 = vpop.permute.xlu0 %1650
      %1654 = vset.pattern.permute.xlu0 0
      %1655 = vperm.xlu0 %1654, %v1625
      %v1656 = vpop.permute.xlu0 %1655
      %1659 = vset.pattern.permute.xlu0 0
      %1660 = vperm.xlu0 %1659, %v1626
      %v1661 = vpop.permute.xlu0 %1660
      %1664 = vset.pattern.permute.xlu0 0
      %1665 = vperm.xlu0 %1664, %v1627
      %v1666 = vpop.permute.xlu0 %1665
      %1668 = vrot.lane.b32.xlu0 %v1597, 127
      %v1669 = vpop.permute.xlu0 %1668
      %1670 = vrot.lane.b32.xlu0 %v1599, 127
      %v1671 = vpop.permute.xlu0 %1670
      %1672 = vrot.lane.b32.xlu0 %v1601, 127
      %v1673 = vpop.permute.xlu0 %1672
      %1674 = vrot.lane.b32.xlu0 %v1603, 127
      %v1675 = vpop.permute.xlu0 %1674
      %1676 = vrot.lane.b32.xlu0 %v1605, 127
      %v1677 = vpop.permute.xlu0 %1676
      %1678 = vrot.lane.b32.xlu0 %v1607, 127
      %v1679 = vpop.permute.xlu0 %1678
      %1680 = vrot.lane.b32.xlu0 %v1609, 127
      %v1681 = vpop.permute.xlu0 %1680
      %1682 = vrot.lane.b32.xlu0 %v1611, 127
      %v1683 = vpop.permute.xlu0 %1682
      %v1697 = vsel %vm781, %v1612, 0
      %v1700 = vsel %vm781, %v1613, 0
      %v1703 = vsel %vm781, %v1614, 0
      %v1706 = vsel %vm781, %v1615, 0
      %v1709 = vsel %vm781, %v1616, 0
      %v1712 = vsel %vm781, %v1617, 0
      %v1715 = vsel %vm781, %v1618, 0
      %v1718 = vsel %vm781, %v1619, 0
      %1720 = vmatpush.msra.mxu0 0.0
      %1721 = vmatpush.msra.mxu0 0.0
      %1722 = vmatpush.msra.mxu0 0.0
      %1723 = vmatpush.msra.mxu0 0.0
      %1724 = vmatpush.msra.mxu0 %v1683
      %1725 = vmatpush.msra.mxu0 %v1681
      %1726 = vmatpush.msra.mxu0 %v1679
      %1727 = vmatpush.msra.mxu0 %v1677
      %1728 = vmatpush.msra.mxu0 %v1675
      %1729 = vmatpush.msra.mxu0 %v1673
      %1730 = vmatpush.msra.mxu0 %v1671
      %1731 = vmatpush.msra.mxu0 %v1669
      %1732 = vmatpush.msra.mxu0 %v1603
      %1733 = vmatpush.msra.mxu0 %v1601
      %1734 = vmatpush.msra.mxu0 %v1599
      %1735 = vmatpush.msra.mxu0 %v1597
      %1736 = vmatmul.f32.gmra.mxu0 %v1697
      %v1737 = vpop.f32.mrf.mxu0
      %v1738 = vadd.f32 %v1631, %v1737
      %1739 = vmatmul.f32.gmra.mxu0 %v1700
      %v1740 = vpop.f32.mrf.mxu0
      %v1741 = vadd.f32 %v1636, %v1740
      %1742 = vmatmul.f32.gmra.mxu0 %v1703
      %v1743 = vpop.f32.mrf.mxu0
      %v1744 = vadd.f32 %v1641, %v1743
      %1745 = vmatmul.f32.gmra.mxu0 %v1706
      %v1746 = vpop.f32.mrf.mxu0
      %v1747 = vadd.f32 %v1646, %v1746
      %1748 = vmatmul.f32.gmra.mxu0 %v1709
      %v1749 = vpop.f32.mrf.mxu0
      %v1750 = vadd.f32 %v1651, %v1749
      %1751 = vmatmul.f32.gmra.mxu0 %v1712
      %v1752 = vpop.f32.mrf.mxu0
      %v1753 = vadd.f32 %v1656, %v1752
      %1754 = vmatmul.f32.gmra.mxu0 %v1715
      %v1755 = vpop.f32.mrf.mxu0
      %v1756 = vadd.f32 %v1661, %v1755
      %1757 = vmatmul.f32.gmra.mxu0 %v1718
      %v1758 = vpop.f32.mrf.mxu0
      %v1759 = vadd.f32 %v1666, %v1758
      %1760 = vdwg.mxu0
      %v1761 = vtanh.pop %v1738
      %v1762 = vtanh.pop %v1741
      %v1763 = vtanh.pop %v1744
      %v1764 = vtanh.pop %v1747
      %v1765 = vxor.u32 %v1750, 2147483648
      %v1766 = vxor.u32 %v1753, 2147483648
      %v1767 = vxor.u32 %v1756, 2147483648
      %v1768 = vxor.u32 %v1759, 2147483648
      %v1769 = vmul.f32 %v1765, 1.442695
      %v1770 = vpow.pop %v1769
      %v1771 = vmul.f32 %v1766, 1.442695
      %v1772 = vpow.pop %v1771
      %v1773 = vmul.f32 %v1767, 1.442695
      %v1774 = vpow.pop %v1773
      %v1775 = vmul.f32 %v1768, 1.442695
      %v1776 = vpow.pop %v1775
      %v1777 = vadd.f32 %v1770, 1.0
      %v1778 = vadd.f32 %v1772, 1.0
      %v1779 = vadd.f32 %v1774, 1.0
      %v1780 = vadd.f32 %v1776, 1.0
      %v1781 = vrcp.pop %v1777
      %v1782 = vmul.f32 %v1777, %v1781
      %v1783 = vsub.f32 1.0, %v1782
      %v1784 = vmul.f32 %v1781, %v1783
      %v1785 = vadd.f32 %v1781, %v1784
      %vm1786 = vweird.f32 %v1777
      %vm1787 = vweird.f32 %v1781
      %vm1788 = vmor %vm1786, %vm1787
      %v1789 = vsel %vm1788, %v1781, %v1785
      %v1790 = vand.u32 2147483647, %v1777
      %vm1791 = vcmp.eq.f32.partialorder %v1790, 8.507059e+37
      %v1792 = vand.u32 %v1777, 2147483648
      %v1793 = vor.u32 1.1754944e-38, %v1792
      %v1794 = vsel %vm1791, %v1793, %v1789
      %v1795 = vmul.f32 1.0, %v1794
      %v1796 = vrcp.pop %v1778
      %v1797 = vmul.f32 %v1778, %v1796
      %v1798 = vsub.f32 1.0, %v1797
      %v1799 = vmul.f32 %v1796, %v1798
      %v1800 = vadd.f32 %v1796, %v1799
      %vm1801 = vweird.f32 %v1778
      %vm1802 = vweird.f32 %v1796
      %vm1803 = vmor %vm1801, %vm1802
      %v1804 = vsel %vm1803, %v1796, %v1800
      %v1805 = vand.u32 2147483647, %v1778
      %vm1806 = vcmp.eq.f32.partialorder %v1805, 8.507059e+37
      %v1807 = vand.u32 %v1778, 2147483648
      %v1808 = vor.u32 1.1754944e-38, %v1807
      %v1809 = vsel %vm1806, %v1808, %v1804
      %v1810 = vmul.f32 1.0, %v1809
      %v1811 = vrcp.pop %v1779
      %v1812 = vmul.f32 %v1779, %v1811
      %v1813 = vsub.f32 1.0, %v1812
      %v1814 = vmul.f32 %v1811, %v1813
      %v1815 = vadd.f32 %v1811, %v1814
      %vm1816 = vweird.f32 %v1779
      %vm1817 = vweird.f32 %v1811
      %vm1818 = vmor %vm1816, %vm1817
      %v1819 = vsel %vm1818, %v1811, %v1815
      %v1820 = vand.u32 2147483647, %v1779
      %vm1821 = vcmp.eq.f32.partialorder %v1820, 8.507059e+37
      %v1822 = vand.u32 %v1779, 2147483648
      %v1823 = vor.u32 1.1754944e-38, %v1822
      %v1824 = vsel %vm1821, %v1823, %v1819
      %v1825 = vmul.f32 1.0, %v1824
      %v1826 = vrcp.pop %v1780
      %v1827 = vmul.f32 %v1780, %v1826
      %v1828 = vsub.f32 1.0, %v1827
      %v1829 = vmul.f32 %v1826, %v1828
      %v1830 = vadd.f32 %v1826, %v1829
      %vm1831 = vweird.f32 %v1780
      %vm1832 = vweird.f32 %v1826
      %vm1833 = vmor %vm1831, %vm1832
      %v1834 = vsel %vm1833, %v1826, %v1830
      %v1835 = vand.u32 2147483647, %v1780
      %vm1836 = vcmp.eq.f32.partialorder %v1835, 8.507059e+37
      %v1837 = vand.u32 %v1780, 2147483648
      %v1838 = vor.u32 1.1754944e-38, %v1837
      %v1839 = vsel %vm1836, %v1838, %v1834
      %v1840 = vmul.f32 1.0, %v1839
      %v1841 = vmul.f32 %v1761, %v1795
      %v1842 = vmul.f32 %v1762, %v1810
      %v1843 = vmul.f32 %v1763, %v1825
      %v1844 = vmul.f32 %v1764, %v1840
      %v1845 = vld [vmem:[%s14] sm:$0xff]
      %v1846 = vld [vmem:[%s14 + $0x8] sm:$0xff]
      %v1847 = vld [vmem:[%s14 + $0x10] sm:$0xff]
      %v1848 = vld [vmem:[%s14 + $0x18] sm:$0xff]
      %v1849 = vld [vmem:[%s14 + $0x20] sm:$0xff]
      %v1850 = vld [vmem:[%s14 + $0x28] sm:$0xff]
      %v1851 = vld [vmem:[%s14 + $0x30] sm:$0xff]
      %v1852 = vld [vmem:[%s14 + $0x38] sm:$0xff]
      %v1853 = vld [vmem:[%s15] sm:$0xff]
      %v1854 = vld [vmem:[%s15 + $0x8] sm:$0xff]
      %v1855 = vld [vmem:[%s15 + $0x10] sm:$0xff]
      %v1856 = vld [vmem:[%s15 + $0x18] sm:$0xff]
      %v1857 = vld [vmem:[%s15 + $0x20] sm:$0xff]
      %v1858 = vld [vmem:[%s15 + $0x28] sm:$0xff]
      %v1859 = vld [vmem:[%s15 + $0x30] sm:$0xff]
      %v1860 = vld [vmem:[%s15 + $0x38] sm:$0xff]
      %1862 = vset.pattern.permute.xlu0 0
      %1863 = vperm.xlu0 %1862, %v1853
      %v1864 = vpop.permute.xlu0 %1863
      %1867 = vset.pattern.permute.xlu0 0
      %1868 = vperm.xlu0 %1867, %v1854
      %v1869 = vpop.permute.xlu0 %1868
      %1872 = vset.pattern.permute.xlu0 0
      %1873 = vperm.xlu0 %1872, %v1855
      %v1874 = vpop.permute.xlu0 %1873
      %1877 = vset.pattern.permute.xlu0 0
      %1878 = vperm.xlu0 %1877, %v1856
      %v1879 = vpop.permute.xlu0 %1878
      %1882 = vset.pattern.permute.xlu0 0
      %1883 = vperm.xlu0 %1882, %v1857
      %v1884 = vpop.permute.xlu0 %1883
      %1887 = vset.pattern.permute.xlu0 0
      %1888 = vperm.xlu0 %1887, %v1858
      %v1889 = vpop.permute.xlu0 %1888
      %1892 = vset.pattern.permute.xlu0 0
      %1893 = vperm.xlu0 %1892, %v1859
      %v1894 = vpop.permute.xlu0 %1893
      %1897 = vset.pattern.permute.xlu0 0
      %1898 = vperm.xlu0 %1897, %v1860
      %v1899 = vpop.permute.xlu0 %1898
      %v1902 = vsel %vm987, %v1845, 0
      %v1905 = vsel %vm987, %v1846, 0
      %v1908 = vsel %vm987, %v1847, 0
      %v1911 = vsel %vm987, %v1848, 0
      %v1914 = vsel %vm987, %v1849, 0
      %v1917 = vsel %vm987, %v1850, 0
      %v1920 = vsel %vm987, %v1851, 0
      %v1923 = vsel %vm987, %v1852, 0
      %1925 = vmatpush.msra.mxu0 0.0
      %1926 = vmatpush.msra.mxu0 0.0
      %1927 = vmatpush.msra.mxu0 0.0
      %1928 = vmatpush.msra.mxu0 0.0
      %1929 = vmatpush.msra.mxu0 0.0
      %1930 = vmatpush.msra.mxu0 0.0
      %1931 = vmatpush.msra.mxu0 0.0
      %1932 = vmatpush.msra.mxu0 0.0
      %1933 = vmatpush.msra.mxu0 0.0
      %1934 = vmatpush.msra.mxu0 0.0
      %1935 = vmatpush.msra.mxu0 0.0
      %1936 = vmatpush.msra.mxu0 0.0
      %1937 = vmatpush.msra.mxu0 %v1844
      %1938 = vmatpush.msra.mxu0 %v1843
      %1939 = vmatpush.msra.mxu0 %v1842
      %1940 = vmatpush.msra.mxu0 %v1841
      %1941 = vmatmul.f32.gmra.mxu0 %v1902
      %v1942 = vpop.f32.mrf.mxu0
      %v1943 = vadd.f32 %v1864, %v1942
      %1944 = vmatmul.f32.gmra.mxu0 %v1905
      %v1945 = vpop.f32.mrf.mxu0
      %v1946 = vadd.f32 %v1869, %v1945
      %1947 = vmatmul.f32.gmra.mxu0 %v1908
      %v1948 = vpop.f32.mrf.mxu0
      %v1949 = vadd.f32 %v1874, %v1948
      %1950 = vmatmul.f32.gmra.mxu0 %v1911
      %v1951 = vpop.f32.mrf.mxu0
      %v1952 = vadd.f32 %v1879, %v1951
      %1953 = vmatmul.f32.gmra.mxu0 %v1914
      %v1954 = vpop.f32.mrf.mxu0
      %v1955 = vadd.f32 %v1884, %v1954
      %1956 = vmatmul.f32.gmra.mxu0 %v1917
      %v1957 = vpop.f32.mrf.mxu0
      %v1958 = vadd.f32 %v1889, %v1957
      %1959 = vmatmul.f32.gmra.mxu0 %v1920
      %v1960 = vpop.f32.mrf.mxu0
      %v1961 = vadd.f32 %v1894, %v1960
      %1962 = vmatmul.f32.gmra.mxu0 %v1923
      %v1963 = vpop.f32.mrf.mxu0
      %v1964 = vadd.f32 %v1899, %v1963
      %1965 = vdwg.mxu0
      %v1966 = vadd.f32 %v1555, %v1943
      %v1967 = vadd.f32 %v1558, %v1946
      %v1968 = vadd.f32 %v1561, %v1949
      %v1969 = vadd.f32 %v1564, %v1952
      %v1970 = vadd.f32 %v1955, 0.0
      %v1971 = vadd.f32 %v1958, 0.0
      %v1972 = vadd.f32 %v1961, 0.0
      %v1973 = vadd.f32 %v1964, 0.0
      %1978 = vrot.lane.b32.xlu0 %v1966, 2
      %v1979 = vpop.permute.xlu0 %1978
      %1980 = vrot.lane.b32.xlu0 %v1967, 2
      %v1981 = vpop.permute.xlu0 %1980
      %1982 = vrot.lane.b32.xlu0 %v1968, 2
      %v1983 = vpop.permute.xlu0 %1982
      %1984 = vrot.lane.b32.xlu0 %v1969, 2
      %v1985 = vpop.permute.xlu0 %1984
      %1990 = vst.msk [vmem:[#allocation2] sm:$0xff] %vm1583, %v1979
      %1991 = vst.msk [vmem:[#allocation2 + $0x8] sm:$0xff] %vm1583, %v1981
      %1992 = vst.msk [vmem:[#allocation2 + $0x10] sm:$0xff] %vm1583, %v1983
      %1993 = vst.msk [vmem:[#allocation2 + $0x18] sm:$0xff] %vm1583, %v1985
      %v1994 = vld [vmem:[#allocation2] sm:$0xff]
      %v1995 = vld [vmem:[#allocation2 + $0x8] sm:$0xff]
      %v1996 = vld [vmem:[#allocation2 + $0x10] sm:$0xff]
      %v1997 = vld [vmem:[#allocation2 + $0x18] sm:$0xff]
      %2002 = vrot.lane.b32.xlu0 %v1994, 126
      %v2003 = vpop.permute.xlu0 %2002
      %2004 = vrot.lane.b32.xlu0 %v1995, 126
      %v2005 = vpop.permute.xlu0 %2004
      %2006 = vrot.lane.b32.xlu0 %v1996, 126
      %v2007 = vpop.permute.xlu0 %2006
      %2008 = vrot.lane.b32.xlu0 %v1997, 126
      %v2009 = vpop.permute.xlu0 %2008
      %2014 = vrot.lane.b32.xlu0 %v1994, 124
      %v2015 = vpop.permute.xlu0 %2014
      %2016 = vrot.lane.b32.xlu0 %v1995, 124
      %v2017 = vpop.permute.xlu0 %2016
      %2018 = vrot.lane.b32.xlu0 %v1996, 124
      %v2019 = vpop.permute.xlu0 %2018
      %2020 = vrot.lane.b32.xlu0 %v1997, 124
      %v2021 = vpop.permute.xlu0 %2020
      %s2026 = scalar_lea.vmem %s12, 64
      %v2027 = vld [vmem:[%s2026] sm:$0xff]
      %v2028 = vld [vmem:[%s2026 + $0x8] sm:$0xff]
      %v2029 = vld [vmem:[%s2026 + $0x10] sm:$0xff]
      %v2030 = vld [vmem:[%s2026 + $0x18] sm:$0xff]
      %v2031 = vld [vmem:[%s2026 + $0x20] sm:$0xff]
      %v2032 = vld [vmem:[%s2026 + $0x28] sm:$0xff]
      %v2033 = vld [vmem:[%s2026 + $0x30] sm:$0xff]
      %v2034 = vld [vmem:[%s2026 + $0x38] sm:$0xff]
      %s2035 = scalar_lea.vmem %s13, 64
      %v2036 = vld [vmem:[%s2035] sm:$0xff]
      %v2037 = vld [vmem:[%s2035 + $0x8] sm:$0xff]
      %v2038 = vld [vmem:[%s2035 + $0x10] sm:$0xff]
      %v2039 = vld [vmem:[%s2035 + $0x18] sm:$0xff]
      %v2040 = vld [vmem:[%s2035 + $0x20] sm:$0xff]
      %v2041 = vld [vmem:[%s2035 + $0x28] sm:$0xff]
      %v2042 = vld [vmem:[%s2035 + $0x30] sm:$0xff]
      %v2043 = vld [vmem:[%s2035 + $0x38] sm:$0xff]
      %2045 = vset.pattern.permute.xlu0 0
      %2046 = vperm.xlu0 %2045, %v2036
      %v2047 = vpop.permute.xlu0 %2046
      %2050 = vset.pattern.permute.xlu0 0
      %2051 = vperm.xlu0 %2050, %v2037
      %v2052 = vpop.permute.xlu0 %2051
      %2055 = vset.pattern.permute.xlu0 0
      %2056 = vperm.xlu0 %2055, %v2038
      %v2057 = vpop.permute.xlu0 %2056
      %2060 = vset.pattern.permute.xlu0 0
      %2061 = vperm.xlu0 %2060, %v2039
      %v2062 = vpop.permute.xlu0 %2061
      %2065 = vset.pattern.permute.xlu0 0
      %2066 = vperm.xlu0 %2065, %v2040
      %v2067 = vpop.permute.xlu0 %2066
      %2070 = vset.pattern.permute.xlu0 0
      %2071 = vperm.xlu0 %2070, %v2041
      %v2072 = vpop.permute.xlu0 %2071
      %2075 = vset.pattern.permute.xlu0 0
      %2076 = vperm.xlu0 %2075, %v2042
      %v2077 = vpop.permute.xlu0 %2076
      %2080 = vset.pattern.permute.xlu0 0
      %2081 = vperm.xlu0 %2080, %v2043
      %v2082 = vpop.permute.xlu0 %2081
      %v2085 = vsel %vm781, %v2027, 0
      %v2088 = vsel %vm781, %v2028, 0
      %v2091 = vsel %vm781, %v2029, 0
      %v2094 = vsel %vm781, %v2030, 0
      %v2097 = vsel %vm781, %v2031, 0
      %v2100 = vsel %vm781, %v2032, 0
      %v2103 = vsel %vm781, %v2033, 0
      %v2106 = vsel %vm781, %v2034, 0
      %2108 = vmatpush.msra.mxu0 0.0
      %2109 = vmatpush.msra.mxu0 0.0
      %2110 = vmatpush.msra.mxu0 0.0
      %2111 = vmatpush.msra.mxu0 0.0
      %2112 = vmatpush.msra.mxu0 %v2021
      %2113 = vmatpush.msra.mxu0 %v2019
      %2114 = vmatpush.msra.mxu0 %v2017
      %2115 = vmatpush.msra.mxu0 %v2015
      %2116 = vmatpush.msra.mxu0 %v2009
      %2117 = vmatpush.msra.mxu0 %v2007
      %2118 = vmatpush.msra.mxu0 %v2005
      %2119 = vmatpush.msra.mxu0 %v2003
      %2120 = vmatpush.msra.mxu0 %v1997
      %2121 = vmatpush.msra.mxu0 %v1996
      %2122 = vmatpush.msra.mxu0 %v1995
      %2123 = vmatpush.msra.mxu0 %v1994
      %2124 = vmatmul.f32.gmra.mxu0 %v2085
      %v2125 = vpop.f32.mrf.mxu0
      %v2126 = vadd.f32 %v2047, %v2125
      %2127 = vmatmul.f32.gmra.mxu0 %v2088
      %v2128 = vpop.f32.mrf.mxu0
      %v2129 = vadd.f32 %v2052, %v2128
      %2130 = vmatmul.f32.gmra.mxu0 %v2091
      %v2131 = vpop.f32.mrf.mxu0
      %v2132 = vadd.f32 %v2057, %v2131
      %2133 = vmatmul.f32.gmra.mxu0 %v2094
      %v2134 = vpop.f32.mrf.mxu0
      %v2135 = vadd.f32 %v2062, %v2134
      %2136 = vmatmul.f32.gmra.mxu0 %v2097
      %v2137 = vpop.f32.mrf.mxu0
      %v2138 = vadd.f32 %v2067, %v2137
      %2139 = vmatmul.f32.gmra.mxu0 %v2100
      %v2140 = vpop.f32.mrf.mxu0
      %v2141 = vadd.f32 %v2072, %v2140
      %2142 = vmatmul.f32.gmra.mxu0 %v2103
      %v2143 = vpop.f32.mrf.mxu0
      %v2144 = vadd.f32 %v2077, %v2143
      %2145 = vmatmul.f32.gmra.mxu0 %v2106
      %v2146 = vpop.f32.mrf.mxu0
      %v2147 = vadd.f32 %v2082, %v2146
      %2148 = vdwg.mxu0
      %v2149 = vtanh.pop %v2126
      %v2150 = vtanh.pop %v2129
      %v2151 = vtanh.pop %v2132
      %v2152 = vtanh.pop %v2135
      %v2153 = vxor.u32 %v2138, 2147483648
      %v2154 = vxor.u32 %v2141, 2147483648
      %v2155 = vxor.u32 %v2144, 2147483648
      %v2156 = vxor.u32 %v2147, 2147483648
      %v2157 = vmul.f32 %v2153, 1.442695
      %v2158 = vpow.pop %v2157
      %v2159 = vmul.f32 %v2154, 1.442695
      %v2160 = vpow.pop %v2159
      %v2161 = vmul.f32 %v2155, 1.442695
      %v2162 = vpow.pop %v2161
      %v2163 = vmul.f32 %v2156, 1.442695
      %v2164 = vpow.pop %v2163
      %v2165 = vadd.f32 %v2158, 1.0
      %v2166 = vadd.f32 %v2160, 1.0
      %v2167 = vadd.f32 %v2162, 1.0
      %v2168 = vadd.f32 %v2164, 1.0
      %v2169 = vrcp.pop %v2165
      %v2170 = vmul.f32 %v2165, %v2169
      %v2171 = vsub.f32 1.0, %v2170
      %v2172 = vmul.f32 %v2169, %v2171
      %v2173 = vadd.f32 %v2169, %v2172
      %vm2174 = vweird.f32 %v2165
      %vm2175 = vweird.f32 %v2169
      %vm2176 = vmor %vm2174, %vm2175
      %v2177 = vsel %vm2176, %v2169, %v2173
      %v2178 = vand.u32 2147483647, %v2165
      %vm2179 = vcmp.eq.f32.partialorder %v2178, 8.507059e+37
      %v2180 = vand.u32 %v2165, 2147483648
      %v2181 = vor.u32 1.1754944e-38, %v2180
      %v2182 = vsel %vm2179, %v2181, %v2177
      %v2183 = vmul.f32 1.0, %v2182
      %v2184 = vrcp.pop %v2166
      %v2185 = vmul.f32 %v2166, %v2184
      %v2186 = vsub.f32 1.0, %v2185
      %v2187 = vmul.f32 %v2184, %v2186
      %v2188 = vadd.f32 %v2184, %v2187
      %vm2189 = vweird.f32 %v2166
      %vm2190 = vweird.f32 %v2184
      %vm2191 = vmor %vm2189, %vm2190
      %v2192 = vsel %vm2191, %v2184, %v2188
      %v2193 = vand.u32 2147483647, %v2166
      %vm2194 = vcmp.eq.f32.partialorder %v2193, 8.507059e+37
      %v2195 = vand.u32 %v2166, 2147483648
      %v2196 = vor.u32 1.1754944e-38, %v2195
      %v2197 = vsel %vm2194, %v2196, %v2192
      %v2198 = vmul.f32 1.0, %v2197
      %v2199 = vrcp.pop %v2167
      %v2200 = vmul.f32 %v2167, %v2199
      %v2201 = vsub.f32 1.0, %v2200
      %v2202 = vmul.f32 %v2199, %v2201
      %v2203 = vadd.f32 %v2199, %v2202
      %vm2204 = vweird.f32 %v2167
      %vm2205 = vweird.f32 %v2199
      %vm2206 = vmor %vm2204, %vm2205
      %v2207 = vsel %vm2206, %v2199, %v2203
      %v2208 = vand.u32 2147483647, %v2167
      %vm2209 = vcmp.eq.f32.partialorder %v2208, 8.507059e+37
      %v2210 = vand.u32 %v2167, 2147483648
      %v2211 = vor.u32 1.1754944e-38, %v2210
      %v2212 = vsel %vm2209, %v2211, %v2207
      %v2213 = vmul.f32 1.0, %v2212
      %v2214 = vrcp.pop %v2168
      %v2215 = vmul.f32 %v2168, %v2214
      %v2216 = vsub.f32 1.0, %v2215
      %v2217 = vmul.f32 %v2214, %v2216
      %v2218 = vadd.f32 %v2214, %v2217
      %vm2219 = vweird.f32 %v2168
      %vm2220 = vweird.f32 %v2214
      %vm2221 = vmor %vm2219, %vm2220
      %v2222 = vsel %vm2221, %v2214, %v2218
      %v2223 = vand.u32 2147483647, %v2168
      %vm2224 = vcmp.eq.f32.partialorder %v2223, 8.507059e+37
      %v2225 = vand.u32 %v2168, 2147483648
      %v2226 = vor.u32 1.1754944e-38, %v2225
      %v2227 = vsel %vm2224, %v2226, %v2222
      %v2228 = vmul.f32 1.0, %v2227
      %v2229 = vmul.f32 %v2149, %v2183
      %v2230 = vmul.f32 %v2150, %v2198
      %v2231 = vmul.f32 %v2151, %v2213
      %v2232 = vmul.f32 %v2152, %v2228
      %s2233 = scalar_lea.vmem %s14, 64
      %v2234 = vld [vmem:[%s2233] sm:$0xff]
      %v2235 = vld [vmem:[%s2233 + $0x8] sm:$0xff]
      %v2236 = vld [vmem:[%s2233 + $0x10] sm:$0xff]
      %v2237 = vld [vmem:[%s2233 + $0x18] sm:$0xff]
      %v2238 = vld [vmem:[%s2233 + $0x20] sm:$0xff]
      %v2239 = vld [vmem:[%s2233 + $0x28] sm:$0xff]
      %v2240 = vld [vmem:[%s2233 + $0x30] sm:$0xff]
      %v2241 = vld [vmem:[%s2233 + $0x38] sm:$0xff]
      %s2242 = scalar_lea.vmem %s15, 64
      %v2243 = vld [vmem:[%s2242] sm:$0xff]
      %v2244 = vld [vmem:[%s2242 + $0x8] sm:$0xff]
      %v2245 = vld [vmem:[%s2242 + $0x10] sm:$0xff]
      %v2246 = vld [vmem:[%s2242 + $0x18] sm:$0xff]
      %v2247 = vld [vmem:[%s2242 + $0x20] sm:$0xff]
      %v2248 = vld [vmem:[%s2242 + $0x28] sm:$0xff]
      %v2249 = vld [vmem:[%s2242 + $0x30] sm:$0xff]
      %v2250 = vld [vmem:[%s2242 + $0x38] sm:$0xff]
      %2252 = vset.pattern.permute.xlu0 0
      %2253 = vperm.xlu0 %2252, %v2243
      %v2254 = vpop.permute.xlu0 %2253
      %2256 = vset.pattern.permute.xlu0 0
      %2257 = vperm.xlu0 %2256, %v2244
      %v2258 = vpop.permute.xlu0 %2257
      %2260 = vset.pattern.permute.xlu0 0
      %2261 = vperm.xlu0 %2260, %v2245
      %v2262 = vpop.permute.xlu0 %2261
      %2264 = vset.pattern.permute.xlu0 0
      %2265 = vperm.xlu0 %2264, %v2246
      %v2266 = vpop.permute.xlu0 %2265
      %2268 = vset.pattern.permute.xlu0 0
      %2269 = vperm.xlu0 %2268, %v2247
      %v2270 = vpop.permute.xlu0 %2269
      %2273 = vset.pattern.permute.xlu0 0
      %2274 = vperm.xlu0 %2273, %v2248
      %v2275 = vpop.permute.xlu0 %2274
      %2278 = vset.pattern.permute.xlu0 0
      %2279 = vperm.xlu0 %2278, %v2249
      %v2280 = vpop.permute.xlu0 %2279
      %2283 = vset.pattern.permute.xlu0 0
      %2284 = vperm.xlu0 %2283, %v2250
      %v2285 = vpop.permute.xlu0 %2284
      %v2288 = vsel %vm987, %v2234, 0
      %v2291 = vsel %vm987, %v2235, 0
      %v2294 = vsel %vm987, %v2236, 0
      %v2297 = vsel %vm987, %v2237, 0
      %v2300 = vsel %vm987, %v2238, 0
      %v2303 = vsel %vm987, %v2239, 0
      %v2306 = vsel %vm987, %v2240, 0
      %v2309 = vsel %vm987, %v2241, 0
      %2311 = vmatpush.msra.mxu0 0.0
      %2312 = vmatpush.msra.mxu0 0.0
      %2313 = vmatpush.msra.mxu0 0.0
      %2314 = vmatpush.msra.mxu0 0.0
      %2315 = vmatpush.msra.mxu0 0.0
      %2316 = vmatpush.msra.mxu0 0.0
      %2317 = vmatpush.msra.mxu0 0.0
      %2318 = vmatpush.msra.mxu0 0.0
      %2319 = vmatpush.msra.mxu0 0.0
      %2320 = vmatpush.msra.mxu0 0.0
      %2321 = vmatpush.msra.mxu0 0.0
      %2322 = vmatpush.msra.mxu0 0.0
      %2323 = vmatpush.msra.mxu0 %v2232
      %2324 = vmatpush.msra.mxu0 %v2231
      %2325 = vmatpush.msra.mxu0 %v2230
      %2326 = vmatpush.msra.mxu0 %v2229
      %2327 = vmatmul.f32.gmra.mxu0 %v2288
      %v2328 = vpop.f32.mrf.mxu0
      %2329 = vmatmul.f32.gmra.mxu0 %v2291
      %v2330 = vpop.f32.mrf.mxu0
      %2331 = vmatmul.f32.gmra.mxu0 %v2294
      %v2332 = vpop.f32.mrf.mxu0
      %2333 = vmatmul.f32.gmra.mxu0 %v2297
      %v2334 = vpop.f32.mrf.mxu0
      %2335 = vmatmul.f32.gmra.mxu0 %v2300
      %v2336 = vpop.f32.mrf.mxu0
      %v2337 = vadd.f32 %v2270, %v2336
      %2338 = vmatmul.f32.gmra.mxu0 %v2303
      %v2339 = vpop.f32.mrf.mxu0
      %v2340 = vadd.f32 %v2275, %v2339
      %2341 = vmatmul.f32.gmra.mxu0 %v2306
      %v2342 = vpop.f32.mrf.mxu0
      %v2343 = vadd.f32 %v2280, %v2342
      %2344 = vmatmul.f32.gmra.mxu0 %v2309
      %v2345 = vpop.f32.mrf.mxu0
      %v2346 = vadd.f32 %v2285, %v2345
      %2347 = vdwg.mxu0
      %v2348 = vadd.f32 %v1970, %v2337
      %v2349 = vadd.f32 %v1971, %v2340
      %v2350 = vadd.f32 %v1972, %v2343
      %v2351 = vadd.f32 %v1973, %v2346
      %v2352 = vld [vmem:[%s17] sm:$0xf]
      %2354 = vset.pattern.permute.xlu0 0
      %2355 = vperm.xlu0 %2354, %v2352
      %v2356 = vpop.permute.xlu0 %2355
      %v2359 = vsel %vm987, %v1566, 0
      %2361 = vmatpush.msra.mxu0 0.0
      %2362 = vmatpush.msra.mxu0 0.0
      %2363 = vmatpush.msra.mxu0 0.0
      %2364 = vmatpush.msra.mxu0 0.0
      %2365 = vmatpush.msra.mxu0 0.0
      %2366 = vmatpush.msra.mxu0 0.0
      %2367 = vmatpush.msra.mxu0 0.0
      %2368 = vmatpush.msra.mxu0 0.0
      %2369 = vmatpush.msra.mxu0 0.0
      %2370 = vmatpush.msra.mxu0 0.0
      %2371 = vmatpush.msra.mxu0 0.0
      %2372 = vmatpush.msra.mxu0 0.0
      %2373 = vmatpush.msra.mxu0 %v2351
      %2374 = vmatpush.msra.mxu0 %v2350
      %2375 = vmatpush.msra.mxu0 %v2349
      %2376 = vmatpush.msra.mxu0 %v2348
      %2377 = vmatmul.f32.gmra.mxu0 %v2359
      %v2378 = vpop.f32.mrf.mxu0
      %v2379 = vadd.f32 %v2356, %v2378
      %2380 = vdwg.mxu0
      %v2381 = vadd.f32 %v1492, %v2379
      %vm2382 = vcmask 125952
      %2383 = vst.msk [vmem:[%s570] sm:$0xf] %vm2382, %v2381
      %p2384 = scmp.lt.s32.totalorder %s29, 1
      %s2385 = scalar_select %p2384, %s29, 1
      %s2386 = smul.addr %s2385, 4
      %s2387 = scalar_lea.vmem %s18, %s2386
      // Predicated region
      $region93: #{encoder_forward.4} parent=91 // pred_check
        %p2388 = pneg %p430
      $region94: #{encoder_forward.4} parent=91 // pred_check_branch
        %2390 = sbr.rel (%p2388) target = $region96
      $region95: #{encoder_forward.4} parent=91 // pred_region
        _
      $region96: #{encoder_forward.4} parent=91 // pred_fallthru
        _
    $region92: #{encoder_forward.4} parent=5 // pred_fallthru
      _
    %p2391 = scmp.le.s32.totalorder 2, %s24
    // Predicated region
    $region97: #{encoder_forward.4} parent=5 // pred_check
      %p2392 = pneg %p2391
    $region98: #{encoder_forward.4} parent=5 // pred_check_branch
      %2394 = sbr.rel (%p2392) target = $region100
    $region99: #{encoder_forward.4} parent=5 // pred_region
      %s2395 = ssub.s32 %s24, 2
      // Predicated region
      $region101: #{encoder_forward.4} parent=99 // pred_check
        %p2396 = pneg %p436
      $region102: #{encoder_forward.4} parent=99 // pred_check_branch
        %2398 = sbr.rel (%p2396) target = $region104
      $region103: #{encoder_forward.4} parent=99 // pred_region
        %p2399 = scmp.lt.s32.totalorder %s30, 1
        %s2400 = scalar_select %p2399, %s30, 1
        %s2401 = smul.addr %s2400, 4
        %s2402 = scalar_lea.vmem %s18, %s2401
      $region104: #{encoder_forward.4} parent=99 // pred_fallthru
        _
    $region100: #{encoder_forward.4} parent=5 // pred_fallthru
      _
  $region6: #{encoder_forward.4} parent=0 // loop_footer
    %s28 = sadd.s32 1, %s24
  $region7: #{encoder_forward.4} parent=0 // loop_footer_branch
    %23 = sbr.rel target = $region3
  $region8: #{encoder_forward.4} parent=0 // loop_exit
    _

// kernel: encoder_forward.5
$region0: #{encoder_forward.5}
  #allocation0 [shape = 'u32[]', space=smem, size = 0x4, offset = 0x4, fixed_abs, tag = 'smem constant byte address 0x4 - core index']
  #allocation1 [shape = 'u32[72,128]{1,0:T(1,128)}', space=vmem, size = 0x9000, scoped, tag = 'internal scratch']
  #allocation2 [shape = 'f32[32,20]{1,0:T(8,128)}', space=vmem, size = 0x4000, scoped, tag = 'scratch operand']
  %s0 = inlined_call_operand.vmem [shape: f32[2,4,16], index: 0, kind: input, shape index: {}]
  %s1 = inlined_call_operand.vmem [shape: f32[32,4], index: 1, kind: input, shape index: {}]
  %s2 = inlined_call_operand.vmem [shape: f32[32,1], index: 2, kind: input, shape index: {}]
  %s3 = inlined_call_operand.vmem [shape: f32[2,64,96], index: 3, kind: input, shape index: {}]
  %s4 = inlined_call_operand.vmem [shape: f32[2,64,1], index: 4, kind: input, shape index: {}]
  %s5 = inlined_call_operand.vmem [shape: f32[2,64,32], index: 5, kind: input, shape index: {}]
  %s6 = inlined_call_operand.vmem [shape: f32[2,64,1], index: 6, kind: input, shape index: {}]
  %s7 = inlined_call_operand.vmem [shape: f32[2,64,96], index: 7, kind: input, shape index: {}]
  %s8 = inlined_call_operand.vmem [shape: f32[2,64,1], index: 8, kind: input, shape index: {}]
  %s9 = inlined_call_operand.vmem [shape: f32[2,64,32], index: 9, kind: input, shape index: {}]
  %s10 = inlined_call_operand.vmem [shape: f32[2,64,1], index: 10, kind: input, shape index: {}]
  %s11 = inlined_call_operand.vmem [shape: f32[4,32], index: 11, kind: input, shape index: {}]
  %s12 = inlined_call_operand.vmem [shape: f32[4,1], index: 12, kind: input, shape index: {}]
  %s13 = inlined_call_operand.vmem [shape: f32[4,32], index: 13, kind: input, shape index: {}]
  %s14 = inlined_call_operand.vmem [shape: f32[4,1], index: 14, kind: input, shape index: {}]
  %s15 = inlined_call_operand.vmem [shape: f32[16,16], index: 15, kind: input, shape index: {}]
  %s16 = inlined_call_operand.vmem [shape: f32[16,16], index: 16, kind: input, shape index: {}]
  %s17 = inlined_call_operand.vmem [shape: f32[2,4,16], index: 17, kind: output, shape index: {}]
  %s18 = sld [smem:[#allocation0]]
  $region101: #{encoder_forward.5} parent=0
    _
  %s20 = ssub.s32 1, %s18
  %s21 = scalar_select 0, %s20, %s18
  loop: start=0, step=1, limit=4
  $region2: #{encoder_forward.5} parent=0 // loop_pre_header
    _
  $region3: #{encoder_forward.5} parent=0 // loop_header
    %s23 = sphi 0, %s27
    %p24 = scmp.ge.s32.totalorder %s23, 4
    %s33 = sphi 0, %s35
    %s36 = sphi 0, %s33
    %s37 = sphi 0, %s36
    %s53 = sphi 0, %s37
    %s57 = sphi 0, %s57
    %s59 = sphi 0, %s57
    %s60 = sphi 0, %s59
    %s74 = sphi 0, %s60
    %s78 = sphi 0, %s78
    %s80 = sphi 0, %s78
    %s81 = sphi 0, %s80
    %s95 = sphi 0, %s81
    %s99 = sphi 0, %s99
    %s101 = sphi 0, %s99
    %s102 = sphi 0, %s101
    %s116 = sphi 0, %s102
    %s120 = sphi 0, %s120
    %s122 = sphi 0, %s120
    %s123 = sphi 0, %s122
    %s137 = sphi 0, %s123
    %s141 = sphi 0, %s141
    %s143 = sphi 0, %s141
    %s144 = sphi 0, %s143
    %s158 = sphi 0, %s144
    %s162 = sphi 0, %s162
    %s164 = sphi 0, %s162
    %s165 = sphi 0, %s164
    %s179 = sphi 0, %s165
    %s183 = sphi 0, %s183
    %s185 = sphi 0, %s183
    %s186 = sphi 0, %s185
    %s200 = sphi 0, %s186
    %s204 = sphi 0, %s204
    %s206 = sphi 0, %s204
    %s207 = sphi 0, %s206
    %s221 = sphi 0, %s207
    %s225 = sphi 0, %s225
    %s227 = sphi 0, %s225
    %s228 = sphi 0, %s227
    %s242 = sphi 0, %s228
    %s246 = sphi 0, %s246
    %s248 = sphi 0, %s246
    %s249 = sphi 0, %s248
    %s263 = sphi 0, %s249
    %s267 = sphi 0, %s267
    %s269 = sphi 0, %s267
    %s270 = sphi 0, %s269
    %s284 = sphi 0, %s270
    %s288 = sphi 0, %s288
    %s290 = sphi 0, %s288
    %s291 = sphi 0, %s290
    %s305 = sphi 0, %s291
    %s309 = sphi 0, %s309
    %s311 = sphi 0, %s309
    %s312 = sphi 0, %s311
    %s326 = sphi 0, %s312
    %s330 = sphi 0, %s330
    %s332 = sphi 0, %s330
    %s333 = sphi 0, %s332
    %s347 = sphi 0, %s333
    %s351 = sphi 0, %s351
    %s353 = sphi 0, %s351
    %s354 = sphi 0, %s353
    %s368 = sphi 0, %s354
    %s372 = sphi 0, %s372
    %s374 = sphi 0, %s372
    %s375 = sphi 0, %s374
    %s389 = sphi 0, %s375
    %s395 = sphi 0, %s397
    %s398 = sphi 0, %s395
    %s399 = sphi 0, %s398
    %s415 = sphi 0, %s399
  $region4: #{encoder_forward.5} parent=0 // loop_header_branch
    %26 = sbr.rel (%p24) target = $region8
  $region5: #{encoder_forward.5} parent=0 // loop_body
    %s28 = ssub.s32 %s23, 1
    %s29 = ssub.s32 %s23, 2
    %s30 = sadd.s32 %s23, 1
    %s31 = ssub.s32 %s23, %s30
    %p32 = scmp.eq.s32.totalorder %s31, 0
    %s34 = sadd.s32 %s33, 1
    %s35 = scalar_select %p32, %s33, %s34
    %p38 = pneg %p32
    %p39 = scmp.eq.s32.totalorder %s23, 1
    %p40 = por %p38, %p39
    %p41 = scmp.ne.s32.totalorder %s33, %s36
    %p42 = scmp.eq.s32.totalorder %s23, 0
    %p43 = por %p41, %p42
    %p44 = scmp.ne.s32.totalorder %s33, %s36
    %p45 = scmp.eq.s32.totalorder %s28, 1
    %p46 = por %p44, %p45
    %p47 = scmp.ne.s32.totalorder %s36, %s37
    %p48 = scmp.eq.s32.totalorder %s28, 0
    %p49 = por %p47, %p48
    %p50 = scmp.ne.s32.totalorder %s36, %s37
    %p51 = scmp.eq.s32.totalorder %s29, 1
    %p52 = por %p50, %p51
    %p54 = scmp.ne.s32.totalorder %s37, %s53
    %p55 = scmp.eq.s32.totalorder %s29, 0
    %p56 = por %p54, %p55
    %s58 = sadd.s32 %s57, 1
    %p61 = scmp.eq.s32.totalorder %s23, 1
    %p62 = scmp.ne.s32.totalorder %s57, %s59
    %p63 = scmp.eq.s32.totalorder %s23, 0
    %p64 = por %p62, %p63
    %p65 = scmp.ne.s32.totalorder %s57, %s59
    %p66 = scmp.eq.s32.totalorder %s28, 1
    %p67 = por %p65, %p66
    %p68 = scmp.ne.s32.totalorder %s59, %s60
    %p69 = scmp.eq.s32.totalorder %s28, 0
    %p70 = por %p68, %p69
    %p71 = scmp.ne.s32.totalorder %s59, %s60
    %p72 = scmp.eq.s32.totalorder %s29, 1
    %p73 = por %p71, %p72
    %p75 = scmp.ne.s32.totalorder %s60, %s74
    %p76 = scmp.eq.s32.totalorder %s29, 0
    %p77 = por %p75, %p76
    %s79 = sadd.s32 %s78, 1
    %p82 = scmp.eq.s32.totalorder %s23, 1
    %p83 = scmp.ne.s32.totalorder %s78, %s80
    %p84 = scmp.eq.s32.totalorder %s23, 0
    %p85 = por %p83, %p84
    %p86 = scmp.ne.s32.totalorder %s78, %s80
    %p87 = scmp.eq.s32.totalorder %s28, 1
    %p88 = por %p86, %p87
    %p89 = scmp.ne.s32.totalorder %s80, %s81
    %p90 = scmp.eq.s32.totalorder %s28, 0
    %p91 = por %p89, %p90
    %p92 = scmp.ne.s32.totalorder %s80, %s81
    %p93 = scmp.eq.s32.totalorder %s29, 1
    %p94 = por %p92, %p93
    %p96 = scmp.ne.s32.totalorder %s81, %s95
    %p97 = scmp.eq.s32.totalorder %s29, 0
    %p98 = por %p96, %p97
    %s100 = sadd.s32 %s99, 1
    %p103 = scmp.eq.s32.totalorder %s23, 1
    %p104 = scmp.ne.s32.totalorder %s99, %s101
    %p105 = scmp.eq.s32.totalorder %s23, 0
    %p106 = por %p104, %p105
    %p107 = scmp.ne.s32.totalorder %s99, %s101
    %p108 = scmp.eq.s32.totalorder %s28, 1
    %p109 = por %p107, %p108
    %p110 = scmp.ne.s32.totalorder %s101, %s102
    %p111 = scmp.eq.s32.totalorder %s28, 0
    %p112 = por %p110, %p111
    %p113 = scmp.ne.s32.totalorder %s101, %s102
    %p114 = scmp.eq.s32.totalorder %s29, 1
    %p115 = por %p113, %p114
    %p117 = scmp.ne.s32.totalorder %s102, %s116
    %p118 = scmp.eq.s32.totalorder %s29, 0
    %p119 = por %p117, %p118
    %s121 = sadd.s32 %s120, 1
    %p124 = scmp.eq.s32.totalorder %s23, 1
    %p125 = scmp.ne.s32.totalorder %s120, %s122
    %p126 = scmp.eq.s32.totalorder %s23, 0
    %p127 = por %p125, %p126
    %p128 = scmp.ne.s32.totalorder %s120, %s122
    %p129 = scmp.eq.s32.totalorder %s28, 1
    %p130 = por %p128, %p129
    %p131 = scmp.ne.s32.totalorder %s122, %s123
    %p132 = scmp.eq.s32.totalorder %s28, 0
    %p133 = por %p131, %p132
    %p134 = scmp.ne.s32.totalorder %s122, %s123
    %p135 = scmp.eq.s32.totalorder %s29, 1
    %p136 = por %p134, %p135
    %p138 = scmp.ne.s32.totalorder %s123, %s137
    %p139 = scmp.eq.s32.totalorder %s29, 0
    %p140 = por %p138, %p139
    %s142 = sadd.s32 %s141, 1
    %p145 = scmp.eq.s32.totalorder %s23, 1
    %p146 = scmp.ne.s32.totalorder %s141, %s143
    %p147 = scmp.eq.s32.totalorder %s23, 0
    %p148 = por %p146, %p147
    %p149 = scmp.ne.s32.totalorder %s141, %s143
    %p150 = scmp.eq.s32.totalorder %s28, 1
    %p151 = por %p149, %p150
    %p152 = scmp.ne.s32.totalorder %s143, %s144
    %p153 = scmp.eq.s32.totalorder %s28, 0
    %p154 = por %p152, %p153
    %p155 = scmp.ne.s32.totalorder %s143, %s144
    %p156 = scmp.eq.s32.totalorder %s29, 1
    %p157 = por %p155, %p156
    %p159 = scmp.ne.s32.totalorder %s144, %s158
    %p160 = scmp.eq.s32.totalorder %s29, 0
    %p161 = por %p159, %p160
    %s163 = sadd.s32 %s162, 1
    %p166 = scmp.eq.s32.totalorder %s23, 1
    %p167 = scmp.ne.s32.totalorder %s162, %s164
    %p168 = scmp.eq.s32.totalorder %s23, 0
    %p169 = por %p167, %p168
    %p170 = scmp.ne.s32.totalorder %s162, %s164
    %p171 = scmp.eq.s32.totalorder %s28, 1
    %p172 = por %p170, %p171
    %p173 = scmp.ne.s32.totalorder %s164, %s165
    %p174 = scmp.eq.s32.totalorder %s28, 0
    %p175 = por %p173, %p174
    %p176 = scmp.ne.s32.totalorder %s164, %s165
    %p177 = scmp.eq.s32.totalorder %s29, 1
    %p178 = por %p176, %p177
    %p180 = scmp.ne.s32.totalorder %s165, %s179
    %p181 = scmp.eq.s32.totalorder %s29, 0
    %p182 = por %p180, %p181
    %s184 = sadd.s32 %s183, 1
    %p187 = scmp.eq.s32.totalorder %s23, 1
    %p188 = scmp.ne.s32.totalorder %s183, %s185
    %p189 = scmp.eq.s32.totalorder %s23, 0
    %p190 = por %p188, %p189
    %p191 = scmp.ne.s32.totalorder %s183, %s185
    %p192 = scmp.eq.s32.totalorder %s28, 1
    %p193 = por %p191, %p192
    %p194 = scmp.ne.s32.totalorder %s185, %s186
    %p195 = scmp.eq.s32.totalorder %s28, 0
    %p196 = por %p194, %p195
    %p197 = scmp.ne.s32.totalorder %s185, %s186
    %p198 = scmp.eq.s32.totalorder %s29, 1
    %p199 = por %p197, %p198
    %p201 = scmp.ne.s32.totalorder %s186, %s200
    %p202 = scmp.eq.s32.totalorder %s29, 0
    %p203 = por %p201, %p202
    %s205 = sadd.s32 %s204, 1
    %p208 = scmp.eq.s32.totalorder %s23, 1
    %p209 = scmp.ne.s32.totalorder %s204, %s206
    %p210 = scmp.eq.s32.totalorder %s23, 0
    %p211 = por %p209, %p210
    %p212 = scmp.ne.s32.totalorder %s204, %s206
    %p213 = scmp.eq.s32.totalorder %s28, 1
    %p214 = por %p212, %p213
    %p215 = scmp.ne.s32.totalorder %s206, %s207
    %p216 = scmp.eq.s32.totalorder %s28, 0
    %p217 = por %p215, %p216
    %p218 = scmp.ne.s32.totalorder %s206, %s207
    %p219 = scmp.eq.s32.totalorder %s29, 1
    %p220 = por %p218, %p219
    %p222 = scmp.ne.s32.totalorder %s207, %s221
    %p223 = scmp.eq.s32.totalorder %s29, 0
    %p224 = por %p222, %p223
    %s226 = sadd.s32 %s225, 1
    %p229 = scmp.eq.s32.totalorder %s23, 1
    %p230 = scmp.ne.s32.totalorder %s225, %s227
    %p231 = scmp.eq.s32.totalorder %s23, 0
    %p232 = por %p230, %p231
    %p233 = scmp.ne.s32.totalorder %s225, %s227
    %p234 = scmp.eq.s32.totalorder %s28, 1
    %p235 = por %p233, %p234
    %p236 = scmp.ne.s32.totalorder %s227, %s228
    %p237 = scmp.eq.s32.totalorder %s28, 0
    %p238 = por %p236, %p237
    %p239 = scmp.ne.s32.totalorder %s227, %s228
    %p240 = scmp.eq.s32.totalorder %s29, 1
    %p241 = por %p239, %p240
    %p243 = scmp.ne.s32.totalorder %s228, %s242
    %p244 = scmp.eq.s32.totalorder %s29, 0
    %p245 = por %p243, %p244
    %s247 = sadd.s32 %s246, 1
    %p250 = scmp.eq.s32.totalorder %s23, 1
    %p251 = scmp.ne.s32.totalorder %s246, %s248
    %p252 = scmp.eq.s32.totalorder %s23, 0
    %p253 = por %p251, %p252
    %p254 = scmp.ne.s32.totalorder %s246, %s248
    %p255 = scmp.eq.s32.totalorder %s28, 1
    %p256 = por %p254, %p255
    %p257 = scmp.ne.s32.totalorder %s248, %s249
    %p258 = scmp.eq.s32.totalorder %s28, 0
    %p259 = por %p257, %p258
    %p260 = scmp.ne.s32.totalorder %s248, %s249
    %p261 = scmp.eq.s32.totalorder %s29, 1
    %p262 = por %p260, %p261
    %p264 = scmp.ne.s32.totalorder %s249, %s263
    %p265 = scmp.eq.s32.totalorder %s29, 0
    %p266 = por %p264, %p265
    %s268 = sadd.s32 %s267, 1
    %p271 = scmp.eq.s32.totalorder %s23, 1
    %p272 = scmp.ne.s32.totalorder %s267, %s269
    %p273 = scmp.eq.s32.totalorder %s23, 0
    %p274 = por %p272, %p273
    %p275 = scmp.ne.s32.totalorder %s267, %s269
    %p276 = scmp.eq.s32.totalorder %s28, 1
    %p277 = por %p275, %p276
    %p278 = scmp.ne.s32.totalorder %s269, %s270
    %p279 = scmp.eq.s32.totalorder %s28, 0
    %p280 = por %p278, %p279
    %p281 = scmp.ne.s32.totalorder %s269, %s270
    %p282 = scmp.eq.s32.totalorder %s29, 1
    %p283 = por %p281, %p282
    %p285 = scmp.ne.s32.totalorder %s270, %s284
    %p286 = scmp.eq.s32.totalorder %s29, 0
    %p287 = por %p285, %p286
    %s289 = sadd.s32 %s288, 1
    %p292 = scmp.eq.s32.totalorder %s23, 1
    %p293 = scmp.ne.s32.totalorder %s288, %s290
    %p294 = scmp.eq.s32.totalorder %s23, 0
    %p295 = por %p293, %p294
    %p296 = scmp.ne.s32.totalorder %s288, %s290
    %p297 = scmp.eq.s32.totalorder %s28, 1
    %p298 = por %p296, %p297
    %p299 = scmp.ne.s32.totalorder %s290, %s291
    %p300 = scmp.eq.s32.totalorder %s28, 0
    %p301 = por %p299, %p300
    %p302 = scmp.ne.s32.totalorder %s290, %s291
    %p303 = scmp.eq.s32.totalorder %s29, 1
    %p304 = por %p302, %p303
    %p306 = scmp.ne.s32.totalorder %s291, %s305
    %p307 = scmp.eq.s32.totalorder %s29, 0
    %p308 = por %p306, %p307
    %s310 = sadd.s32 %s309, 1
    %p313 = scmp.eq.s32.totalorder %s23, 1
    %p314 = scmp.ne.s32.totalorder %s309, %s311
    %p315 = scmp.eq.s32.totalorder %s23, 0
    %p316 = por %p314, %p315
    %p317 = scmp.ne.s32.totalorder %s309, %s311
    %p318 = scmp.eq.s32.totalorder %s28, 1
    %p319 = por %p317, %p318
    %p320 = scmp.ne.s32.totalorder %s311, %s312
    %p321 = scmp.eq.s32.totalorder %s28, 0
    %p322 = por %p320, %p321
    %p323 = scmp.ne.s32.totalorder %s311, %s312
    %p324 = scmp.eq.s32.totalorder %s29, 1
    %p325 = por %p323, %p324
    %p327 = scmp.ne.s32.totalorder %s312, %s326
    %p328 = scmp.eq.s32.totalorder %s29, 0
    %p329 = por %p327, %p328
    %s331 = sadd.s32 %s330, 1
    %p334 = scmp.eq.s32.totalorder %s23, 1
    %p335 = scmp.ne.s32.totalorder %s330, %s332
    %p336 = scmp.eq.s32.totalorder %s23, 0
    %p337 = por %p335, %p336
    %p338 = scmp.ne.s32.totalorder %s330, %s332
    %p339 = scmp.eq.s32.totalorder %s28, 1
    %p340 = por %p338, %p339
    %p341 = scmp.ne.s32.totalorder %s332, %s333
    %p342 = scmp.eq.s32.totalorder %s28, 0
    %p343 = por %p341, %p342
    %p344 = scmp.ne.s32.totalorder %s332, %s333
    %p345 = scmp.eq.s32.totalorder %s29, 1
    %p346 = por %p344, %p345
    %p348 = scmp.ne.s32.totalorder %s333, %s347
    %p349 = scmp.eq.s32.totalorder %s29, 0
    %p350 = por %p348, %p349
    %s352 = sadd.s32 %s351, 1
    %p355 = scmp.eq.s32.totalorder %s23, 1
    %p356 = scmp.ne.s32.totalorder %s351, %s353
    %p357 = scmp.eq.s32.totalorder %s23, 0
    %p358 = por %p356, %p357
    %p359 = scmp.ne.s32.totalorder %s351, %s353
    %p360 = scmp.eq.s32.totalorder %s28, 1
    %p361 = por %p359, %p360
    %p362 = scmp.ne.s32.totalorder %s353, %s354
    %p363 = scmp.eq.s32.totalorder %s28, 0
    %p364 = por %p362, %p363
    %p365 = scmp.ne.s32.totalorder %s353, %s354
    %p366 = scmp.eq.s32.totalorder %s29, 1
    %p367 = por %p365, %p366
    %p369 = scmp.ne.s32.totalorder %s354, %s368
    %p370 = scmp.eq.s32.totalorder %s29, 0
    %p371 = por %p369, %p370
    %s373 = sadd.s32 %s372, 1
    %p376 = scmp.eq.s32.totalorder %s23, 1
    %p377 = scmp.ne.s32.totalorder %s372, %s374
    %p378 = scmp.eq.s32.totalorder %s23, 0
    %p379 = por %p377, %p378
    %p380 = scmp.ne.s32.totalorder %s372, %s374
    %p381 = scmp.eq.s32.totalorder %s28, 1
    %p382 = por %p380, %p381
    %p383 = scmp.ne.s32.totalorder %s374, %s375
    %p384 = scmp.eq.s32.totalorder %s28, 0
    %p385 = por %p383, %p384
    %p386 = scmp.ne.s32.totalorder %s374, %s375
    %p387 = scmp.eq.s32.totalorder %s29, 1
    %p388 = por %p386, %p387
    %p390 = scmp.ne.s32.totalorder %s375, %s389
    %p391 = scmp.eq.s32.totalorder %s29, 0
    %p392 = por %p390, %p391
    %s393 = ssub.s32 %s23, %s30
    %p394 = scmp.eq.s32.totalorder %s393, 0
    %s396 = sadd.s32 %s395, 1
    %s397 = scalar_select %p394, %s395, %s396
    %p400 = pneg %p394
    %p401 = scmp.eq.s32.totalorder %s23, 1
    %p402 = por %p400, %p401
    %p403 = scmp.ne.s32.totalorder %s395, %s398
    %p404 = scmp.eq.s32.totalorder %s23, 0
    %p405 = por %p403, %p404
    %p406 = scmp.ne.s32.totalorder %s395, %s398
    %p407 = scmp.eq.s32.totalorder %s28, 1
    %p408 = por %p406, %p407
    %p409 = scmp.ne.s32.totalorder %s398, %s399
    %p410 = scmp.eq.s32.totalorder %s28, 0
    %p411 = por %p409, %p410
    %p412 = scmp.ne.s32.totalorder %s398, %s399
    %p413 = scmp.eq.s32.totalorder %s29, 1
    %p414 = por %p412, %p413
    %p416 = scmp.ne.s32.totalorder %s399, %s415
    %p417 = scmp.eq.s32.totalorder %s29, 0
    %p418 = por %p416, %p417
    %p419 = scmp.le.s32.totalorder 1, %s23
    %p420 = scmp.lt.s32.totalorder %s23, 3
    %p421 = pnand %p419, %p420
    %p422 = pneg %p421
    // Predicated region
    $region9: #{encoder_forward.5} parent=5 // pred_check
      _
    $region10: #{encoder_forward.5} parent=5 // pred_check_branch
      %424 = sbr.rel (%p421) target = $region12
    $region11: #{encoder_forward.5} parent=5 // pred_region
      %s425 = ssub.s32 %s23, 1
      // Predicated region
      $region13: #{encoder_forward.5} parent=11 // pred_check
        %p426 = pneg %p70
      $region14: #{encoder_forward.5} parent=11 // pred_check_branch
        %428 = sbr.rel (%p426) target = $region16
      $region15: #{encoder_forward.5} parent=11 // pred_region
        _
      $region16: #{encoder_forward.5} parent=11 // pred_fallthru
        _
      // Predicated region
      $region17: #{encoder_forward.5} parent=11 // pred_check
        %p429 = pneg %p91
      $region18: #{encoder_forward.5} parent=11 // pred_check_branch
        %431 = sbr.rel (%p429) target = $region20
      $region19: #{encoder_forward.5} parent=11 // pred_region
        _
      $region20: #{encoder_forward.5} parent=11 // pred_fallthru
        _
      // Predicated region
      $region21: #{encoder_forward.5} parent=11 // pred_check
        %p432 = pneg %p112
      $region22: #{encoder_forward.5} parent=11 // pred_check_branch
        %434 = sbr.rel (%p432) target = $region24
      $region23: #{encoder_forward.5} parent=11 // pred_region
        _
      $region24: #{encoder_forward.5} parent=11 // pred_fallthru
        _
      // Predicated region
      $region25: #{encoder_forward.5} parent=11 // pred_check
        %p435 = pneg %p133
      $region26: #{encoder_forward.5} parent=11 // pred_check_branch
        %437 = sbr.rel (%p435) target = $region28
      $region27: #{encoder_forward.5} parent=11 // pred_region
        _
      $region28: #{encoder_forward.5} parent=11 // pred_fallthru
        _
      // Predicated region
      $region29: #{encoder_forward.5} parent=11 // pred_check
        %p438 = pneg %p154
      $region30: #{encoder_forward.5} parent=11 // pred_check_branch
        %440 = sbr.rel (%p438) target = $region32
      $region31: #{encoder_forward.5} parent=11 // pred_region
        _
      $region32: #{encoder_forward.5} parent=11 // pred_fallthru
        _
      // Predicated region
      $region33: #{encoder_forward.5} parent=11 // pred_check
        %p441 = pneg %p175
      $region34: #{encoder_forward.5} parent=11 // pred_check_branch
        %443 = sbr.rel (%p441) target = $region36
      $region35: #{encoder_forward.5} parent=11 // pred_region
        _
      $region36: #{encoder_forward.5} parent=11 // pred_fallthru
        _
      // Predicated region
      $region37: #{encoder_forward.5} parent=11 // pred_check
        %p444 = pneg %p196
      $region38: #{encoder_forward.5} parent=11 // pred_check_branch
        %446 = sbr.rel (%p444) target = $region40
      $region39: #{encoder_forward.5} parent=11 // pred_region
        _
      $region40: #{encoder_forward.5} parent=11 // pred_fallthru
        _
      // Predicated region
      $region41: #{encoder_forward.5} parent=11 // pred_check
        %p447 = pneg %p217
      $region42: #{encoder_forward.5} parent=11 // pred_check_branch
        %449 = sbr.rel (%p447) target = $region44
      $region43: #{encoder_forward.5} parent=11 // pred_region
        _
      $region44: #{encoder_forward.5} parent=11 // pred_fallthru
        _
      // Predicated region
      $region45: #{encoder_forward.5} parent=11 // pred_check
        %p450 = pneg %p238
      $region46: #{encoder_forward.5} parent=11 // pred_check_branch
        %452 = sbr.rel (%p450) target = $region48
      $region47: #{encoder_forward.5} parent=11 // pred_region
        _
      $region48: #{encoder_forward.5} parent=11 // pred_fallthru
        _
      // Predicated region
      $region49: #{encoder_forward.5} parent=11 // pred_check
        %p453 = pneg %p259
      $region50: #{encoder_forward.5} parent=11 // pred_check_branch
        %455 = sbr.rel (%p453) target = $region52
      $region51: #{encoder_forward.5} parent=11 // pred_region
        _
      $region52: #{encoder_forward.5} parent=11 // pred_fallthru
        _
      // Predicated region
      $region53: #{encoder_forward.5} parent=11 // pred_check
        %p456 = pneg %p280
      $region54: #{encoder_forward.5} parent=11 // pred_check_branch
        %458 = sbr.rel (%p456) target = $region56
      $region55: #{encoder_forward.5} parent=11 // pred_region
        _
      $region56: #{encoder_forward.5} parent=11 // pred_fallthru
        _
      // Predicated region
      $region57: #{encoder_forward.5} parent=11 // pred_check
        %p459 = pneg %p301
      $region58: #{encoder_forward.5} parent=11 // pred_check_branch
        %461 = sbr.rel (%p459) target = $region60
      $region59: #{encoder_forward.5} parent=11 // pred_region
        _
      $region60: #{encoder_forward.5} parent=11 // pred_fallthru
        _
      // Predicated region
      $region61: #{encoder_forward.5} parent=11 // pred_check
        %p462 = pneg %p322
      $region62: #{encoder_forward.5} parent=11 // pred_check_branch
        %464 = sbr.rel (%p462) target = $region64
      $region63: #{encoder_forward.5} parent=11 // pred_region
        _
      $region64: #{encoder_forward.5} parent=11 // pred_fallthru
        _
      // Predicated region
      $region65: #{encoder_forward.5} parent=11 // pred_check
        %p465 = pneg %p343
      $region66: #{encoder_forward.5} parent=11 // pred_check_branch
        %467 = sbr.rel (%p465) target = $region68
      $region67: #{encoder_forward.5} parent=11 // pred_region
        _
      $region68: #{encoder_forward.5} parent=11 // pred_fallthru
        _
      // Predicated region
      $region69: #{encoder_forward.5} parent=11 // pred_check
        %p468 = pneg %p364
      $region70: #{encoder_forward.5} parent=11 // pred_check_branch
        %470 = sbr.rel (%p468) target = $region72
      $region71: #{encoder_forward.5} parent=11 // pred_region
        _
      $region72: #{encoder_forward.5} parent=11 // pred_fallthru
        _
      // Predicated region
      $region73: #{encoder_forward.5} parent=11 // pred_check
        %p471 = pneg %p385
      $region74: #{encoder_forward.5} parent=11 // pred_check_branch
        %473 = sbr.rel (%p471) target = $region76
      $region75: #{encoder_forward.5} parent=11 // pred_region
        _
      $region76: #{encoder_forward.5} parent=11 // pred_fallthru
        _
    $region12: #{encoder_forward.5} parent=5 // pred_fallthru
      _
    %p474 = scmp.lt.s32.totalorder %s23, 2
    // Predicated region
    $region77: #{encoder_forward.5} parent=5 // pred_check
      %p475 = pneg %p474
    $region78: #{encoder_forward.5} parent=5 // pred_check_branch
      %477 = sbr.rel (%p475) target = $region80
    $region79: #{encoder_forward.5} parent=5 // pred_region
      // Predicated region
      $region81: #{encoder_forward.5} parent=79 // pred_check
        %p478 = pneg %p43
      $region82: #{encoder_forward.5} parent=79 // pred_check_branch
        %480 = sbr.rel (%p478) target = $region84
      $region83: #{encoder_forward.5} parent=79 // pred_region
        %p481 = scmp.lt.s32.totalorder %s23, 1
        %s482 = scalar_select %p481, %s23, 1
        %s483 = smul.addr %s482, 4
        %s484 = scalar_lea.vmem %s0, %s483
      $region84: #{encoder_forward.5} parent=79 // pred_fallthru
        _
    $region80: #{encoder_forward.5} parent=5 // pred_fallthru
      _
    %p485 = scmp.le.s32.totalorder 1, %s23
    %p486 = scmp.lt.s32.totalorder %s23, 3
    %p487 = pnand %p485, %p486
    %p488 = pneg %p487
    // Predicated region
    $region85: #{encoder_forward.5} parent=5 // pred_check
      _
    $region86: #{encoder_forward.5} parent=5 // pred_check_branch
      %490 = sbr.rel (%p487) target = $region88
    $region87: #{encoder_forward.5} parent=5 // pred_region
      %s491 = ssub.s32 %s23, 1
      %p492 = scmp.lt.s32.totalorder %s28, 1
      %s493 = scalar_select %p492, %s28, 1
      %s494 = smul.addr %s493, 4
      %s495 = scalar_lea.vmem %s0, %s494
      %p496 = pneg %p49
      %p497 = pneg %p46
      %p498 = pneg %p70
      %p499 = pneg %p67
      %p500 = pneg %p91
      %p501 = pneg %p88
      %p502 = pneg %p112
      %p503 = pneg %p109
      %p504 = pneg %p133
      %p505 = pneg %p130
      %p506 = pneg %p154
      %p507 = pneg %p151
      %p508 = pneg %p175
      %p509 = pneg %p172
      %p510 = pneg %p196
      %p511 = pneg %p193
      %p512 = pneg %p217
      %p513 = pneg %p214
      %p514 = pneg %p238
      %p515 = pneg %p235
      %p516 = pneg %p259
      %p517 = pneg %p256
      %p518 = pneg %p280
      %p519 = pneg %p277
      %p520 = pneg %p301
      %p521 = pneg %p298
      %p522 = pneg %p322
      %p523 = pneg %p319
      %p524 = pneg %p343
      %p525 = pneg %p340
      %p526 = pneg %p364
      %p527 = pneg %p361
      %p528 = pneg %p385
      %p529 = pneg %p382
      %p530 = pneg %p411
      %p531 = pneg %p408
      %p532 = scmp.lt.s32.totalorder %s28, 1
      %s533 = scalar_select %p532, %s28, 1
      %s534 = smul.addr %s533, 4
      %s535 = scalar_lea.vmem %s17, %s534
      %p536 = scmp.lt.s32.totalorder %s28, 1
      %s537 = scalar_select %p536, %s28, 1
      %s538 = smul.addr %s537, 4
      %s539 = scalar_lea.vmem %s0, %s538
      %p540 = scmp.lt.s32.totalorder %s28, 1
      %s541 = scalar_select %p540, %s28, 1
      %s542 = smul.addr %s541, 4
      %s543 = scalar_lea.vmem %s17, %s542
      %vm544 = vcmask 162816
      %545 = vst.msk [vmem:[#allocation2] sm:$0xff] %vm544, 0.0
      %546 = vst.msk [vmem:[#allocation2 + $0x8] sm:$0xff] %vm544, 0.0
      %547 = vst.msk [vmem:[#allocation2 + $0x10] sm:$0xff] %vm544, 0.0
      %548 = vst.msk [vmem:[#allocation2 + $0x18] sm:$0xff] %vm544, 0.0
      %v549 = vld [vmem:[%s539] sm:$0xf]
      %v550 = vld [vmem:[%s1] sm:$0xff]
      %v551 = vld [vmem:[%s1 + $0x8] sm:$0xff]
      %v552 = vld [vmem:[%s1 + $0x10] sm:$0xff]
      %v553 = vld [vmem:[%s1 + $0x18] sm:$0xff]
      %v554 = vld [vmem:[%s2] sm:$0xff]
      %v555 = vld [vmem:[%s2 + $0x8] sm:$0xff]
      %v556 = vld [vmem:[%s2 + $0x10] sm:$0xff]
      %v557 = vld [vmem:[%s2 + $0x18] sm:$0xff]
      %559 = vset.pattern.permute.xlu0 0
      %560 = vperm.xlu0 %559, %v554
      %v561 = vpop.permute.xlu0 %560
      %564 = vset.pattern.permute.xlu0 0
      %565 = vperm.xlu0 %564, %v555
      %v566 = vpop.permute.xlu0 %565
      %569 = vset.pattern.permute.xlu0 0
      %570 = vperm.xlu0 %569, %v556
      %v571 = vpop.permute.xlu0 %570
      %574 = vset.pattern.permute.xlu0 0
      %575 = vperm.xlu0 %574, %v557
      %v576 = vpop.permute.xlu0 %575
      %vm578 = vcmask 31744
      %v580 = vsel %vm578, %v550, 0
      %v583 = vsel %vm578, %v551, 0
      %v586 = vsel %vm578, %v552, 0
      %v589 = vsel %vm578, %v553, 0
      %vm591 = vcmask 1043456
      %v593 = vsel %vm591, %v549, 0
      %595 = vmatpush.msra.mxu0 0.0
      %596 = vmatpush.msra.mxu0 0.0
      %597 = vmatpush.msra.mxu0 0.0
      %598 = vmatpush.msra.mxu0 0.0
      %599 = vmatpush.msra.mxu0 0.0
      %600 = vmatpush.msra.mxu0 0.0
      %601 = vmatpush.msra.mxu0 0.0
      %602 = vmatpush.msra.mxu0 0.0
      %603 = vmatpush.msra.mxu0 0.0
      %604 = vmatpush.msra.mxu0 0.0
      %605 = vmatpush.msra.mxu0 0.0
      %606 = vmatpush.msra.mxu0 0.0
      %607 = vmatpush.msra.mxu0 0.0
      %608 = vmatpush.msra.mxu0 0.0
      %609 = vmatpush.msra.mxu0 0.0
      %610 = vmatpush.msra.mxu0 %v593
      %611 = vmatmul.f32.gmra.mxu0 %v580
      %v612 = vpop.f32.mrf.mxu0
      %v613 = vadd.f32 %v561, %v612
      %614 = vmatmul.f32.gmra.mxu0 %v583
      %v615 = vpop.f32.mrf.mxu0
      %v616 = vadd.f32 %v566, %v615
      %617 = vmatmul.f32.gmra.mxu0 %v586
      %v618 = vpop.f32.mrf.mxu0
      %v619 = vadd.f32 %v571, %v618
      %620 = vmatmul.f32.gmra.mxu0 %v589
      %v621 = vpop.f32.mrf.mxu0
      %v622 = vadd.f32 %v576, %v621
      %623 = vdwg.mxu0
      %v624 = vld [vmem:[%s11] sm:$0xf]
      %629 = vrot.lane.b32.xlu0 %v613, 2
      %v630 = vpop.permute.xlu0 %629
      %631 = vrot.lane.b32.xlu0 %v616, 2
      %v632 = vpop.permute.xlu0 %631
      %633 = vrot.lane.b32.xlu0 %v619, 2
      %v634 = vpop.permute.xlu0 %633
      %635 = vrot.lane.b32.xlu0 %v622, 2
      %v636 = vpop.permute.xlu0 %635
      %vm641 = vcmask 146448
      %642 = vst.msk [vmem:[#allocation2] sm:$0xff] %vm641, %v630
      %643 = vst.msk [vmem:[#allocation2 + $0x8] sm:$0xff] %vm641, %v632
      %644 = vst.msk [vmem:[#allocation2 + $0x10] sm:$0xff] %vm641, %v634
      %645 = vst.msk [vmem:[#allocation2 + $0x18] sm:$0xff] %vm641, %v636
      %v646 = vld [vmem:[#allocation2] sm:$0xff]
      %v647 = vld [vmem:[#allocation2 + $0x8] sm:$0xff]
      %v648 = vld [vmem:[#allocation2 + $0x10] sm:$0xff]
      %v649 = vld [vmem:[#allocation2 + $0x18] sm:$0xff]
      %654 = vrot.lane.b32.xlu0 %v646, 127
      %v655 = vpop.permute.xlu0 %654
      %656 = vrot.lane.b32.xlu0 %v647, 127
      %v657 = vpop.permute.xlu0 %656
      %658 = vrot.lane.b32.xlu0 %v648, 127
      %v659 = vpop.permute.xlu0 %658
      %660 = vrot.lane.b32.xlu0 %v649, 127
      %v661 = vpop.permute.xlu0 %660
      %662 = vrot.lane.b32.xlu0 %v646, 126
      %v663 = vpop.permute.xlu0 %662
      %664 = vrot.lane.b32.xlu0 %v647, 126
      %v665 = vpop.permute.xlu0 %664
      %666 = vrot.lane.b32.xlu0 %v648, 126
      %v667 = vpop.permute.xlu0 %666
      %668 = vrot.lane.b32.xlu0 %v649, 126
      %v669 = vpop.permute.xlu0 %668
      %v670 = vld [vmem:[%s3] sm:$0xff]
      %v671 = vld [vmem:[%s3 + $0x8] sm:$0xff]
      %v672 = vld [vmem:[%s3 + $0x10] sm:$0xff]
      %v673 = vld [vmem:[%s3 + $0x18] sm:$0xff]
      %v674 = vld [vmem:[%s3 + $0x20] sm:$0xff]
      %v675 = vld [vmem:[%s3 + $0x28] sm:$0xff]
      %v676 = vld [vmem:[%s3 + $0x30] sm:$0xff]
      %v677 = vld [vmem:[%s3 + $0x38] sm:$0xff]
      %v678 = vld [vmem:[%s4] sm:$0xff]
      %v679 = vld [vmem:[%s4 + $0x8] sm:$0xff]
      %v680 = vld [vmem:[%s4 + $0x10] sm:$0xff]
      %v681 = vld [vmem:[%s4 + $0x18] sm:$0xff]
      %v682 = vld [vmem:[%s4 + $0x20] sm:$0xff]
      %v683 = vld [vmem:[%s4 + $0x28] sm:$0xff]
      %v684 = vld [vmem:[%s4 + $0x30] sm:$0xff]
      %v685 = vld [vmem:[%s4 + $0x38] sm:$0xff]
      %687 = vset.pattern.permute.xlu0 0
      %688 = vperm.xlu0 %687, %v678
      %v689 = vpop.permute.xlu0 %688
      %692 = vset.pattern.permute.xlu0 0
      %693 = vperm.xlu0 %692, %v679
      %v694 = vpop.permute.xlu0 %693
      %697 = vset.pattern.permute.xlu0 0
      %698 = vperm.xlu0 %697, %v680
      %v699 = vpop.permute.xlu0 %698
      %702 = vset.pattern.permute.xlu0 0
      %703 = vperm.xlu0 %702, %v681
      %v704 = vpop.permute.xlu0 %703
      %707 = vset.pattern.permute.xlu0 0
      %708 = vperm.xlu0 %707, %v682
      %v709 = vpop.permute.xlu0 %708
      %712 = vset.pattern.permute.xlu0 0
      %713 = vperm.xlu0 %712, %v683
      %v714 = vpop.permute.xlu0 %713
      %717 = vset.pattern.permute.xlu0 0
      %718 = vperm.xlu0 %717, %v684
      %v719 = vpop.permute.xlu0 %718
      %722 = vset.pattern.permute.xlu0 0
      %723 = vperm.xlu0 %722, %v685
      %v724 = vpop.permute.xlu0 %723
      %726 = vrot.lane.b32.xlu0 %v655, 127
      %v727 = vpop.permute.xlu0 %726
      %728 = vrot.lane.b32.xlu0 %v657, 127
      %v729 = vpop.permute.xlu0 %728
      %730 = vrot.lane.b32.xlu0 %v659, 127
      %v731 = vpop.permute.xlu0 %730
      %732 = vrot.lane.b32.xlu0 %v661, 127
      %v733 = vpop.permute.xlu0 %732
      %734 = vrot.lane.b32.xlu0 %v663, 127
      %v735 = vpop.permute.xlu0 %734
      %736 = vrot.lane.b32.xlu0 %v665, 127
      %v737 = vpop.permute.xlu0 %736
      %738 = vrot.lane.b32.xlu0 %v667, 127
      %v739 = vpop.permute.xlu0 %738
      %740 = vrot.lane.b32.xlu0 %v669, 127
      %v741 = vpop.permute.xlu0 %740
      %vm754 = vcmask 785408
      %v756 = vsel %vm754, %v670, 0
      %v759 = vsel %vm754, %v671, 0
      %v762 = vsel %vm754, %v672, 0
      %v765 = vsel %vm754, %v673, 0
      %v768 = vsel %vm754, %v674, 0
      %v771 = vsel %vm754, %v675, 0
      %v774 = vsel %vm754, %v676, 0
      %v777 = vsel %vm754, %v677, 0
      %779 = vmatpush.msra.mxu0 0.0
      %780 = vmatpush.msra.mxu0 0.0
      %781 = vmatpush.msra.mxu0 0.0
      %782 = vmatpush.msra.mxu0 0.0
      %783 = vmatpush.msra.mxu0 %v741
      %784 = vmatpush.msra.mxu0 %v739
      %785 = vmatpush.msra.mxu0 %v737
      %786 = vmatpush.msra.mxu0 %v735
      %787 = vmatpush.msra.mxu0 %v733
      %788 = vmatpush.msra.mxu0 %v731
      %789 = vmatpush.msra.mxu0 %v729
      %790 = vmatpush.msra.mxu0 %v727
      %791 = vmatpush.msra.mxu0 %v661
      %792 = vmatpush.msra.mxu0 %v659
      %793 = vmatpush.msra.mxu0 %v657
      %794 = vmatpush.msra.mxu0 %v655
      %795 = vmatmul.f32.gmra.mxu0 %v756
      %v796 = vpop.f32.mrf.mxu0
      %v797 = vadd.f32 %v689, %v796
      %798 = vmatmul.f32.gmra.mxu0 %v759
      %v799 = vpop.f32.mrf.mxu0
      %v800 = vadd.f32 %v694, %v799
      %801 = vmatmul.f32.gmra.mxu0 %v762
      %v802 = vpop.f32.mrf.mxu0
      %v803 = vadd.f32 %v699, %v802
      %804 = vmatmul.f32.gmra.mxu0 %v765
      %v805 = vpop.f32.mrf.mxu0
      %v806 = vadd.f32 %v704, %v805
      %807 = vmatmul.f32.gmra.mxu0 %v768
      %v808 = vpop.f32.mrf.mxu0
      %v809 = vadd.f32 %v709, %v808
      %810 = vmatmul.f32.gmra.mxu0 %v771
      %v811 = vpop.f32.mrf.mxu0
      %v812 = vadd.f32 %v714, %v811
      %813 = vmatmul.f32.gmra.mxu0 %v774
      %v814 = vpop.f32.mrf.mxu0
      %v815 = vadd.f32 %v719, %v814
      %816 = vmatmul.f32.gmra.mxu0 %v777
      %v817 = vpop.f32.mrf.mxu0
      %v818 = vadd.f32 %v724, %v817
      %819 = vdwg.mxu0
      %v820 = vtanh.pop %v797
      %v821 = vtanh.pop %v800
      %v822 = vtanh.pop %v803
      %v823 = vtanh.pop %v806
      %v824 = vxor.u32 %v809, 2147483648
      %v825 = vxor.u32 %v812, 2147483648
      %v826 = vxor.u32 %v815, 2147483648
      %v827 = vxor.u32 %v818, 2147483648
      %v828 = vmul.f32 %v824, 1.442695
      %v829 = vpow.pop %v828
      %v830 = vmul.f32 %v825, 1.442695
      %v831 = vpow.pop %v830
      %v832 = vmul.f32 %v826, 1.442695
      %v833 = vpow.pop %v832
      %v834 = vmul.f32 %v827, 1.442695
      %v835 = vpow.pop %v834
      %v836 = vadd.f32 %v829, 1.0
      %v837 = vadd.f32 %v831, 1.0
      %v838 = vadd.f32 %v833, 1.0
      %v839 = vadd.f32 %v835, 1.0
      %v840 = vrcp.pop %v836
      %v841 = vmul.f32 %v836, %v840
      %v842 = vsub.f32 1.0, %v841
      %v843 = vmul.f32 %v840, %v842
      %v844 = vadd.f32 %v840, %v843
      %vm845 = vweird.f32 %v836
      %vm846 = vweird.f32 %v840
      %vm847 = vmor %vm845, %vm846
      %v848 = vsel %vm847, %v840, %v844
      %v849 = vand.u32 2147483647, %v836
      %vm850 = vcmp.eq.f32.partialorder %v849, 8.507059e+37
      %v851 = vand.u32 %v836, 2147483648
      %v852 = vor.u32 1.1754944e-38, %v851
      %v853 = vsel %vm850, %v852, %v848
      %v854 = vmul.f32 1.0, %v853
      %v855 = vrcp.pop %v837
      %v856 = vmul.f32 %v837, %v855
      %v857 = vsub.f32 1.0, %v856
      %v858 = vmul.f32 %v855, %v857
      %v859 = vadd.f32 %v855, %v858
      %vm860 = vweird.f32 %v837
      %vm861 = vweird.f32 %v855
      %vm862 = vmor %vm860, %vm861
      %v863 = vsel %vm862, %v855, %v859
      %v864 = vand.u32 2147483647, %v837
      %vm865 = vcmp.eq.f32.partialorder %v864, 8.507059e+37
      %v866 = vand.u32 %v837, 2147483648
      %v867 = vor.u32 1.1754944e-38, %v866
      %v868 = vsel %vm865, %v867, %v863
      %v869 = vmul.f32 1.0, %v868
      %v870 = vrcp.pop %v838
      %v871 = vmul.f32 %v838, %v870
      %v872 = vsub.f32 1.0, %v871
      %v873 = vmul.f32 %v870, %v872
      %v874 = vadd.f32 %v870, %v873
      %vm875 = vweird.f32 %v838
      %vm876 = vweird.f32 %v870
      %vm877 = vmor %vm875, %vm876
      %v878 = vsel %vm877, %v870, %v874
      %v879 = vand.u32 2147483647, %v838
      %vm880 = vcmp.eq.f32.partialorder %v879, 8.507059e+37
      %v881 = vand.u32 %v838, 2147483648
      %v882 = vor.u32 1.1754944e-38, %v881
      %v883 = vsel %vm880, %v882, %v878
      %v884 = vmul.f32 1.0, %v883
      %v885 = vrcp.pop %v839
      %v886 = vmul.f32 %v839, %v885
      %v887 = vsub.f32 1.0, %v886
      %v888 = vmul.f32 %v885, %v887
      %v889 = vadd.f32 %v885, %v888
      %vm890 = vweird.f32 %v839
      %vm891 = vweird.f32 %v885
      %vm892 = vmor %vm890, %vm891
      %v893 = vsel %vm892, %v885, %v889
      %v894 = vand.u32 2147483647, %v839
      %vm895 = vcmp.eq.f32.partialorder %v894, 8.507059e+37
      %v896 = vand.u32 %v839, 2147483648
      %v897 = vor.u32 1.1754944e-38, %v896
      %v898 = vsel %vm895, %v897, %v893
      %v899 = vmul.f32 1.0, %v898
      %v900 = vmul.f32 %v820, %v854
      %v901 = vmul.f32 %v821, %v869
      %v902 = vmul.f32 %v822, %v884
      %v903 = vmul.f32 %v823, %v899
      %v904 = vld [vmem:[%s5] sm:$0xff]
      %v905 = vld [vmem:[%s5 + $0x8] sm:$0xff]
      %v906 = vld [vmem:[%s5 + $0x10] sm:$0xff]
      %v907 = vld [vmem:[%s5 + $0x18] sm:$0xff]
      %v908 = vld [vmem:[%s5 + $0x20] sm:$0xff]
      %v909 = vld [vmem:[%s5 + $0x28] sm:$0xff]
      %v910 = vld [vmem:[%s5 + $0x30] sm:$0xff]
      %v911 = vld [vmem:[%s5 + $0x38] sm:$0xff]
      %v912 = vld [vmem:[%s6] sm:$0xff]
      %v913 = vld [vmem:[%s6 + $0x8] sm:$0xff]
      %v914 = vld [vmem:[%s6 + $0x10] sm:$0xff]
      %v915 = vld [vmem:[%s6 + $0x18] sm:$0xff]
      %v916 = vld [vmem:[%s6 + $0x20] sm:$0xff]
      %v917 = vld [vmem:[%s6 + $0x28] sm:$0xff]
      %v918 = vld [vmem:[%s6 + $0x30] sm:$0xff]
      %v919 = vld [vmem:[%s6 + $0x38] sm:$0xff]
      %921 = vset.pattern.permute.xlu0 0
      %922 = vperm.xlu0 %921, %v912
      %v923 = vpop.permute.xlu0 %922
      %926 = vset.pattern.permute.xlu0 0
      %927 = vperm.xlu0 %926, %v913
      %v928 = vpop.permute.xlu0 %927
      %931 = vset.pattern.permute.xlu0 0
      %932 = vperm.xlu0 %931, %v914
      %v933 = vpop.permute.xlu0 %932
      %936 = vset.pattern.permute.xlu0 0
      %937 = vperm.xlu0 %936, %v915
      %v938 = vpop.permute.xlu0 %937
      %941 = vset.pattern.permute.xlu0 0
      %942 = vperm.xlu0 %941, %v916
      %v943 = vpop.permute.xlu0 %942
      %946 = vset.pattern.permute.xlu0 0
      %947 = vperm.xlu0 %946, %v917
      %v948 = vpop.permute.xlu0 %947
      %951 = vset.pattern.permute.xlu0 0
      %952 = vperm.xlu0 %951, %v918
      %v953 = vpop.permute.xlu0 %952
      %956 = vset.pattern.permute.xlu0 0
      %957 = vperm.xlu0 %956, %v919
      %v958 = vpop.permute.xlu0 %957
      %vm960 = vcmask 261120
      %v962 = vsel %vm960, %v904, 0
      %v965 = vsel %vm960, %v905, 0
      %v968 = vsel %vm960, %v906, 0
      %v971 = vsel %vm960, %v907, 0
      %v974 = vsel %vm960, %v908, 0
      %v977 = vsel %vm960, %v909, 0
      %v980 = vsel %vm960, %v910, 0
      %v983 = vsel %vm960, %v911, 0
      %985 = vmatpush.msra.mxu0 0.0
      %986 = vmatpush.msra.mxu0 0.0
      %987 = vmatpush.msra.mxu0 0.0
      %988 = vmatpush.msra.mxu0 0.0
      %989 = vmatpush.msra.mxu0 0.0
      %990 = vmatpush.msra.mxu0 0.0
      %991 = vmatpush.msra.mxu0 0.0
      %992 = vmatpush.msra.mxu0 0.0
      %993 = vmatpush.msra.mxu0 0.0
      %994 = vmatpush.msra.mxu0 0.0
      %995 = vmatpush.msra.mxu0 0.0
      %996 = vmatpush.msra.mxu0 0.0
      %997 = vmatpush.msra.mxu0 %v903
      %998 = vmatpush.msra.mxu0 %v902
      %999 = vmatpush.msra.mxu0 %v901
      %1000 = vmatpush.msra.mxu0 %v900
      %1001 = vmatmul.f32.gmra.mxu0 %v962
      %v1002 = vpop.f32.mrf.mxu0
      %v1003 = vadd.f32 %v923, %v1002
      %1004 = vmatmul.f32.gmra.mxu0 %v965
      %v1005 = vpop.f32.mrf.mxu0
      %v1006 = vadd.f32 %v928, %v1005
      %1007 = vmatmul.f32.gmra.mxu0 %v968
      %v1008 = vpop.f32.mrf.mxu0
      %v1009 = vadd.f32 %v933, %v1008
      %1010 = vmatmul.f32.gmra.mxu0 %v971
      %v1011 = vpop.f32.mrf.mxu0
      %v1012 = vadd.f32 %v938, %v1011
      %1013 = vmatmul.f32.gmra.mxu0 %v974
      %v1014 = vpop.f32.mrf.mxu0
      %v1015 = vadd.f32 %v943, %v1014
      %1016 = vmatmul.f32.gmra.mxu0 %v977
      %v1017 = vpop.f32.mrf.mxu0
      %v1018 = vadd.f32 %v948, %v1017
      %1019 = vmatmul.f32.gmra.mxu0 %v980
      %v1020 = vpop.f32.mrf.mxu0
      %v1021 = vadd.f32 %v953, %v1020
      %1022 = vmatmul.f32.gmra.mxu0 %v983
      %v1023 = vpop.f32.mrf.mxu0
      %v1024 = vadd.f32 %v958, %v1023
      %1025 = vdwg.mxu0
      %v1026 = vadd.f32 %v613, %v1003
      %v1027 = vadd.f32 %v616, %v1006
      %v1028 = vadd.f32 %v619, %v1009
      %v1029 = vadd.f32 %v622, %v1012
      %v1030 = vadd.f32 %v1015, 0.0
      %v1031 = vadd.f32 %v1018, 0.0
      %v1032 = vadd.f32 %v1021, 0.0
      %v1033 = vadd.f32 %v1024, 0.0
      %1038 = vrot.lane.b32.xlu0 %v1026, 2
      %v1039 = vpop.permute.xlu0 %1038
      %1040 = vrot.lane.b32.xlu0 %v1027, 2
      %v1041 = vpop.permute.xlu0 %1040
      %1042 = vrot.lane.b32.xlu0 %v1028, 2
      %v1043 = vpop.permute.xlu0 %1042
      %1044 = vrot.lane.b32.xlu0 %v1029, 2
      %v1045 = vpop.permute.xlu0 %1044
      %1050 = vst.msk [vmem:[#allocation2] sm:$0xff] %vm641, %v1039
      %1051 = vst.msk [vmem:[#allocation2 + $0x8] sm:$0xff] %vm641, %v1041
      %1052 = vst.msk [vmem:[#allocation2 + $0x10] sm:$0xff] %vm641, %v1043
      %1053 = vst.msk [vmem:[#allocation2 + $0x18] sm:$0xff] %vm641, %v1045
      %v1054 = vld [vmem:[#allocation2] sm:$0xff]
      %v1055 = vld [vmem:[#allocation2 + $0x8] sm:$0xff]
      %v1056 = vld [vmem:[#allocation2 + $0x10] sm:$0xff]
      %v1057 = vld [vmem:[#allocation2 + $0x18] sm:$0xff]
      %1062 = vrot.lane.b32.xlu0 %v1054, 126
      %v1063 = vpop.permute.xlu0 %1062
      %1064 = vrot.lane.b32.xlu0 %v1055, 126
      %v1065 = vpop.permute.xlu0 %1064
      %1066 = vrot.lane.b32.xlu0 %v1056, 126
      %v1067 = vpop.permute.xlu0 %1066
      %1068 = vrot.lane.b32.xlu0 %v1057, 126
      %v1069 = vpop.permute.xlu0 %1068
      %1074 = vrot.lane.b32.xlu0 %v1054, 124
      %v1075 = vpop.permute.xlu0 %1074
      %1076 = vrot.lane.b32.xlu0 %v1055, 124
      %v1077 = vpop.permute.xlu0 %1076
      %1078 = vrot.lane.b32.xlu0 %v1056, 124
      %v1079 = vpop.permute.xlu0 %1078
      %1080 = vrot.lane.b32.xlu0 %v1057, 124
      %v1081 = vpop.permute.xlu0 %1080
      %s1086 = scalar_lea.vmem %s3, 64
      %v1087 = vld [vmem:[%s1086] sm:$0xff]
      %v1088 = vld [vmem:[%s1086 + $0x8] sm:$0xff]
      %v1089 = vld [vmem:[%s1086 + $0x10] sm:$0xff]
      %v1090 = vld [vmem:[%s1086 + $0x18] sm:$0xff]
      %v1091 = vld [vmem:[%s1086 + $0x20] sm:$0xff]
      %v1092 = vld [vmem:[%s1086 + $0x28] sm:$0xff]
      %v1093 = vld [vmem:[%s1086 + $0x30] sm:$0xff]
      %v1094 = vld [vmem:[%s1086 + $0x38] sm:$0xff]
      %s1095 = scalar_lea.vmem %s4, 64
      %v1096 = vld [vmem:[%s1095] sm:$0xff]
      %v1097 = vld [vmem:[%s1095 + $0x8] sm:$0xff]
      %v1098 = vld [vmem:[%s1095 + $0x10] sm:$0xff]
      %v1099 = vld [vmem:[%s1095 + $0x18] sm:$0xff]
      %v1100 = vld [vmem:[%s1095 + $0x20] sm:$0xff]
      %v1101 = vld [vmem:[%s1095 + $0x28] sm:$0xff]
      %v1102 = vld [vmem:[%s1095 + $0x30] sm:$0xff]
      %v1103 = vld [vmem:[%s1095 + $0x38] sm:$0xff]
      %1105 = vset.pattern.permute.xlu0 0
      %1106 = vperm.xlu0 %1105, %v1096
      %v1107 = vpop.permute.xlu0 %1106
      %1110 = vset.pattern.permute.xlu0 0
      %1111 = vperm.xlu0 %1110, %v1097
      %v1112 = vpop.permute.xlu0 %1111
      %1115 = vset.pattern.permute.xlu0 0
      %1116 = vperm.xlu0 %1115, %v1098
      %v1117 = vpop.permute.xlu0 %1116
      %1120 = vset.pattern.permute.xlu0 0
      %1121 = vperm.xlu0 %1120, %v1099
      %v1122 = vpop.permute.xlu0 %1121
      %1125 = vset.pattern.permute.xlu0 0
      %1126 = vperm.xlu0 %1125, %v1100
      %v1127 = vpop.permute.xlu0 %1126
      %1130 = vset.pattern.permute.xlu0 0
      %1131 = vperm.xlu0 %1130, %v1101
      %v1132 = vpop.permute.xlu0 %1131
      %1135 = vset.pattern.permute.xlu0 0
      %1136 = vperm.xlu0 %1135, %v1102
      %v1137 = vpop.permute.xlu0 %1136
      %1140 = vset.pattern.permute.xlu0 0
      %1141 = vperm.xlu0 %1140, %v1103
      %v1142 = vpop.permute.xlu0 %1141
      %v1145 = vsel %vm754, %v1087, 0
      %v1148 = vsel %vm754, %v1088, 0
      %v1151 = vsel %vm754, %v1089, 0
      %v1154 = vsel %vm754, %v1090, 0
      %v1157 = vsel %vm754, %v1091, 0
      %v1160 = vsel %vm754, %v1092, 0
      %v1163 = vsel %vm754, %v1093, 0
      %v1166 = vsel %vm754, %v1094, 0
      %1168 = vmatpush.msra.mxu0 0.0
      %1169 = vmatpush.msra.mxu0 0.0
      %1170 = vmatpush.msra.mxu0 0.0
      %1171 = vmatpush.msra.mxu0 0.0
      %1172 = vmatpush.msra.mxu0 %v1081
      %1173 = vmatpush.msra.mxu0 %v1079
      %1174 = vmatpush.msra.mxu0 %v1077
      %1175 = vmatpush.msra.mxu0 %v1075
      %1176 = vmatpush.msra.mxu0 %v1069
      %1177 = vmatpush.msra.mxu0 %v1067
      %1178 = vmatpush.msra.mxu0 %v1065
      %1179 = vmatpush.msra.mxu0 %v1063
      %1180 = vmatpush.msra.mxu0 %v1057
      %1181 = vmatpush.msra.mxu0 %v1056
      %1182 = vmatpush.msra.mxu0 %v1055
      %1183 = vmatpush.msra.mxu0 %v1054
      %1184 = vmatmul.f32.gmra.mxu0 %v1145
      %v1185 = vpop.f32.mrf.mxu0
      %v1186 = vadd.f32 %v1107, %v1185
      %1187 = vmatmul.f32.gmra.mxu0 %v1148
      %v1188 = vpop.f32.mrf.mxu0
      %v1189 = vadd.f32 %v1112, %v1188
      %1190 = vmatmul.f32.gmra.mxu0 %v1151
      %v1191 = vpop.f32.mrf.mxu0
      %v1192 = vadd.f32 %v1117, %v1191
      %1193 = vmatmul.f32.gmra.mxu0 %v1154
      %v1194 = vpop.f32.mrf.mxu0
      %v1195 = vadd.f32 %v1122, %v1194
      %1196 = vmatmul.f32.gmra.mxu0 %v1157
      %v1197 = vpop.f32.mrf.mxu0
      %v1198 = vadd.f32 %v1127, %v1197
      %1199 = vmatmul.f32.gmra.mxu0 %v1160
      %v1200 = vpop.f32.mrf.mxu0
      %v1201 = vadd.f32 %v1132, %v1200
      %1202 = vmatmul.f32.gmra.mxu0 %v1163
      %v1203 = vpop.f32.mrf.mxu0
      %v1204 = vadd.f32 %v1137, %v1203
      %1205 = vmatmul.f32.gmra.mxu0 %v1166
      %v1206 = vpop.f32.mrf.mxu0
      %v1207 = vadd.f32 %v1142, %v1206
      %1208 = vdwg.mxu0
      %v1209 = vtanh.pop %v1186
      %v1210 = vtanh.pop %v1189
      %v1211 = vtanh.pop %v1192
      %v1212 = vtanh.pop %v1195
      %v1213 = vxor.u32 %v1198, 2147483648
      %v1214 = vxor.u32 %v1201, 2147483648
      %v1215 = vxor.u32 %v1204, 2147483648
      %v1216 = vxor.u32 %v1207, 2147483648
      %v1217 = vmul.f32 %v1213, 1.442695
      %v1218 = vpow.pop %v1217
      %v1219 = vmul.f32 %v1214, 1.442695
      %v1220 = vpow.pop %v1219
      %v1221 = vmul.f32 %v1215, 1.442695
      %v1222 = vpow.pop %v1221
      %v1223 = vmul.f32 %v1216, 1.442695
      %v1224 = vpow.pop %v1223
      %v1225 = vadd.f32 %v1218, 1.0
      %v1226 = vadd.f32 %v1220, 1.0
      %v1227 = vadd.f32 %v1222, 1.0
      %v1228 = vadd.f32 %v1224, 1.0
      %v1229 = vrcp.pop %v1225
      %v1230 = vmul.f32 %v1225, %v1229
      %v1231 = vsub.f32 1.0, %v1230
      %v1232 = vmul.f32 %v1229, %v1231
      %v1233 = vadd.f32 %v1229, %v1232
      %vm1234 = vweird.f32 %v1225
      %vm1235 = vweird.f32 %v1229
      %vm1236 = vmor %vm1234, %vm1235
      %v1237 = vsel %vm1236, %v1229, %v1233
      %v1238 = vand.u32 2147483647, %v1225
      %vm1239 = vcmp.eq.f32.partialorder %v1238, 8.507059e+37
      %v1240 = vand.u32 %v1225, 2147483648
      %v1241 = vor.u32 1.1754944e-38, %v1240
      %v1242 = vsel %vm1239, %v1241, %v1237
      %v1243 = vmul.f32 1.0, %v1242
      %v1244 = vrcp.pop %v1226
      %v1245 = vmul.f32 %v1226, %v1244
      %v1246 = vsub.f32 1.0, %v1245
      %v1247 = vmul.f32 %v1244, %v1246
      %v1248 = vadd.f32 %v1244, %v1247
      %vm1249 = vweird.f32 %v1226
      %vm1250 = vweird.f32 %v1244
      %vm1251 = vmor %vm1249, %vm1250
      %v1252 = vsel %vm1251, %v1244, %v1248
      %v1253 = vand.u32 2147483647, %v1226
      %vm1254 = vcmp.eq.f32.partialorder %v1253, 8.507059e+37
      %v1255 = vand.u32 %v1226, 2147483648
      %v1256 = vor.u32 1.1754944e-38, %v1255
      %v1257 = vsel %vm1254, %v1256, %v1252
      %v1258 = vmul.f32 1.0, %v1257
      %v1259 = vrcp.pop %v1227
      %v1260 = vmul.f32 %v1227, %v1259
      %v1261 = vsub.f32 1.0, %v1260
      %v1262 = vmul.f32 %v1259, %v1261
      %v1263 = vadd.f32 %v1259, %v1262
      %vm1264 = vweird.f32 %v1227
      %vm1265 = vweird.f32 %v1259
      %vm1266 = vmor %vm1264, %vm1265
      %v1267 = vsel %vm1266, %v1259, %v1263
      %v1268 = vand.u32 2147483647, %v1227
      %vm1269 = vcmp.eq.f32.partialorder %v1268, 8.507059e+37
      %v1270 = vand.u32 %v1227, 2147483648
      %v1271 = vor.u32 1.1754944e-38, %v1270
      %v1272 = vsel %vm1269, %v1271, %v1267
      %v1273 = vmul.f32 1.0, %v1272
      %v1274 = vrcp.pop %v1228
      %v1275 = vmul.f32 %v1228, %v1274
      %v1276 = vsub.f32 1.0, %v1275
      %v1277 = vmul.f32 %v1274, %v1276
      %v1278 = vadd.f32 %v1274, %v1277
      %vm1279 = vweird.f32 %v1228
      %vm1280 = vweird.f32 %v1274
      %vm1281 = vmor %vm1279, %vm1280
      %v1282 = vsel %vm1281, %v1274, %v1278
      %v1283 = vand.u32 2147483647, %v1228
      %vm1284 = vcmp.eq.f32.partialorder %v1283, 8.507059e+37
      %v1285 = vand.u32 %v1228, 2147483648
      %v1286 = vor.u32 1.1754944e-38, %v1285
      %v1287 = vsel %vm1284, %v1286, %v1282
      %v1288 = vmul.f32 1.0, %v1287
      %v1289 = vmul.f32 %v1209, %v1243
      %v1290 = vmul.f32 %v1210, %v1258
      %v1291 = vmul.f32 %v1211, %v1273
      %v1292 = vmul.f32 %v1212, %v1288
      %s1293 = scalar_lea.vmem %s5, 64
      %v1294 = vld [vmem:[%s1293] sm:$0xff]
      %v1295 = vld [vmem:[%s1293 + $0x8] sm:$0xff]
      %v1296 = vld [vmem:[%s1293 + $0x10] sm:$0xff]
      %v1297 = vld [vmem:[%s1293 + $0x18] sm:$0xff]
      %v1298 = vld [vmem:[%s1293 + $0x20] sm:$0xff]
      %v1299 = vld [vmem:[%s1293 + $0x28] sm:$0xff]
      %v1300 = vld [vmem:[%s1293 + $0x30] sm:$0xff]
      %v1301 = vld [vmem:[%s1293 + $0x38] sm:$0xff]
      %s1302 = scalar_lea.vmem %s6, 64
      %v1303 = vld [vmem:[%s1302] sm:$0xff]
      %v1304 = vld [vmem:[%s1302 + $0x8] sm:$0xff]
      %v1305 = vld [vmem:[%s1302 + $0x10] sm:$0xff]
      %v1306 = vld [vmem:[%s1302 + $0x18] sm:$0xff]
      %v1307 = vld [vmem:[%s1302 + $0x20] sm:$0xff]
      %v1308 = vld [vmem:[%s1302 + $0x28] sm:$0xff]
      %v1309 = vld [vmem:[%s1302 + $0x30] sm:$0xff]
      %v1310 = vld [vmem:[%s1302 + $0x38] sm:$0xff]
      %1312 = vset.pattern.permute.xlu0 0
      %1313 = vperm.xlu0 %1312, %v1303
      %v1314 = vpop.permute.xlu0 %1313
      %1316 = vset.pattern.permute.xlu0 0
      %1317 = vperm.xlu0 %1316, %v1304
      %v1318 = vpop.permute.xlu0 %1317
      %1320 = vset.pattern.permute.xlu0 0
      %1321 = vperm.xlu0 %1320, %v1305
      %v1322 = vpop.permute.xlu0 %1321
      %1324 = vset.pattern.permute.xlu0 0
      %1325 = vperm.xlu0 %1324, %v1306
      %v1326 = vpop.permute.xlu0 %1325
      %1328 = vset.pattern.permute.xlu0 0
      %1329 = vperm.xlu0 %1328, %v1307
      %v1330 = vpop.permute.xlu0 %1329
      %1333 = vset.pattern.permute.xlu0 0
      %1334 = vperm.xlu0 %1333, %v1308
      %v1335 = vpop.permute.xlu0 %1334
      %1338 = vset.pattern.permute.xlu0 0
      %1339 = vperm.xlu0 %1338, %v1309
      %v1340 = vpop.permute.xlu0 %1339
      %1343 = vset.pattern.permute.xlu0 0
      %1344 = vperm.xlu0 %1343, %v1310
      %v1345 = vpop.permute.xlu0 %1344
      %v1348 = vsel %vm960, %v1294, 0
      %v1351 = vsel %vm960, %v1295, 0
      %v1354 = vsel %vm960, %v1296, 0
      %v1357 = vsel %vm960, %v1297, 0
      %v1360 = vsel %vm960, %v1298, 0
      %v1363 = vsel %vm960, %v1299, 0
      %v1366 = vsel %vm960, %v1300, 0
      %v1369 = vsel %vm960, %v1301, 0
      %1371 = vmatpush.msra.mxu0 0.0
      %1372 = vmatpush.msra.mxu0 0.0
      %1373 = vmatpush.msra.mxu0 0.0
      %1374 = vmatpush.msra.mxu0 0.0
      %1375 = vmatpush.msra.mxu0 0.0
      %1376 = vmatpush.msra.mxu0 0.0
      %1377 = vmatpush.msra.mxu0 0.0
      %1378 = vmatpush.msra.mxu0 0.0
      %1379 = vmatpush.msra.mxu0 0.0
      %1380 = vmatpush.msra.mxu0 0.0
      %1381 = vmatpush.msra.mxu0 0.0
      %1382 = vmatpush.msra.mxu0 0.0
      %1383 = vmatpush.msra.mxu0 %v1292
      %1384 = vmatpush.msra.mxu0 %v1291
      %1385 = vmatpush.msra.mxu0 %v1290
      %1386 = vmatpush.msra.mxu0 %v1289
      %1387 = vmatmul.f32.gmra.mxu0 %v1348
      %v1388 = vpop.f32.mrf.mxu0
      %1389 = vmatmul.f32.gmra.mxu0 %v1351
      %v1390 = vpop.f32.mrf.mxu0
      %1391 = vmatmul.f32.gmra.mxu0 %v1354
      %v1392 = vpop.f32.mrf.mxu0
      %1393 = vmatmul.f32.gmra.mxu0 %v1357
      %v1394 = vpop.f32.mrf.mxu0
      %1395 = vmatmul.f32.gmra.mxu0 %v1360
      %v1396 = vpop.f32.mrf.mxu0
      %v1397 = vadd.f32 %v1330, %v1396
      %1398 = vmatmul.f32.gmra.mxu0 %v1363
      %v1399 = vpop.f32.mrf.mxu0
      %v1400 = vadd.f32 %v1335, %v1399
      %1401 = vmatmul.f32.gmra.mxu0 %v1366
      %v1402 = vpop.f32.mrf.mxu0
      %v1403 = vadd.f32 %v1340, %v1402
      %1404 = vmatmul.f32.gmra.mxu0 %v1369
      %v1405 = vpop.f32.mrf.mxu0
      %v1406 = vadd.f32 %v1345, %v1405
      %1407 = vdwg.mxu0
      %v1408 = vadd.f32 %v1030, %v1397
      %v1409 = vadd.f32 %v1031, %v1400
      %v1410 = vadd.f32 %v1032, %v1403
      %v1411 = vadd.f32 %v1033, %v1406
      %v1412 = vld [vmem:[%s12] sm:$0xf]
      %1414 = vset.pattern.permute.xlu0 0
      %1415 = vperm.xlu0 %1414, %v1412
      %v1416 = vpop.permute.xlu0 %1415
      %v1419 = vsel %vm960, %v624, 0
      %1421 = vmatpush.msra.mxu0 0.0
      %1422 = vmatpush.msra.mxu0 0.0
      %1423 = vmatpush.msra.mxu0 0.0
      %1424 = vmatpush.msra.mxu0 0.0
      %1425 = vmatpush.msra.mxu0 0.0
      %1426 = vmatpush.msra.mxu0 0.0
      %1427 = vmatpush.msra.mxu0 0.0
      %1428 = vmatpush.msra.mxu0 0.0
      %1429 = vmatpush.msra.mxu0 0.0
      %1430 = vmatpush.msra.mxu0 0.0
      %1431 = vmatpush.msra.mxu0 0.0
      %1432 = vmatpush.msra.mxu0 0.0
      %1433 = vmatpush.msra.mxu0 %v1411
      %1434 = vmatpush.msra.mxu0 %v1410
      %1435 = vmatpush.msra.mxu0 %v1409
      %1436 = vmatpush.msra.mxu0 %v1408
      %1437 = vmatmul.f32.gmra.mxu0 %v1419
      %v1438 = vpop.f32.mrf.mxu0
      %v1439 = vadd.f32 %v1416, %v1438
      %1440 = vdwg.mxu0
      %v1441 = vld [vmem:[%s13] sm:$0xf]
      %1442 = vst.msk [vmem:[#allocation2] sm:$0xff] %vm641, %v630
      %1443 = vst.msk [vmem:[#allocation2 + $0x8] sm:$0xff] %vm641, %v632
      %1444 = vst.msk [vmem:[#allocation2 + $0x10] sm:$0xff] %vm641, %v634
      %1445 = vst.msk [vmem:[#allocation2 + $0x18] sm:$0xff] %vm641, %v636
      %v1446 = vld [vmem:[#allocation2] sm:$0xff]
      %v1447 = vld [vmem:[#allocation2 + $0x8] sm:$0xff]
      %v1448 = vld [vmem:[#allocation2 + $0x10] sm:$0xff]
      %v1449 = vld [vmem:[#allocation2 + $0x18] sm:$0xff]
      %1454 = vrot.lane.b32.xlu0 %v1446, 127
      %v1455 = vpop.permute.xlu0 %1454
      %1456 = vrot.lane.b32.xlu0 %v1447, 127
      %v1457 = vpop.permute.xlu0 %1456
      %1458 = vrot.lane.b32.xlu0 %v1448, 127
      %v1459 = vpop.permute.xlu0 %1458
      %1460 = vrot.lane.b32.xlu0 %v1449, 127
      %v1461 = vpop.permute.xlu0 %1460
      %1462 = vrot.lane.b32.xlu0 %v1446, 126
      %v1463 = vpop.permute.xlu0 %1462
      %1464 = vrot.lane.b32.xlu0 %v1447, 126
      %v1465 = vpop.permute.xlu0 %1464
      %1466 = vrot.lane.b32.xlu0 %v1448, 126
      %v1467 = vpop.permute.xlu0 %1466
      %1468 = vrot.lane.b32.xlu0 %v1449, 126
      %v1469 = vpop.permute.xlu0 %1468
      %v1470 = vld [vmem:[%s7] sm:$0xff]
      %v1471 = vld [vmem:[%s7 + $0x8] sm:$0xff]
      %v1472 = vld [vmem:[%s7 + $0x10] sm:$0xff]
      %v1473 = vld [vmem:[%s7 + $0x18] sm:$0xff]
      %v1474 = vld [vmem:[%s7 + $0x20] sm:$0xff]
      %v1475 = vld [vmem:[%s7 + $0x28] sm:$0xff]
      %v1476 = vld [vmem:[%s7 + $0x30] sm:$0xff]
      %v1477 = vld [vmem:[%s7 + $0x38] sm:$0xff]
      %v1478 = vld [vmem:[%s8] sm:$0xff]
      %v1479 = vld [vmem:[%s8 + $0x8] sm:$0xff]
      %v1480 = vld [vmem:[%s8 + $0x10] sm:$0xff]
      %v1481 = vld [vmem:[%s8 + $0x18] sm:$0xff]
      %v1482 = vld [vmem:[%s8 + $0x20] sm:$0xff]
      %v1483 = vld [vmem:[%s8 + $0x28] sm:$0xff]
      %v1484 = vld [vmem:[%s8 + $0x30] sm:$0xff]
      %v1485 = vld [vmem:[%s8 + $0x38] sm:$0xff]
      %1487 = vset.pattern.permute.xlu0 0
      %1488 = vperm.xlu0 %1487, %v1478
      %v1489 = vpop.permute.xlu0 %1488
      %1492 = vset.pattern.permute.xlu0 0
      %1493 = vperm.xlu0 %1492, %v1479
      %v1494 = vpop.permute.xlu0 %1493
      %1497 = vset.pattern.permute.xlu0 0
      %1498 = vperm.xlu0 %1497, %v1480
      %v1499 = vpop.permute.xlu0 %1498
      %1502 = vset.pattern.permute.xlu0 0
      %1503 = vperm.xlu0 %1502, %v1481
      %v1504 = vpop.permute.xlu0 %1503
      %1507 = vset.pattern.permute.xlu0 0
      %1508 = vperm.xlu0 %1507, %v1482
      %v1509 = vpop.permute.xlu0 %1508
      %1512 = vset.pattern.permute.xlu0 0
      %1513 = vperm.xlu0 %1512, %v1483
      %v1514 = vpop.permute.xlu0 %1513
      %1517 = vset.pattern.permute.xlu0 0
      %1518 = vperm.xlu0 %1517, %v1484
      %v1519 = vpop.permute.xlu0 %1518
      %1522 = vset.pattern.permute.xlu0 0
      %1523 = vperm.xlu0 %1522, %v1485
      %v1524 = vpop.permute.xlu0 %1523
      %1526 = vrot.lane.b32.xlu0 %v1455, 127
      %v1527 = vpop.permute.xlu0 %1526
      %1528 = vrot.lane.b32.xlu0 %v1457, 127
      %v1529 = vpop.permute.xlu0 %1528
      %1530 = vrot.lane.b32.xlu0 %v1459, 127
      %v1531 = vpop.permute.xlu0 %1530
      %1532 = vrot.lane.b32.xlu0 %v1461, 127
      %v1533 = vpop.permute.xlu0 %1532
      %1534 = vrot.lane.b32.xlu0 %v1463, 127
      %v1535 = vpop.permute.xlu0 %1534
      %1536 = vrot.lane.b32.xlu0 %v1465, 127
      %v1537 = vpop.permute.xlu0 %1536
      %1538 = vrot.lane.b32.xlu0 %v1467, 127
      %v1539 = vpop.permute.xlu0 %1538
      %1540 = vrot.lane.b32.xlu0 %v1469, 127
      %v1541 = vpop.permute.xlu0 %1540
      %v1555 = vsel %vm754, %v1470, 0
      %v1558 = vsel %vm754, %v1471, 0
      %v1561 = vsel %vm754, %v1472, 0
      %v1564 = vsel %vm754, %v1473, 0
      %v1567 = vsel %vm754, %v1474, 0
      %v1570 = vsel %vm754, %v1475, 0
      %v1573 = vsel %vm754, %v1476, 0
      %v1576 = vsel %vm754, %v1477, 0
      %1578 = vmatpush.msra.mxu0 0.0
      %1579 = vmatpush.msra.mxu0 0.0
      %1580 = vmatpush.msra.mxu0 0.0
      %1581 = vmatpush.msra.mxu0 0.0
      %1582 = vmatpush.msra.mxu0 %v1541
      %1583 = vmatpush.msra.mxu0 %v1539
      %1584 = vmatpush.msra.mxu0 %v1537
      %1585 = vmatpush.msra.mxu0 %v1535
      %1586 = vmatpush.msra.mxu0 %v1533
      %1587 = vmatpush.msra.mxu0 %v1531
      %1588 = vmatpush.msra.mxu0 %v1529
      %1589 = vmatpush.msra.mxu0 %v1527
      %1590 = vmatpush.msra.mxu0 %v1461
      %1591 = vmatpush.msra.mxu0 %v1459
      %1592 = vmatpush.msra.mxu0 %v1457
      %1593 = vmatpush.msra.mxu0 %v1455
      %1594 = vmatmul.f32.gmra.mxu0 %v1555
      %v1595 = vpop.f32.mrf.mxu0
      %v1596 = vadd.f32 %v1489, %v1595
      %1597 = vmatmul.f32.gmra.mxu0 %v1558
      %v1598 = vpop.f32.mrf.mxu0
      %v1599 = vadd.f32 %v1494, %v1598
      %1600 = vmatmul.f32.gmra.mxu0 %v1561
      %v1601 = vpop.f32.mrf.mxu0
      %v1602 = vadd.f32 %v1499, %v1601
      %1603 = vmatmul.f32.gmra.mxu0 %v1564
      %v1604 = vpop.f32.mrf.mxu0
      %v1605 = vadd.f32 %v1504, %v1604
      %1606 = vmatmul.f32.gmra.mxu0 %v1567
      %v1607 = vpop.f32.mrf.mxu0
      %v1608 = vadd.f32 %v1509, %v1607
      %1609 = vmatmul.f32.gmra.mxu0 %v1570
      %v1610 = vpop.f32.mrf.mxu0
      %v1611 = vadd.f32 %v1514, %v1610
      %1612 = vmatmul.f32.gmra.mxu0 %v1573
      %v1613 = vpop.f32.mrf.mxu0
      %v1614 = vadd.f32 %v1519, %v1613
      %1615 = vmatmul.f32.gmra.mxu0 %v1576
      %v1616 = vpop.f32.mrf.mxu0
      %v1617 = vadd.f32 %v1524, %v1616
      %1618 = vdwg.mxu0
      %v1619 = vtanh.pop %v1596
      %v1620 = vtanh.pop %v1599
      %v1621 = vtanh.pop %v1602
      %v1622 = vtanh.pop %v1605
      %v1623 = vxor.u32 %v1608, 2147483648
      %v1624 = vxor.u32 %v1611, 2147483648
      %v1625 = vxor.u32 %v1614, 2147483648
      %v1626 = vxor.u32 %v1617, 2147483648
      %v1627 = vmul.f32 %v1623, 1.442695
      %v1628 = vpow.pop %v1627
      %v1629 = vmul.f32 %v1624, 1.442695
      %v1630 = vpow.pop %v1629
      %v1631 = vmul.f32 %v1625, 1.442695
      %v1632 = vpow.pop %v1631
      %v1633 = vmul.f32 %v1626, 1.442695
      %v1634 = vpow.pop %v1633
      %v1635 = vadd.f32 %v1628, 1.0
      %v1636 = vadd.f32 %v1630, 1.0
      %v1637 = vadd.f32 %v1632, 1.0
      %v1638 = vadd.f32 %v1634, 1.0
      %v1639 = vrcp.pop %v1635
      %v1640 = vmul.f32 %v1635, %v1639
      %v1641 = vsub.f32 1.0, %v1640
      %v1642 = vmul.f32 %v1639, %v1641
      %v1643 = vadd.f32 %v1639, %v1642
      %vm1644 = vweird.f32 %v1635
      %vm1645 = vweird.f32 %v1639
      %vm1646 = vmor %vm1644, %vm1645
      %v1647 = vsel %vm1646, %v1639, %v1643
      %v1648 = vand.u32 2147483647, %v1635
      %vm1649 = vcmp.eq.f32.partialorder %v1648, 8.507059e+37
      %v1650 = vand.u32 %v1635, 2147483648
      %v1651 = vor.u32 1.1754944e-38, %v1650
      %v1652 = vsel %vm1649, %v1651, %v1647
      %v1653 = vmul.f32 1.0, %v1652
      %v1654 = vrcp.pop %v1636
      %v1655 = vmul.f32 %v1636, %v1654
      %v1656 = vsub.f32 1.0, %v1655
      %v1657 = vmul.f32 %v1654, %v1656
      %v1658 = vadd.f32 %v1654, %v1657
      %vm1659 = vweird.f32 %v1636
      %vm1660 = vweird.f32 %v1654
      %vm1661 = vmor %vm1659, %vm1660
      %v1662 = vsel %vm1661, %v1654, %v1658
      %v1663 = vand.u32 2147483647, %v1636
      %vm1664 = vcmp.eq.f32.partialorder %v1663, 8.507059e+37
      %v1665 = vand.u32 %v1636, 2147483648
      %v1666 = vor.u32 1.1754944e-38, %v1665
      %v1667 = vsel %vm1664, %v1666, %v1662
      %v1668 = vmul.f32 1.0, %v1667
      %v1669 = vrcp.pop %v1637
      %v1670 = vmul.f32 %v1637, %v1669
      %v1671 = vsub.f32 1.0, %v1670
      %v1672 = vmul.f32 %v1669, %v1671
      %v1673 = vadd.f32 %v1669, %v1672
      %vm1674 = vweird.f32 %v1637
      %vm1675 = vweird.f32 %v1669
      %vm1676 = vmor %vm1674, %vm1675
      %v1677 = vsel %vm1676, %v1669, %v1673
      %v1678 = vand.u32 2147483647, %v1637
      %vm1679 = vcmp.eq.f32.partialorder %v1678, 8.507059e+37
      %v1680 = vand.u32 %v1637, 2147483648
      %v1681 = vor.u32 1.1754944e-38, %v1680
      %v1682 = vsel %vm1679, %v1681, %v1677
      %v1683 = vmul.f32 1.0, %v1682
      %v1684 = vrcp.pop %v1638
      %v1685 = vmul.f32 %v1638, %v1684
      %v1686 = vsub.f32 1.0, %v1685
      %v1687 = vmul.f32 %v1684, %v1686
      %v1688 = vadd.f32 %v1684, %v1687
      %vm1689 = vweird.f32 %v1638
      %vm1690 = vweird.f32 %v1684
      %vm1691 = vmor %vm1689, %vm1690
      %v1692 = vsel %vm1691, %v1684, %v1688
      %v1693 = vand.u32 2147483647, %v1638
      %vm1694 = vcmp.eq.f32.partialorder %v1693, 8.507059e+37
      %v1695 = vand.u32 %v1638, 2147483648
      %v1696 = vor.u32 1.1754944e-38, %v1695
      %v1697 = vsel %vm1694, %v1696, %v1692
      %v1698 = vmul.f32 1.0, %v1697
      %v1699 = vmul.f32 %v1619, %v1653
      %v1700 = vmul.f32 %v1620, %v1668
      %v1701 = vmul.f32 %v1621, %v1683
      %v1702 = vmul.f32 %v1622, %v1698
      %v1703 = vld [vmem:[%s9] sm:$0xff]
      %v1704 = vld [vmem:[%s9 + $0x8] sm:$0xff]
      %v1705 = vld [vmem:[%s9 + $0x10] sm:$0xff]
      %v1706 = vld [vmem:[%s9 + $0x18] sm:$0xff]
      %v1707 = vld [vmem:[%s9 + $0x20] sm:$0xff]
      %v1708 = vld [vmem:[%s9 + $0x28] sm:$0xff]
      %v1709 = vld [vmem:[%s9 + $0x30] sm:$0xff]
      %v1710 = vld [vmem:[%s9 + $0x38] sm:$0xff]
      %v1711 = vld [vmem:[%s10] sm:$0xff]
      %v1712 = vld [vmem:[%s10 + $0x8] sm:$0xff]
      %v1713 = vld [vmem:[%s10 + $0x10] sm:$0xff]
      %v1714 = vld [vmem:[%s10 + $0x18] sm:$0xff]
      %v1715 = vld [vmem:[%s10 + $0x20] sm:$0xff]
      %v1716 = vld [vmem:[%s10 + $0x28] sm:$0xff]
      %v1717 = vld [vmem:[%s10 + $0x30] sm:$0xff]
      %v1718 = vld [vmem:[%s10 + $0x38] sm:$0xff]
      %1720 = vset.pattern.permute.xlu0 0
      %1721 = vperm.xlu0 %1720, %v1711
      %v1722 = vpop.permute.xlu0 %1721
      %1725 = vset.pattern.permute.xlu0 0
      %1726 = vperm.xlu0 %1725, %v1712
      %v1727 = vpop.permute.xlu0 %1726
      %1730 = vset.pattern.permute.xlu0 0
      %1731 = vperm.xlu0 %1730, %v1713
      %v1732 = vpop.permute.xlu0 %1731
      %1735 = vset.pattern.permute.xlu0 0
      %1736 = vperm.xlu0 %1735, %v1714
      %v1737 = vpop.permute.xlu0 %1736
      %1740 = vset.pattern.permute.xlu0 0
      %1741 = vperm.xlu0 %1740, %v1715
      %v1742 = vpop.permute.xlu0 %1741
      %1745 = vset.pattern.permute.xlu0 0
      %1746 = vperm.xlu0 %1745, %v1716
      %v1747 = vpop.permute.xlu0 %1746
      %1750 = vset.pattern.permute.xlu0 0
      %1751 = vperm.xlu0 %1750, %v1717
      %v1752 = vpop.permute.xlu0 %1751
      %1755 = vset.pattern.permute.xlu0 0
      %1756 = vperm.xlu0 %1755, %v1718
      %v1757 = vpop.permute.xlu0 %1756
      %v1760 = vsel %vm960, %v1703, 0
      %v1763 = vsel %vm960, %v1704, 0
      %v1766 = vsel %vm960, %v1705, 0
      %v1769 = vsel %vm960, %v1706, 0
      %v1772 = vsel %vm960, %v1707, 0
      %v1775 = vsel %vm960, %v1708, 0
      %v1778 = vsel %vm960, %v1709, 0
      %v1781 = vsel %vm960, %v1710, 0
      %1783 = vmatpush.msra.mxu0 0.0
      %1784 = vmatpush.msra.mxu0 0.0
      %1785 = vmatpush.msra.mxu0 0.0
      %1786 = vmatpush.msra.mxu0 0.0
      %1787 = vmatpush.msra.mxu0 0.0
      %1788 = vmatpush.msra.mxu0 0.0
      %1789 = vmatpush.msra.mxu0 0.0
      %1790 = vmatpush.msra.mxu0 0.0
      %1791 = vmatpush.msra.mxu0 0.0
      %1792 = vmatpush.msra.mxu0 0.0
      %1793 = vmatpush.msra.mxu0 0.0
      %1794 = vmatpush.msra.mxu0 0.0
      %1795 = vmatpush.msra.mxu0 %v1702
      %1796 = vmatpush.msra.mxu0 %v1701
      %1797 = vmatpush.msra.mxu0 %v1700
      %1798 = vmatpush.msra.mxu0 %v1699
      %1799 = vmatmul.f32.gmra.mxu0 %v1760
      %v1800 = vpop.f32.mrf.mxu0
      %v1801 = vadd.f32 %v1722, %v1800
      %1802 = vmatmul.f32.gmra.mxu0 %v1763
      %v1803 = vpop.f32.mrf.mxu0
      %v1804 = vadd.f32 %v1727, %v1803
      %1805 = vmatmul.f32.gmra.mxu0 %v1766
      %v1806 = vpop.f32.mrf.mxu0
      %v1807 = vadd.f32 %v1732, %v1806
      %1808 = vmatmul.f32.gmra.mxu0 %v1769
      %v1809 = vpop.f32.mrf.mxu0
      %v1810 = vadd.f32 %v1737, %v1809
      %1811 = vmatmul.f32.gmra.mxu0 %v1772
      %v1812 = vpop.f32.mrf.mxu0
      %v1813 = vadd.f32 %v1742, %v1812
      %1814 = vmatmul.f32.gmra.mxu0 %v1775
      %v1815 = vpop.f32.mrf.mxu0
      %v1816 = vadd.f32 %v1747, %v1815
      %1817 = vmatmul.f32.gmra.mxu0 %v1778
      %v1818 = vpop.f32.mrf.mxu0
      %v1819 = vadd.f32 %v1752, %v1818
      %1820 = vmatmul.f32.gmra.mxu0 %v1781
      %v1821 = vpop.f32.mrf.mxu0
      %v1822 = vadd.f32 %v1757, %v1821
      %1823 = vdwg.mxu0
      %v1824 = vadd.f32 %v613, %v1801
      %v1825 = vadd.f32 %v616, %v1804
      %v1826 = vadd.f32 %v619, %v1807
      %v1827 = vadd.f32 %v622, %v1810
      %v1828 = vadd.f32 %v1813, 0.0
      %v1829 = vadd.f32 %v1816, 0.0
      %v1830 = vadd.f32 %v1819, 0.0
      %v1831 = vadd.f32 %v1822, 0.0
      %1836 = vrot.lane.b32.xlu0 %v1824, 2
      %v1837 = vpop.permute.xlu0 %1836
      %1838 = vrot.lane.b32.xlu0 %v1825, 2
      %v1839 = vpop.permute.xlu0 %1838
      %1840 = vrot.lane.b32.xlu0 %v1826, 2
      %v1841 = vpop.permute.xlu0 %1840
      %1842 = vrot.lane.b32.xlu0 %v1827, 2
      %v1843 = vpop.permute.xlu0 %1842
      %1848 = vst.msk [vmem:[#allocation2] sm:$0xff] %vm641, %v1837
      %1849 = vst.msk [vmem:[#allocation2 + $0x8] sm:$0xff] %vm641, %v1839
      %1850 = vst.msk [vmem:[#allocation2 + $0x10] sm:$0xff] %vm641, %v1841
      %1851 = vst.msk [vmem:[#allocation2 + $0x18] sm:$0xff] %vm641, %v1843
      %v1852 = vld [vmem:[#allocation2] sm:$0xff]
      %v1853 = vld [vmem:[#allocation2 + $0x8] sm:$0xff]
      %v1854 = vld [vmem:[#allocation2 + $0x10] sm:$0xff]
      %v1855 = vld [vmem:[#allocation2 + $0x18] sm:$0xff]
      %1860 = vrot.lane.b32.xlu0 %v1852, 126
      %v1861 = vpop.permute.xlu0 %1860
      %1862 = vrot.lane.b32.xlu0 %v1853, 126
      %v1863 = vpop.permute.xlu0 %1862
      %1864 = vrot.lane.b32.xlu0 %v1854, 126
      %v1865 = vpop.permute.xlu0 %1864
      %1866 = vrot.lane.b32.xlu0 %v1855, 126
      %v1867 = vpop.permute.xlu0 %1866
      %1872 = vrot.lane.b32.xlu0 %v1852, 124
      %v1873 = vpop.permute.xlu0 %1872
      %1874 = vrot.lane.b32.xlu0 %v1853, 124
      %v1875 = vpop.permute.xlu0 %1874
      %1876 = vrot.lane.b32.xlu0 %v1854, 124
      %v1877 = vpop.permute.xlu0 %1876
      %1878 = vrot.lane.b32.xlu0 %v1855, 124
      %v1879 = vpop.permute.xlu0 %1878
      %s1884 = scalar_lea.vmem %s7, 64
      %v1885 = vld [vmem:[%s1884] sm:$0xff]
      %v1886 = vld [vmem:[%s1884 + $0x8] sm:$0xff]
      %v1887 = vld [vmem:[%s1884 + $0x10] sm:$0xff]
      %v1888 = vld [vmem:[%s1884 + $0x18] sm:$0xff]
      %v1889 = vld [vmem:[%s1884 + $0x20] sm:$0xff]
      %v1890 = vld [vmem:[%s1884 + $0x28] sm:$0xff]
      %v1891 = vld [vmem:[%s1884 + $0x30] sm:$0xff]
      %v1892 = vld [vmem:[%s1884 + $0x38] sm:$0xff]
      %s1893 = scalar_lea.vmem %s8, 64
      %v1894 = vld [vmem:[%s1893] sm:$0xff]
      %v1895 = vld [vmem:[%s1893 + $0x8] sm:$0xff]
      %v1896 = vld [vmem:[%s1893 + $0x10] sm:$0xff]
      %v1897 = vld [vmem:[%s1893 + $0x18] sm:$0xff]
      %v1898 = vld [vmem:[%s1893 + $0x20] sm:$0xff]
      %v1899 = vld [vmem:[%s1893 + $0x28] sm:$0xff]
      %v1900 = vld [vmem:[%s1893 + $0x30] sm:$0xff]
      %v1901 = vld [vmem:[%s1893 + $0x38] sm:$0xff]
      %1903 = vset.pattern.permute.xlu0 0
      %1904 = vperm.xlu0 %1903, %v1894
      %v1905 = vpop.permute.xlu0 %1904
      %1908 = vset.pattern.permute.xlu0 0
      %1909 = vperm.xlu0 %1908, %v1895
      %v1910 = vpop.permute.xlu0 %1909
      %1913 = vset.pattern.permute.xlu0 0
      %1914 = vperm.xlu0 %1913, %v1896
      %v1915 = vpop.permute.xlu0 %1914
      %1918 = vset.pattern.permute.xlu0 0
      %1919 = vperm.xlu0 %1918, %v1897
      %v1920 = vpop.permute.xlu0 %1919
      %1923 = vset.pattern.permute.xlu0 0
      %1924 = vperm.xlu0 %1923, %v1898
      %v1925 = vpop.permute.xlu0 %1924
      %1928 = vset.pattern.permute.xlu0 0
      %1929 = vperm.xlu0 %1928, %v1899
      %v1930 = vpop.permute.xlu0 %1929
      %1933 = vset.pattern.permute.xlu0 0
      %1934 = vperm.xlu0 %1933, %v1900
      %v1935 = vpop.permute.xlu0 %1934
      %1938 = vset.pattern.permute.xlu0 0
      %1939 = vperm.xlu0 %1938, %v1901
      %v1940 = vpop.permute.xlu0 %1939
      %v1943 = vsel %vm754, %v1885, 0
      %v1946 = vsel %vm754, %v1886, 0
      %v1949 = vsel %vm754, %v1887, 0
      %v1952 = vsel %vm754, %v1888, 0
      %v1955 = vsel %vm754, %v1889, 0
      %v1958 = vsel %vm754, %v1890, 0
      %v1961 = vsel %vm754, %v1891, 0
      %v1964 = vsel %vm754, %v1892, 0
      %1966 = vmatpush.msra.mxu0 0.0
      %1967 = vmatpush.msra.mxu0 0.0
      %1968 = vmatpush.msra.mxu0 0.0
      %1969 = vmatpush.msra.mxu0 0.0
      %1970 = vmatpush.msra.mxu0 %v1879
      %1971 = vmatpush.msra.mxu0 %v1877
      %1972 = vmatpush.msra.mxu0 %v1875
      %1973 = vmatpush.msra.mxu0 %v1873
      %1974 = vmatpush.msra.mxu0 %v1867
      %1975 = vmatpush.msra.mxu0 %v1865
      %1976 = vmatpush.msra.mxu0 %v1863
      %1977 = vmatpush.msra.mxu0 %v1861
      %1978 = vmatpush.msra.mxu0 %v1855
      %1979 = vmatpush.msra.mxu0 %v1854
      %1980 = vmatpush.msra.mxu0 %v1853
      %1981 = vmatpush.msra.mxu0 %v1852
      %1982 = vmatmul.f32.gmra.mxu0 %v1943
      %v1983 = vpop.f32.mrf.mxu0
      %v1984 = vadd.f32 %v1905, %v1983
      %1985 = vmatmul.f32.gmra.mxu0 %v1946
      %v1986 = vpop.f32.mrf.mxu0
      %v1987 = vadd.f32 %v1910, %v1986
      %1988 = vmatmul.f32.gmra.mxu0 %v1949
      %v1989 = vpop.f32.mrf.mxu0
      %v1990 = vadd.f32 %v1915, %v1989
      %1991 = vmatmul.f32.gmra.mxu0 %v1952
      %v1992 = vpop.f32.mrf.mxu0
      %v1993 = vadd.f32 %v1920, %v1992
      %1994 = vmatmul.f32.gmra.mxu0 %v1955
      %v1995 = vpop.f32.mrf.mxu0
      %v1996 = vadd.f32 %v1925, %v1995
      %1997 = vmatmul.f32.gmra.mxu0 %v1958
      %v1998 = vpop.f32.mrf.mxu0
      %v1999 = vadd.f32 %v1930, %v1998
      %2000 = vmatmul.f32.gmra.mxu0 %v1961
      %v2001 = vpop.f32.mrf.mxu0
      %v2002 = vadd.f32 %v1935, %v2001
      %2003 = vmatmul.f32.gmra.mxu0 %v1964
      %v2004 = vpop.f32.mrf.mxu0
      %v2005 = vadd.f32 %v1940, %v2004
      %2006 = vdwg.mxu0
      %v2007 = vtanh.pop %v1984
      %v2008 = vtanh.pop %v1987
      %v2009 = vtanh.pop %v1990
      %v2010 = vtanh.pop %v1993
      %v2011 = vxor.u32 %v1996, 2147483648
      %v2012 = vxor.u32 %v1999, 2147483648
      %v2013 = vxor.u32 %v2002, 2147483648
      %v2014 = vxor.u32 %v2005, 2147483648
      %v2015 = vmul.f32 %v2011, 1.442695
      %v2016 = vpow.pop %v2015
      %v2017 = vmul.f32 %v2012, 1.442695
      %v2018 = vpow.pop %v2017
      %v2019 = vmul.f32 %v2013, 1.442695
      %v2020 = vpow.pop %v2019
      %v2021 = vmul.f32 %v2014, 1.442695
      %v2022 = vpow.pop %v2021
      %v2023 = vadd.f32 %v2016, 1.0
      %v2024 = vadd.f32 %v2018, 1.0
      %v2025 = vadd.f32 %v2020, 1.0
      %v2026 = vadd.f32 %v2022, 1.0
      %v2027 = vrcp.pop %v2023
      %v2028 = vmul.f32 %v2023, %v2027
      %v2029 = vsub.f32 1.0, %v2028
      %v2030 = vmul.f32 %v2027, %v2029
      %v2031 = vadd.f32 %v2027, %v2030
      %vm2032 = vweird.f32 %v2023
      %vm2033 = vweird.f32 %v2027
      %vm2034 = vmor %vm2032, %vm2033
      %v2035 = vsel %vm2034, %v2027, %v2031
      %v2036 = vand.u32 2147483647, %v2023
      %vm2037 = vcmp.eq.f32.partialorder %v2036, 8.507059e+37
      %v2038 = vand.u32 %v2023, 2147483648
      %v2039 = vor.u32 1.1754944e-38, %v2038
      %v2040 = vsel %vm2037, %v2039, %v2035
      %v2041 = vmul.f32 1.0, %v2040
      %v2042 = vrcp.pop %v2024
      %v2043 = vmul.f32 %v2024, %v2042
      %v2044 = vsub.f32 1.0, %v2043
      %v2045 = vmul.f32 %v2042, %v2044
      %v2046 = vadd.f32 %v2042, %v2045
      %vm2047 = vweird.f32 %v2024
      %vm2048 = vweird.f32 %v2042
      %vm2049 = vmor %vm2047, %vm2048
      %v2050 = vsel %vm2049, %v2042, %v2046
      %v2051 = vand.u32 2147483647, %v2024
      %vm2052 = vcmp.eq.f32.partialorder %v2051, 8.507059e+37
      %v2053 = vand.u32 %v2024, 2147483648
      %v2054 = vor.u32 1.1754944e-38, %v2053
      %v2055 = vsel %vm2052, %v2054, %v2050
      %v2056 = vmul.f32 1.0, %v2055
      %v2057 = vrcp.pop %v2025
      %v2058 = vmul.f32 %v2025, %v2057
      %v2059 = vsub.f32 1.0, %v2058
      %v2060 = vmul.f32 %v2057, %v2059
      %v2061 = vadd.f32 %v2057, %v2060
      %vm2062 = vweird.f32 %v2025
      %vm2063 = vweird.f32 %v2057
      %vm2064 = vmor %vm2062, %vm2063
      %v2065 = vsel %vm2064, %v2057, %v2061
      %v2066 = vand.u32 2147483647, %v2025
      %vm2067 = vcmp.eq.f32.partialorder %v2066, 8.507059e+37
      %v2068 = vand.u32 %v2025, 2147483648
      %v2069 = vor.u32 1.1754944e-38, %v2068
      %v2070 = vsel %vm2067, %v2069, %v2065
      %v2071 = vmul.f32 1.0, %v2070
      %v2072 = vrcp.pop %v2026
      %v2073 = vmul.f32 %v2026, %v2072
      %v2074 = vsub.f32 1.0, %v2073
      %v2075 = vmul.f32 %v2072, %v2074
      %v2076 = vadd.f32 %v2072, %v2075
      %vm2077 = vweird.f32 %v2026
      %vm2078 = vweird.f32 %v2072
      %vm2079 = vmor %vm2077, %vm2078
      %v2080 = vsel %vm2079, %v2072, %v2076
      %v2081 = vand.u32 2147483647, %v2026
      %vm2082 = vcmp.eq.f32.partialorder %v2081, 8.507059e+37
      %v2083 = vand.u32 %v2026, 2147483648
      %v2084 = vor.u32 1.1754944e-38, %v2083
      %v2085 = vsel %vm2082, %v2084, %v2080
      %v2086 = vmul.f32 1.0, %v2085
      %v2087 = vmul.f32 %v2007, %v2041
      %v2088 = vmul.f32 %v2008, %v2056
      %v2089 = vmul.f32 %v2009, %v2071
      %v2090 = vmul.f32 %v2010, %v2086
      %s2091 = scalar_lea.vmem %s9, 64
      %v2092 = vld [vmem:[%s2091] sm:$0xff]
      %v2093 = vld [vmem:[%s2091 + $0x8] sm:$0xff]
      %v2094 = vld [vmem:[%s2091 + $0x10] sm:$0xff]
      %v2095 = vld [vmem:[%s2091 + $0x18] sm:$0xff]
      %v2096 = vld [vmem:[%s2091 + $0x20] sm:$0xff]
      %v2097 = vld [vmem:[%s2091 + $0x28] sm:$0xff]
      %v2098 = vld [vmem:[%s2091 + $0x30] sm:$0xff]
      %v2099 = vld [vmem:[%s2091 + $0x38] sm:$0xff]
      %s2100 = scalar_lea.vmem %s10, 64
      %v2101 = vld [vmem:[%s2100] sm:$0xff]
      %v2102 = vld [vmem:[%s2100 + $0x8] sm:$0xff]
      %v2103 = vld [vmem:[%s2100 + $0x10] sm:$0xff]
      %v2104 = vld [vmem:[%s2100 + $0x18] sm:$0xff]
      %v2105 = vld [vmem:[%s2100 + $0x20] sm:$0xff]
      %v2106 = vld [vmem:[%s2100 + $0x28] sm:$0xff]
      %v2107 = vld [vmem:[%s2100 + $0x30] sm:$0xff]
      %v2108 = vld [vmem:[%s2100 + $0x38] sm:$0xff]
      %2110 = vset.pattern.permute.xlu0 0
      %2111 = vperm.xlu0 %2110, %v2101
      %v2112 = vpop.permute.xlu0 %2111
      %2114 = vset.pattern.permute.xlu0 0
      %2115 = vperm.xlu0 %2114, %v2102
      %v2116 = vpop.permute.xlu0 %2115
      %2118 = vset.pattern.permute.xlu0 0
      %2119 = vperm.xlu0 %2118, %v2103
      %v2120 = vpop.permute.xlu0 %2119
      %2122 = vset.pattern.permute.xlu0 0
      %2123 = vperm.xlu0 %2122, %v2104
      %v2124 = vpop.permute.xlu0 %2123
      %2126 = vset.pattern.permute.xlu0 0
      %2127 = vperm.xlu0 %2126, %v2105
      %v2128 = vpop.permute.xlu0 %2127
      %2131 = vset.pattern.permute.xlu0 0
      %2132 = vperm.xlu0 %2131, %v2106
      %v2133 = vpop.permute.xlu0 %2132
      %2136 = vset.pattern.permute.xlu0 0
      %2137 = vperm.xlu0 %2136, %v2107
      %v2138 = vpop.permute.xlu0 %2137
      %2141 = vset.pattern.permute.xlu0 0
      %2142 = vperm.xlu0 %2141, %v2108
      %v2143 = vpop.permute.xlu0 %2142
      %v2146 = vsel %vm960, %v2092, 0
      %v2149 = vsel %vm960, %v2093, 0
      %v2152 = vsel %vm960, %v2094, 0
      %v2155 = vsel %vm960, %v2095, 0
      %v2158 = vsel %vm960, %v2096, 0
      %v2161 = vsel %vm960, %v2097, 0
      %v2164 = vsel %vm960, %v2098, 0
      %v2167 = vsel %vm960, %v2099, 0
      %2169 = vmatpush.msra.mxu0 0.0
      %2170 = vmatpush.msra.mxu0 0.0
      %2171 = vmatpush.msra.mxu0 0.0
      %2172 = vmatpush.msra.mxu0 0.0
      %2173 = vmatpush.msra.mxu0 0.0
      %2174 = vmatpush.msra.mxu0 0.0
      %2175 = vmatpush.msra.mxu0 0.0
      %2176 = vmatpush.msra.mxu0 0.0
      %2177 = vmatpush.msra.mxu0 0.0
      %2178 = vmatpush.msra.mxu0 0.0
      %2179 = vmatpush.msra.mxu0 0.0
      %2180 = vmatpush.msra.mxu0 0.0
      %2181 = vmatpush.msra.mxu0 %v2090
      %2182 = vmatpush.msra.mxu0 %v2089
      %2183 = vmatpush.msra.mxu0 %v2088
      %2184 = vmatpush.msra.mxu0 %v2087
      %2185 = vmatmul.f32.gmra.mxu0 %v2146
      %v2186 = vpop.f32.mrf.mxu0
      %2187 = vmatmul.f32.gmra.mxu0 %v2149
      %v2188 = vpop.f32.mrf.mxu0
      %2189 = vmatmul.f32.gmra.mxu0 %v2152
      %v2190 = vpop.f32.mrf.mxu0
      %2191 = vmatmul.f32.gmra.mxu0 %v2155
      %v2192 = vpop.f32.mrf.mxu0
      %2193 = vmatmul.f32.gmra.mxu0 %v2158
      %v2194 = vpop.f32.mrf.mxu0
      %v2195 = vadd.f32 %v2128, %v2194
      %2196 = vmatmul.f32.gmra.mxu0 %v2161
      %v2197 = vpop.f32.mrf.mxu0
      %v2198 = vadd.f32 %v2133, %v2197
      %2199 = vmatmul.f32.gmra.mxu0 %v2164
      %v2200 = vpop.f32.mrf.mxu0
      %v2201 = vadd.f32 %v2138, %v2200
      %2202 = vmatmul.f32.gmra.mxu0 %v2167
      %v2203 = vpop.f32.mrf.mxu0
      %v2204 = vadd.f32 %v2143, %v2203
      %2205 = vdwg.mxu0
      %v2206 = vadd.f32 %v1828, %v2195
      %v2207 = vadd.f32 %v1829, %v2198
      %v2208 = vadd.f32 %v1830, %v2201
      %v2209 = vadd.f32 %v1831, %v2204
      %v2210 = vld [vmem:[%s14] sm:$0xf]
      %2212 = vset.pattern.permute.xlu0 0
      %2213 = vperm.xlu0 %2212, %v2210
      %v2214 = vpop.permute.xlu0 %2213
      %v2217 = vsel %vm960, %v1441, 0
      %2219 = vmatpush.msra.mxu0 0.0
      %2220 = vmatpush.msra.mxu0 0.0
      %2221 = vmatpush.msra.mxu0 0.0
      %2222 = vmatpush.msra.mxu0 0.0
      %2223 = vmatpush.msra.mxu0 0.0
      %2224 = vmatpush.msra.mxu0 0.0
      %2225 = vmatpush.msra.mxu0 0.0
      %2226 = vmatpush.msra.mxu0 0.0
      %2227 = vmatpush.msra.mxu0 0.0
      %2228 = vmatpush.msra.mxu0 0.0
      %2229 = vmatpush.msra.mxu0 0.0
      %2230 = vmatpush.msra.mxu0 0.0
      %2231 = vmatpush.msra.mxu0 %v2209
      %2232 = vmatpush.msra.mxu0 %v2208
      %2233 = vmatpush.msra.mxu0 %v2207
      %2234 = vmatpush.msra.mxu0 %v2206
      %2235 = vmatmul.f32.gmra.mxu0 %v2217
      %v2236 = vpop.f32.mrf.mxu0
      %v2237 = vadd.f32 %v2214, %v2236
      %2238 = vdwg.mxu0
      %v2239 = vld [vmem:[%s15] sm:$0xff]
      %v2240 = vld [vmem:[%s15 + $0x8] sm:$0xff]
      %v2241 = vld [vmem:[%s16] sm:$0xff]
      %v2242 = vld [vmem:[%s16 + $0x8] sm:$0xff]
      %vm2243 = vcmask 130048
      %v2245 = vsel %vm2243, %v2237, 0
      %2247 = vmatpush.msra.mxu0 0.0
      %2248 = vmatpush.msra.mxu0 0.0
      %2249 = vmatpush.msra.mxu0 0.0
      %2250 = vmatpush.msra.mxu0 0.0
      %2251 = vmatpush.msra.mxu0 0.0
      %2252 = vmatpush.msra.mxu0 0.0
      %2253 = vmatpush.msra.mxu0 0.0
      %2254 = vmatpush.msra.mxu0 0.0
      %2255 = vmatpush.msra.mxu0 0.0
      %2256 = vmatpush.msra.mxu0 0.0
      %2257 = vmatpush.msra.mxu0 0.0
      %2258 = vmatpush.msra.mxu0 0.0
      %2259 = vmatpush.msra.mxu0 0.0
      %2260 = vmatpush.msra.mxu0 0.0
      %2261 = vmatpush.msra.mxu0 %v2242
      %2262 = vmatpush.msra.mxu0 %v2241
      %2263 = vmatmul.f32.gmra.mxu0 %v2245
      %v2264 = vpop.f32.mrf.mxu0
      %v2265 = vadd.f32 0.0, %v2264
      %2266 = vdwg.mxu0
      %v2268 = vsel %vm2243, %v1439, 0
      %2270 = vmatpush.msra.mxu0 0.0
      %2271 = vmatpush.msra.mxu0 0.0
      %2272 = vmatpush.msra.mxu0 0.0
      %2273 = vmatpush.msra.mxu0 0.0
      %2274 = vmatpush.msra.mxu0 0.0
      %2275 = vmatpush.msra.mxu0 0.0
      %2276 = vmatpush.msra.mxu0 0.0
      %2277 = vmatpush.msra.mxu0 0.0
      %2278 = vmatpush.msra.mxu0 0.0
      %2279 = vmatpush.msra.mxu0 0.0
      %2280 = vmatpush.msra.mxu0 0.0
      %2281 = vmatpush.msra.mxu0 0.0
      %2282 = vmatpush.msra.mxu0 0.0
      %2283 = vmatpush.msra.mxu0 0.0
      %2284 = vmatpush.msra.mxu0 %v2240
      %2285 = vmatpush.msra.mxu0 %v2239
      %2286 = vmatmul.f32.gmra.mxu0 %v2268
      %v2287 = vpop.f32.mrf.mxu0
      %v2288 = vadd.f32 %v2265, %v2287
      %2289 = vdwg.mxu0
      %v2290 = vadd.f32 %v549, %v2288
      %vm2291 = vcmask 125952
      %2292 = vst.msk [vmem:[%s543] sm:$0xf] %vm2291, %v2290
      %p2293 = scmp.lt.s32.totalorder %s28, 1
      %s2294 = scalar_select %p2293, %s28, 1
      %s2295 = smul.addr %s2294, 4
      %s2296 = scalar_lea.vmem %s17, %s2295
      // Predicated region
      $region89: #{encoder_forward.5} parent=87 // pred_check
        %p2297 = pneg %p408
      $region90: #{encoder_forward.5} parent=87 // pred_check_branch
        %2299 = sbr.rel (%p2297) target = $region92
      $region91: #{encoder_forward.5} parent=87 // pred_region
        _
      $region92: #{encoder_forward.5} parent=87 // pred_fallthru
        _
    $region88: #{encoder_forward.5} parent=5 // pred_fallthru
      _
    %p2300 = scmp.le.s32.totalorder 2, %s23
    // Predicated region
    $region93: #{encoder_forward.5} parent=5 // pred_check
      %p2301 = pneg %p2300
    $region94: #{encoder_forward.5} parent=5 // pred_check_branch
      %2303 = sbr.rel (%p2301) target = $region96
    $region95: #{encoder_forward.5} parent=5 // pred_region
      %s2304 = ssub.s32 %s23, 2
      // Predicated region
      $region97: #{encoder_forward.5} parent=95 // pred_check
        %p2305 = pneg %p414
      $region98: #{encoder_forward.5} parent=95 // pred_check_branch
        %2307 = sbr.rel (%p2305) target = $region100
      $region99: #{encoder_forward.5} parent=95 // pred_region
        %p2308 = scmp.lt.s32.totalorder %s29, 1
        %s2309 = scalar_select %p2308, %s29, 1
        %s2310 = smul.addr %s2309, 4
        %s2311 = scalar_lea.vmem %s17, %s2310
      $region100: #{encoder_forward.5} parent=95 // pred_fallthru
        _
    $region96: #{encoder_forward.5} parent=5 // pred_fallthru
      _
  $region6: #{encoder_forward.5} parent=0 // loop_footer
    %s27 = sadd.s32 1, %s23
  $region7: #{encoder_forward.5} parent=0 // loop_footer_branch
    %22 = sbr.rel target = $region3
  $region8: #{encoder_forward.5} parent=0 // loop_exit
    _

// kernel: encoder_forward.6
$region0: #{encoder_forward.6}
  #allocation0 [shape = 'u32[]', space=smem, size = 0x4, offset = 0x4, fixed_abs, tag = 'smem constant byte address 0x4 - core index']
  #allocation1 [shape = 'u32[72,128]{1,0:T(1,128)}', space=vmem, size = 0x9000, scoped, tag = 'internal scratch']
  #allocation2 [shape = 'f32[32,36]{1,0:T(8,128)}', space=vmem, size = 0x4000, scoped, tag = 'scratch operand']
  %s0 = inlined_call_operand.vmem [shape: f32[2,4,16], index: 0, kind: input, shape index: {}]
  %s1 = inlined_call_operand.vmem [shape: f32[16,32], index: 1, kind: input, shape index: {}]
  %s2 = inlined_call_operand.vmem [shape: f32[32,4], index: 2, kind: input, shape index: {}]
  %s3 = inlined_call_operand.vmem [shape: f32[32,1], index: 3, kind: input, shape index: {}]
  %s4 = inlined_call_operand.vmem [shape: f32[2,64,96], index: 4, kind: input, shape index: {}]
  %s5 = inlined_call_operand.vmem [shape: f32[2,64,1], index: 5, kind: input, shape index: {}]
  %s6 = inlined_call_operand.vmem [shape: f32[2,64,32], index: 6, kind: input, shape index: {}]
  %s7 = inlined_call_operand.vmem [shape: f32[2,64,1], index: 7, kind: input, shape index: {}]
  %s8 = inlined_call_operand.vmem [shape: f32[4,32], index: 8, kind: input, shape index: {}]
  %s9 = inlined_call_operand.vmem [shape: f32[4,1], index: 9, kind: input, shape index: {}]
  %s10 = inlined_call_operand.vmem [shape: f32[32,4], index: 10, kind: input, shape index: {}]
  %s11 = inlined_call_operand.vmem [shape: f32[32,1], index: 11, kind: input, shape index: {}]
  %s12 = inlined_call_operand.vmem [shape: f32[2,64,96], index: 12, kind: input, shape index: {}]
  %s13 = inlined_call_operand.vmem [shape: f32[2,64,1], index: 13, kind: input, shape index: {}]
  %s14 = inlined_call_operand.vmem [shape: f32[2,64,32], index: 14, kind: input, shape index: {}]
  %s15 = inlined_call_operand.vmem [shape: f32[2,64,1], index: 15, kind: input, shape index: {}]
  %s16 = inlined_call_operand.vmem [shape: f32[4,32], index: 16, kind: input, shape index: {}]
  %s17 = inlined_call_operand.vmem [shape: f32[4,1], index: 17, kind: input, shape index: {}]
  %s18 = inlined_call_operand.vmem [shape: f32[2,4,32], index: 18, kind: output, shape index: {}]
  %s19 = sld [smem:[#allocation0]]
  $region105: #{encoder_forward.6} parent=0
    _
  %s21 = ssub.s32 1, %s19
  %s22 = scalar_select 0, %s21, %s19
  loop: start=0, step=1, limit=4
  $region2: #{encoder_forward.6} parent=0 // loop_pre_header
    _
  $region3: #{encoder_forward.6} parent=0 // loop_header
    %s24 = sphi 0, %s28
    %p25 = scmp.ge.s32.totalorder %s24, 4
    %s34 = sphi 0, %s36
    %s37 = sphi 0, %s34
    %s38 = sphi 0, %s37
    %s54 = sphi 0, %s38
    %s58 = sphi 0, %s58
    %s60 = sphi 0, %s58
    %s61 = sphi 0, %s60
    %s75 = sphi 0, %s61
    %s79 = sphi 0, %s79
    %s81 = sphi 0, %s79
    %s82 = sphi 0, %s81
    %s96 = sphi 0, %s82
    %s100 = sphi 0, %s100
    %s102 = sphi 0, %s100
    %s103 = sphi 0, %s102
    %s117 = sphi 0, %s103
    %s121 = sphi 0, %s121
    %s123 = sphi 0, %s121
    %s124 = sphi 0, %s123
    %s138 = sphi 0, %s124
    %s142 = sphi 0, %s142
    %s144 = sphi 0, %s142
    %s145 = sphi 0, %s144
    %s159 = sphi 0, %s145
    %s163 = sphi 0, %s163
    %s165 = sphi 0, %s163
    %s166 = sphi 0, %s165
    %s180 = sphi 0, %s166
    %s184 = sphi 0, %s184
    %s186 = sphi 0, %s184
    %s187 = sphi 0, %s186
    %s201 = sphi 0, %s187
    %s205 = sphi 0, %s205
    %s207 = sphi 0, %s205
    %s208 = sphi 0, %s207
    %s222 = sphi 0, %s208
    %s226 = sphi 0, %s226
    %s228 = sphi 0, %s226
    %s229 = sphi 0, %s228
    %s243 = sphi 0, %s229
    %s247 = sphi 0, %s247
    %s249 = sphi 0, %s247
    %s250 = sphi 0, %s249
    %s264 = sphi 0, %s250
    %s268 = sphi 0, %s268
    %s270 = sphi 0, %s268
    %s271 = sphi 0, %s270
    %s285 = sphi 0, %s271
    %s289 = sphi 0, %s289
    %s291 = sphi 0, %s289
    %s292 = sphi 0, %s291
    %s306 = sphi 0, %s292
    %s310 = sphi 0, %s310
    %s312 = sphi 0, %s310
    %s313 = sphi 0, %s312
    %s327 = sphi 0, %s313
    %s331 = sphi 0, %s331
    %s333 = sphi 0, %s331
    %s334 = sphi 0, %s333
    %s348 = sphi 0, %s334
    %s352 = sphi 0, %s352
    %s354 = sphi 0, %s352
    %s355 = sphi 0, %s354
    %s369 = sphi 0, %s355
    %s373 = sphi 0, %s373
    %s375 = sphi 0, %s373
    %s376 = sphi 0, %s375
    %s390 = sphi 0, %s376
    %s394 = sphi 0, %s394
    %s396 = sphi 0, %s394
    %s397 = sphi 0, %s396
    %s411 = sphi 0, %s397
    %s417 = sphi 0, %s419
    %s420 = sphi 0, %s417
    %s421 = sphi 0, %s420
    %s437 = sphi 0, %s421
  $region4: #{encoder_forward.6} parent=0 // loop_header_branch
    %27 = sbr.rel (%p25) target = $region8
  $region5: #{encoder_forward.6} parent=0 // loop_body
    %s29 = ssub.s32 %s24, 1
    %s30 = ssub.s32 %s24, 2
    %s31 = sadd.s32 %s24, 1
    %s32 = ssub.s32 %s24, %s31
    %p33 = scmp.eq.s32.totalorder %s32, 0
    %s35 = sadd.s32 %s34, 1
    %s36 = scalar_select %p33, %s34, %s35
    %p39 = pneg %p33
    %p40 = scmp.eq.s32.totalorder %s24, 1
    %p41 = por %p39, %p40
    %p42 = scmp.ne.s32.totalorder %s34, %s37
    %p43 = scmp.eq.s32.totalorder %s24, 0
    %p44 = por %p42, %p43
    %p45 = scmp.ne.s32.totalorder %s34, %s37
    %p46 = scmp.eq.s32.totalorder %s29, 1
    %p47 = por %p45, %p46
    %p48 = scmp.ne.s32.totalorder %s37, %s38
    %p49 = scmp.eq.s32.totalorder %s29, 0
    %p50 = por %p48, %p49
    %p51 = scmp.ne.s32.totalorder %s37, %s38
    %p52 = scmp.eq.s32.totalorder %s30, 1
    %p53 = por %p51, %p52
    %p55 = scmp.ne.s32.totalorder %s38, %s54
    %p56 = scmp.eq.s32.totalorder %s30, 0
    %p57 = por %p55, %p56
    %s59 = sadd.s32 %s58, 1
    %p62 = scmp.eq.s32.totalorder %s24, 1
    %p63 = scmp.ne.s32.totalorder %s58, %s60
    %p64 = scmp.eq.s32.totalorder %s24, 0
    %p65 = por %p63, %p64
    %p66 = scmp.ne.s32.totalorder %s58, %s60
    %p67 = scmp.eq.s32.totalorder %s29, 1
    %p68 = por %p66, %p67
    %p69 = scmp.ne.s32.totalorder %s60, %s61
    %p70 = scmp.eq.s32.totalorder %s29, 0
    %p71 = por %p69, %p70
    %p72 = scmp.ne.s32.totalorder %s60, %s61
    %p73 = scmp.eq.s32.totalorder %s30, 1
    %p74 = por %p72, %p73
    %p76 = scmp.ne.s32.totalorder %s61, %s75
    %p77 = scmp.eq.s32.totalorder %s30, 0
    %p78 = por %p76, %p77
    %s80 = sadd.s32 %s79, 1
    %p83 = scmp.eq.s32.totalorder %s24, 1
    %p84 = scmp.ne.s32.totalorder %s79, %s81
    %p85 = scmp.eq.s32.totalorder %s24, 0
    %p86 = por %p84, %p85
    %p87 = scmp.ne.s32.totalorder %s79, %s81
    %p88 = scmp.eq.s32.totalorder %s29, 1
    %p89 = por %p87, %p88
    %p90 = scmp.ne.s32.totalorder %s81, %s82
    %p91 = scmp.eq.s32.totalorder %s29, 0
    %p92 = por %p90, %p91
    %p93 = scmp.ne.s32.totalorder %s81, %s82
    %p94 = scmp.eq.s32.totalorder %s30, 1
    %p95 = por %p93, %p94
    %p97 = scmp.ne.s32.totalorder %s82, %s96
    %p98 = scmp.eq.s32.totalorder %s30, 0
    %p99 = por %p97, %p98
    %s101 = sadd.s32 %s100, 1
    %p104 = scmp.eq.s32.totalorder %s24, 1
    %p105 = scmp.ne.s32.totalorder %s100, %s102
    %p106 = scmp.eq.s32.totalorder %s24, 0
    %p107 = por %p105, %p106
    %p108 = scmp.ne.s32.totalorder %s100, %s102
    %p109 = scmp.eq.s32.totalorder %s29, 1
    %p110 = por %p108, %p109
    %p111 = scmp.ne.s32.totalorder %s102, %s103
    %p112 = scmp.eq.s32.totalorder %s29, 0
    %p113 = por %p111, %p112
    %p114 = scmp.ne.s32.totalorder %s102, %s103
    %p115 = scmp.eq.s32.totalorder %s30, 1
    %p116 = por %p114, %p115
    %p118 = scmp.ne.s32.totalorder %s103, %s117
    %p119 = scmp.eq.s32.totalorder %s30, 0
    %p120 = por %p118, %p119
    %s122 = sadd.s32 %s121, 1
    %p125 = scmp.eq.s32.totalorder %s24, 1
    %p126 = scmp.ne.s32.totalorder %s121, %s123
    %p127 = scmp.eq.s32.totalorder %s24, 0
    %p128 = por %p126, %p127
    %p129 = scmp.ne.s32.totalorder %s121, %s123
    %p130 = scmp.eq.s32.totalorder %s29, 1
    %p131 = por %p129, %p130
    %p132 = scmp.ne.s32.totalorder %s123, %s124
    %p133 = scmp.eq.s32.totalorder %s29, 0
    %p134 = por %p132, %p133
    %p135 = scmp.ne.s32.totalorder %s123, %s124
    %p136 = scmp.eq.s32.totalorder %s30, 1
    %p137 = por %p135, %p136
    %p139 = scmp.ne.s32.totalorder %s124, %s138
    %p140 = scmp.eq.s32.totalorder %s30, 0
    %p141 = por %p139, %p140
    %s143 = sadd.s32 %s142, 1
    %p146 = scmp.eq.s32.totalorder %s24, 1
    %p147 = scmp.ne.s32.totalorder %s142, %s144
    %p148 = scmp.eq.s32.totalorder %s24, 0
    %p149 = por %p147, %p148
    %p150 = scmp.ne.s32.totalorder %s142, %s144
    %p151 = scmp.eq.s32.totalorder %s29, 1
    %p152 = por %p150, %p151
    %p153 = scmp.ne.s32.totalorder %s144, %s145
    %p154 = scmp.eq.s32.totalorder %s29, 0
    %p155 = por %p153, %p154
    %p156 = scmp.ne.s32.totalorder %s144, %s145
    %p157 = scmp.eq.s32.totalorder %s30, 1
    %p158 = por %p156, %p157
    %p160 = scmp.ne.s32.totalorder %s145, %s159
    %p161 = scmp.eq.s32.totalorder %s30, 0
    %p162 = por %p160, %p161
    %s164 = sadd.s32 %s163, 1
    %p167 = scmp.eq.s32.totalorder %s24, 1
    %p168 = scmp.ne.s32.totalorder %s163, %s165
    %p169 = scmp.eq.s32.totalorder %s24, 0
    %p170 = por %p168, %p169
    %p171 = scmp.ne.s32.totalorder %s163, %s165
    %p172 = scmp.eq.s32.totalorder %s29, 1
    %p173 = por %p171, %p172
    %p174 = scmp.ne.s32.totalorder %s165, %s166
    %p175 = scmp.eq.s32.totalorder %s29, 0
    %p176 = por %p174, %p175
    %p177 = scmp.ne.s32.totalorder %s165, %s166
    %p178 = scmp.eq.s32.totalorder %s30, 1
    %p179 = por %p177, %p178
    %p181 = scmp.ne.s32.totalorder %s166, %s180
    %p182 = scmp.eq.s32.totalorder %s30, 0
    %p183 = por %p181, %p182
    %s185 = sadd.s32 %s184, 1
    %p188 = scmp.eq.s32.totalorder %s24, 1
    %p189 = scmp.ne.s32.totalorder %s184, %s186
    %p190 = scmp.eq.s32.totalorder %s24, 0
    %p191 = por %p189, %p190
    %p192 = scmp.ne.s32.totalorder %s184, %s186
    %p193 = scmp.eq.s32.totalorder %s29, 1
    %p194 = por %p192, %p193
    %p195 = scmp.ne.s32.totalorder %s186, %s187
    %p196 = scmp.eq.s32.totalorder %s29, 0
    %p197 = por %p195, %p196
    %p198 = scmp.ne.s32.totalorder %s186, %s187
    %p199 = scmp.eq.s32.totalorder %s30, 1
    %p200 = por %p198, %p199
    %p202 = scmp.ne.s32.totalorder %s187, %s201
    %p203 = scmp.eq.s32.totalorder %s30, 0
    %p204 = por %p202, %p203
    %s206 = sadd.s32 %s205, 1
    %p209 = scmp.eq.s32.totalorder %s24, 1
    %p210 = scmp.ne.s32.totalorder %s205, %s207
    %p211 = scmp.eq.s32.totalorder %s24, 0
    %p212 = por %p210, %p211
    %p213 = scmp.ne.s32.totalorder %s205, %s207
    %p214 = scmp.eq.s32.totalorder %s29, 1
    %p215 = por %p213, %p214
    %p216 = scmp.ne.s32.totalorder %s207, %s208
    %p217 = scmp.eq.s32.totalorder %s29, 0
    %p218 = por %p216, %p217
    %p219 = scmp.ne.s32.totalorder %s207, %s208
    %p220 = scmp.eq.s32.totalorder %s30, 1
    %p221 = por %p219, %p220
    %p223 = scmp.ne.s32.totalorder %s208, %s222
    %p224 = scmp.eq.s32.totalorder %s30, 0
    %p225 = por %p223, %p224
    %s227 = sadd.s32 %s226, 1
    %p230 = scmp.eq.s32.totalorder %s24, 1
    %p231 = scmp.ne.s32.totalorder %s226, %s228
    %p232 = scmp.eq.s32.totalorder %s24, 0
    %p233 = por %p231, %p232
    %p234 = scmp.ne.s32.totalorder %s226, %s228
    %p235 = scmp.eq.s32.totalorder %s29, 1
    %p236 = por %p234, %p235
    %p237 = scmp.ne.s32.totalorder %s228, %s229
    %p238 = scmp.eq.s32.totalorder %s29, 0
    %p239 = por %p237, %p238
    %p240 = scmp.ne.s32.totalorder %s228, %s229
    %p241 = scmp.eq.s32.totalorder %s30, 1
    %p242 = por %p240, %p241
    %p244 = scmp.ne.s32.totalorder %s229, %s243
    %p245 = scmp.eq.s32.totalorder %s30, 0
    %p246 = por %p244, %p245
    %s248 = sadd.s32 %s247, 1
    %p251 = scmp.eq.s32.totalorder %s24, 1
    %p252 = scmp.ne.s32.totalorder %s247, %s249
    %p253 = scmp.eq.s32.totalorder %s24, 0
    %p254 = por %p252, %p253
    %p255 = scmp.ne.s32.totalorder %s247, %s249
    %p256 = scmp.eq.s32.totalorder %s29, 1
    %p257 = por %p255, %p256
    %p258 = scmp.ne.s32.totalorder %s249, %s250
    %p259 = scmp.eq.s32.totalorder %s29, 0
    %p260 = por %p258, %p259
    %p261 = scmp.ne.s32.totalorder %s249, %s250
    %p262 = scmp.eq.s32.totalorder %s30, 1
    %p263 = por %p261, %p262
    %p265 = scmp.ne.s32.totalorder %s250, %s264
    %p266 = scmp.eq.s32.totalorder %s30, 0
    %p267 = por %p265, %p266
    %s269 = sadd.s32 %s268, 1
    %p272 = scmp.eq.s32.totalorder %s24, 1
    %p273 = scmp.ne.s32.totalorder %s268, %s270
    %p274 = scmp.eq.s32.totalorder %s24, 0
    %p275 = por %p273, %p274
    %p276 = scmp.ne.s32.totalorder %s268, %s270
    %p277 = scmp.eq.s32.totalorder %s29, 1
    %p278 = por %p276, %p277
    %p279 = scmp.ne.s32.totalorder %s270, %s271
    %p280 = scmp.eq.s32.totalorder %s29, 0
    %p281 = por %p279, %p280
    %p282 = scmp.ne.s32.totalorder %s270, %s271
    %p283 = scmp.eq.s32.totalorder %s30, 1
    %p284 = por %p282, %p283
    %p286 = scmp.ne.s32.totalorder %s271, %s285
    %p287 = scmp.eq.s32.totalorder %s30, 0
    %p288 = por %p286, %p287
    %s290 = sadd.s32 %s289, 1
    %p293 = scmp.eq.s32.totalorder %s24, 1
    %p294 = scmp.ne.s32.totalorder %s289, %s291
    %p295 = scmp.eq.s32.totalorder %s24, 0
    %p296 = por %p294, %p295
    %p297 = scmp.ne.s32.totalorder %s289, %s291
    %p298 = scmp.eq.s32.totalorder %s29, 1
    %p299 = por %p297, %p298
    %p300 = scmp.ne.s32.totalorder %s291, %s292
    %p301 = scmp.eq.s32.totalorder %s29, 0
    %p302 = por %p300, %p301
    %p303 = scmp.ne.s32.totalorder %s291, %s292
    %p304 = scmp.eq.s32.totalorder %s30, 1
    %p305 = por %p303, %p304
    %p307 = scmp.ne.s32.totalorder %s292, %s306
    %p308 = scmp.eq.s32.totalorder %s30, 0
    %p309 = por %p307, %p308
    %s311 = sadd.s32 %s310, 1
    %p314 = scmp.eq.s32.totalorder %s24, 1
    %p315 = scmp.ne.s32.totalorder %s310, %s312
    %p316 = scmp.eq.s32.totalorder %s24, 0
    %p317 = por %p315, %p316
    %p318 = scmp.ne.s32.totalorder %s310, %s312
    %p319 = scmp.eq.s32.totalorder %s29, 1
    %p320 = por %p318, %p319
    %p321 = scmp.ne.s32.totalorder %s312, %s313
    %p322 = scmp.eq.s32.totalorder %s29, 0
    %p323 = por %p321, %p322
    %p324 = scmp.ne.s32.totalorder %s312, %s313
    %p325 = scmp.eq.s32.totalorder %s30, 1
    %p326 = por %p324, %p325
    %p328 = scmp.ne.s32.totalorder %s313, %s327
    %p329 = scmp.eq.s32.totalorder %s30, 0
    %p330 = por %p328, %p329
    %s332 = sadd.s32 %s331, 1
    %p335 = scmp.eq.s32.totalorder %s24, 1
    %p336 = scmp.ne.s32.totalorder %s331, %s333
    %p337 = scmp.eq.s32.totalorder %s24, 0
    %p338 = por %p336, %p337
    %p339 = scmp.ne.s32.totalorder %s331, %s333
    %p340 = scmp.eq.s32.totalorder %s29, 1
    %p341 = por %p339, %p340
    %p342 = scmp.ne.s32.totalorder %s333, %s334
    %p343 = scmp.eq.s32.totalorder %s29, 0
    %p344 = por %p342, %p343
    %p345 = scmp.ne.s32.totalorder %s333, %s334
    %p346 = scmp.eq.s32.totalorder %s30, 1
    %p347 = por %p345, %p346
    %p349 = scmp.ne.s32.totalorder %s334, %s348
    %p350 = scmp.eq.s32.totalorder %s30, 0
    %p351 = por %p349, %p350
    %s353 = sadd.s32 %s352, 1
    %p356 = scmp.eq.s32.totalorder %s24, 1
    %p357 = scmp.ne.s32.totalorder %s352, %s354
    %p358 = scmp.eq.s32.totalorder %s24, 0
    %p359 = por %p357, %p358
    %p360 = scmp.ne.s32.totalorder %s352, %s354
    %p361 = scmp.eq.s32.totalorder %s29, 1
    %p362 = por %p360, %p361
    %p363 = scmp.ne.s32.totalorder %s354, %s355
    %p364 = scmp.eq.s32.totalorder %s29, 0
    %p365 = por %p363, %p364
    %p366 = scmp.ne.s32.totalorder %s354, %s355
    %p367 = scmp.eq.s32.totalorder %s30, 1
    %p368 = por %p366, %p367
    %p370 = scmp.ne.s32.totalorder %s355, %s369
    %p371 = scmp.eq.s32.totalorder %s30, 0
    %p372 = por %p370, %p371
    %s374 = sadd.s32 %s373, 1
    %p377 = scmp.eq.s32.totalorder %s24, 1
    %p378 = scmp.ne.s32.totalorder %s373, %s375
    %p379 = scmp.eq.s32.totalorder %s24, 0
    %p380 = por %p378, %p379
    %p381 = scmp.ne.s32.totalorder %s373, %s375
    %p382 = scmp.eq.s32.totalorder %s29, 1
    %p383 = por %p381, %p382
    %p384 = scmp.ne.s32.totalorder %s375, %s376
    %p385 = scmp.eq.s32.totalorder %s29, 0
    %p386 = por %p384, %p385
    %p387 = scmp.ne.s32.totalorder %s375, %s376
    %p388 = scmp.eq.s32.totalorder %s30, 1
    %p389 = por %p387, %p388
    %p391 = scmp.ne.s32.totalorder %s376, %s390
    %p392 = scmp.eq.s32.totalorder %s30, 0
    %p393 = por %p391, %p392
    %s395 = sadd.s32 %s394, 1
    %p398 = scmp.eq.s32.totalorder %s24, 1
    %p399 = scmp.ne.s32.totalorder %s394, %s396
    %p400 = scmp.eq.s32.totalorder %s24, 0
    %p401 = por %p399, %p400
    %p402 = scmp.ne.s32.totalorder %s394, %s396
    %p403 = scmp.eq.s32.totalorder %s29, 1
    %p404 = por %p402, %p403
    %p405 = scmp.ne.s32.totalorder %s396, %s397
    %p406 = scmp.eq.s32.totalorder %s29, 0
    %p407 = por %p405, %p406
    %p408 = scmp.ne.s32.totalorder %s396, %s397
    %p409 = scmp.eq.s32.totalorder %s30, 1
    %p410 = por %p408, %p409
    %p412 = scmp.ne.s32.totalorder %s397, %s411
    %p413 = scmp.eq.s32.totalorder %s30, 0
    %p414 = por %p412, %p413
    %s415 = ssub.s32 %s24, %s31
    %p416 = scmp.eq.s32.totalorder %s415, 0
    %s418 = sadd.s32 %s417, 1
    %s419 = scalar_select %p416, %s417, %s418
    %p422 = pneg %p416
    %p423 = scmp.eq.s32.totalorder %s24, 1
    %p424 = por %p422, %p423
    %p425 = scmp.ne.s32.totalorder %s417, %s420
    %p426 = scmp.eq.s32.totalorder %s24, 0
    %p427 = por %p425, %p426
    %p428 = scmp.ne.s32.totalorder %s417, %s420
    %p429 = scmp.eq.s32.totalorder %s29, 1
    %p430 = por %p428, %p429
    %p431 = scmp.ne.s32.totalorder %s420, %s421
    %p432 = scmp.eq.s32.totalorder %s29, 0
    %p433 = por %p431, %p432
    %p434 = scmp.ne.s32.totalorder %s420, %s421
    %p435 = scmp.eq.s32.totalorder %s30, 1
    %p436 = por %p434, %p435
    %p438 = scmp.ne.s32.totalorder %s421, %s437
    %p439 = scmp.eq.s32.totalorder %s30, 0
    %p440 = por %p438, %p439
    %p441 = scmp.le.s32.totalorder 1, %s24
    %p442 = scmp.lt.s32.totalorder %s24, 3
    %p443 = pnand %p441, %p442
    %p444 = pneg %p443
    // Predicated region
    $region9: #{encoder_forward.6} parent=5 // pred_check
      _
    $region10: #{encoder_forward.6} parent=5 // pred_check_branch
      %446 = sbr.rel (%p443) target = $region12
    $region11: #{encoder_forward.6} parent=5 // pred_region
      %s447 = ssub.s32 %s24, 1
      // Predicated region
      $region13: #{encoder_forward.6} parent=11 // pred_check
        %p448 = pneg %p71
      $region14: #{encoder_forward.6} parent=11 // pred_check_branch
        %450 = sbr.rel (%p448) target = $region16
      $region15: #{encoder_forward.6} parent=11 // pred_region
        _
      $region16: #{encoder_forward.6} parent=11 // pred_fallthru
        _
      // Predicated region
      $region17: #{encoder_forward.6} parent=11 // pred_check
        %p451 = pneg %p92
      $region18: #{encoder_forward.6} parent=11 // pred_check_branch
        %453 = sbr.rel (%p451) target = $region20
      $region19: #{encoder_forward.6} parent=11 // pred_region
        _
      $region20: #{encoder_forward.6} parent=11 // pred_fallthru
        _
      // Predicated region
      $region21: #{encoder_forward.6} parent=11 // pred_check
        %p454 = pneg %p113
      $region22: #{encoder_forward.6} parent=11 // pred_check_branch
        %456 = sbr.rel (%p454) target = $region24
      $region23: #{encoder_forward.6} parent=11 // pred_region
        _
      $region24: #{encoder_forward.6} parent=11 // pred_fallthru
        _
      // Predicated region
      $region25: #{encoder_forward.6} parent=11 // pred_check
        %p457 = pneg %p134
      $region26: #{encoder_forward.6} parent=11 // pred_check_branch
        %459 = sbr.rel (%p457) target = $region28
      $region27: #{encoder_forward.6} parent=11 // pred_region
        _
      $region28: #{encoder_forward.6} parent=11 // pred_fallthru
        _
      // Predicated region
      $region29: #{encoder_forward.6} parent=11 // pred_check
        %p460 = pneg %p155
      $region30: #{encoder_forward.6} parent=11 // pred_check_branch
        %462 = sbr.rel (%p460) target = $region32
      $region31: #{encoder_forward.6} parent=11 // pred_region
        _
      $region32: #{encoder_forward.6} parent=11 // pred_fallthru
        _
      // Predicated region
      $region33: #{encoder_forward.6} parent=11 // pred_check
        %p463 = pneg %p176
      $region34: #{encoder_forward.6} parent=11 // pred_check_branch
        %465 = sbr.rel (%p463) target = $region36
      $region35: #{encoder_forward.6} parent=11 // pred_region
        _
      $region36: #{encoder_forward.6} parent=11 // pred_fallthru
        _
      // Predicated region
      $region37: #{encoder_forward.6} parent=11 // pred_check
        %p466 = pneg %p197
      $region38: #{encoder_forward.6} parent=11 // pred_check_branch
        %468 = sbr.rel (%p466) target = $region40
      $region39: #{encoder_forward.6} parent=11 // pred_region
        _
      $region40: #{encoder_forward.6} parent=11 // pred_fallthru
        _
      // Predicated region
      $region41: #{encoder_forward.6} parent=11 // pred_check
        %p469 = pneg %p218
      $region42: #{encoder_forward.6} parent=11 // pred_check_branch
        %471 = sbr.rel (%p469) target = $region44
      $region43: #{encoder_forward.6} parent=11 // pred_region
        _
      $region44: #{encoder_forward.6} parent=11 // pred_fallthru
        _
      // Predicated region
      $region45: #{encoder_forward.6} parent=11 // pred_check
        %p472 = pneg %p239
      $region46: #{encoder_forward.6} parent=11 // pred_check_branch
        %474 = sbr.rel (%p472) target = $region48
      $region47: #{encoder_forward.6} parent=11 // pred_region
        _
      $region48: #{encoder_forward.6} parent=11 // pred_fallthru
        _
      // Predicated region
      $region49: #{encoder_forward.6} parent=11 // pred_check
        %p475 = pneg %p260
      $region50: #{encoder_forward.6} parent=11 // pred_check_branch
        %477 = sbr.rel (%p475) target = $region52
      $region51: #{encoder_forward.6} parent=11 // pred_region
        _
      $region52: #{encoder_forward.6} parent=11 // pred_fallthru
        _
      // Predicated region
      $region53: #{encoder_forward.6} parent=11 // pred_check
        %p478 = pneg %p281
      $region54: #{encoder_forward.6} parent=11 // pred_check_branch
        %480 = sbr.rel (%p478) target = $region56
      $region55: #{encoder_forward.6} parent=11 // pred_region
        _
      $region56: #{encoder_forward.6} parent=11 // pred_fallthru
        _
      // Predicated region
      $region57: #{encoder_forward.6} parent=11 // pred_check
        %p481 = pneg %p302
      $region58: #{encoder_forward.6} parent=11 // pred_check_branch
        %483 = sbr.rel (%p481) target = $region60
      $region59: #{encoder_forward.6} parent=11 // pred_region
        _
      $region60: #{encoder_forward.6} parent=11 // pred_fallthru
        _
      // Predicated region
      $region61: #{encoder_forward.6} parent=11 // pred_check
        %p484 = pneg %p323
      $region62: #{encoder_forward.6} parent=11 // pred_check_branch
        %486 = sbr.rel (%p484) target = $region64
      $region63: #{encoder_forward.6} parent=11 // pred_region
        _
      $region64: #{encoder_forward.6} parent=11 // pred_fallthru
        _
      // Predicated region
      $region65: #{encoder_forward.6} parent=11 // pred_check
        %p487 = pneg %p344
      $region66: #{encoder_forward.6} parent=11 // pred_check_branch
        %489 = sbr.rel (%p487) target = $region68
      $region67: #{encoder_forward.6} parent=11 // pred_region
        _
      $region68: #{encoder_forward.6} parent=11 // pred_fallthru
        _
      // Predicated region
      $region69: #{encoder_forward.6} parent=11 // pred_check
        %p490 = pneg %p365
      $region70: #{encoder_forward.6} parent=11 // pred_check_branch
        %492 = sbr.rel (%p490) target = $region72
      $region71: #{encoder_forward.6} parent=11 // pred_region
        _
      $region72: #{encoder_forward.6} parent=11 // pred_fallthru
        _
      // Predicated region
      $region73: #{encoder_forward.6} parent=11 // pred_check
        %p493 = pneg %p386
      $region74: #{encoder_forward.6} parent=11 // pred_check_branch
        %495 = sbr.rel (%p493) target = $region76
      $region75: #{encoder_forward.6} parent=11 // pred_region
        _
      $region76: #{encoder_forward.6} parent=11 // pred_fallthru
        _
      // Predicated region
      $region77: #{encoder_forward.6} parent=11 // pred_check
        %p496 = pneg %p407
      $region78: #{encoder_forward.6} parent=11 // pred_check_branch
        %498 = sbr.rel (%p496) target = $region80
      $region79: #{encoder_forward.6} parent=11 // pred_region
        _
      $region80: #{encoder_forward.6} parent=11 // pred_fallthru
        _
    $region12: #{encoder_forward.6} parent=5 // pred_fallthru
      _
    %p499 = scmp.lt.s32.totalorder %s24, 2
    // Predicated region
    $region81: #{encoder_forward.6} parent=5 // pred_check
      %p500 = pneg %p499
    $region82: #{encoder_forward.6} parent=5 // pred_check_branch
      %502 = sbr.rel (%p500) target = $region84
    $region83: #{encoder_forward.6} parent=5 // pred_region
      // Predicated region
      $region85: #{encoder_forward.6} parent=83 // pred_check
        %p503 = pneg %p44
      $region86: #{encoder_forward.6} parent=83 // pred_check_branch
        %505 = sbr.rel (%p503) target = $region88
      $region87: #{encoder_forward.6} parent=83 // pred_region
        %p506 = scmp.lt.s32.totalorder %s24, 1
        %s507 = scalar_select %p506, %s24, 1
        %s508 = smul.addr %s507, 4
        %s509 = scalar_lea.vmem %s0, %s508
      $region88: #{encoder_forward.6} parent=83 // pred_fallthru
        _
    $region84: #{encoder_forward.6} parent=5 // pred_fallthru
      _
    %p510 = scmp.le.s32.totalorder 1, %s24
    %p511 = scmp.lt.s32.totalorder %s24, 3
    %p512 = pnand %p510, %p511
    %p513 = pneg %p512
    // Predicated region
    $region89: #{encoder_forward.6} parent=5 // pred_check
      _
    $region90: #{encoder_forward.6} parent=5 // pred_check_branch
      %515 = sbr.rel (%p512) target = $region92
    $region91: #{encoder_forward.6} parent=5 // pred_region
      %s516 = ssub.s32 %s24, 1
      %p517 = scmp.lt.s32.totalorder %s29, 1
      %s518 = scalar_select %p517, %s29, 1
      %s519 = smul.addr %s518, 4
      %s520 = scalar_lea.vmem %s0, %s519
      %p521 = pneg %p50
      %p522 = pneg %p47
      %p523 = pneg %p71
      %p524 = pneg %p68
      %p525 = pneg %p92
      %p526 = pneg %p89
      %p527 = pneg %p113
      %p528 = pneg %p110
      %p529 = pneg %p134
      %p530 = pneg %p131
      %p531 = pneg %p155
      %p532 = pneg %p152
      %p533 = pneg %p176
      %p534 = pneg %p173
      %p535 = pneg %p197
      %p536 = pneg %p194
      %p537 = pneg %p218
      %p538 = pneg %p215
      %p539 = pneg %p239
      %p540 = pneg %p236
      %p541 = pneg %p260
      %p542 = pneg %p257
      %p543 = pneg %p281
      %p544 = pneg %p278
      %p545 = pneg %p302
      %p546 = pneg %p299
      %p547 = pneg %p323
      %p548 = pneg %p320
      %p549 = pneg %p344
      %p550 = pneg %p341
      %p551 = pneg %p365
      %p552 = pneg %p362
      %p553 = pneg %p386
      %p554 = pneg %p383
      %p555 = pneg %p407
      %p556 = pneg %p404
      %p557 = pneg %p433
      %p558 = pneg %p430
      %p559 = scmp.lt.s32.totalorder %s29, 1
      %s560 = scalar_select %p559, %s29, 1
      %s561 = smul.addr %s560, 4
      %s562 = scalar_lea.vmem %s18, %s561
      %p563 = scmp.lt.s32.totalorder %s29, 1
      %s564 = scalar_select %p563, %s29, 1
      %s565 = smul.addr %s564, 4
      %s566 = scalar_lea.vmem %s0, %s565
      %p567 = scmp.lt.s32.totalorder %s29, 1
      %s568 = scalar_select %p567, %s29, 1
      %s569 = smul.addr %s568, 4
      %s570 = scalar_lea.vmem %s18, %s569
      %vm571 = vcmask 293888
      %572 = vst.msk [vmem:[#allocation2] sm:$0xff] %vm571, 0.0
      %573 = vst.msk [vmem:[#allocation2 + $0x8] sm:$0xff] %vm571, 0.0
      %574 = vst.msk [vmem:[#allocation2 + $0x10] sm:$0xff] %vm571, 0.0
      %575 = vst.msk [vmem:[#allocation2 + $0x18] sm:$0xff] %vm571, 0.0
      %v576 = vld [vmem:[%s566] sm:$0xf]
      %v577 = vld [vmem:[%s2] sm:$0xff]
      %v578 = vld [vmem:[%s2 + $0x8] sm:$0xff]
      %v579 = vld [vmem:[%s2 + $0x10] sm:$0xff]
      %v580 = vld [vmem:[%s2 + $0x18] sm:$0xff]
      %v581 = vld [vmem:[%s3] sm:$0xff]
      %v582 = vld [vmem:[%s3 + $0x8] sm:$0xff]
      %v583 = vld [vmem:[%s3 + $0x10] sm:$0xff]
      %v584 = vld [vmem:[%s3 + $0x18] sm:$0xff]
      %586 = vset.pattern.permute.xlu0 0
      %587 = vperm.xlu0 %586, %v581
      %v588 = vpop.permute.xlu0 %587
      %591 = vset.pattern.permute.xlu0 0
      %592 = vperm.xlu0 %591, %v582
      %v593 = vpop.permute.xlu0 %592
      %596 = vset.pattern.permute.xlu0 0
      %597 = vperm.xlu0 %596, %v583
      %v598 = vpop.permute.xlu0 %597
      %601 = vset.pattern.permute.xlu0 0
      %602 = vperm.xlu0 %601, %v584
      %v603 = vpop.permute.xlu0 %602
      %vm605 = vcmask 31744
      %v607 = vsel %vm605, %v577, 0
      %v610 = vsel %vm605, %v578, 0
      %v613 = vsel %vm605, %v579, 0
      %v616 = vsel %vm605, %v580, 0
      %vm618 = vcmask 1043456
      %v620 = vsel %vm618, %v576, 0
      %622 = vmatpush.msra.mxu0 0.0
      %623 = vmatpush.msra.mxu0 0.0
      %624 = vmatpush.msra.mxu0 0.0
      %625 = vmatpush.msra.mxu0 0.0
      %626 = vmatpush.msra.mxu0 0.0
      %627 = vmatpush.msra.mxu0 0.0
      %628 = vmatpush.msra.mxu0 0.0
      %629 = vmatpush.msra.mxu0 0.0
      %630 = vmatpush.msra.mxu0 0.0
      %631 = vmatpush.msra.mxu0 0.0
      %632 = vmatpush.msra.mxu0 0.0
      %633 = vmatpush.msra.mxu0 0.0
      %634 = vmatpush.msra.mxu0 0.0
      %635 = vmatpush.msra.mxu0 0.0
      %636 = vmatpush.msra.mxu0 0.0
      %637 = vmatpush.msra.mxu0 %v620
      %638 = vmatmul.f32.gmra.mxu0 %v607
      %v639 = vpop.f32.mrf.mxu0
      %v640 = vadd.f32 %v588, %v639
      %641 = vmatmul.f32.gmra.mxu0 %v610
      %v642 = vpop.f32.mrf.mxu0
      %v643 = vadd.f32 %v593, %v642
      %644 = vmatmul.f32.gmra.mxu0 %v613
      %v645 = vpop.f32.mrf.mxu0
      %v646 = vadd.f32 %v598, %v645
      %647 = vmatmul.f32.gmra.mxu0 %v616
      %v648 = vpop.f32.mrf.mxu0
      %v649 = vadd.f32 %v603, %v648
      %650 = vdwg.mxu0
      %v651 = vld [vmem:[%s8] sm:$0xf]
      %656 = vrot.lane.b32.xlu0 %v640, 2
      %v657 = vpop.permute.xlu0 %656
      %658 = vrot.lane.b32.xlu0 %v643, 2
      %v659 = vpop.permute.xlu0 %658
      %660 = vrot.lane.b32.xlu0 %v646, 2
      %v661 = vpop.permute.xlu0 %660
      %662 = vrot.lane.b32.xlu0 %v649, 2
      %v663 = vpop.permute.xlu0 %662
      %vm668 = vcmask 146448
      %669 = vst.msk [vmem:[#allocation2] sm:$0xff] %vm668, %v657
      %670 = vst.msk [vmem:[#allocation2 + $0x8] sm:$0xff] %vm668, %v659
      %671 = vst.msk [vmem:[#allocation2 + $0x10] sm:$0xff] %vm668, %v661
      %672 = vst.msk [vmem:[#allocation2 + $0x18] sm:$0xff] %vm668, %v663
      %v673 = vld [vmem:[#allocation2] sm:$0xff]
      %v674 = vld [vmem:[#allocation2 + $0x8] sm:$0xff]
      %v675 = vld [vmem:[#allocation2 + $0x10] sm:$0xff]
      %v676 = vld [vmem:[#allocation2 + $0x18] sm:$0xff]
      %681 = vrot.lane.b32.xlu0 %v673, 127
      %v682 = vpop.permute.xlu0 %681
      %683 = vrot.lane.b32.xlu0 %v674, 127
      %v684 = vpop.permute.xlu0 %683
      %685 = vrot.lane.b32.xlu0 %v675, 127
      %v686 = vpop.permute.xlu0 %685
      %687 = vrot.lane.b32.xlu0 %v676, 127
      %v688 = vpop.permute.xlu0 %687
      %689 = vrot.lane.b32.xlu0 %v673, 126
      %v690 = vpop.permute.xlu0 %689
      %691 = vrot.lane.b32.xlu0 %v674, 126
      %v692 = vpop.permute.xlu0 %691
      %693 = vrot.lane.b32.xlu0 %v675, 126
      %v694 = vpop.permute.xlu0 %693
      %695 = vrot.lane.b32.xlu0 %v676, 126
      %v696 = vpop.permute.xlu0 %695
      %v697 = vld [vmem:[%s4] sm:$0xff]
      %v698 = vld [vmem:[%s4 + $0x8] sm:$0xff]
      %v699 = vld [vmem:[%s4 + $0x10] sm:$0xff]
      %v700 = vld [vmem:[%s4 + $0x18] sm:$0xff]
      %v701 = vld [vmem:[%s4 + $0x20] sm:$0xff]
      %v702 = vld [vmem:[%s4 + $0x28] sm:$0xff]
      %v703 = vld [vmem:[%s4 + $0x30] sm:$0xff]
      %v704 = vld [vmem:[%s4 + $0x38] sm:$0xff]
      %v705 = vld [vmem:[%s5] sm:$0xff]
      %v706 = vld [vmem:[%s5 + $0x8] sm:$0xff]
      %v707 = vld [vmem:[%s5 + $0x10] sm:$0xff]
      %v708 = vld [vmem:[%s5 + $0x18] sm:$0xff]
      %v709 = vld [vmem:[%s5 + $0x20] sm:$0xff]
      %v710 = vld [vmem:[%s5 + $0x28] sm:$0xff]
      %v711 = vld [vmem:[%s5 + $0x30] sm:$0xff]
      %v712 = vld [vmem:[%s5 + $0x38] sm:$0xff]
      %714 = vset.pattern.permute.xlu0 0
      %715 = vperm.xlu0 %714, %v705
      %v716 = vpop.permute.xlu0 %715
      %719 = vset.pattern.permute.xlu0 0
      %720 = vperm.xlu0 %719, %v706
      %v721 = vpop.permute.xlu0 %720
      %724 = vset.pattern.permute.xlu0 0
      %725 = vperm.xlu0 %724, %v707
      %v726 = vpop.permute.xlu0 %725
      %729 = vset.pattern.permute.xlu0 0
      %730 = vperm.xlu0 %729, %v708
      %v731 = vpop.permute.xlu0 %730
      %734 = vset.pattern.permute.xlu0 0
      %735 = vperm.xlu0 %734, %v709
      %v736 = vpop.permute.xlu0 %735
      %739 = vset.pattern.permute.xlu0 0
      %740 = vperm.xlu0 %739, %v710
      %v741 = vpop.permute.xlu0 %740
      %744 = vset.pattern.permute.xlu0 0
      %745 = vperm.xlu0 %744, %v711
      %v746 = vpop.permute.xlu0 %745
      %749 = vset.pattern.permute.xlu0 0
      %750 = vperm.xlu0 %749, %v712
      %v751 = vpop.permute.xlu0 %750
      %753 = vrot.lane.b32.xlu0 %v682, 127
      %v754 = vpop.permute.xlu0 %753
      %755 = vrot.lane.b32.xlu0 %v684, 127
      %v756 = vpop.permute.xlu0 %755
      %757 = vrot.lane.b32.xlu0 %v686, 127
      %v758 = vpop.permute.xlu0 %757
      %759 = vrot.lane.b32.xlu0 %v688, 127
      %v760 = vpop.permute.xlu0 %759
      %761 = vrot.lane.b32.xlu0 %v690, 127
      %v762 = vpop.permute.xlu0 %761
      %763 = vrot.lane.b32.xlu0 %v692, 127
      %v764 = vpop.permute.xlu0 %763
      %765 = vrot.lane.b32.xlu0 %v694, 127
      %v766 = vpop.permute.xlu0 %765
      %767 = vrot.lane.b32.xlu0 %v696, 127
      %v768 = vpop.permute.xlu0 %767
      %vm781 = vcmask 785408
      %v783 = vsel %vm781, %v697, 0
      %v786 = vsel %vm781, %v698, 0
      %v789 = vsel %vm781, %v699, 0
      %v792 = vsel %vm781, %v700, 0
      %v795 = vsel %vm781, %v701, 0
      %v798 = vsel %vm781, %v702, 0
      %v801 = vsel %vm781, %v703, 0
      %v804 = vsel %vm781, %v704, 0
      %806 = vmatpush.msra.mxu0 0.0
      %807 = vmatpush.msra.mxu0 0.0
      %808 = vmatpush.msra.mxu0 0.0
      %809 = vmatpush.msra.mxu0 0.0
      %810 = vmatpush.msra.mxu0 %v768
      %811 = vmatpush.msra.mxu0 %v766
      %812 = vmatpush.msra.mxu0 %v764
      %813 = vmatpush.msra.mxu0 %v762
      %814 = vmatpush.msra.mxu0 %v760
      %815 = vmatpush.msra.mxu0 %v758
      %816 = vmatpush.msra.mxu0 %v756
      %817 = vmatpush.msra.mxu0 %v754
      %818 = vmatpush.msra.mxu0 %v688
      %819 = vmatpush.msra.mxu0 %v686
      %820 = vmatpush.msra.mxu0 %v684
      %821 = vmatpush.msra.mxu0 %v682
      %822 = vmatmul.f32.gmra.mxu0 %v783
      %v823 = vpop.f32.mrf.mxu0
      %v824 = vadd.f32 %v716, %v823
      %825 = vmatmul.f32.gmra.mxu0 %v786
      %v826 = vpop.f32.mrf.mxu0
      %v827 = vadd.f32 %v721, %v826
      %828 = vmatmul.f32.gmra.mxu0 %v789
      %v829 = vpop.f32.mrf.mxu0
      %v830 = vadd.f32 %v726, %v829
      %831 = vmatmul.f32.gmra.mxu0 %v792
      %v832 = vpop.f32.mrf.mxu0
      %v833 = vadd.f32 %v731, %v832
      %834 = vmatmul.f32.gmra.mxu0 %v795
      %v835 = vpop.f32.mrf.mxu0
      %v836 = vadd.f32 %v736, %v835
      %837 = vmatmul.f32.gmra.mxu0 %v798
      %v838 = vpop.f32.mrf.mxu0
      %v839 = vadd.f32 %v741, %v838
      %840 = vmatmul.f32.gmra.mxu0 %v801
      %v841 = vpop.f32.mrf.mxu0
      %v842 = vadd.f32 %v746, %v841
      %843 = vmatmul.f32.gmra.mxu0 %v804
      %v844 = vpop.f32.mrf.mxu0
      %v845 = vadd.f32 %v751, %v844
      %846 = vdwg.mxu0
      %v847 = vtanh.pop %v824
      %v848 = vtanh.pop %v827
      %v849 = vtanh.pop %v830
      %v850 = vtanh.pop %v833
      %v851 = vxor.u32 %v836, 2147483648
      %v852 = vxor.u32 %v839, 2147483648
      %v853 = vxor.u32 %v842, 2147483648
      %v854 = vxor.u32 %v845, 2147483648
      %v855 = vmul.f32 %v851, 1.442695
      %v856 = vpow.pop %v855
      %v857 = vmul.f32 %v852, 1.442695
      %v858 = vpow.pop %v857
      %v859 = vmul.f32 %v853, 1.442695
      %v860 = vpow.pop %v859
      %v861 = vmul.f32 %v854, 1.442695
      %v862 = vpow.pop %v861
      %v863 = vadd.f32 %v856, 1.0
      %v864 = vadd.f32 %v858, 1.0
      %v865 = vadd.f32 %v860, 1.0
      %v866 = vadd.f32 %v862, 1.0
      %v867 = vrcp.pop %v863
      %v868 = vmul.f32 %v863, %v867
      %v869 = vsub.f32 1.0, %v868
      %v870 = vmul.f32 %v867, %v869
      %v871 = vadd.f32 %v867, %v870
      %vm872 = vweird.f32 %v863
      %vm873 = vweird.f32 %v867
      %vm874 = vmor %vm872, %vm873
      %v875 = vsel %vm874, %v867, %v871
      %v876 = vand.u32 2147483647, %v863
      %vm877 = vcmp.eq.f32.partialorder %v876, 8.507059e+37
      %v878 = vand.u32 %v863, 2147483648
      %v879 = vor.u32 1.1754944e-38, %v878
      %v880 = vsel %vm877, %v879, %v875
      %v881 = vmul.f32 1.0, %v880
      %v882 = vrcp.pop %v864
      %v883 = vmul.f32 %v864, %v882
      %v884 = vsub.f32 1.0, %v883
      %v885 = vmul.f32 %v882, %v884
      %v886 = vadd.f32 %v882, %v885
      %vm887 = vweird.f32 %v864
      %vm888 = vweird.f32 %v882
      %vm889 = vmor %vm887, %vm888
      %v890 = vsel %vm889, %v882, %v886
      %v891 = vand.u32 2147483647, %v864
      %vm892 = vcmp.eq.f32.partialorder %v891, 8.507059e+37
      %v893 = vand.u32 %v864, 2147483648
      %v894 = vor.u32 1.1754944e-38, %v893
      %v895 = vsel %vm892, %v894, %v890
      %v896 = vmul.f32 1.0, %v895
      %v897 = vrcp.pop %v865
      %v898 = vmul.f32 %v865, %v897
      %v899 = vsub.f32 1.0, %v898
      %v900 = vmul.f32 %v897, %v899
      %v901 = vadd.f32 %v897, %v900
      %vm902 = vweird.f32 %v865
      %vm903 = vweird.f32 %v897
      %vm904 = vmor %vm902, %vm903
      %v905 = vsel %vm904, %v897, %v901
      %v906 = vand.u32 2147483647, %v865
      %vm907 = vcmp.eq.f32.partialorder %v906, 8.507059e+37
      %v908 = vand.u32 %v865, 2147483648
      %v909 = vor.u32 1.1754944e-38, %v908
      %v910 = vsel %vm907, %v909, %v905
      %v911 = vmul.f32 1.0, %v910
      %v912 = vrcp.pop %v866
      %v913 = vmul.f32 %v866, %v912
      %v914 = vsub.f32 1.0, %v913
      %v915 = vmul.f32 %v912, %v914
      %v916 = vadd.f32 %v912, %v915
      %vm917 = vweird.f32 %v866
      %vm918 = vweird.f32 %v912
      %vm919 = vmor %vm917, %vm918
      %v920 = vsel %vm919, %v912, %v916
      %v921 = vand.u32 2147483647, %v866
      %vm922 = vcmp.eq.f32.partialorder %v921, 8.507059e+37
      %v923 = vand.u32 %v866, 2147483648
      %v924 = vor.u32 1.1754944e-38, %v923
      %v925 = vsel %vm922, %v924, %v920
      %v926 = vmul.f32 1.0, %v925
      %v927 = vmul.f32 %v847, %v881
      %v928 = vmul.f32 %v848, %v896
      %v929 = vmul.f32 %v849, %v911
      %v930 = vmul.f32 %v850, %v926
      %v931 = vld [vmem:[%s6] sm:$0xff]
      %v932 = vld [vmem:[%s6 + $0x8] sm:$0xff]
      %v933 = vld [vmem:[%s6 + $0x10] sm:$0xff]
      %v934 = vld [vmem:[%s6 + $0x18] sm:$0xff]
      %v935 = vld [vmem:[%s6 + $0x20] sm:$0xff]
      %v936 = vld [vmem:[%s6 + $0x28] sm:$0xff]
      %v937 = vld [vmem:[%s6 + $0x30] sm:$0xff]
      %v938 = vld [vmem:[%s6 + $0x38] sm:$0xff]
      %v939 = vld [vmem:[%s7] sm:$0xff]
      %v940 = vld [vmem:[%s7 + $0x8] sm:$0xff]
      %v941 = vld [vmem:[%s7 + $0x10] sm:$0xff]
      %v942 = vld [vmem:[%s7 + $0x18] sm:$0xff]
      %v943 = vld [vmem:[%s7 + $0x20] sm:$0xff]
      %v944 = vld [vmem:[%s7 + $0x28] sm:$0xff]
      %v945 = vld [vmem:[%s7 + $0x30] sm:$0xff]
      %v946 = vld [vmem:[%s7 + $0x38] sm:$0xff]
      %948 = vset.pattern.permute.xlu0 0
      %949 = vperm.xlu0 %948, %v939
      %v950 = vpop.permute.xlu0 %949
      %953 = vset.pattern.permute.xlu0 0
      %954 = vperm.xlu0 %953, %v940
      %v955 = vpop.permute.xlu0 %954
      %958 = vset.pattern.permute.xlu0 0
      %959 = vperm.xlu0 %958, %v941
      %v960 = vpop.permute.xlu0 %959
      %963 = vset.pattern.permute.xlu0 0
      %964 = vperm.xlu0 %963, %v942
      %v965 = vpop.permute.xlu0 %964
      %968 = vset.pattern.permute.xlu0 0
      %969 = vperm.xlu0 %968, %v943
      %v970 = vpop.permute.xlu0 %969
      %973 = vset.pattern.permute.xlu0 0
      %974 = vperm.xlu0 %973, %v944
      %v975 = vpop.permute.xlu0 %974
      %978 = vset.pattern.permute.xlu0 0
      %979 = vperm.xlu0 %978, %v945
      %v980 = vpop.permute.xlu0 %979
      %983 = vset.pattern.permute.xlu0 0
      %984 = vperm.xlu0 %983, %v946
      %v985 = vpop.permute.xlu0 %984
      %vm987 = vcmask 261120
      %v989 = vsel %vm987, %v931, 0
      %v992 = vsel %vm987, %v932, 0
      %v995 = vsel %vm987, %v933, 0
      %v998 = vsel %vm987, %v934, 0
      %v1001 = vsel %vm987, %v935, 0
      %v1004 = vsel %vm987, %v936, 0
      %v1007 = vsel %vm987, %v937, 0
      %v1010 = vsel %vm987, %v938, 0
      %1012 = vmatpush.msra.mxu0 0.0
      %1013 = vmatpush.msra.mxu0 0.0
      %1014 = vmatpush.msra.mxu0 0.0
      %1015 = vmatpush.msra.mxu0 0.0
      %1016 = vmatpush.msra.mxu0 0.0
      %1017 = vmatpush.msra.mxu0 0.0
      %1018 = vmatpush.msra.mxu0 0.0
      %1019 = vmatpush.msra.mxu0 0.0
      %1020 = vmatpush.msra.mxu0 0.0
      %1021 = vmatpush.msra.mxu0 0.0
      %1022 = vmatpush.msra.mxu0 0.0
      %1023 = vmatpush.msra.mxu0 0.0
      %1024 = vmatpush.msra.mxu0 %v930
      %1025 = vmatpush.msra.mxu0 %v929
      %1026 = vmatpush.msra.mxu0 %v928
      %1027 = vmatpush.msra.mxu0 %v927
      %1028 = vmatmul.f32.gmra.mxu0 %v989
      %v1029 = vpop.f32.mrf.mxu0
      %v1030 = vadd.f32 %v950, %v1029
      %1031 = vmatmul.f32.gmra.mxu0 %v992
      %v1032 = vpop.f32.mrf.mxu0
      %v1033 = vadd.f32 %v955, %v1032
      %1034 = vmatmul.f32.gmra.mxu0 %v995
      %v1035 = vpop.f32.mrf.mxu0
      %v1036 = vadd.f32 %v960, %v1035
      %1037 = vmatmul.f32.gmra.mxu0 %v998
      %v1038 = vpop.f32.mrf.mxu0
      %v1039 = vadd.f32 %v965, %v1038
      %1040 = vmatmul.f32.gmra.mxu0 %v1001
      %v1041 = vpop.f32.mrf.mxu0
      %v1042 = vadd.f32 %v970, %v1041
      %1043 = vmatmul.f32.gmra.mxu0 %v1004
      %v1044 = vpop.f32.mrf.mxu0
      %v1045 = vadd.f32 %v975, %v1044
      %1046 = vmatmul.f32.gmra.mxu0 %v1007
      %v1047 = vpop.f32.mrf.mxu0
      %v1048 = vadd.f32 %v980, %v1047
      %1049 = vmatmul.f32.gmra.mxu0 %v1010
      %v1050 = vpop.f32.mrf.mxu0
      %v1051 = vadd.f32 %v985, %v1050
      %1052 = vdwg.mxu0
      %v1053 = vadd.f32 %v640, %v1030
      %v1054 = vadd.f32 %v643, %v1033
      %v1055 = vadd.f32 %v646, %v1036
      %v1056 = vadd.f32 %v649, %v1039
      %v1057 = vadd.f32 %v1042, 0.0
      %v1058 = vadd.f32 %v1045, 0.0
      %v1059 = vadd.f32 %v1048, 0.0
      %v1060 = vadd.f32 %v1051, 0.0
      %1065 = vrot.lane.b32.xlu0 %v1053, 2
      %v1066 = vpop.permute.xlu0 %1065
      %1067 = vrot.lane.b32.xlu0 %v1054, 2
      %v1068 = vpop.permute.xlu0 %1067
      %1069 = vrot.lane.b32.xlu0 %v1055, 2
      %v1070 = vpop.permute.xlu0 %1069
      %1071 = vrot.lane.b32.xlu0 %v1056, 2
      %v1072 = vpop.permute.xlu0 %1071
      %1077 = vst.msk [vmem:[#allocation2] sm:$0xff] %vm668, %v1066
      %1078 = vst.msk [vmem:[#allocation2 + $0x8] sm:$0xff] %vm668, %v1068
      %1079 = vst.msk [vmem:[#allocation2 + $0x10] sm:$0xff] %vm668, %v1070
      %1080 = vst.msk [vmem:[#allocation2 + $0x18] sm:$0xff] %vm668, %v1072
      %v1081 = vld [vmem:[#allocation2] sm:$0xff]
      %v1082 = vld [vmem:[#allocation2 + $0x8] sm:$0xff]
      %v1083 = vld [vmem:[#allocation2 + $0x10] sm:$0xff]
      %v1084 = vld [vmem:[#allocation2 + $0x18] sm:$0xff]
      %1089 = vrot.lane.b32.xlu0 %v1081, 126
      %v1090 = vpop.permute.xlu0 %1089
      %1091 = vrot.lane.b32.xlu0 %v1082, 126
      %v1092 = vpop.permute.xlu0 %1091
      %1093 = vrot.lane.b32.xlu0 %v1083, 126
      %v1094 = vpop.permute.xlu0 %1093
      %1095 = vrot.lane.b32.xlu0 %v1084, 126
      %v1096 = vpop.permute.xlu0 %1095
      %1101 = vrot.lane.b32.xlu0 %v1081, 124
      %v1102 = vpop.permute.xlu0 %1101
      %1103 = vrot.lane.b32.xlu0 %v1082, 124
      %v1104 = vpop.permute.xlu0 %1103
      %1105 = vrot.lane.b32.xlu0 %v1083, 124
      %v1106 = vpop.permute.xlu0 %1105
      %1107 = vrot.lane.b32.xlu0 %v1084, 124
      %v1108 = vpop.permute.xlu0 %1107
      %s1113 = scalar_lea.vmem %s4, 64
      %v1114 = vld [vmem:[%s1113] sm:$0xff]
      %v1115 = vld [vmem:[%s1113 + $0x8] sm:$0xff]
      %v1116 = vld [vmem:[%s1113 + $0x10] sm:$0xff]
      %v1117 = vld [vmem:[%s1113 + $0x18] sm:$0xff]
      %v1118 = vld [vmem:[%s1113 + $0x20] sm:$0xff]
      %v1119 = vld [vmem:[%s1113 + $0x28] sm:$0xff]
      %v1120 = vld [vmem:[%s1113 + $0x30] sm:$0xff]
      %v1121 = vld [vmem:[%s1113 + $0x38] sm:$0xff]
      %s1122 = scalar_lea.vmem %s5, 64
      %v1123 = vld [vmem:[%s1122] sm:$0xff]
      %v1124 = vld [vmem:[%s1122 + $0x8] sm:$0xff]
      %v1125 = vld [vmem:[%s1122 + $0x10] sm:$0xff]
      %v1126 = vld [vmem:[%s1122 + $0x18] sm:$0xff]
      %v1127 = vld [vmem:[%s1122 + $0x20] sm:$0xff]
      %v1128 = vld [vmem:[%s1122 + $0x28] sm:$0xff]
      %v1129 = vld [vmem:[%s1122 + $0x30] sm:$0xff]
      %v1130 = vld [vmem:[%s1122 + $0x38] sm:$0xff]
      %1132 = vset.pattern.permute.xlu0 0
      %1133 = vperm.xlu0 %1132, %v1123
      %v1134 = vpop.permute.xlu0 %1133
      %1137 = vset.pattern.permute.xlu0 0
      %1138 = vperm.xlu0 %1137, %v1124
      %v1139 = vpop.permute.xlu0 %1138
      %1142 = vset.pattern.permute.xlu0 0
      %1143 = vperm.xlu0 %1142, %v1125
      %v1144 = vpop.permute.xlu0 %1143
      %1147 = vset.pattern.permute.xlu0 0
      %1148 = vperm.xlu0 %1147, %v1126
      %v1149 = vpop.permute.xlu0 %1148
      %1152 = vset.pattern.permute.xlu0 0
      %1153 = vperm.xlu0 %1152, %v1127
      %v1154 = vpop.permute.xlu0 %1153
      %1157 = vset.pattern.permute.xlu0 0
      %1158 = vperm.xlu0 %1157, %v1128
      %v1159 = vpop.permute.xlu0 %1158
      %1162 = vset.pattern.permute.xlu0 0
      %1163 = vperm.xlu0 %1162, %v1129
      %v1164 = vpop.permute.xlu0 %1163
      %1167 = vset.pattern.permute.xlu0 0
      %1168 = vperm.xlu0 %1167, %v1130
      %v1169 = vpop.permute.xlu0 %1168
      %v1172 = vsel %vm781, %v1114, 0
      %v1175 = vsel %vm781, %v1115, 0
      %v1178 = vsel %vm781, %v1116, 0
      %v1181 = vsel %vm781, %v1117, 0
      %v1184 = vsel %vm781, %v1118, 0
      %v1187 = vsel %vm781, %v1119, 0
      %v1190 = vsel %vm781, %v1120, 0
      %v1193 = vsel %vm781, %v1121, 0
      %1195 = vmatpush.msra.mxu0 0.0
      %1196 = vmatpush.msra.mxu0 0.0
      %1197 = vmatpush.msra.mxu0 0.0
      %1198 = vmatpush.msra.mxu0 0.0
      %1199 = vmatpush.msra.mxu0 %v1108
      %1200 = vmatpush.msra.mxu0 %v1106
      %1201 = vmatpush.msra.mxu0 %v1104
      %1202 = vmatpush.msra.mxu0 %v1102
      %1203 = vmatpush.msra.mxu0 %v1096
      %1204 = vmatpush.msra.mxu0 %v1094
      %1205 = vmatpush.msra.mxu0 %v1092
      %1206 = vmatpush.msra.mxu0 %v1090
      %1207 = vmatpush.msra.mxu0 %v1084
      %1208 = vmatpush.msra.mxu0 %v1083
      %1209 = vmatpush.msra.mxu0 %v1082
      %1210 = vmatpush.msra.mxu0 %v1081
      %1211 = vmatmul.f32.gmra.mxu0 %v1172
      %v1212 = vpop.f32.mrf.mxu0
      %v1213 = vadd.f32 %v1134, %v1212
      %1214 = vmatmul.f32.gmra.mxu0 %v1175
      %v1215 = vpop.f32.mrf.mxu0
      %v1216 = vadd.f32 %v1139, %v1215
      %1217 = vmatmul.f32.gmra.mxu0 %v1178
      %v1218 = vpop.f32.mrf.mxu0
      %v1219 = vadd.f32 %v1144, %v1218
      %1220 = vmatmul.f32.gmra.mxu0 %v1181
      %v1221 = vpop.f32.mrf.mxu0
      %v1222 = vadd.f32 %v1149, %v1221
      %1223 = vmatmul.f32.gmra.mxu0 %v1184
      %v1224 = vpop.f32.mrf.mxu0
      %v1225 = vadd.f32 %v1154, %v1224
      %1226 = vmatmul.f32.gmra.mxu0 %v1187
      %v1227 = vpop.f32.mrf.mxu0
      %v1228 = vadd.f32 %v1159, %v1227
      %1229 = vmatmul.f32.gmra.mxu0 %v1190
      %v1230 = vpop.f32.mrf.mxu0
      %v1231 = vadd.f32 %v1164, %v1230
      %1232 = vmatmul.f32.gmra.mxu0 %v1193
      %v1233 = vpop.f32.mrf.mxu0
      %v1234 = vadd.f32 %v1169, %v1233
      %1235 = vdwg.mxu0
      %v1236 = vtanh.pop %v1213
      %v1237 = vtanh.pop %v1216
      %v1238 = vtanh.pop %v1219
      %v1239 = vtanh.pop %v1222
      %v1240 = vxor.u32 %v1225, 2147483648
      %v1241 = vxor.u32 %v1228, 2147483648
      %v1242 = vxor.u32 %v1231, 2147483648
      %v1243 = vxor.u32 %v1234, 2147483648
      %v1244 = vmul.f32 %v1240, 1.442695
      %v1245 = vpow.pop %v1244
      %v1246 = vmul.f32 %v1241, 1.442695
      %v1247 = vpow.pop %v1246
      %v1248 = vmul.f32 %v1242, 1.442695
      %v1249 = vpow.pop %v1248
      %v1250 = vmul.f32 %v1243, 1.442695
      %v1251 = vpow.pop %v1250
      %v1252 = vadd.f32 %v1245, 1.0
      %v1253 = vadd.f32 %v1247, 1.0
      %v1254 = vadd.f32 %v1249, 1.0
      %v1255 = vadd.f32 %v1251, 1.0
      %v1256 = vrcp.pop %v1252
      %v1257 = vmul.f32 %v1252, %v1256
      %v1258 = vsub.f32 1.0, %v1257
      %v1259 = vmul.f32 %v1256, %v1258
      %v1260 = vadd.f32 %v1256, %v1259
      %vm1261 = vweird.f32 %v1252
      %vm1262 = vweird.f32 %v1256
      %vm1263 = vmor %vm1261, %vm1262
      %v1264 = vsel %vm1263, %v1256, %v1260
      %v1265 = vand.u32 2147483647, %v1252
      %vm1266 = vcmp.eq.f32.partialorder %v1265, 8.507059e+37
      %v1267 = vand.u32 %v1252, 2147483648
      %v1268 = vor.u32 1.1754944e-38, %v1267
      %v1269 = vsel %vm1266, %v1268, %v1264
      %v1270 = vmul.f32 1.0, %v1269
      %v1271 = vrcp.pop %v1253
      %v1272 = vmul.f32 %v1253, %v1271
      %v1273 = vsub.f32 1.0, %v1272
      %v1274 = vmul.f32 %v1271, %v1273
      %v1275 = vadd.f32 %v1271, %v1274
      %vm1276 = vweird.f32 %v1253
      %vm1277 = vweird.f32 %v1271
      %vm1278 = vmor %vm1276, %vm1277
      %v1279 = vsel %vm1278, %v1271, %v1275
      %v1280 = vand.u32 2147483647, %v1253
      %vm1281 = vcmp.eq.f32.partialorder %v1280, 8.507059e+37
      %v1282 = vand.u32 %v1253, 2147483648
      %v1283 = vor.u32 1.1754944e-38, %v1282
      %v1284 = vsel %vm1281, %v1283, %v1279
      %v1285 = vmul.f32 1.0, %v1284
      %v1286 = vrcp.pop %v1254
      %v1287 = vmul.f32 %v1254, %v1286
      %v1288 = vsub.f32 1.0, %v1287
      %v1289 = vmul.f32 %v1286, %v1288
      %v1290 = vadd.f32 %v1286, %v1289
      %vm1291 = vweird.f32 %v1254
      %vm1292 = vweird.f32 %v1286
      %vm1293 = vmor %vm1291, %vm1292
      %v1294 = vsel %vm1293, %v1286, %v1290
      %v1295 = vand.u32 2147483647, %v1254
      %vm1296 = vcmp.eq.f32.partialorder %v1295, 8.507059e+37
      %v1297 = vand.u32 %v1254, 2147483648
      %v1298 = vor.u32 1.1754944e-38, %v1297
      %v1299 = vsel %vm1296, %v1298, %v1294
      %v1300 = vmul.f32 1.0, %v1299
      %v1301 = vrcp.pop %v1255
      %v1302 = vmul.f32 %v1255, %v1301
      %v1303 = vsub.f32 1.0, %v1302
      %v1304 = vmul.f32 %v1301, %v1303
      %v1305 = vadd.f32 %v1301, %v1304
      %vm1306 = vweird.f32 %v1255
      %vm1307 = vweird.f32 %v1301
      %vm1308 = vmor %vm1306, %vm1307
      %v1309 = vsel %vm1308, %v1301, %v1305
      %v1310 = vand.u32 2147483647, %v1255
      %vm1311 = vcmp.eq.f32.partialorder %v1310, 8.507059e+37
      %v1312 = vand.u32 %v1255, 2147483648
      %v1313 = vor.u32 1.1754944e-38, %v1312
      %v1314 = vsel %vm1311, %v1313, %v1309
      %v1315 = vmul.f32 1.0, %v1314
      %v1316 = vmul.f32 %v1236, %v1270
      %v1317 = vmul.f32 %v1237, %v1285
      %v1318 = vmul.f32 %v1238, %v1300
      %v1319 = vmul.f32 %v1239, %v1315
      %s1320 = scalar_lea.vmem %s6, 64
      %v1321 = vld [vmem:[%s1320] sm:$0xff]
      %v1322 = vld [vmem:[%s1320 + $0x8] sm:$0xff]
      %v1323 = vld [vmem:[%s1320 + $0x10] sm:$0xff]
      %v1324 = vld [vmem:[%s1320 + $0x18] sm:$0xff]
      %v1325 = vld [vmem:[%s1320 + $0x20] sm:$0xff]
      %v1326 = vld [vmem:[%s1320 + $0x28] sm:$0xff]
      %v1327 = vld [vmem:[%s1320 + $0x30] sm:$0xff]
      %v1328 = vld [vmem:[%s1320 + $0x38] sm:$0xff]
      %s1329 = scalar_lea.vmem %s7, 64
      %v1330 = vld [vmem:[%s1329] sm:$0xff]
      %v1331 = vld [vmem:[%s1329 + $0x8] sm:$0xff]
      %v1332 = vld [vmem:[%s1329 + $0x10] sm:$0xff]
      %v1333 = vld [vmem:[%s1329 + $0x18] sm:$0xff]
      %v1334 = vld [vmem:[%s1329 + $0x20] sm:$0xff]
      %v1335 = vld [vmem:[%s1329 + $0x28] sm:$0xff]
      %v1336 = vld [vmem:[%s1329 + $0x30] sm:$0xff]
      %v1337 = vld [vmem:[%s1329 + $0x38] sm:$0xff]
      %1339 = vset.pattern.permute.xlu0 0
      %1340 = vperm.xlu0 %1339, %v1330
      %v1341 = vpop.permute.xlu0 %1340
      %1343 = vset.pattern.permute.xlu0 0
      %1344 = vperm.xlu0 %1343, %v1331
      %v1345 = vpop.permute.xlu0 %1344
      %1347 = vset.pattern.permute.xlu0 0
      %1348 = vperm.xlu0 %1347, %v1332
      %v1349 = vpop.permute.xlu0 %1348
      %1351 = vset.pattern.permute.xlu0 0
      %1352 = vperm.xlu0 %1351, %v1333
      %v1353 = vpop.permute.xlu0 %1352
      %1355 = vset.pattern.permute.xlu0 0
      %1356 = vperm.xlu0 %1355, %v1334
      %v1357 = vpop.permute.xlu0 %1356
      %1360 = vset.pattern.permute.xlu0 0
      %1361 = vperm.xlu0 %1360, %v1335
      %v1362 = vpop.permute.xlu0 %1361
      %1365 = vset.pattern.permute.xlu0 0
      %1366 = vperm.xlu0 %1365, %v1336
      %v1367 = vpop.permute.xlu0 %1366
      %1370 = vset.pattern.permute.xlu0 0
      %1371 = vperm.xlu0 %1370, %v1337
      %v1372 = vpop.permute.xlu0 %1371
      %v1375 = vsel %vm987, %v1321, 0
      %v1378 = vsel %vm987, %v1322, 0
      %v1381 = vsel %vm987, %v1323, 0
      %v1384 = vsel %vm987, %v1324, 0
      %v1387 = vsel %vm987, %v1325, 0
      %v1390 = vsel %vm987, %v1326, 0
      %v1393 = vsel %vm987, %v1327, 0
      %v1396 = vsel %vm987, %v1328, 0
      %1398 = vmatpush.msra.mxu0 0.0
      %1399 = vmatpush.msra.mxu0 0.0
      %1400 = vmatpush.msra.mxu0 0.0
      %1401 = vmatpush.msra.mxu0 0.0
      %1402 = vmatpush.msra.mxu0 0.0
      %1403 = vmatpush.msra.mxu0 0.0
      %1404 = vmatpush.msra.mxu0 0.0
      %1405 = vmatpush.msra.mxu0 0.0
      %1406 = vmatpush.msra.mxu0 0.0
      %1407 = vmatpush.msra.mxu0 0.0
      %1408 = vmatpush.msra.mxu0 0.0
      %1409 = vmatpush.msra.mxu0 0.0
      %1410 = vmatpush.msra.mxu0 %v1319
      %1411 = vmatpush.msra.mxu0 %v1318
      %1412 = vmatpush.msra.mxu0 %v1317
      %1413 = vmatpush.msra.mxu0 %v1316
      %1414 = vmatmul.f32.gmra.mxu0 %v1375
      %v1415 = vpop.f32.mrf.mxu0
      %1416 = vmatmul.f32.gmra.mxu0 %v1378
      %v1417 = vpop.f32.mrf.mxu0
      %1418 = vmatmul.f32.gmra.mxu0 %v1381
      %v1419 = vpop.f32.mrf.mxu0
      %1420 = vmatmul.f32.gmra.mxu0 %v1384
      %v1421 = vpop.f32.mrf.mxu0
      %1422 = vmatmul.f32.gmra.mxu0 %v1387
      %v1423 = vpop.f32.mrf.mxu0
      %v1424 = vadd.f32 %v1357, %v1423
      %1425 = vmatmul.f32.gmra.mxu0 %v1390
      %v1426 = vpop.f32.mrf.mxu0
      %v1427 = vadd.f32 %v1362, %v1426
      %1428 = vmatmul.f32.gmra.mxu0 %v1393
      %v1429 = vpop.f32.mrf.mxu0
      %v1430 = vadd.f32 %v1367, %v1429
      %1431 = vmatmul.f32.gmra.mxu0 %v1396
      %v1432 = vpop.f32.mrf.mxu0
      %v1433 = vadd.f32 %v1372, %v1432
      %1434 = vdwg.mxu0
      %v1435 = vadd.f32 %v1057, %v1424
      %v1436 = vadd.f32 %v1058, %v1427
      %v1437 = vadd.f32 %v1059, %v1430
      %v1438 = vadd.f32 %v1060, %v1433
      %v1439 = vld [vmem:[%s9] sm:$0xf]
      %1441 = vset.pattern.permute.xlu0 0
      %1442 = vperm.xlu0 %1441, %v1439
      %v1443 = vpop.permute.xlu0 %1442
      %v1446 = vsel %vm987, %v651, 0
      %1448 = vmatpush.msra.mxu0 0.0
      %1449 = vmatpush.msra.mxu0 0.0
      %1450 = vmatpush.msra.mxu0 0.0
      %1451 = vmatpush.msra.mxu0 0.0
      %1452 = vmatpush.msra.mxu0 0.0
      %1453 = vmatpush.msra.mxu0 0.0
      %1454 = vmatpush.msra.mxu0 0.0
      %1455 = vmatpush.msra.mxu0 0.0
      %1456 = vmatpush.msra.mxu0 0.0
      %1457 = vmatpush.msra.mxu0 0.0
      %1458 = vmatpush.msra.mxu0 0.0
      %1459 = vmatpush.msra.mxu0 0.0
      %1460 = vmatpush.msra.mxu0 %v1438
      %1461 = vmatpush.msra.mxu0 %v1437
      %1462 = vmatpush.msra.mxu0 %v1436
      %1463 = vmatpush.msra.mxu0 %v1435
      %1464 = vmatmul.f32.gmra.mxu0 %v1446
      %v1465 = vpop.f32.mrf.mxu0
      %v1466 = vadd.f32 %v1443, %v1465
      %1467 = vdwg.mxu0
      %v1468 = vadd.f32 %v576, %v1466
      %v1469 = vld [vmem:[%s1] sm:$0xff]
      %v1470 = vld [vmem:[%s1 + $0x8] sm:$0xff]
      %vm1471 = vcmask 130048
      %v1473 = vsel %vm1471, %v1468, 0
      %1475 = vmatpush.msra.mxu0 0.0
      %1476 = vmatpush.msra.mxu0 0.0
      %1477 = vmatpush.msra.mxu0 0.0
      %1478 = vmatpush.msra.mxu0 0.0
      %1479 = vmatpush.msra.mxu0 0.0
      %1480 = vmatpush.msra.mxu0 0.0
      %1481 = vmatpush.msra.mxu0 0.0
      %1482 = vmatpush.msra.mxu0 0.0
      %1483 = vmatpush.msra.mxu0 0.0
      %1484 = vmatpush.msra.mxu0 0.0
      %1485 = vmatpush.msra.mxu0 0.0
      %1486 = vmatpush.msra.mxu0 0.0
      %1487 = vmatpush.msra.mxu0 0.0
      %1488 = vmatpush.msra.mxu0 0.0
      %1489 = vmatpush.msra.mxu0 %v1470
      %1490 = vmatpush.msra.mxu0 %v1469
      %1491 = vmatmul.f32.gmra.mxu0 %v1473
      %v1492 = vpop.f32.mrf.mxu0
      %v1493 = vadd.f32 0.0, %v1492
      %1494 = vdwg.mxu0
      %v1495 = vld [vmem:[%s10] sm:$0xff]
      %v1496 = vld [vmem:[%s10 + $0x8] sm:$0xff]
      %v1497 = vld [vmem:[%s10 + $0x10] sm:$0xff]
      %v1498 = vld [vmem:[%s10 + $0x18] sm:$0xff]
      %v1499 = vld [vmem:[%s11] sm:$0xff]
      %v1500 = vld [vmem:[%s11 + $0x8] sm:$0xff]
      %v1501 = vld [vmem:[%s11 + $0x10] sm:$0xff]
      %v1502 = vld [vmem:[%s11 + $0x18] sm:$0xff]
      %1504 = vset.pattern.permute.xlu0 0
      %1505 = vperm.xlu0 %1504, %v1499
      %v1506 = vpop.permute.xlu0 %1505
      %1509 = vset.pattern.permute.xlu0 0
      %1510 = vperm.xlu0 %1509, %v1500
      %v1511 = vpop.permute.xlu0 %1510
      %1514 = vset.pattern.permute.xlu0 0
      %1515 = vperm.xlu0 %1514, %v1501
      %v1516 = vpop.permute.xlu0 %1515
      %1519 = vset.pattern.permute.xlu0 0
      %1520 = vperm.xlu0 %1519, %v1502
      %v1521 = vpop.permute.xlu0 %1520
      %v1524 = vsel %vm605, %v1495, 0
      %v1527 = vsel %vm605, %v1496, 0
      %v1530 = vsel %vm605, %v1497, 0
      %v1533 = vsel %vm605, %v1498, 0
      %v1536 = vsel %vm618, %v1493, 0
      %1538 = vmatpush.msra.mxu0 0.0
      %1539 = vmatpush.msra.mxu0 0.0
      %1540 = vmatpush.msra.mxu0 0.0
      %1541 = vmatpush.msra.mxu0 0.0
      %1542 = vmatpush.msra.mxu0 0.0
      %1543 = vmatpush.msra.mxu0 0.0
      %1544 = vmatpush.msra.mxu0 0.0
      %1545 = vmatpush.msra.mxu0 0.0
      %1546 = vmatpush.msra.mxu0 0.0
      %1547 = vmatpush.msra.mxu0 0.0
      %1548 = vmatpush.msra.mxu0 0.0
      %1549 = vmatpush.msra.mxu0 0.0
      %1550 = vmatpush.msra.mxu0 0.0
      %1551 = vmatpush.msra.mxu0 0.0
      %1552 = vmatpush.msra.mxu0 0.0
      %1553 = vmatpush.msra.mxu0 %v1536
      %1554 = vmatmul.f32.gmra.mxu0 %v1524
      %v1555 = vpop.f32.mrf.mxu0
      %v1556 = vadd.f32 %v1506, %v1555
      %1557 = vmatmul.f32.gmra.mxu0 %v1527
      %v1558 = vpop.f32.mrf.mxu0
      %v1559 = vadd.f32 %v1511, %v1558
      %1560 = vmatmul.f32.gmra.mxu0 %v1530
      %v1561 = vpop.f32.mrf.mxu0
      %v1562 = vadd.f32 %v1516, %v1561
      %1563 = vmatmul.f32.gmra.mxu0 %v1533
      %v1564 = vpop.f32.mrf.mxu0
      %v1565 = vadd.f32 %v1521, %v1564
      %1566 = vdwg.mxu0
      %v1567 = vld [vmem:[%s16] sm:$0xf]
      %1572 = vrot.lane.b32.xlu0 %v1556, 2
      %v1573 = vpop.permute.xlu0 %1572
      %1574 = vrot.lane.b32.xlu0 %v1559, 2
      %v1575 = vpop.permute.xlu0 %1574
      %1576 = vrot.lane.b32.xlu0 %v1562, 2
      %v1577 = vpop.permute.xlu0 %1576
      %1578 = vrot.lane.b32.xlu0 %v1565, 2
      %v1579 = vpop.permute.xlu0 %1578
      %vm1584 = vcmask 277520
      %1585 = vst.msk [vmem:[#allocation2] sm:$0xff] %vm1584, %v1573
      %1586 = vst.msk [vmem:[#allocation2 + $0x8] sm:$0xff] %vm1584, %v1575
      %1587 = vst.msk [vmem:[#allocation2 + $0x10] sm:$0xff] %vm1584, %v1577
      %1588 = vst.msk [vmem:[#allocation2 + $0x18] sm:$0xff] %vm1584, %v1579
      %v1589 = vld [vmem:[#allocation2] sm:$0xff]
      %v1590 = vld [vmem:[#allocation2 + $0x8] sm:$0xff]
      %v1591 = vld [vmem:[#allocation2 + $0x10] sm:$0xff]
      %v1592 = vld [vmem:[#allocation2 + $0x18] sm:$0xff]
      %1597 = vrot.lane.b32.xlu0 %v1589, 127
      %v1598 = vpop.permute.xlu0 %1597
      %1599 = vrot.lane.b32.xlu0 %v1590, 127
      %v1600 = vpop.permute.xlu0 %1599
      %1601 = vrot.lane.b32.xlu0 %v1591, 127
      %v1602 = vpop.permute.xlu0 %1601
      %1603 = vrot.lane.b32.xlu0 %v1592, 127
      %v1604 = vpop.permute.xlu0 %1603
      %1605 = vrot.lane.b32.xlu0 %v1589, 126
      %v1606 = vpop.permute.xlu0 %1605
      %1607 = vrot.lane.b32.xlu0 %v1590, 126
      %v1608 = vpop.permute.xlu0 %1607
      %1609 = vrot.lane.b32.xlu0 %v1591, 126
      %v1610 = vpop.permute.xlu0 %1609
      %1611 = vrot.lane.b32.xlu0 %v1592, 126
      %v1612 = vpop.permute.xlu0 %1611
      %v1613 = vld [vmem:[%s12] sm:$0xff]
      %v1614 = vld [vmem:[%s12 + $0x8] sm:$0xff]
      %v1615 = vld [vmem:[%s12 + $0x10] sm:$0xff]
      %v1616 = vld [vmem:[%s12 + $0x18] sm:$0xff]
      %v1617 = vld [vmem:[%s12 + $0x20] sm:$0xff]
      %v1618 = vld [vmem:[%s12 + $0x28] sm:$0xff]
      %v1619 = vld [vmem:[%s12 + $0x30] sm:$0xff]
      %v1620 = vld [vmem:[%s12 + $0x38] sm:$0xff]
      %v1621 = vld [vmem:[%s13] sm:$0xff]
      %v1622 = vld [vmem:[%s13 + $0x8] sm:$0xff]
      %v1623 = vld [vmem:[%s13 + $0x10] sm:$0xff]
      %v1624 = vld [vmem:[%s13 + $0x18] sm:$0xff]
      %v1625 = vld [vmem:[%s13 + $0x20] sm:$0xff]
      %v1626 = vld [vmem:[%s13 + $0x28] sm:$0xff]
      %v1627 = vld [vmem:[%s13 + $0x30] sm:$0xff]
      %v1628 = vld [vmem:[%s13 + $0x38] sm:$0xff]
      %1630 = vset.pattern.permute.xlu0 0
      %1631 = vperm.xlu0 %1630, %v1621
      %v1632 = vpop.permute.xlu0 %1631
      %1635 = vset.pattern.permute.xlu0 0
      %1636 = vperm.xlu0 %1635, %v1622
      %v1637 = vpop.permute.xlu0 %1636
      %1640 = vset.pattern.permute.xlu0 0
      %1641 = vperm.xlu0 %1640, %v1623
      %v1642 = vpop.permute.xlu0 %1641
      %1645 = vset.pattern.permute.xlu0 0
      %1646 = vperm.xlu0 %1645, %v1624
      %v1647 = vpop.permute.xlu0 %1646
      %1650 = vset.pattern.permute.xlu0 0
      %1651 = vperm.xlu0 %1650, %v1625
      %v1652 = vpop.permute.xlu0 %1651
      %1655 = vset.pattern.permute.xlu0 0
      %1656 = vperm.xlu0 %1655, %v1626
      %v1657 = vpop.permute.xlu0 %1656
      %1660 = vset.pattern.permute.xlu0 0
      %1661 = vperm.xlu0 %1660, %v1627
      %v1662 = vpop.permute.xlu0 %1661
      %1665 = vset.pattern.permute.xlu0 0
      %1666 = vperm.xlu0 %1665, %v1628
      %v1667 = vpop.permute.xlu0 %1666
      %1669 = vrot.lane.b32.xlu0 %v1598, 127
      %v1670 = vpop.permute.xlu0 %1669
      %1671 = vrot.lane.b32.xlu0 %v1600, 127
      %v1672 = vpop.permute.xlu0 %1671
      %1673 = vrot.lane.b32.xlu0 %v1602, 127
      %v1674 = vpop.permute.xlu0 %1673
      %1675 = vrot.lane.b32.xlu0 %v1604, 127
      %v1676 = vpop.permute.xlu0 %1675
      %1677 = vrot.lane.b32.xlu0 %v1606, 127
      %v1678 = vpop.permute.xlu0 %1677
      %1679 = vrot.lane.b32.xlu0 %v1608, 127
      %v1680 = vpop.permute.xlu0 %1679
      %1681 = vrot.lane.b32.xlu0 %v1610, 127
      %v1682 = vpop.permute.xlu0 %1681
      %1683 = vrot.lane.b32.xlu0 %v1612, 127
      %v1684 = vpop.permute.xlu0 %1683
      %v1698 = vsel %vm781, %v1613, 0
      %v1701 = vsel %vm781, %v1614, 0
      %v1704 = vsel %vm781, %v1615, 0
      %v1707 = vsel %vm781, %v1616, 0
      %v1710 = vsel %vm781, %v1617, 0
      %v1713 = vsel %vm781, %v1618, 0
      %v1716 = vsel %vm781, %v1619, 0
      %v1719 = vsel %vm781, %v1620, 0
      %1721 = vmatpush.msra.mxu0 0.0
      %1722 = vmatpush.msra.mxu0 0.0
      %1723 = vmatpush.msra.mxu0 0.0
      %1724 = vmatpush.msra.mxu0 0.0
      %1725 = vmatpush.msra.mxu0 %v1684
      %1726 = vmatpush.msra.mxu0 %v1682
      %1727 = vmatpush.msra.mxu0 %v1680
      %1728 = vmatpush.msra.mxu0 %v1678
      %1729 = vmatpush.msra.mxu0 %v1676
      %1730 = vmatpush.msra.mxu0 %v1674
      %1731 = vmatpush.msra.mxu0 %v1672
      %1732 = vmatpush.msra.mxu0 %v1670
      %1733 = vmatpush.msra.mxu0 %v1604
      %1734 = vmatpush.msra.mxu0 %v1602
      %1735 = vmatpush.msra.mxu0 %v1600
      %1736 = vmatpush.msra.mxu0 %v1598
      %1737 = vmatmul.f32.gmra.mxu0 %v1698
      %v1738 = vpop.f32.mrf.mxu0
      %v1739 = vadd.f32 %v1632, %v1738
      %1740 = vmatmul.f32.gmra.mxu0 %v1701
      %v1741 = vpop.f32.mrf.mxu0
      %v1742 = vadd.f32 %v1637, %v1741
      %1743 = vmatmul.f32.gmra.mxu0 %v1704
      %v1744 = vpop.f32.mrf.mxu0
      %v1745 = vadd.f32 %v1642, %v1744
      %1746 = vmatmul.f32.gmra.mxu0 %v1707
      %v1747 = vpop.f32.mrf.mxu0
      %v1748 = vadd.f32 %v1647, %v1747
      %1749 = vmatmul.f32.gmra.mxu0 %v1710
      %v1750 = vpop.f32.mrf.mxu0
      %v1751 = vadd.f32 %v1652, %v1750
      %1752 = vmatmul.f32.gmra.mxu0 %v1713
      %v1753 = vpop.f32.mrf.mxu0
      %v1754 = vadd.f32 %v1657, %v1753
      %1755 = vmatmul.f32.gmra.mxu0 %v1716
      %v1756 = vpop.f32.mrf.mxu0
      %v1757 = vadd.f32 %v1662, %v1756
      %1758 = vmatmul.f32.gmra.mxu0 %v1719
      %v1759 = vpop.f32.mrf.mxu0
      %v1760 = vadd.f32 %v1667, %v1759
      %1761 = vdwg.mxu0
      %v1762 = vtanh.pop %v1739
      %v1763 = vtanh.pop %v1742
      %v1764 = vtanh.pop %v1745
      %v1765 = vtanh.pop %v1748
      %v1766 = vxor.u32 %v1751, 2147483648
      %v1767 = vxor.u32 %v1754, 2147483648
      %v1768 = vxor.u32 %v1757, 2147483648
      %v1769 = vxor.u32 %v1760, 2147483648
      %v1770 = vmul.f32 %v1766, 1.442695
      %v1771 = vpow.pop %v1770
      %v1772 = vmul.f32 %v1767, 1.442695
      %v1773 = vpow.pop %v1772
      %v1774 = vmul.f32 %v1768, 1.442695
      %v1775 = vpow.pop %v1774
      %v1776 = vmul.f32 %v1769, 1.442695
      %v1777 = vpow.pop %v1776
      %v1778 = vadd.f32 %v1771, 1.0
      %v1779 = vadd.f32 %v1773, 1.0
      %v1780 = vadd.f32 %v1775, 1.0
      %v1781 = vadd.f32 %v1777, 1.0
      %v1782 = vrcp.pop %v1778
      %v1783 = vmul.f32 %v1778, %v1782
      %v1784 = vsub.f32 1.0, %v1783
      %v1785 = vmul.f32 %v1782, %v1784
      %v1786 = vadd.f32 %v1782, %v1785
      %vm1787 = vweird.f32 %v1778
      %vm1788 = vweird.f32 %v1782
      %vm1789 = vmor %vm1787, %vm1788
      %v1790 = vsel %vm1789, %v1782, %v1786
      %v1791 = vand.u32 2147483647, %v1778
      %vm1792 = vcmp.eq.f32.partialorder %v1791, 8.507059e+37
      %v1793 = vand.u32 %v1778, 2147483648
      %v1794 = vor.u32 1.1754944e-38, %v1793
      %v1795 = vsel %vm1792, %v1794, %v1790
      %v1796 = vmul.f32 1.0, %v1795
      %v1797 = vrcp.pop %v1779
      %v1798 = vmul.f32 %v1779, %v1797
      %v1799 = vsub.f32 1.0, %v1798
      %v1800 = vmul.f32 %v1797, %v1799
      %v1801 = vadd.f32 %v1797, %v1800
      %vm1802 = vweird.f32 %v1779
      %vm1803 = vweird.f32 %v1797
      %vm1804 = vmor %vm1802, %vm1803
      %v1805 = vsel %vm1804, %v1797, %v1801
      %v1806 = vand.u32 2147483647, %v1779
      %vm1807 = vcmp.eq.f32.partialorder %v1806, 8.507059e+37
      %v1808 = vand.u32 %v1779, 2147483648
      %v1809 = vor.u32 1.1754944e-38, %v1808
      %v1810 = vsel %vm1807, %v1809, %v1805
      %v1811 = vmul.f32 1.0, %v1810
      %v1812 = vrcp.pop %v1780
      %v1813 = vmul.f32 %v1780, %v1812
      %v1814 = vsub.f32 1.0, %v1813
      %v1815 = vmul.f32 %v1812, %v1814
      %v1816 = vadd.f32 %v1812, %v1815
      %vm1817 = vweird.f32 %v1780
      %vm1818 = vweird.f32 %v1812
      %vm1819 = vmor %vm1817, %vm1818
      %v1820 = vsel %vm1819, %v1812, %v1816
      %v1821 = vand.u32 2147483647, %v1780
      %vm1822 = vcmp.eq.f32.partialorder %v1821, 8.507059e+37
      %v1823 = vand.u32 %v1780, 2147483648
      %v1824 = vor.u32 1.1754944e-38, %v1823
      %v1825 = vsel %vm1822, %v1824, %v1820
      %v1826 = vmul.f32 1.0, %v1825
      %v1827 = vrcp.pop %v1781
      %v1828 = vmul.f32 %v1781, %v1827
      %v1829 = vsub.f32 1.0, %v1828
      %v1830 = vmul.f32 %v1827, %v1829
      %v1831 = vadd.f32 %v1827, %v1830
      %vm1832 = vweird.f32 %v1781
      %vm1833 = vweird.f32 %v1827
      %vm1834 = vmor %vm1832, %vm1833
      %v1835 = vsel %vm1834, %v1827, %v1831
      %v1836 = vand.u32 2147483647, %v1781
      %vm1837 = vcmp.eq.f32.partialorder %v1836, 8.507059e+37
      %v1838 = vand.u32 %v1781, 2147483648
      %v1839 = vor.u32 1.1754944e-38, %v1838
      %v1840 = vsel %vm1837, %v1839, %v1835
      %v1841 = vmul.f32 1.0, %v1840
      %v1842 = vmul.f32 %v1762, %v1796
      %v1843 = vmul.f32 %v1763, %v1811
      %v1844 = vmul.f32 %v1764, %v1826
      %v1845 = vmul.f32 %v1765, %v1841
      %v1846 = vld [vmem:[%s14] sm:$0xff]
      %v1847 = vld [vmem:[%s14 + $0x8] sm:$0xff]
      %v1848 = vld [vmem:[%s14 + $0x10] sm:$0xff]
      %v1849 = vld [vmem:[%s14 + $0x18] sm:$0xff]
      %v1850 = vld [vmem:[%s14 + $0x20] sm:$0xff]
      %v1851 = vld [vmem:[%s14 + $0x28] sm:$0xff]
      %v1852 = vld [vmem:[%s14 + $0x30] sm:$0xff]
      %v1853 = vld [vmem:[%s14 + $0x38] sm:$0xff]
      %v1854 = vld [vmem:[%s15] sm:$0xff]
      %v1855 = vld [vmem:[%s15 + $0x8] sm:$0xff]
      %v1856 = vld [vmem:[%s15 + $0x10] sm:$0xff]
      %v1857 = vld [vmem:[%s15 + $0x18] sm:$0xff]
      %v1858 = vld [vmem:[%s15 + $0x20] sm:$0xff]
      %v1859 = vld [vmem:[%s15 + $0x28] sm:$0xff]
      %v1860 = vld [vmem:[%s15 + $0x30] sm:$0xff]
      %v1861 = vld [vmem:[%s15 + $0x38] sm:$0xff]
      %1863 = vset.pattern.permute.xlu0 0
      %1864 = vperm.xlu0 %1863, %v1854
      %v1865 = vpop.permute.xlu0 %1864
      %1868 = vset.pattern.permute.xlu0 0
      %1869 = vperm.xlu0 %1868, %v1855
      %v1870 = vpop.permute.xlu0 %1869
      %1873 = vset.pattern.permute.xlu0 0
      %1874 = vperm.xlu0 %1873, %v1856
      %v1875 = vpop.permute.xlu0 %1874
      %1878 = vset.pattern.permute.xlu0 0
      %1879 = vperm.xlu0 %1878, %v1857
      %v1880 = vpop.permute.xlu0 %1879
      %1883 = vset.pattern.permute.xlu0 0
      %1884 = vperm.xlu0 %1883, %v1858
      %v1885 = vpop.permute.xlu0 %1884
      %1888 = vset.pattern.permute.xlu0 0
      %1889 = vperm.xlu0 %1888, %v1859
      %v1890 = vpop.permute.xlu0 %1889
      %1893 = vset.pattern.permute.xlu0 0
      %1894 = vperm.xlu0 %1893, %v1860
      %v1895 = vpop.permute.xlu0 %1894
      %1898 = vset.pattern.permute.xlu0 0
      %1899 = vperm.xlu0 %1898, %v1861
      %v1900 = vpop.permute.xlu0 %1899
      %v1903 = vsel %vm987, %v1846, 0
      %v1906 = vsel %vm987, %v1847, 0
      %v1909 = vsel %vm987, %v1848, 0
      %v1912 = vsel %vm987, %v1849, 0
      %v1915 = vsel %vm987, %v1850, 0
      %v1918 = vsel %vm987, %v1851, 0
      %v1921 = vsel %vm987, %v1852, 0
      %v1924 = vsel %vm987, %v1853, 0
      %1926 = vmatpush.msra.mxu0 0.0
      %1927 = vmatpush.msra.mxu0 0.0
      %1928 = vmatpush.msra.mxu0 0.0
      %1929 = vmatpush.msra.mxu0 0.0
      %1930 = vmatpush.msra.mxu0 0.0
      %1931 = vmatpush.msra.mxu0 0.0
      %1932 = vmatpush.msra.mxu0 0.0
      %1933 = vmatpush.msra.mxu0 0.0
      %1934 = vmatpush.msra.mxu0 0.0
      %1935 = vmatpush.msra.mxu0 0.0
      %1936 = vmatpush.msra.mxu0 0.0
      %1937 = vmatpush.msra.mxu0 0.0
      %1938 = vmatpush.msra.mxu0 %v1845
      %1939 = vmatpush.msra.mxu0 %v1844
      %1940 = vmatpush.msra.mxu0 %v1843
      %1941 = vmatpush.msra.mxu0 %v1842
      %1942 = vmatmul.f32.gmra.mxu0 %v1903
      %v1943 = vpop.f32.mrf.mxu0
      %v1944 = vadd.f32 %v1865, %v1943
      %1945 = vmatmul.f32.gmra.mxu0 %v1906
      %v1946 = vpop.f32.mrf.mxu0
      %v1947 = vadd.f32 %v1870, %v1946
      %1948 = vmatmul.f32.gmra.mxu0 %v1909
      %v1949 = vpop.f32.mrf.mxu0
      %v1950 = vadd.f32 %v1875, %v1949
      %1951 = vmatmul.f32.gmra.mxu0 %v1912
      %v1952 = vpop.f32.mrf.mxu0
      %v1953 = vadd.f32 %v1880, %v1952
      %1954 = vmatmul.f32.gmra.mxu0 %v1915
      %v1955 = vpop.f32.mrf.mxu0
      %v1956 = vadd.f32 %v1885, %v1955
      %1957 = vmatmul.f32.gmra.mxu0 %v1918
      %v1958 = vpop.f32.mrf.mxu0
      %v1959 = vadd.f32 %v1890, %v1958
      %1960 = vmatmul.f32.gmra.mxu0 %v1921
      %v1961 = vpop.f32.mrf.mxu0
      %v1962 = vadd.f32 %v1895, %v1961
      %1963 = vmatmul.f32.gmra.mxu0 %v1924
      %v1964 = vpop.f32.mrf.mxu0
      %v1965 = vadd.f32 %v1900, %v1964
      %1966 = vdwg.mxu0
      %v1967 = vadd.f32 %v1556, %v1944
      %v1968 = vadd.f32 %v1559, %v1947
      %v1969 = vadd.f32 %v1562, %v1950
      %v1970 = vadd.f32 %v1565, %v1953
      %v1971 = vadd.f32 %v1956, 0.0
      %v1972 = vadd.f32 %v1959, 0.0
      %v1973 = vadd.f32 %v1962, 0.0
      %v1974 = vadd.f32 %v1965, 0.0
      %1979 = vrot.lane.b32.xlu0 %v1967, 2
      %v1980 = vpop.permute.xlu0 %1979
      %1981 = vrot.lane.b32.xlu0 %v1968, 2
      %v1982 = vpop.permute.xlu0 %1981
      %1983 = vrot.lane.b32.xlu0 %v1969, 2
      %v1984 = vpop.permute.xlu0 %1983
      %1985 = vrot.lane.b32.xlu0 %v1970, 2
      %v1986 = vpop.permute.xlu0 %1985
      %1991 = vst.msk [vmem:[#allocation2] sm:$0xff] %vm1584, %v1980
      %1992 = vst.msk [vmem:[#allocation2 + $0x8] sm:$0xff] %vm1584, %v1982
      %1993 = vst.msk [vmem:[#allocation2 + $0x10] sm:$0xff] %vm1584, %v1984
      %1994 = vst.msk [vmem:[#allocation2 + $0x18] sm:$0xff] %vm1584, %v1986
      %v1995 = vld [vmem:[#allocation2] sm:$0xff]
      %v1996 = vld [vmem:[#allocation2 + $0x8] sm:$0xff]
      %v1997 = vld [vmem:[#allocation2 + $0x10] sm:$0xff]
      %v1998 = vld [vmem:[#allocation2 + $0x18] sm:$0xff]
      %2003 = vrot.lane.b32.xlu0 %v1995, 126
      %v2004 = vpop.permute.xlu0 %2003
      %2005 = vrot.lane.b32.xlu0 %v1996, 126
      %v2006 = vpop.permute.xlu0 %2005
      %2007 = vrot.lane.b32.xlu0 %v1997, 126
      %v2008 = vpop.permute.xlu0 %2007
      %2009 = vrot.lane.b32.xlu0 %v1998, 126
      %v2010 = vpop.permute.xlu0 %2009
      %2015 = vrot.lane.b32.xlu0 %v1995, 124
      %v2016 = vpop.permute.xlu0 %2015
      %2017 = vrot.lane.b32.xlu0 %v1996, 124
      %v2018 = vpop.permute.xlu0 %2017
      %2019 = vrot.lane.b32.xlu0 %v1997, 124
      %v2020 = vpop.permute.xlu0 %2019
      %2021 = vrot.lane.b32.xlu0 %v1998, 124
      %v2022 = vpop.permute.xlu0 %2021
      %s2027 = scalar_lea.vmem %s12, 64
      %v2028 = vld [vmem:[%s2027] sm:$0xff]
      %v2029 = vld [vmem:[%s2027 + $0x8] sm:$0xff]
      %v2030 = vld [vmem:[%s2027 + $0x10] sm:$0xff]
      %v2031 = vld [vmem:[%s2027 + $0x18] sm:$0xff]
      %v2032 = vld [vmem:[%s2027 + $0x20] sm:$0xff]
      %v2033 = vld [vmem:[%s2027 + $0x28] sm:$0xff]
      %v2034 = vld [vmem:[%s2027 + $0x30] sm:$0xff]
      %v2035 = vld [vmem:[%s2027 + $0x38] sm:$0xff]
      %s2036 = scalar_lea.vmem %s13, 64
      %v2037 = vld [vmem:[%s2036] sm:$0xff]
      %v2038 = vld [vmem:[%s2036 + $0x8] sm:$0xff]
      %v2039 = vld [vmem:[%s2036 + $0x10] sm:$0xff]
      %v2040 = vld [vmem:[%s2036 + $0x18] sm:$0xff]
      %v2041 = vld [vmem:[%s2036 + $0x20] sm:$0xff]
      %v2042 = vld [vmem:[%s2036 + $0x28] sm:$0xff]
      %v2043 = vld [vmem:[%s2036 + $0x30] sm:$0xff]
      %v2044 = vld [vmem:[%s2036 + $0x38] sm:$0xff]
      %2046 = vset.pattern.permute.xlu0 0
      %2047 = vperm.xlu0 %2046, %v2037
      %v2048 = vpop.permute.xlu0 %2047
      %2051 = vset.pattern.permute.xlu0 0
      %2052 = vperm.xlu0 %2051, %v2038
      %v2053 = vpop.permute.xlu0 %2052
      %2056 = vset.pattern.permute.xlu0 0
      %2057 = vperm.xlu0 %2056, %v2039
      %v2058 = vpop.permute.xlu0 %2057
      %2061 = vset.pattern.permute.xlu0 0
      %2062 = vperm.xlu0 %2061, %v2040
      %v2063 = vpop.permute.xlu0 %2062
      %2066 = vset.pattern.permute.xlu0 0
      %2067 = vperm.xlu0 %2066, %v2041
      %v2068 = vpop.permute.xlu0 %2067
      %2071 = vset.pattern.permute.xlu0 0
      %2072 = vperm.xlu0 %2071, %v2042
      %v2073 = vpop.permute.xlu0 %2072
      %2076 = vset.pattern.permute.xlu0 0
      %2077 = vperm.xlu0 %2076, %v2043
      %v2078 = vpop.permute.xlu0 %2077
      %2081 = vset.pattern.permute.xlu0 0
      %2082 = vperm.xlu0 %2081, %v2044
      %v2083 = vpop.permute.xlu0 %2082
      %v2086 = vsel %vm781, %v2028, 0
      %v2089 = vsel %vm781, %v2029, 0
      %v2092 = vsel %vm781, %v2030, 0
      %v2095 = vsel %vm781, %v2031, 0
      %v2098 = vsel %vm781, %v2032, 0
      %v2101 = vsel %vm781, %v2033, 0
      %v2104 = vsel %vm781, %v2034, 0
      %v2107 = vsel %vm781, %v2035, 0
      %2109 = vmatpush.msra.mxu0 0.0
      %2110 = vmatpush.msra.mxu0 0.0
      %2111 = vmatpush.msra.mxu0 0.0
      %2112 = vmatpush.msra.mxu0 0.0
      %2113 = vmatpush.msra.mxu0 %v2022
      %2114 = vmatpush.msra.mxu0 %v2020
      %2115 = vmatpush.msra.mxu0 %v2018
      %2116 = vmatpush.msra.mxu0 %v2016
      %2117 = vmatpush.msra.mxu0 %v2010
      %2118 = vmatpush.msra.mxu0 %v2008
      %2119 = vmatpush.msra.mxu0 %v2006
      %2120 = vmatpush.msra.mxu0 %v2004
      %2121 = vmatpush.msra.mxu0 %v1998
      %2122 = vmatpush.msra.mxu0 %v1997
      %2123 = vmatpush.msra.mxu0 %v1996
      %2124 = vmatpush.msra.mxu0 %v1995
      %2125 = vmatmul.f32.gmra.mxu0 %v2086
      %v2126 = vpop.f32.mrf.mxu0
      %v2127 = vadd.f32 %v2048, %v2126
      %2128 = vmatmul.f32.gmra.mxu0 %v2089
      %v2129 = vpop.f32.mrf.mxu0
      %v2130 = vadd.f32 %v2053, %v2129
      %2131 = vmatmul.f32.gmra.mxu0 %v2092
      %v2132 = vpop.f32.mrf.mxu0
      %v2133 = vadd.f32 %v2058, %v2132
      %2134 = vmatmul.f32.gmra.mxu0 %v2095
      %v2135 = vpop.f32.mrf.mxu0
      %v2136 = vadd.f32 %v2063, %v2135
      %2137 = vmatmul.f32.gmra.mxu0 %v2098
      %v2138 = vpop.f32.mrf.mxu0
      %v2139 = vadd.f32 %v2068, %v2138
      %2140 = vmatmul.f32.gmra.mxu0 %v2101
      %v2141 = vpop.f32.mrf.mxu0
      %v2142 = vadd.f32 %v2073, %v2141
      %2143 = vmatmul.f32.gmra.mxu0 %v2104
      %v2144 = vpop.f32.mrf.mxu0
      %v2145 = vadd.f32 %v2078, %v2144
      %2146 = vmatmul.f32.gmra.mxu0 %v2107
      %v2147 = vpop.f32.mrf.mxu0
      %v2148 = vadd.f32 %v2083, %v2147
      %2149 = vdwg.mxu0
      %v2150 = vtanh.pop %v2127
      %v2151 = vtanh.pop %v2130
      %v2152 = vtanh.pop %v2133
      %v2153 = vtanh.pop %v2136
      %v2154 = vxor.u32 %v2139, 2147483648
      %v2155 = vxor.u32 %v2142, 2147483648
      %v2156 = vxor.u32 %v2145, 2147483648
      %v2157 = vxor.u32 %v2148, 2147483648
      %v2158 = vmul.f32 %v2154, 1.442695
      %v2159 = vpow.pop %v2158
      %v2160 = vmul.f32 %v2155, 1.442695
      %v2161 = vpow.pop %v2160
      %v2162 = vmul.f32 %v2156, 1.442695
      %v2163 = vpow.pop %v2162
      %v2164 = vmul.f32 %v2157, 1.442695
      %v2165 = vpow.pop %v2164
      %v2166 = vadd.f32 %v2159, 1.0
      %v2167 = vadd.f32 %v2161, 1.0
      %v2168 = vadd.f32 %v2163, 1.0
      %v2169 = vadd.f32 %v2165, 1.0
      %v2170 = vrcp.pop %v2166
      %v2171 = vmul.f32 %v2166, %v2170
      %v2172 = vsub.f32 1.0, %v2171
      %v2173 = vmul.f32 %v2170, %v2172
      %v2174 = vadd.f32 %v2170, %v2173
      %vm2175 = vweird.f32 %v2166
      %vm2176 = vweird.f32 %v2170
      %vm2177 = vmor %vm2175, %vm2176
      %v2178 = vsel %vm2177, %v2170, %v2174
      %v2179 = vand.u32 2147483647, %v2166
      %vm2180 = vcmp.eq.f32.partialorder %v2179, 8.507059e+37
      %v2181 = vand.u32 %v2166, 2147483648
      %v2182 = vor.u32 1.1754944e-38, %v2181
      %v2183 = vsel %vm2180, %v2182, %v2178
      %v2184 = vmul.f32 1.0, %v2183
      %v2185 = vrcp.pop %v2167
      %v2186 = vmul.f32 %v2167, %v2185
      %v2187 = vsub.f32 1.0, %v2186
      %v2188 = vmul.f32 %v2185, %v2187
      %v2189 = vadd.f32 %v2185, %v2188
      %vm2190 = vweird.f32 %v2167
      %vm2191 = vweird.f32 %v2185
      %vm2192 = vmor %vm2190, %vm2191
      %v2193 = vsel %vm2192, %v2185, %v2189
      %v2194 = vand.u32 2147483647, %v2167
      %vm2195 = vcmp.eq.f32.partialorder %v2194, 8.507059e+37
      %v2196 = vand.u32 %v2167, 2147483648
      %v2197 = vor.u32 1.1754944e-38, %v2196
      %v2198 = vsel %vm2195, %v2197, %v2193
      %v2199 = vmul.f32 1.0, %v2198
      %v2200 = vrcp.pop %v2168
      %v2201 = vmul.f32 %v2168, %v2200
      %v2202 = vsub.f32 1.0, %v2201
      %v2203 = vmul.f32 %v2200, %v2202
      %v2204 = vadd.f32 %v2200, %v2203
      %vm2205 = vweird.f32 %v2168
      %vm2206 = vweird.f32 %v2200
      %vm2207 = vmor %vm2205, %vm2206
      %v2208 = vsel %vm2207, %v2200, %v2204
      %v2209 = vand.u32 2147483647, %v2168
      %vm2210 = vcmp.eq.f32.partialorder %v2209, 8.507059e+37
      %v2211 = vand.u32 %v2168, 2147483648
      %v2212 = vor.u32 1.1754944e-38, %v2211
      %v2213 = vsel %vm2210, %v2212, %v2208
      %v2214 = vmul.f32 1.0, %v2213
      %v2215 = vrcp.pop %v2169
      %v2216 = vmul.f32 %v2169, %v2215
      %v2217 = vsub.f32 1.0, %v2216
      %v2218 = vmul.f32 %v2215, %v2217
      %v2219 = vadd.f32 %v2215, %v2218
      %vm2220 = vweird.f32 %v2169
      %vm2221 = vweird.f32 %v2215
      %vm2222 = vmor %vm2220, %vm2221
      %v2223 = vsel %vm2222, %v2215, %v2219
      %v2224 = vand.u32 2147483647, %v2169
      %vm2225 = vcmp.eq.f32.partialorder %v2224, 8.507059e+37
      %v2226 = vand.u32 %v2169, 2147483648
      %v2227 = vor.u32 1.1754944e-38, %v2226
      %v2228 = vsel %vm2225, %v2227, %v2223
      %v2229 = vmul.f32 1.0, %v2228
      %v2230 = vmul.f32 %v2150, %v2184
      %v2231 = vmul.f32 %v2151, %v2199
      %v2232 = vmul.f32 %v2152, %v2214
      %v2233 = vmul.f32 %v2153, %v2229
      %s2234 = scalar_lea.vmem %s14, 64
      %v2235 = vld [vmem:[%s2234] sm:$0xff]
      %v2236 = vld [vmem:[%s2234 + $0x8] sm:$0xff]
      %v2237 = vld [vmem:[%s2234 + $0x10] sm:$0xff]
      %v2238 = vld [vmem:[%s2234 + $0x18] sm:$0xff]
      %v2239 = vld [vmem:[%s2234 + $0x20] sm:$0xff]
      %v2240 = vld [vmem:[%s2234 + $0x28] sm:$0xff]
      %v2241 = vld [vmem:[%s2234 + $0x30] sm:$0xff]
      %v2242 = vld [vmem:[%s2234 + $0x38] sm:$0xff]
      %s2243 = scalar_lea.vmem %s15, 64
      %v2244 = vld [vmem:[%s2243] sm:$0xff]
      %v2245 = vld [vmem:[%s2243 + $0x8] sm:$0xff]
      %v2246 = vld [vmem:[%s2243 + $0x10] sm:$0xff]
      %v2247 = vld [vmem:[%s2243 + $0x18] sm:$0xff]
      %v2248 = vld [vmem:[%s2243 + $0x20] sm:$0xff]
      %v2249 = vld [vmem:[%s2243 + $0x28] sm:$0xff]
      %v2250 = vld [vmem:[%s2243 + $0x30] sm:$0xff]
      %v2251 = vld [vmem:[%s2243 + $0x38] sm:$0xff]
      %2253 = vset.pattern.permute.xlu0 0
      %2254 = vperm.xlu0 %2253, %v2244
      %v2255 = vpop.permute.xlu0 %2254
      %2257 = vset.pattern.permute.xlu0 0
      %2258 = vperm.xlu0 %2257, %v2245
      %v2259 = vpop.permute.xlu0 %2258
      %2261 = vset.pattern.permute.xlu0 0
      %2262 = vperm.xlu0 %2261, %v2246
      %v2263 = vpop.permute.xlu0 %2262
      %2265 = vset.pattern.permute.xlu0 0
      %2266 = vperm.xlu0 %2265, %v2247
      %v2267 = vpop.permute.xlu0 %2266
      %2269 = vset.pattern.permute.xlu0 0
      %2270 = vperm.xlu0 %2269, %v2248
      %v2271 = vpop.permute.xlu0 %2270
      %2274 = vset.pattern.permute.xlu0 0
      %2275 = vperm.xlu0 %2274, %v2249
      %v2276 = vpop.permute.xlu0 %2275
      %2279 = vset.pattern.permute.xlu0 0
      %2280 = vperm.xlu0 %2279, %v2250
      %v2281 = vpop.permute.xlu0 %2280
      %2284 = vset.pattern.permute.xlu0 0
      %2285 = vperm.xlu0 %2284, %v2251
      %v2286 = vpop.permute.xlu0 %2285
      %v2289 = vsel %vm987, %v2235, 0
      %v2292 = vsel %vm987, %v2236, 0
      %v2295 = vsel %vm987, %v2237, 0
      %v2298 = vsel %vm987, %v2238, 0
      %v2301 = vsel %vm987, %v2239, 0
      %v2304 = vsel %vm987, %v2240, 0
      %v2307 = vsel %vm987, %v2241, 0
      %v2310 = vsel %vm987, %v2242, 0
      %2312 = vmatpush.msra.mxu0 0.0
      %2313 = vmatpush.msra.mxu0 0.0
      %2314 = vmatpush.msra.mxu0 0.0
      %2315 = vmatpush.msra.mxu0 0.0
      %2316 = vmatpush.msra.mxu0 0.0
      %2317 = vmatpush.msra.mxu0 0.0
      %2318 = vmatpush.msra.mxu0 0.0
      %2319 = vmatpush.msra.mxu0 0.0
      %2320 = vmatpush.msra.mxu0 0.0
      %2321 = vmatpush.msra.mxu0 0.0
      %2322 = vmatpush.msra.mxu0 0.0
      %2323 = vmatpush.msra.mxu0 0.0
      %2324 = vmatpush.msra.mxu0 %v2233
      %2325 = vmatpush.msra.mxu0 %v2232
      %2326 = vmatpush.msra.mxu0 %v2231
      %2327 = vmatpush.msra.mxu0 %v2230
      %2328 = vmatmul.f32.gmra.mxu0 %v2289
      %v2329 = vpop.f32.mrf.mxu0
      %2330 = vmatmul.f32.gmra.mxu0 %v2292
      %v2331 = vpop.f32.mrf.mxu0
      %2332 = vmatmul.f32.gmra.mxu0 %v2295
      %v2333 = vpop.f32.mrf.mxu0
      %2334 = vmatmul.f32.gmra.mxu0 %v2298
      %v2335 = vpop.f32.mrf.mxu0
      %2336 = vmatmul.f32.gmra.mxu0 %v2301
      %v2337 = vpop.f32.mrf.mxu0
      %v2338 = vadd.f32 %v2271, %v2337
      %2339 = vmatmul.f32.gmra.mxu0 %v2304
      %v2340 = vpop.f32.mrf.mxu0
      %v2341 = vadd.f32 %v2276, %v2340
      %2342 = vmatmul.f32.gmra.mxu0 %v2307
      %v2343 = vpop.f32.mrf.mxu0
      %v2344 = vadd.f32 %v2281, %v2343
      %2345 = vmatmul.f32.gmra.mxu0 %v2310
      %v2346 = vpop.f32.mrf.mxu0
      %v2347 = vadd.f32 %v2286, %v2346
      %2348 = vdwg.mxu0
      %v2349 = vadd.f32 %v1971, %v2338
      %v2350 = vadd.f32 %v1972, %v2341
      %v2351 = vadd.f32 %v1973, %v2344
      %v2352 = vadd.f32 %v1974, %v2347
      %v2353 = vld [vmem:[%s17] sm:$0xf]
      %2355 = vset.pattern.permute.xlu0 0
      %2356 = vperm.xlu0 %2355, %v2353
      %v2357 = vpop.permute.xlu0 %2356
      %v2360 = vsel %vm987, %v1567, 0
      %2362 = vmatpush.msra.mxu0 0.0
      %2363 = vmatpush.msra.mxu0 0.0
      %2364 = vmatpush.msra.mxu0 0.0
      %2365 = vmatpush.msra.mxu0 0.0
      %2366 = vmatpush.msra.mxu0 0.0
      %2367 = vmatpush.msra.mxu0 0.0
      %2368 = vmatpush.msra.mxu0 0.0
      %2369 = vmatpush.msra.mxu0 0.0
      %2370 = vmatpush.msra.mxu0 0.0
      %2371 = vmatpush.msra.mxu0 0.0
      %2372 = vmatpush.msra.mxu0 0.0
      %2373 = vmatpush.msra.mxu0 0.0
      %2374 = vmatpush.msra.mxu0 %v2352
      %2375 = vmatpush.msra.mxu0 %v2351
      %2376 = vmatpush.msra.mxu0 %v2350
      %2377 = vmatpush.msra.mxu0 %v2349
      %2378 = vmatmul.f32.gmra.mxu0 %v2360
      %v2379 = vpop.f32.mrf.mxu0
      %v2380 = vadd.f32 %v2357, %v2379
      %2381 = vdwg.mxu0
      %v2382 = vadd.f32 %v1493, %v2380
      %vm2383 = vcmask 257024
      %2384 = vst.msk [vmem:[%s570] sm:$0xf] %vm2383, %v2382
      %p2385 = scmp.lt.s32.totalorder %s29, 1
      %s2386 = scalar_select %p2385, %s29, 1
      %s2387 = smul.addr %s2386, 4
      %s2388 = scalar_lea.vmem %s18, %s2387
      // Predicated region
      $region93: #{encoder_forward.6} parent=91 // pred_check
        %p2389 = pneg %p430
      $region94: #{encoder_forward.6} parent=91 // pred_check_branch
        %2391 = sbr.rel (%p2389) target = $region96
      $region95: #{encoder_forward.6} parent=91 // pred_region
        _
      $region96: #{encoder_forward.6} parent=91 // pred_fallthru
        _
    $region92: #{encoder_forward.6} parent=5 // pred_fallthru
      _
    %p2392 = scmp.le.s32.totalorder 2, %s24
    // Predicated region
    $region97: #{encoder_forward.6} parent=5 // pred_check
      %p2393 = pneg %p2392
    $region98: #{encoder_forward.6} parent=5 // pred_check_branch
      %2395 = sbr.rel (%p2393) target = $region100
    $region99: #{encoder_forward.6} parent=5 // pred_region
      %s2396 = ssub.s32 %s24, 2
      // Predicated region
      $region101: #{encoder_forward.6} parent=99 // pred_check
        %p2397 = pneg %p436
      $region102: #{encoder_forward.6} parent=99 // pred_check_branch
        %2399 = sbr.rel (%p2397) target = $region104
      $region103: #{encoder_forward.6} parent=99 // pred_region
        %p2400 = scmp.lt.s32.totalorder %s30, 1
        %s2401 = scalar_select %p2400, %s30, 1
        %s2402 = smul.addr %s2401, 4
        %s2403 = scalar_lea.vmem %s18, %s2402
      $region104: #{encoder_forward.6} parent=99 // pred_fallthru
        _
    $region100: #{encoder_forward.6} parent=5 // pred_fallthru
      _
  $region6: #{encoder_forward.6} parent=0 // loop_footer
    %s28 = sadd.s32 1, %s24
  $region7: #{encoder_forward.6} parent=0 // loop_footer_branch
    %23 = sbr.rel target = $region3
  $region8: #{encoder_forward.6} parent=0 // loop_exit
    _

</llo_original>
